<compile_context>
chip_gen: v5e
topology: v5e:2x2
jax: 0.10.0
libtpu: 0.0.40
codegen_flags: <defaults>
</compile_context>

<pallas_src>
import jax
import jax.numpy as jnp
from jax import lax
from jax.experimental import pallas as pl
from jax.experimental.pallas import tpu as pltpu

EPS = 1e-3                                   # InstanceNorm3d eps
GROUPS = 16                                  # hard-coded in the PyTorch module (Conv3d groups=16)
RRELU_SLOPE = (1.0 / 8.0 + 1.0 / 3.0) / 2.0  # eval-mode RReLU == LeakyReLU((lower+upper)/2)


def _round_up(x, m):
    return (x + m - 1) // m * m


def _make_kernel(k, d, Wp, HWp_pad, P_out, Cin, total_len, n_valid):
    """Fused conv + instance-norm + rrelu for one batch element."""
    KK = k * k
    inv_cnt = 1.0 / float(n_valid)
    inplane = [(kh, kw) for kh in range(k) for kw in range(k)]

    def kernel(x_ref, w_ref, m_ref, o_ref, stack_ref, acc_ref):
        # x_ref    : (Cin, total_len)       lane-padded, zero-padded input slab (stream dtype)
        # w_ref    : (k, Out, k^2*Cin)      block-diagonal grouped weight, kd-major (stream dtype)
        # m_ref    : (1, P_out)             validity mask (f32)
        # o_ref    : (Out, P_out)           output slab (wrapper crops the padding)
        # stack_ref: (k^2*Cin, total_len)   VMEM scratch with the in-plane rolled taps
        # acc_ref  : (Out, P_out)           f32 VMEM accumulator

        # Build the stacked slab: one XLU lane-roll per in-plane tap (k^2-1 rolls total);
        # depth (kd) offsets become aligned static slices in the dot loop below.
        for j, (kh, kw) in enumerate(inplane):
            off = (kh * Wp + kw) * d
            src = x_ref[...]
            rolled = src if off == 0 else pltpu.roll(src, shift=total_len - off, axis=1)
            stack_ref[j * Cin:(j + 1) * Cin, :] = rolled

        # Conv: k dots with contraction depth k^2*Cin.  Stream dtype (bf16/f32) fed
        # directly to the MXU; f32 accumulation in VMEM scratch.
        acc_ref[...] = jnp.dot(w_ref[0], stack_ref[:, :P_out],
                               preferred_element_type=jnp.float32)
        for kd in range(1, k):
            start = kd * d * HWp_pad          # static, multiple of 128 -> aligned slice load
            acc_ref[...] += jnp.dot(w_ref[kd], stack_ref[:, start:start + P_out],
                                    preferred_element_type=jnp.float32)

        acc = acc_ref[...]
        # InstanceNorm3d (affine=False, biased variance): masked single-pass stats, f32 math.
        m = m_ref[...]                        # (1, P_out), broadcasts over Out rows
        xm = acc * m
        s = jnp.sum(xm, axis=-1, keepdims=True)
        ss = jnp.sum(xm * acc, axis=-1, keepdims=True)
        mean = s * inv_cnt
        var = ss * inv_cnt - mean * mean
        y = (acc - mean) * lax.rsqrt(var + EPS)

        # RReLU (eval mode) == leaky relu with the mean slope.
        y = jnp.where(y >= 0.0, y, y * RRELU_SLOPE)
        o_ref[...] = y.astype(o_ref.dtype)

    return kernel


def dilate_forward(x, weight, kSize, stride=1, d=1, compute_dtype=None):
    """x: (N, Cin, D, H, W); weight: (Out, Cin/GROUPS, k, k, k).

    compute_dtype: optional dtype (e.g. jnp.bfloat16) for streaming the slab/weights through
    HBM/VMEM and the MXU; accumulation and normalization remain f32.
    """
    assert stride == 1  # module configuration under test uses stride=1
    N, Cin, D, H, W = x.shape
    Out = weight.shape[0]
    k = kSize
    assert k % 2 == 1, "roll-wrap safety / padding formula derived for odd kernel sizes"
    assert Cin % GROUPS == 0 and Out % GROUPS == 0
    Cin_g = Cin // GROUPS
    Out_g = Out // GROUPS
    assert weight.shape == (Out, Cin_g, k, k, k)

    p = ((k - 1) // 2) * d                    # module: padding = (kSize-1)//2 * dilation
    assert (k - 1) * d == 2 * p
    Dp, Hp, Wp = D + 2 * p, H + 2 * p, W + 2 * p
    HWp_pad = _round_up(Hp * Wp, 128)         # per-depth-slice lane padding (128-aligned)
    P_out = D * HWp_pad                       # output slab length (lane-dense, mult of 128)
    total_len = Dp * HWp_pad                  # input slab length
    KK = k * k

    # Wrap-around safety: garbage pulled in by the full-slab lane rolls must never land on a
    # valid output position (it is masked from the stats and cropped from the output).
    max_off_ip = (k - 1) * d * (Wp + 1)
    assert HWp_pad - max_off_ip > (H - 1) * Wp + (W - 1), "roll wrap would hit valid outputs"

    stream_dtype = jnp.dtype(compute_dtype) if compute_dtype is not None else jnp.dtype(x.dtype)

    # --- glue (pad+pad+convert fuse into one XLA pass): cast, zero-pad spatially, flatten each
    # padded depth slice onto a 128-aligned lane chunk.
    x_pad = jnp.pad(x.astype(stream_dtype), ((0, 0), (0, 0), (p, p), (p, p), (p, p)))
    x_flat = x_pad.reshape(N, Cin, Dp, Hp * Wp)
    x_flat = jnp.pad(x_flat, ((0, 0), (0, 0), (0, 0), (0, HWp_pad - Hp * Wp)))
    x_flat = x_flat.reshape(N, Cin, total_len)

    # Block-diagonal grouped weight with the in-plane taps folded into the contraction dim:
    # shape (k /*kd*/, Out, k^2*Cin), last-dim index = (kh*k + kw)*Cin + cin.
    w_r = weight.reshape(GROUPS, Out_g, Cin_g, k, k, k)
    eye = jnp.eye(GROUPS, dtype=weight.dtype)
    w_bd = jnp.einsum('gh,gocabe->agobehc', eye, w_r).reshape(k, Out, KK * Cin)
    w_bd = w_bd.astype(stream_dtype)
    # TODO(synk): at larger channel counts loop groups on a grid axis instead of this 15/16-zero
    #             dense weight (the MXU has slack at these sizes, so the zeros are free here).

    # Validity mask over the lane-padded flattened output domain (only real (d,h,w) positions
    # contribute to the instance-norm statistics; everything else is cropped away below).
    q = jnp.arange(P_out)
    rem = q % HWp_pad
    hh = rem // Wp
    ww = rem % Wp
    mask = ((rem < Hp * Wp) & (hh < H) & (ww < W)).astype(jnp.float32).reshape(1, P_out)

    kernel = _make_kernel(k, d, Wp, HWp_pad, P_out, Cin, total_len, D * H * W)

    # Explicit VMEM budget (v7x has only 64 MiB physical; default scoped limit is smaller).
    bs = stream_dtype.itemsize
    bo = jnp.dtype(x.dtype).itemsize
    est_vmem = (2 * Cin * total_len * bs          # double-buffered input block
                + 2 * Out * P_out * bo            # double-buffered output block
                + 2 * k * Out * KK * Cin * bs     # weight (constant index_map)
                + 2 * P_out * 4                   # mask  (constant index_map)
                + KK * Cin * total_len * bs       # stacked-tap scratch
                + Out * P_out * 4)                # f32 accumulator scratch
    assert est_vmem <= 40 * 2 ** 20, (
        "TODO(synk): spatial tiling + two-pass instance norm needed for volumes this large")
    vmem_limit = int(min(max(2 * est_vmem, 32 * 2 ** 20), 64 * 2 ** 20))

    out = pl.pallas_call(
        kernel,
        out_shape=jax.ShapeDtypeStruct((N, Out, P_out), x.dtype),
        grid_spec=pltpu.PrefetchScalarGridSpec(
            num_scalar_prefetch=0,
            grid=(N,),
            in_specs=[
                pl.BlockSpec((None, Cin, total_len), lambda n: (n, 0, 0)),
                pl.BlockSpec((k, Out, KK * Cin), lambda n: (0, 0, 0)),   # constant -> DMA'd once
                pl.BlockSpec((1, P_out), lambda n: (0, 0)),              # constant -> DMA'd once
            ],
            out_specs=pl.BlockSpec((None, Out, P_out), lambda n: (n, 0, 0)),
            scratch_shapes=[
                pltpu.VMEM((KK * Cin, total_len), stream_dtype),  # stacked in-plane taps
                pltpu.VMEM((Out, P_out), jnp.float32),            # f32 conv accumulator
            ],
        ),
        compiler_params=pltpu.CompilerParams(
            dimension_semantics=("parallel",),
            vmem_limit_bytes=vmem_limit),
    )(x_flat, w_bd, mask)

    # Crop the padded / lane-padded flattened domain back to (N, Out, D, H, W).
    out = out.reshape(N, Out, D, HWp_pad)[:, :, :, :Hp * Wp]
    out = out.reshape(N, Out, D, Hp, Wp)[:, :, :, :H, :W]
    return out


def _reference(x, weight, kSize, d=1):
    """Pure-JAX reference matching the PyTorch forward (eval mode)."""
    p = ((kSize - 1) // 2) * d
    y = lax.conv_general_dilated(
        x, weight, window_strides=(1, 1, 1),
        padding=[(p, p)] * 3,
        rhs_dilation=(d, d, d),
        dimension_numbers=("NCDHW", "OIDHW", "NCDHW"),
        feature_group_count=GROUPS)
    mean = y.mean(axis=(2, 3, 4), keepdims=True)
    var = ((y - mean) ** 2).mean(axis=(2, 3, 4), keepdims=True)
    yn = (y - mean) * lax.rsqrt(var + EPS)
    return jnp.where(yn >= 0.0, yn, yn * RRELU_SLOPE)


if __name__ == "__main__":
    key = jax.random.PRNGKey(0)
    k_x, k_w = jax.random.split(key)

    # small shapes consistent with the module (3D conv, groups=16 hard-coded)
    N, In, Out, kSize = 2, 32, 32, 3
    D = H = W = 8

    x = jax.random.normal(k_x, (N, In, D, H, W), jnp.float32)

    # deterministic synthetic weights (Conv3d default-like uniform init)
    Cin_g = In // GROUPS
    fan_in = Cin_g * kSize ** 3
    bound = 1.0 / (fan_in ** 0.5)
    weight = jax.random.uniform(
        k_w, (Out, Cin_g, kSize, kSize, kSize), jnp.float32, -bound, bound)

    # f32 path, dilation=1
    out = jax.block_until_ready(dilate_forward(x, weight, kSize, d=1))
    ref = _reference(x, weight, kSize, d=1)
    assert out.shape == (N, Out, D, H, W)
    assert jnp.allclose(out, ref, atol=1e-4, rtol=1e-4), float(
        jnp.max(jnp.abs(out - ref)))

    # f32 path, dilation=2 (exercises the dilated taps / depth-slice offsets)
    out2 = jax.block_until_ready(dilate_forward(x, weight, kSize, d=2))
    ref2 = _reference(x, weight, kSize, d=2)
    assert out2.shape == (N, Out, D, H, W)
    assert jnp.allclose(out2, ref2, atol=1e-4, rtol=1e-4), float(
        jnp.max(jnp.abs(out2 - ref2)))

    # bf16 streaming path (halves HBM/VMEM bytes on the dominant stream; MXU fed bf16 natively,
    # accumulation and norm math stay f32)
    out3 = jax.block_until_ready(
        dilate_forward(x, weight, kSize, d=1, compute_dtype=jnp.bfloat16))
    assert jnp.allclose(out3, ref, atol=5e-2, rtol=5e-2), float(
        jnp.max(jnp.abs(out3 - ref)))

    print("KERNEL_OK")
</pallas_src>

<mosaic_0001>
module attributes {stable_mosaic.version = 11 : i64} {
  func.func @kernel(%arg0: i32, %arg1: memref<1x32x1280xf32, #tpu.memory_space<vmem>>, %arg2: memref<3x32x288xf32, #tpu.memory_space<vmem>>, %arg3: memref<1x1024xf32, #tpu.memory_space<vmem>>, %arg4: memref<1x32x1024xf32, #tpu.memory_space<vmem>>, %arg5: memref<288x1280xf32, #tpu.memory_space<vmem>>, %arg6: memref<32x1024xf32, #tpu.memory_space<vmem>>) attributes {dimension_semantics = [#tpu.dimension_semantics<parallel>], iteration_bounds = array<i64: 2>, scalar_prefetch = 0 : i64, scratch_operands = 2 : i64, tpu.core_type = #tpu.core_type<tc>, window_params = [{transform_indices = @transform_0, window_bounds = array<i64: 1, 32, 1280>}, {pipeline_mode = #tpu.pipeline_mode<synchronous>, transform_indices = @transform_1, window_bounds = array<i64: 3, 32, 288>}, {pipeline_mode = #tpu.pipeline_mode<synchronous>, transform_indices = @transform_2, window_bounds = array<i64: 1, 1024>}, {transform_indices = @transform_3, window_bounds = array<i64: 1, 32, 1024>}]} {
    %c0 = arith.constant 0 : index
    %c0_0 = arith.constant 0 : index
    %c0_1 = arith.constant 0 : index
    %0 = vector.load %arg1[%c0, %c0_0, %c0_1] : memref<1x32x1280xf32, #tpu.memory_space<vmem>>, vector<1x32x1280xf32>
    %1 = vector.shape_cast %0 : vector<1x32x1280xf32> to vector<32x1280xf32>
    %c0_2 = arith.constant 0 : index
    %c0_3 = arith.constant 0 : index
    %2 = vector.load %arg5[%c0_2, %c0_3] : memref<288x1280xf32, #tpu.memory_space<vmem>>, vector<32x1280xf32>
    tpu.vector_store %arg5[%c0_2, %c0_3], %1 {strides = array<i32>} : memref<288x1280xf32, #tpu.memory_space<vmem>>, vector<32x1280xf32>,
    %c0_4 = arith.constant 0 : index
    %c0_5 = arith.constant 0 : index
    %c0_6 = arith.constant 0 : index
    %3 = vector.load %arg1[%c0_4, %c0_5, %c0_6] : memref<1x32x1280xf32, #tpu.memory_space<vmem>>, vector<1x32x1280xf32>
    %4 = vector.shape_cast %3 : vector<1x32x1280xf32> to vector<32x1280xf32>
    %c1279_i32 = arith.constant 1279 : i32
    %5 = tpu.dynamic_rotate %4 by %c1279_i32 dim 1 : vector<32x1280xf32>, i32 -> vector<32x1280xf32>
    %c32 = arith.constant 32 : index
    %c0_7 = arith.constant 0 : index
    %6 = vector.load %arg5[%c32, %c0_7] : memref<288x1280xf32, #tpu.memory_space<vmem>>, vector<32x1280xf32>
    tpu.vector_store %arg5[%c32, %c0_7], %5 {strides = array<i32>} : memref<288x1280xf32, #tpu.memory_space<vmem>>, vector<32x1280xf32>,
    %c0_8 = arith.constant 0 : index
    %c0_9 = arith.constant 0 : index
    %c0_10 = arith.constant 0 : index
    %7 = vector.load %arg1[%c0_8, %c0_9, %c0_10] : memref<1x32x1280xf32, #tpu.memory_space<vmem>>, vector<1x32x1280xf32>
    %8 = vector.shape_cast %7 : vector<1x32x1280xf32> to vector<32x1280xf32>
    %c1278_i32 = arith.constant 1278 : i32
    %9 = tpu.dynamic_rotate %8 by %c1278_i32 dim 1 : vector<32x1280xf32>, i32 -> vector<32x1280xf32>
    %c64 = arith.constant 64 : index
    %c0_11 = arith.constant 0 : index
    %10 = vector.load %arg5[%c64, %c0_11] : memref<288x1280xf32, #tpu.memory_space<vmem>>, vector<32x1280xf32>
    tpu.vector_store %arg5[%c64, %c0_11], %9 {strides = array<i32>} : memref<288x1280xf32, #tpu.memory_space<vmem>>, vector<32x1280xf32>,
    %c0_12 = arith.constant 0 : index
    %c0_13 = arith.constant 0 : index
    %c0_14 = arith.constant 0 : index
    %11 = vector.load %arg1[%c0_12, %c0_13, %c0_14] : memref<1x32x1280xf32, #tpu.memory_space<vmem>>, vector<1x32x1280xf32>
    %12 = vector.shape_cast %11 : vector<1x32x1280xf32> to vector<32x1280xf32>
    %c1270_i32 = arith.constant 1270 : i32
    %13 = tpu.dynamic_rotate %12 by %c1270_i32 dim 1 : vector<32x1280xf32>, i32 -> vector<32x1280xf32>
    %c96 = arith.constant 96 : index
    %c0_15 = arith.constant 0 : index
    %14 = vector.load %arg5[%c96, %c0_15] : memref<288x1280xf32, #tpu.memory_space<vmem>>, vector<32x1280xf32>
    tpu.vector_store %arg5[%c96, %c0_15], %13 {strides = array<i32>} : memref<288x1280xf32, #tpu.memory_space<vmem>>, vector<32x1280xf32>,
    %c0_16 = arith.constant 0 : index
    %c0_17 = arith.constant 0 : index
    %c0_18 = arith.constant 0 : index
    %15 = vector.load %arg1[%c0_16, %c0_17, %c0_18] : memref<1x32x1280xf32, #tpu.memory_space<vmem>>, vector<1x32x1280xf32>
    %16 = vector.shape_cast %15 : vector<1x32x1280xf32> to vector<32x1280xf32>
    %c1269_i32 = arith.constant 1269 : i32
    %17 = tpu.dynamic_rotate %16 by %c1269_i32 dim 1 : vector<32x1280xf32>, i32 -> vector<32x1280xf32>
    %c128 = arith.constant 128 : index
    %c0_19 = arith.constant 0 : index
    %18 = vector.load %arg5[%c128, %c0_19] : memref<288x1280xf32, #tpu.memory_space<vmem>>, vector<32x1280xf32>
    tpu.vector_store %arg5[%c128, %c0_19], %17 {strides = array<i32>} : memref<288x1280xf32, #tpu.memory_space<vmem>>, vector<32x1280xf32>,
    %c0_20 = arith.constant 0 : index
    %c0_21 = arith.constant 0 : index
    %c0_22 = arith.constant 0 : index
    %19 = vector.load %arg1[%c0_20, %c0_21, %c0_22] : memref<1x32x1280xf32, #tpu.memory_space<vmem>>, vector<1x32x1280xf32>
    %20 = vector.shape_cast %19 : vector<1x32x1280xf32> to vector<32x1280xf32>
    %c1268_i32 = arith.constant 1268 : i32
    %21 = tpu.dynamic_rotate %20 by %c1268_i32 dim 1 : vector<32x1280xf32>, i32 -> vector<32x1280xf32>
    %c160 = arith.constant 160 : index
    %c0_23 = arith.constant 0 : index
    %22 = vector.load %arg5[%c160, %c0_23] : memref<288x1280xf32, #tpu.memory_space<vmem>>, vector<32x1280xf32>
    tpu.vector_store %arg5[%c160, %c0_23], %21 {strides = array<i32>} : memref<288x1280xf32, #tpu.memory_space<vmem>>, vector<32x1280xf32>,
    %c0_24 = arith.constant 0 : index
    %c0_25 = arith.constant 0 : index
    %c0_26 = arith.constant 0 : index
    %23 = vector.load %arg1[%c0_24, %c0_25, %c0_26] : memref<1x32x1280xf32, #tpu.memory_space<vmem>>, vector<1x32x1280xf32>
    %24 = vector.shape_cast %23 : vector<1x32x1280xf32> to vector<32x1280xf32>
    %c1260_i32 = arith.constant 1260 : i32
    %25 = tpu.dynamic_rotate %24 by %c1260_i32 dim 1 : vector<32x1280xf32>, i32 -> vector<32x1280xf32>
    %c192 = arith.constant 192 : index
    %c0_27 = arith.constant 0 : index
    %26 = vector.load %arg5[%c192, %c0_27] : memref<288x1280xf32, #tpu.memory_space<vmem>>, vector<32x1280xf32>
    tpu.vector_store %arg5[%c192, %c0_27], %25 {strides = array<i32>} : memref<288x1280xf32, #tpu.memory_space<vmem>>, vector<32x1280xf32>,
    %c0_28 = arith.constant 0 : index
    %c0_29 = arith.constant 0 : index
    %c0_30 = arith.constant 0 : index
    %27 = vector.load %arg1[%c0_28, %c0_29, %c0_30] : memref<1x32x1280xf32, #tpu.memory_space<vmem>>, vector<1x32x1280xf32>
    %28 = vector.shape_cast %27 : vector<1x32x1280xf32> to vector<32x1280xf32>
    %c1259_i32 = arith.constant 1259 : i32
    %29 = tpu.dynamic_rotate %28 by %c1259_i32 dim 1 : vector<32x1280xf32>, i32 -> vector<32x1280xf32>
    %c224 = arith.constant 224 : index
    %c0_31 = arith.constant 0 : index
    %30 = vector.load %arg5[%c224, %c0_31] : memref<288x1280xf32, #tpu.memory_space<vmem>>, vector<32x1280xf32>
    tpu.vector_store %arg5[%c224, %c0_31], %29 {strides = array<i32>} : memref<288x1280xf32, #tpu.memory_space<vmem>>, vector<32x1280xf32>,
    %c0_32 = arith.constant 0 : index
    %c0_33 = arith.constant 0 : index
    %c0_34 = arith.constant 0 : index
    %31 = vector.load %arg1[%c0_32, %c0_33, %c0_34] : memref<1x32x1280xf32, #tpu.memory_space<vmem>>, vector<1x32x1280xf32>
    %32 = vector.shape_cast %31 : vector<1x32x1280xf32> to vector<32x1280xf32>
    %c1258_i32 = arith.constant 1258 : i32
    %33 = tpu.dynamic_rotate %32 by %c1258_i32 dim 1 : vector<32x1280xf32>, i32 -> vector<32x1280xf32>
    %c256 = arith.constant 256 : index
    %c0_35 = arith.constant 0 : index
    %34 = vector.load %arg5[%c256, %c0_35] : memref<288x1280xf32, #tpu.memory_space<vmem>>, vector<32x1280xf32>
    tpu.vector_store %arg5[%c256, %c0_35], %33 {strides = array<i32>} : memref<288x1280xf32, #tpu.memory_space<vmem>>, vector<32x1280xf32>,
    %c0_36 = arith.constant 0 : index
    %c0_37 = arith.constant 0 : index
    %c0_38 = arith.constant 0 : index
    %35 = vector.load %arg2[%c0_36, %c0_37, %c0_38] : memref<3x32x288xf32, #tpu.memory_space<vmem>>, vector<1x32x288xf32>
    %36 = vector.shape_cast %35 : vector<1x32x288xf32> to vector<32x288xf32>
    %c0_39 = arith.constant 0 : index
    %c0_40 = arith.constant 0 : index
    %37 = vector.load %arg5[%c0_39, %c0_40] : memref<288x1280xf32, #tpu.memory_space<vmem>>, vector<288x1024xf32>
    %cst = arith.constant dense<0.000000e+00> : vector<32x1024xf32>
    %38 = tpu.matmul %36, %37, %cst {dimension_numbers = #tpu.dot_dimension_numbers<[1], [0], [0], [1], [0, 0, 1, 1], [], []>} : vector<32x288xf32>, vector<288x1024xf32>, vector<32x1024xf32> -> vector<32x1024xf32>
    %c0_41 = arith.constant 0 : index
    %c0_42 = arith.constant 0 : index
    %39 = vector.load %arg6[%c0_41, %c0_42] : memref<32x1024xf32, #tpu.memory_space<vmem>>, vector<32x1024xf32>
    tpu.vector_store %arg6[%c0_41, %c0_42], %38 {strides = array<i32>} : memref<32x1024xf32, #tpu.memory_space<vmem>>, vector<32x1024xf32>,
    %c0_43 = arith.constant 0 : index
    %c0_44 = arith.constant 0 : index
    %40 = vector.load %arg6[%c0_43, %c0_44] : memref<32x1024xf32, #tpu.memory_space<vmem>>, vector<32x1024xf32>
    %c1 = arith.constant 1 : index
    %c0_45 = arith.constant 0 : index
    %c0_46 = arith.constant 0 : index
    %41 = vector.load %arg2[%c1, %c0_45, %c0_46] : memref<3x32x288xf32, #tpu.memory_space<vmem>>, vector<1x32x288xf32>
    %42 = vector.shape_cast %41 : vector<1x32x288xf32> to vector<32x288xf32>
    %c0_47 = arith.constant 0 : index
    %c128_48 = arith.constant 128 : index
    %43 = vector.load %arg5[%c0_47, %c128_48] : memref<288x1280xf32, #tpu.memory_space<vmem>>, vector<288x1024xf32>
    %cst_49 = arith.constant dense<0.000000e+00> : vector<32x1024xf32>
    %44 = tpu.matmul %42, %43, %cst_49 {dimension_numbers = #tpu.dot_dimension_numbers<[1], [0], [0], [1], [0, 0, 1, 1], [], []>} : vector<32x288xf32>, vector<288x1024xf32>, vector<32x1024xf32> -> vector<32x1024xf32>
    %45 = arith.addf %40, %44 : vector<32x1024xf32>
    %c0_50 = arith.constant 0 : index
    %c0_51 = arith.constant 0 : index
    %46 = vector.load %arg6[%c0_50, %c0_51] : memref<32x1024xf32, #tpu.memory_space<vmem>>, vector<32x1024xf32>
    tpu.vector_store %arg6[%c0_50, %c0_51], %45 {strides = array<i32>} : memref<32x1024xf32, #tpu.memory_space<vmem>>, vector<32x1024xf32>,
    %c0_52 = arith.constant 0 : index
    %c0_53 = arith.constant 0 : index
    %47 = vector.load %arg6[%c0_52, %c0_53] : memref<32x1024xf32, #tpu.memory_space<vmem>>, vector<32x1024xf32>
    %c2 = arith.constant 2 : index
    %c0_54 = arith.constant 0 : index
    %c0_55 = arith.constant 0 : index
    %48 = vector.load %arg2[%c2, %c0_54, %c0_55] : memref<3x32x288xf32, #tpu.memory_space<vmem>>, vector<1x32x288xf32>
    %49 = vector.shape_cast %48 : vector<1x32x288xf32> to vector<32x288xf32>
    %c0_56 = arith.constant 0 : index
    %c256_57 = arith.constant 256 : index
    %50 = vector.load %arg5[%c0_56, %c256_57] : memref<288x1280xf32, #tpu.memory_space<vmem>>, vector<288x1024xf32>
    %cst_58 = arith.constant dense<0.000000e+00> : vector<32x1024xf32>
    %51 = tpu.matmul %49, %50, %cst_58 {dimension_numbers = #tpu.dot_dimension_numbers<[1], [0], [0], [1], [0, 0, 1, 1], [], []>} : vector<32x288xf32>, vector<288x1024xf32>, vector<32x1024xf32> -> vector<32x1024xf32>
    %52 = arith.addf %47, %51 : vector<32x1024xf32>
    %c0_59 = arith.constant 0 : index
    %c0_60 = arith.constant 0 : index
    %53 = vector.load %arg6[%c0_59, %c0_60] : memref<32x1024xf32, #tpu.memory_space<vmem>>, vector<32x1024xf32>
    tpu.vector_store %arg6[%c0_59, %c0_60], %52 {strides = array<i32>} : memref<32x1024xf32, #tpu.memory_space<vmem>>, vector<32x1024xf32>,
    %c0_61 = arith.constant 0 : index
    %c0_62 = arith.constant 0 : index
    %54 = vector.load %arg6[%c0_61, %c0_62] : memref<32x1024xf32, #tpu.memory_space<vmem>>, vector<32x1024xf32>
    %c0_63 = arith.constant 0 : index
    %c0_64 = arith.constant 0 : index
    %55 = vector.load %arg3[%c0_63, %c0_64] : memref<1x1024xf32, #tpu.memory_space<vmem>>, vector<1x1024xf32>
    %56 = vector.broadcast %55 : vector<1x1024xf32> to vector<32x1024xf32>
    %57 = arith.mulf %54, %56 : vector<32x1024xf32>
    %cst_65 = arith.constant dense<0.000000e+00> : vector<32xf32>
    %58 = vector.multi_reduction <add>, %57, %cst_65 [1] : vector<32x1024xf32> to vector<32xf32>
    %59 = vector.shape_cast %58 : vector<32xf32> to vector<32x1xf32>
    %60 = arith.mulf %57, %54 : vector<32x1024xf32>
    %cst_66 = arith.constant dense<0.000000e+00> : vector<32xf32>
    %61 = vector.multi_reduction <add>, %60, %cst_66 [1] : vector<32x1024xf32> to vector<32xf32>
    %62 = vector.shape_cast %61 : vector<32xf32> to vector<32x1xf32>
    %cst_67 = arith.constant 0.001953125 : f32
    %63 = vector.broadcast %cst_67 : f32 to vector<32x1xf32>
    %64 = arith.mulf %59, %63 : vector<32x1xf32>
    %cst_68 = arith.constant 0.001953125 : f32
    %65 = vector.broadcast %cst_68 : f32 to vector<32x1xf32>
    %66 = arith.mulf %62, %65 : vector<32x1xf32>
    %67 = arith.mulf %64, %64 : vector<32x1xf32>
    %68 = arith.subf %66, %67 : vector<32x1xf32>
    %69 = vector.broadcast %64 : vector<32x1xf32> to vector<32x1024xf32>
    %70 = arith.subf %54, %69 : vector<32x1024xf32>
    %cst_69 = arith.constant 1.000000e-03 : f32
    %71 = vector.broadcast %cst_69 : f32 to vector<32x1xf32>
    %72 = arith.addf %68, %71 : vector<32x1xf32>
    %73 = math.rsqrt %72 : vector<32x1xf32>
    %74 = vector.broadcast %73 : vector<32x1xf32> to vector<32x1024xf32>
    %75 = arith.mulf %70, %74 : vector<32x1024xf32>
    %cst_70 = arith.constant 0.000000e+00 : f32
    %76 = vector.broadcast %cst_70 : f32 to vector<32x1024xf32>
    %77 = arith.cmpf oge, %75, %76 : vector<32x1024xf32>
    %cst_71 = arith.constant 0.229166672 : f32
    %78 = vector.broadcast %cst_71 : f32 to vector<32x1024xf32>
    %79 = arith.mulf %75, %78 : vector<32x1024xf32>
    %80 = arith.select %77, %75, %79 : vector<32x1024xi1>, vector<32x1024xf32>
    %c0_72 = arith.constant 0 : index
    %c0_73 = arith.constant 0 : index
    %c0_74 = arith.constant 0 : index
    %81 = vector.load %arg4[%c0_72, %c0_73, %c0_74] : memref<1x32x1024xf32, #tpu.memory_space<vmem>>, vector<1x32x1024xf32>
    %82 = vector.shape_cast %81 : vector<1x32x1024xf32> to vector<32x1024xf32>
    %83 = vector.shape_cast %80 : vector<32x1024xf32> to vector<1x32x1024xf32>
    tpu.vector_store %arg4[%c0_72, %c0_73, %c0_74], %83 {strides = array<i32>} : memref<1x32x1024xf32, #tpu.memory_space<vmem>>, vector<1x32x1024xf32>,
    return
  }
  func.func @transform_0(%arg0: i32) -> (i32, i32, i32) {
    %c0_i32 = arith.constant 0 : i32
    %c0_i32_0 = arith.constant 0 : i32
    %c0_i32_1 = arith.constant 0 : i32
    return %arg0, %c0_i32, %c0_i32_0 : i32, i32, i32
  }
  func.func @transform_1(%arg0: i32) -> (i32, i32, i32) {
    %c0_i32 = arith.constant 0 : i32
    %c0_i32_0 = arith.constant 0 : i32
    %c0_i32_1 = arith.constant 0 : i32
    %c0_i32_2 = arith.constant 0 : i32
    return %c0_i32, %c0_i32_0, %c0_i32_1 : i32, i32, i32
  }
  func.func @transform_2(%arg0: i32) -> (i32, i32) {
    %c0_i32 = arith.constant 0 : i32
    %c0_i32_0 = arith.constant 0 : i32
    %c0_i32_1 = arith.constant 0 : i32
    return %c0_i32, %c0_i32_0 : i32, i32
  }
  func.func @transform_3(%arg0: i32) -> (i32, i32, i32) {
    %c0_i32 = arith.constant 0 : i32
    %c0_i32_0 = arith.constant 0 : i32
    %c0_i32_1 = arith.constant 0 : i32
    return %arg0, %c0_i32, %c0_i32_0 : i32, i32, i32
  }
}

</mosaic_0001>

<llo_original>
// kernel: tpu_custom_call.1
$region0: #{tpu_custom_call.1}
  #allocation0 [shape = 'u32[]', space=smem, size = 0x4, offset = 0x4, fixed_abs, tag = 'smem constant byte address 0x4 - core index']
  #allocation1 [shape = 'u32[72,128]{1,0:T(1,128)}', space=vmem, size = 0x9000, scoped, tag = 'internal scratch']
  #allocation2 [shape = 'f32[288,1280]{1,0:T(8,128)}', space=vmem, size = 0x168000, scoped, tag = 'scratch operand']
  #allocation3 [shape = 'f32[32,1024]{1,0:T(8,128)}', space=vmem, size = 0x20000, scoped, tag = 'scratch operand']
  %s0 = inlined_call_operand.hbm [shape: f32[2,32,1280], index: 0, kind: input, shape index: {}]
  %s1 = inlined_call_operand.hbm [shape: f32[3,32,288], index: 1, kind: input, shape index: {}]
  %s2 = inlined_call_operand.hbm [shape: f32[1,1024], index: 2, kind: input, shape index: {}]
  %s3 = inlined_call_operand.hbm [shape: f32[2,32,1024], index: 3, kind: output, shape index: {}]
  %s4 = sld [smem:[#allocation0]]
  $region57: #{tpu_custom_call.1} parent=0
    _
  %s6 = ssub.s32 1, %s4
  %s7 = scalar_select 0, %s6, %s4
  $region1: #{tpu_custom_call.1} parent=0
    #allocation4 [shape = 'u8[327680]{0}', space=vmem, size = 0x50000, scoped, tag = 'input window, operand 0']
    #allocation5 [shape = 's32[2]{0}', space=sflag, size = 0x8, scoped, tag = 'scoped memory for tpu_custom_call.1']
    #allocation6 [shape = 's32[2]{0}', space=sflag, size = 0x8, scoped, tag = 'scoped memory for tpu_custom_call.1']
    #allocation7 [shape = 'u8[147456]{0}', space=vmem, size = 0x24000, scoped, tag = 'input window, operand 1, single buffered']
    #allocation8 [shape = 's32[1]{0}', space=sflag, size = 0x4, scoped, tag = 'scoped memory for tpu_custom_call.1']
    #allocation9 [shape = 'u8[4096]{0}', space=vmem, size = 0x1000, scoped, tag = 'input window, operand 2, single buffered']
    #allocation10 [shape = 'u8[262144]{0}', space=vmem, size = 0x40000, scoped, tag = 'output window, operand 0']
    %8 = vsyncpa [#allocation5], 0
    %s9 = scalar_lea.sflag [#allocation5], 1
    %10 = vsyncpa %s9, 0
    %11 = vsyncpa [#allocation8], 0
    %12 = vsyncpa [#allocation6], 0
    %s13 = scalar_lea.sflag [#allocation6], 1
    %14 = vsyncpa %s13, 0
    loop: start=0, step=1, limit=4
    $region2: #{tpu_custom_call.1} parent=1 // loop_pre_header
      _
    $region3: #{tpu_custom_call.1} parent=1 // loop_header
      %s16 = sphi 0, %s20
      %p17 = scmp.ge.s32.totalorder %s16, 4
      %s26 = sphi 0, %s28
      %s29 = sphi 0, %s26
      %s30 = sphi 0, %s29
      %s46 = sphi 0, %s30
      %s50 = sphi 0, %s50
      %s52 = sphi 0, %s50
      %s53 = sphi 0, %s52
      %s67 = sphi 0, %s53
      %s71 = sphi 0, %s71
      %s73 = sphi 0, %s71
      %s74 = sphi 0, %s73
      %s88 = sphi 0, %s74
      %s94 = sphi 0, %s96
      %s97 = sphi 0, %s94
      %s98 = sphi 0, %s97
      %s114 = sphi 0, %s98
    $region4: #{tpu_custom_call.1} parent=1 // loop_header_branch
      %19 = sbr.rel (%p17) target = $region8
    $region5: #{tpu_custom_call.1} parent=1 // loop_body
      %s21 = ssub.s32 %s16, 1
      %s22 = ssub.s32 %s16, 2
      %s23 = sadd.s32 %s16, 1
      %s24 = ssub.s32 %s16, %s23
      %p25 = scmp.eq.s32.totalorder %s24, 0
      %s27 = sadd.s32 %s26, 1
      %s28 = scalar_select %p25, %s26, %s27
      %p31 = pneg %p25
      %p32 = scmp.eq.s32.totalorder %s16, 1
      %p33 = por %p31, %p32
      %p34 = scmp.ne.s32.totalorder %s26, %s29
      %p35 = scmp.eq.s32.totalorder %s16, 0
      %p36 = por %p34, %p35
      %p37 = scmp.ne.s32.totalorder %s26, %s29
      %p38 = scmp.eq.s32.totalorder %s21, 1
      %p39 = por %p37, %p38
      %p40 = scmp.ne.s32.totalorder %s29, %s30
      %p41 = scmp.eq.s32.totalorder %s21, 0
      %p42 = por %p40, %p41
      %p43 = scmp.ne.s32.totalorder %s29, %s30
      %p44 = scmp.eq.s32.totalorder %s22, 1
      %p45 = por %p43, %p44
      %p47 = scmp.ne.s32.totalorder %s30, %s46
      %p48 = scmp.eq.s32.totalorder %s22, 0
      %p49 = por %p47, %p48
      %s51 = sadd.s32 %s50, 1
      %p54 = scmp.eq.s32.totalorder %s16, 1
      %p55 = scmp.ne.s32.totalorder %s50, %s52
      %p56 = scmp.eq.s32.totalorder %s16, 0
      %p57 = por %p55, %p56
      %p58 = scmp.ne.s32.totalorder %s50, %s52
      %p59 = scmp.eq.s32.totalorder %s21, 1
      %p60 = por %p58, %p59
      %p61 = scmp.ne.s32.totalorder %s52, %s53
      %p62 = scmp.eq.s32.totalorder %s21, 0
      %p63 = por %p61, %p62
      %p64 = scmp.ne.s32.totalorder %s52, %s53
      %p65 = scmp.eq.s32.totalorder %s22, 1
      %p66 = por %p64, %p65
      %p68 = scmp.ne.s32.totalorder %s53, %s67
      %p69 = scmp.eq.s32.totalorder %s22, 0
      %p70 = por %p68, %p69
      %s72 = sadd.s32 %s71, 1
      %p75 = scmp.eq.s32.totalorder %s16, 1
      %p76 = scmp.ne.s32.totalorder %s71, %s73
      %p77 = scmp.eq.s32.totalorder %s16, 0
      %p78 = por %p76, %p77
      %p79 = scmp.ne.s32.totalorder %s71, %s73
      %p80 = scmp.eq.s32.totalorder %s21, 1
      %p81 = por %p79, %p80
      %p82 = scmp.ne.s32.totalorder %s73, %s74
      %p83 = scmp.eq.s32.totalorder %s21, 0
      %p84 = por %p82, %p83
      %p85 = scmp.ne.s32.totalorder %s73, %s74
      %p86 = scmp.eq.s32.totalorder %s22, 1
      %p87 = por %p85, %p86
      %p89 = scmp.ne.s32.totalorder %s74, %s88
      %p90 = scmp.eq.s32.totalorder %s22, 0
      %p91 = por %p89, %p90
      %s92 = ssub.s32 %s16, %s23
      %p93 = scmp.eq.s32.totalorder %s92, 0
      %s95 = sadd.s32 %s94, 1
      %s96 = scalar_select %p93, %s94, %s95
      %p99 = pneg %p93
      %p100 = scmp.eq.s32.totalorder %s16, 1
      %p101 = por %p99, %p100
      %p102 = scmp.ne.s32.totalorder %s94, %s97
      %p103 = scmp.eq.s32.totalorder %s16, 0
      %p104 = por %p102, %p103
      %p105 = scmp.ne.s32.totalorder %s94, %s97
      %p106 = scmp.eq.s32.totalorder %s21, 1
      %p107 = por %p105, %p106
      %p108 = scmp.ne.s32.totalorder %s97, %s98
      %p109 = scmp.eq.s32.totalorder %s21, 0
      %p110 = por %p108, %p109
      %p111 = scmp.ne.s32.totalorder %s97, %s98
      %p112 = scmp.eq.s32.totalorder %s22, 1
      %p113 = por %p111, %p112
      %p115 = scmp.ne.s32.totalorder %s98, %s114
      %p116 = scmp.eq.s32.totalorder %s22, 0
      %p117 = por %p115, %p116
      %p118 = scmp.le.s32.totalorder 1, %s16
      %p119 = scmp.lt.s32.totalorder %s16, 3
      %p120 = pnand %p118, %p119
      %p121 = pneg %p120
      // Predicated region
      $region9: #{tpu_custom_call.1} parent=5 // pred_check
        _
      $region10: #{tpu_custom_call.1} parent=5 // pred_check_branch
        %123 = sbr.rel (%p120) target = $region12
      $region11: #{tpu_custom_call.1} parent=5 // pred_region
        %s124 = ssub.s32 %s16, 1
        // Predicated region
        $region13: #{tpu_custom_call.1} parent=11 // pred_check
          %p125 = pneg %p63
        $region14: #{tpu_custom_call.1} parent=11 // pred_check_branch
          %127 = sbr.rel (%p125) target = $region16
        $region15: #{tpu_custom_call.1} parent=11 // pred_region
          %129 = vsyncadd [#allocation8], 0
          %s130 = sshll.u32 %s1, 4
          %s131 = int_to_ptr.hbm [resolvable:$true] %s130
          %s132 = sshll.u32 [#allocation7], 4
          %s133 = int_to_ptr.vmem [resolvable:$true] %s132
          %138 = dma.hbm_to_vmem [thread:$0]  %s131, 4608, %s133, [#allocation8], 384, 384, 24
        $region16: #{tpu_custom_call.1} parent=11 // pred_fallthru
          _
        // Predicated region
        $region17: #{tpu_custom_call.1} parent=11 // pred_check
          %p139 = pneg %p84
        $region18: #{tpu_custom_call.1} parent=11 // pred_check_branch
          %141 = sbr.rel (%p139) target = $region20
        $region19: #{tpu_custom_call.1} parent=11 // pred_region
          %143 = vsyncadd [#allocation8], 0
          %s145 = sshll.u32 %s2, 4
          %s146 = int_to_ptr.hbm [resolvable:$true] %s145
          %s147 = sshll.u32 [#allocation9], 4
          %s148 = int_to_ptr.vmem [resolvable:$true] %s147
          %150 = dma.hbm_to_vmem [thread:$0]  %s146, 128, %s148, [#allocation8]
        $region20: #{tpu_custom_call.1} parent=11 // pred_fallthru
          _
      $region12: #{tpu_custom_call.1} parent=5 // pred_fallthru
        _
      %p151 = scmp.lt.s32.totalorder %s16, 2
      // Predicated region
      $region21: #{tpu_custom_call.1} parent=5 // pred_check
        %p152 = pneg %p151
      $region22: #{tpu_custom_call.1} parent=5 // pred_check_branch
        %154 = sbr.rel (%p152) target = $region24
      $region23: #{tpu_custom_call.1} parent=5 // pred_region
        // Predicated region
        $region25: #{tpu_custom_call.1} parent=23 // pred_check
          %p155 = pneg %p36
        $region26: #{tpu_custom_call.1} parent=23 // pred_check_branch
          %157 = sbr.rel (%p155) target = $region28
        $region27: #{tpu_custom_call.1} parent=23 // pred_region
          %s158 = sand.u32 %s26, 1
          %s159 = scalar_lea.sflag [#allocation5], %s158
          %s160 = sand.u32 %s26, 1
          %s161 = smul.addr %s160, 320
          %s162 = scalar_lea.vmem [#allocation4], %s161
          %164 = vsyncadd %s159, 0
          %s165 = smul.addr %s16, 40
          %s166 = smul.addr %s165, 8
          %s167 = scalar_lea.hbm %s0, %s166
          %s168 = sshll.u32 %s167, 4
          %s169 = int_to_ptr.hbm [resolvable:$true] %s168
          %s170 = sshll.u32 %s162, 4
          %s171 = int_to_ptr.vmem [resolvable:$true] %s170
          %176 = dma.hbm_to_vmem [thread:$0]  %s169, 5120, %s171, %s159, 1280, 1280, 80
        $region28: #{tpu_custom_call.1} parent=23 // pred_fallthru
          _
      $region24: #{tpu_custom_call.1} parent=5 // pred_fallthru
        _
      %p177 = scmp.le.s32.totalorder 1, %s16
      %p178 = scmp.lt.s32.totalorder %s16, 3
      %p179 = pnand %p177, %p178
      %p180 = pneg %p179
      // Predicated region
      $region29: #{tpu_custom_call.1} parent=5 // pred_check
        _
      $region30: #{tpu_custom_call.1} parent=5 // pred_check_branch
        %182 = sbr.rel (%p179) target = $region32
      $region31: #{tpu_custom_call.1} parent=5 // pred_region
        %s183 = ssub.s32 %s16, 1
        %s184 = sand.u32 %s29, 1
        %s185 = scalar_lea.sflag [#allocation5], %s184
        %s186 = sand.u32 %s29, 1
        %s187 = smul.addr %s186, 320
        %s188 = scalar_lea.vmem [#allocation4], %s187
        // Predicated region
        $region33: #{tpu_custom_call.1} parent=31 // pred_check
          %p189 = pneg %p42
        $region34: #{tpu_custom_call.1} parent=31 // pred_check_branch
          %191 = sbr.rel (%p189) target = $region36
        $region35: #{tpu_custom_call.1} parent=31 // pred_region
          %193 = dma.done %s185, 5120
        $region36: #{tpu_custom_call.1} parent=31 // pred_fallthru
          _
        // Predicated region
        $region37: #{tpu_custom_call.1} parent=31 // pred_check
          %p194 = pneg %p63
        $region38: #{tpu_custom_call.1} parent=31 // pred_check_branch
          %196 = sbr.rel (%p194) target = $region40
        $region39: #{tpu_custom_call.1} parent=31 // pred_region
          %198 = dma.done [#allocation8], 4608
        $region40: #{tpu_custom_call.1} parent=31 // pred_fallthru
          _
        // Predicated region
        $region41: #{tpu_custom_call.1} parent=31 // pred_check
          %p199 = pneg %p84
        $region42: #{tpu_custom_call.1} parent=31 // pred_check_branch
          %201 = sbr.rel (%p199) target = $region44
        $region43: #{tpu_custom_call.1} parent=31 // pred_region
          %203 = dma.done [#allocation8], 128
        $region44: #{tpu_custom_call.1} parent=31 // pred_fallthru
          _
        %s204 = sand.u32 %s29, 1
        %s205 = scalar_lea.sflag [#allocation5], %s204
        %s206 = sand.u32 %s29, 1
        %s207 = smul.addr %s206, 320
        %s208 = scalar_lea.vmem [#allocation4], %s207
        %p209 = pneg %p42
        %p210 = pneg %p39
        %p211 = pneg %p63
        %p212 = pneg %p60
        %p213 = pneg %p84
        %p214 = pneg %p81
        %p215 = pneg %p110
        %p216 = pneg %p107
        %s217 = sand.u32 %s97, 1
        %s218 = scalar_lea.sflag [#allocation6], %s217
        %s219 = sand.u32 %s97, 1
        %s220 = smul.addr %s219, 256
        %s221 = scalar_lea.vmem [#allocation10], %s220
        %v222 = vld [vmem:[%s188] sm:$0xff]
        %v223 = vld [vmem:[%s188 + $0x8] sm:$0xff]
        %v224 = vld [vmem:[%s188 + $0x10] sm:$0xff]
        %v225 = vld [vmem:[%s188 + $0x18] sm:$0xff]
        %v226 = vld [vmem:[%s188 + $0x20] sm:$0xff]
        %v227 = vld [vmem:[%s188 + $0x28] sm:$0xff]
        %v228 = vld [vmem:[%s188 + $0x30] sm:$0xff]
        %v229 = vld [vmem:[%s188 + $0x38] sm:$0xff]
        %v230 = vld [vmem:[%s188 + $0x40] sm:$0xff]
        %v231 = vld [vmem:[%s188 + $0x48] sm:$0xff]
        %v232 = vld [vmem:[%s188 + $0x50] sm:$0xff]
        %v233 = vld [vmem:[%s188 + $0x58] sm:$0xff]
        %v234 = vld [vmem:[%s188 + $0x60] sm:$0xff]
        %v235 = vld [vmem:[%s188 + $0x68] sm:$0xff]
        %v236 = vld [vmem:[%s188 + $0x70] sm:$0xff]
        %v237 = vld [vmem:[%s188 + $0x78] sm:$0xff]
        %v238 = vld [vmem:[%s188 + $0x80] sm:$0xff]
        %v239 = vld [vmem:[%s188 + $0x88] sm:$0xff]
        %v240 = vld [vmem:[%s188 + $0x90] sm:$0xff]
        %v241 = vld [vmem:[%s188 + $0x98] sm:$0xff]
        %v242 = vld [vmem:[%s188 + $0xa0] sm:$0xff]
        %v243 = vld [vmem:[%s188 + $0xa8] sm:$0xff]
        %v244 = vld [vmem:[%s188 + $0xb0] sm:$0xff]
        %v245 = vld [vmem:[%s188 + $0xb8] sm:$0xff]
        %v246 = vld [vmem:[%s188 + $0xc0] sm:$0xff]
        %v247 = vld [vmem:[%s188 + $0xc8] sm:$0xff]
        %v248 = vld [vmem:[%s188 + $0xd0] sm:$0xff]
        %v249 = vld [vmem:[%s188 + $0xd8] sm:$0xff]
        %v250 = vld [vmem:[%s188 + $0xe0] sm:$0xff]
        %v251 = vld [vmem:[%s188 + $0xe8] sm:$0xff]
        %v252 = vld [vmem:[%s188 + $0xf0] sm:$0xff]
        %v253 = vld [vmem:[%s188 + $0xf8] sm:$0xff]
        %v254 = vld [vmem:[%s188 + $0x100] sm:$0xff]
        %v255 = vld [vmem:[%s188 + $0x108] sm:$0xff]
        %v256 = vld [vmem:[%s188 + $0x110] sm:$0xff]
        %v257 = vld [vmem:[%s188 + $0x118] sm:$0xff]
        %v258 = vld [vmem:[%s188 + $0x120] sm:$0xff]
        %v259 = vld [vmem:[%s188 + $0x128] sm:$0xff]
        %v260 = vld [vmem:[%s188 + $0x130] sm:$0xff]
        %v261 = vld [vmem:[%s188 + $0x138] sm:$0xff]
        %262 = vst [vmem:[#allocation2] sm:$0xff] %v222
        %263 = vst [vmem:[#allocation2 + $0x8] sm:$0xff] %v223
        %264 = vst [vmem:[#allocation2 + $0x10] sm:$0xff] %v224
        %265 = vst [vmem:[#allocation2 + $0x18] sm:$0xff] %v225
        %266 = vst [vmem:[#allocation2 + $0x20] sm:$0xff] %v226
        %267 = vst [vmem:[#allocation2 + $0x28] sm:$0xff] %v227
        %268 = vst [vmem:[#allocation2 + $0x30] sm:$0xff] %v228
        %269 = vst [vmem:[#allocation2 + $0x38] sm:$0xff] %v229
        %270 = vst [vmem:[#allocation2 + $0x40] sm:$0xff] %v230
        %271 = vst [vmem:[#allocation2 + $0x48] sm:$0xff] %v231
        %272 = vst [vmem:[#allocation2 + $0x50] sm:$0xff] %v232
        %273 = vst [vmem:[#allocation2 + $0x58] sm:$0xff] %v233
        %274 = vst [vmem:[#allocation2 + $0x60] sm:$0xff] %v234
        %275 = vst [vmem:[#allocation2 + $0x68] sm:$0xff] %v235
        %276 = vst [vmem:[#allocation2 + $0x70] sm:$0xff] %v236
        %277 = vst [vmem:[#allocation2 + $0x78] sm:$0xff] %v237
        %278 = vst [vmem:[#allocation2 + $0x80] sm:$0xff] %v238
        %279 = vst [vmem:[#allocation2 + $0x88] sm:$0xff] %v239
        %280 = vst [vmem:[#allocation2 + $0x90] sm:$0xff] %v240
        %281 = vst [vmem:[#allocation2 + $0x98] sm:$0xff] %v241
        %282 = vst [vmem:[#allocation2 + $0xa0] sm:$0xff] %v242
        %283 = vst [vmem:[#allocation2 + $0xa8] sm:$0xff] %v243
        %284 = vst [vmem:[#allocation2 + $0xb0] sm:$0xff] %v244
        %285 = vst [vmem:[#allocation2 + $0xb8] sm:$0xff] %v245
        %286 = vst [vmem:[#allocation2 + $0xc0] sm:$0xff] %v246
        %287 = vst [vmem:[#allocation2 + $0xc8] sm:$0xff] %v247
        %288 = vst [vmem:[#allocation2 + $0xd0] sm:$0xff] %v248
        %289 = vst [vmem:[#allocation2 + $0xd8] sm:$0xff] %v249
        %290 = vst [vmem:[#allocation2 + $0xe0] sm:$0xff] %v250
        %291 = vst [vmem:[#allocation2 + $0xe8] sm:$0xff] %v251
        %292 = vst [vmem:[#allocation2 + $0xf0] sm:$0xff] %v252
        %293 = vst [vmem:[#allocation2 + $0xf8] sm:$0xff] %v253
        %294 = vst [vmem:[#allocation2 + $0x100] sm:$0xff] %v254
        %295 = vst [vmem:[#allocation2 + $0x108] sm:$0xff] %v255
        %296 = vst [vmem:[#allocation2 + $0x110] sm:$0xff] %v256
        %297 = vst [vmem:[#allocation2 + $0x118] sm:$0xff] %v257
        %298 = vst [vmem:[#allocation2 + $0x120] sm:$0xff] %v258
        %299 = vst [vmem:[#allocation2 + $0x128] sm:$0xff] %v259
        %300 = vst [vmem:[#allocation2 + $0x130] sm:$0xff] %v260
        %301 = vst [vmem:[#allocation2 + $0x138] sm:$0xff] %v261
        %v302 = vld [vmem:[%s188] sm:$0xff]
        %v303 = vld [vmem:[%s188 + $0x8] sm:$0xff]
        %v304 = vld [vmem:[%s188 + $0x10] sm:$0xff]
        %v305 = vld [vmem:[%s188 + $0x18] sm:$0xff]
        %v306 = vld [vmem:[%s188 + $0x20] sm:$0xff]
        %v307 = vld [vmem:[%s188 + $0x28] sm:$0xff]
        %v308 = vld [vmem:[%s188 + $0x30] sm:$0xff]
        %v309 = vld [vmem:[%s188 + $0x38] sm:$0xff]
        %v310 = vld [vmem:[%s188 + $0x40] sm:$0xff]
        %v311 = vld [vmem:[%s188 + $0x48] sm:$0xff]
        %v312 = vld [vmem:[%s188 + $0x50] sm:$0xff]
        %v313 = vld [vmem:[%s188 + $0x58] sm:$0xff]
        %v314 = vld [vmem:[%s188 + $0x60] sm:$0xff]
        %v315 = vld [vmem:[%s188 + $0x68] sm:$0xff]
        %v316 = vld [vmem:[%s188 + $0x70] sm:$0xff]
        %v317 = vld [vmem:[%s188 + $0x78] sm:$0xff]
        %v318 = vld [vmem:[%s188 + $0x80] sm:$0xff]
        %v319 = vld [vmem:[%s188 + $0x88] sm:$0xff]
        %v320 = vld [vmem:[%s188 + $0x90] sm:$0xff]
        %v321 = vld [vmem:[%s188 + $0x98] sm:$0xff]
        %v322 = vld [vmem:[%s188 + $0xa0] sm:$0xff]
        %v323 = vld [vmem:[%s188 + $0xa8] sm:$0xff]
        %v324 = vld [vmem:[%s188 + $0xb0] sm:$0xff]
        %v325 = vld [vmem:[%s188 + $0xb8] sm:$0xff]
        %v326 = vld [vmem:[%s188 + $0xc0] sm:$0xff]
        %v327 = vld [vmem:[%s188 + $0xc8] sm:$0xff]
        %v328 = vld [vmem:[%s188 + $0xd0] sm:$0xff]
        %v329 = vld [vmem:[%s188 + $0xd8] sm:$0xff]
        %v330 = vld [vmem:[%s188 + $0xe0] sm:$0xff]
        %v331 = vld [vmem:[%s188 + $0xe8] sm:$0xff]
        %v332 = vld [vmem:[%s188 + $0xf0] sm:$0xff]
        %v333 = vld [vmem:[%s188 + $0xf8] sm:$0xff]
        %v334 = vld [vmem:[%s188 + $0x100] sm:$0xff]
        %v335 = vld [vmem:[%s188 + $0x108] sm:$0xff]
        %v336 = vld [vmem:[%s188 + $0x110] sm:$0xff]
        %v337 = vld [vmem:[%s188 + $0x118] sm:$0xff]
        %v338 = vld [vmem:[%s188 + $0x120] sm:$0xff]
        %v339 = vld [vmem:[%s188 + $0x128] sm:$0xff]
        %v340 = vld [vmem:[%s188 + $0x130] sm:$0xff]
        %v341 = vld [vmem:[%s188 + $0x138] sm:$0xff]
        %342 = vrot.lane.b32.xlu0 %v302, 127
        %v343 = vpop.permute.xlu0 %342
        %344 = vrot.lane.b32.xlu0 %v312, 127
        %v345 = vpop.permute.xlu0 %344
        %346 = vrot.lane.b32.xlu0 %v322, 127
        %v347 = vpop.permute.xlu0 %346
        %348 = vrot.lane.b32.xlu0 %v332, 127
        %v349 = vpop.permute.xlu0 %348
        %350 = vrot.lane.b32.xlu0 %v303, 127
        %v351 = vpop.permute.xlu0 %350
        %352 = vrot.lane.b32.xlu0 %v313, 127
        %v353 = vpop.permute.xlu0 %352
        %354 = vrot.lane.b32.xlu0 %v323, 127
        %v355 = vpop.permute.xlu0 %354
        %356 = vrot.lane.b32.xlu0 %v333, 127
        %v357 = vpop.permute.xlu0 %356
        %358 = vrot.lane.b32.xlu0 %v304, 127
        %v359 = vpop.permute.xlu0 %358
        %360 = vrot.lane.b32.xlu0 %v314, 127
        %v361 = vpop.permute.xlu0 %360
        %362 = vrot.lane.b32.xlu0 %v324, 127
        %v363 = vpop.permute.xlu0 %362
        %364 = vrot.lane.b32.xlu0 %v334, 127
        %v365 = vpop.permute.xlu0 %364
        %366 = vrot.lane.b32.xlu0 %v305, 127
        %v367 = vpop.permute.xlu0 %366
        %368 = vrot.lane.b32.xlu0 %v315, 127
        %v369 = vpop.permute.xlu0 %368
        %370 = vrot.lane.b32.xlu0 %v325, 127
        %v371 = vpop.permute.xlu0 %370
        %372 = vrot.lane.b32.xlu0 %v335, 127
        %v373 = vpop.permute.xlu0 %372
        %374 = vrot.lane.b32.xlu0 %v306, 127
        %v375 = vpop.permute.xlu0 %374
        %376 = vrot.lane.b32.xlu0 %v316, 127
        %v377 = vpop.permute.xlu0 %376
        %378 = vrot.lane.b32.xlu0 %v326, 127
        %v379 = vpop.permute.xlu0 %378
        %380 = vrot.lane.b32.xlu0 %v336, 127
        %v381 = vpop.permute.xlu0 %380
        %382 = vrot.lane.b32.xlu0 %v307, 127
        %v383 = vpop.permute.xlu0 %382
        %384 = vrot.lane.b32.xlu0 %v317, 127
        %v385 = vpop.permute.xlu0 %384
        %386 = vrot.lane.b32.xlu0 %v327, 127
        %v387 = vpop.permute.xlu0 %386
        %388 = vrot.lane.b32.xlu0 %v337, 127
        %v389 = vpop.permute.xlu0 %388
        %390 = vrot.lane.b32.xlu0 %v308, 127
        %v391 = vpop.permute.xlu0 %390
        %392 = vrot.lane.b32.xlu0 %v318, 127
        %v393 = vpop.permute.xlu0 %392
        %394 = vrot.lane.b32.xlu0 %v328, 127
        %v395 = vpop.permute.xlu0 %394
        %396 = vrot.lane.b32.xlu0 %v338, 127
        %v397 = vpop.permute.xlu0 %396
        %398 = vrot.lane.b32.xlu0 %v309, 127
        %v399 = vpop.permute.xlu0 %398
        %400 = vrot.lane.b32.xlu0 %v319, 127
        %v401 = vpop.permute.xlu0 %400
        %402 = vrot.lane.b32.xlu0 %v329, 127
        %v403 = vpop.permute.xlu0 %402
        %404 = vrot.lane.b32.xlu0 %v339, 127
        %v405 = vpop.permute.xlu0 %404
        %406 = vrot.lane.b32.xlu0 %v310, 127
        %v407 = vpop.permute.xlu0 %406
        %408 = vrot.lane.b32.xlu0 %v320, 127
        %v409 = vpop.permute.xlu0 %408
        %410 = vrot.lane.b32.xlu0 %v330, 127
        %v411 = vpop.permute.xlu0 %410
        %412 = vrot.lane.b32.xlu0 %v340, 127
        %v413 = vpop.permute.xlu0 %412
        %414 = vrot.lane.b32.xlu0 %v311, 127
        %v415 = vpop.permute.xlu0 %414
        %416 = vrot.lane.b32.xlu0 %v321, 127
        %v417 = vpop.permute.xlu0 %416
        %418 = vrot.lane.b32.xlu0 %v331, 127
        %v419 = vpop.permute.xlu0 %418
        %420 = vrot.lane.b32.xlu0 %v341, 127
        %v421 = vpop.permute.xlu0 %420
        %v422 = vlaneseq
        %v423 = vand.u32 %v422, 127
        %vm424 = vcmp.lt.s32.totalorder %v423, 127
        %v425 = vsel %vm424, %v407, %v415
        %v426 = vsel %vm424, %v409, %v417
        %v427 = vsel %vm424, %v411, %v419
        %v428 = vsel %vm424, %v413, %v421
        %v429 = vsel %vm424, %v399, %v407
        %v430 = vsel %vm424, %v401, %v409
        %v431 = vsel %vm424, %v403, %v411
        %v432 = vsel %vm424, %v405, %v413
        %v433 = vsel %vm424, %v391, %v399
        %v434 = vsel %vm424, %v393, %v401
        %v435 = vsel %vm424, %v395, %v403
        %v436 = vsel %vm424, %v397, %v405
        %v437 = vsel %vm424, %v383, %v391
        %v438 = vsel %vm424, %v385, %v393
        %v439 = vsel %vm424, %v387, %v395
        %v440 = vsel %vm424, %v389, %v397
        %v441 = vsel %vm424, %v375, %v383
        %v442 = vsel %vm424, %v377, %v385
        %v443 = vsel %vm424, %v379, %v387
        %v444 = vsel %vm424, %v381, %v389
        %v445 = vsel %vm424, %v367, %v375
        %v446 = vsel %vm424, %v369, %v377
        %v447 = vsel %vm424, %v371, %v379
        %v448 = vsel %vm424, %v373, %v381
        %v449 = vsel %vm424, %v359, %v367
        %v450 = vsel %vm424, %v361, %v369
        %v451 = vsel %vm424, %v363, %v371
        %v452 = vsel %vm424, %v365, %v373
        %v453 = vsel %vm424, %v351, %v359
        %v454 = vsel %vm424, %v353, %v361
        %v455 = vsel %vm424, %v355, %v363
        %v456 = vsel %vm424, %v357, %v365
        %v457 = vsel %vm424, %v343, %v351
        %v458 = vsel %vm424, %v345, %v353
        %v459 = vsel %vm424, %v347, %v355
        %v460 = vsel %vm424, %v349, %v357
        %v461 = vsel %vm424, %v415, %v343
        %v462 = vsel %vm424, %v417, %v345
        %v463 = vsel %vm424, %v419, %v347
        %v464 = vsel %vm424, %v421, %v349
        %465 = vst [vmem:[#allocation2 + $0x140] sm:$0xff] %v457
        %466 = vst [vmem:[#allocation2 + $0x148] sm:$0xff] %v453
        %467 = vst [vmem:[#allocation2 + $0x150] sm:$0xff] %v449
        %468 = vst [vmem:[#allocation2 + $0x158] sm:$0xff] %v445
        %469 = vst [vmem:[#allocation2 + $0x160] sm:$0xff] %v441
        %470 = vst [vmem:[#allocation2 + $0x168] sm:$0xff] %v437
        %471 = vst [vmem:[#allocation2 + $0x170] sm:$0xff] %v433
        %472 = vst [vmem:[#allocation2 + $0x178] sm:$0xff] %v429
        %473 = vst [vmem:[#allocation2 + $0x180] sm:$0xff] %v425
        %474 = vst [vmem:[#allocation2 + $0x188] sm:$0xff] %v461
        %475 = vst [vmem:[#allocation2 + $0x190] sm:$0xff] %v458
        %476 = vst [vmem:[#allocation2 + $0x198] sm:$0xff] %v454
        %477 = vst [vmem:[#allocation2 + $0x1a0] sm:$0xff] %v450
        %478 = vst [vmem:[#allocation2 + $0x1a8] sm:$0xff] %v446
        %479 = vst [vmem:[#allocation2 + $0x1b0] sm:$0xff] %v442
        %480 = vst [vmem:[#allocation2 + $0x1b8] sm:$0xff] %v438
        %481 = vst [vmem:[#allocation2 + $0x1c0] sm:$0xff] %v434
        %482 = vst [vmem:[#allocation2 + $0x1c8] sm:$0xff] %v430
        %483 = vst [vmem:[#allocation2 + $0x1d0] sm:$0xff] %v426
        %484 = vst [vmem:[#allocation2 + $0x1d8] sm:$0xff] %v462
        %485 = vst [vmem:[#allocation2 + $0x1e0] sm:$0xff] %v459
        %486 = vst [vmem:[#allocation2 + $0x1e8] sm:$0xff] %v455
        %487 = vst [vmem:[#allocation2 + $0x1f0] sm:$0xff] %v451
        %488 = vst [vmem:[#allocation2 + $0x1f8] sm:$0xff] %v447
        %489 = vst [vmem:[#allocation2 + $0x200] sm:$0xff] %v443
        %490 = vst [vmem:[#allocation2 + $0x208] sm:$0xff] %v439
        %491 = vst [vmem:[#allocation2 + $0x210] sm:$0xff] %v435
        %492 = vst [vmem:[#allocation2 + $0x218] sm:$0xff] %v431
        %493 = vst [vmem:[#allocation2 + $0x220] sm:$0xff] %v427
        %494 = vst [vmem:[#allocation2 + $0x228] sm:$0xff] %v463
        %495 = vst [vmem:[#allocation2 + $0x230] sm:$0xff] %v460
        %496 = vst [vmem:[#allocation2 + $0x238] sm:$0xff] %v456
        %497 = vst [vmem:[#allocation2 + $0x240] sm:$0xff] %v452
        %498 = vst [vmem:[#allocation2 + $0x248] sm:$0xff] %v448
        %499 = vst [vmem:[#allocation2 + $0x250] sm:$0xff] %v444
        %500 = vst [vmem:[#allocation2 + $0x258] sm:$0xff] %v440
        %501 = vst [vmem:[#allocation2 + $0x260] sm:$0xff] %v436
        %502 = vst [vmem:[#allocation2 + $0x268] sm:$0xff] %v432
        %503 = vst [vmem:[#allocation2 + $0x270] sm:$0xff] %v428
        %504 = vst [vmem:[#allocation2 + $0x278] sm:$0xff] %v464
        %v505 = vld [vmem:[%s188] sm:$0xff]
        %v506 = vld [vmem:[%s188 + $0x8] sm:$0xff]
        %v507 = vld [vmem:[%s188 + $0x10] sm:$0xff]
        %v508 = vld [vmem:[%s188 + $0x18] sm:$0xff]
        %v509 = vld [vmem:[%s188 + $0x20] sm:$0xff]
        %v510 = vld [vmem:[%s188 + $0x28] sm:$0xff]
        %v511 = vld [vmem:[%s188 + $0x30] sm:$0xff]
        %v512 = vld [vmem:[%s188 + $0x38] sm:$0xff]
        %v513 = vld [vmem:[%s188 + $0x40] sm:$0xff]
        %v514 = vld [vmem:[%s188 + $0x48] sm:$0xff]
        %v515 = vld [vmem:[%s188 + $0x50] sm:$0xff]
        %v516 = vld [vmem:[%s188 + $0x58] sm:$0xff]
        %v517 = vld [vmem:[%s188 + $0x60] sm:$0xff]
        %v518 = vld [vmem:[%s188 + $0x68] sm:$0xff]
        %v519 = vld [vmem:[%s188 + $0x70] sm:$0xff]
        %v520 = vld [vmem:[%s188 + $0x78] sm:$0xff]
        %v521 = vld [vmem:[%s188 + $0x80] sm:$0xff]
        %v522 = vld [vmem:[%s188 + $0x88] sm:$0xff]
        %v523 = vld [vmem:[%s188 + $0x90] sm:$0xff]
        %v524 = vld [vmem:[%s188 + $0x98] sm:$0xff]
        %v525 = vld [vmem:[%s188 + $0xa0] sm:$0xff]
        %v526 = vld [vmem:[%s188 + $0xa8] sm:$0xff]
        %v527 = vld [vmem:[%s188 + $0xb0] sm:$0xff]
        %v528 = vld [vmem:[%s188 + $0xb8] sm:$0xff]
        %v529 = vld [vmem:[%s188 + $0xc0] sm:$0xff]
        %v530 = vld [vmem:[%s188 + $0xc8] sm:$0xff]
        %v531 = vld [vmem:[%s188 + $0xd0] sm:$0xff]
        %v532 = vld [vmem:[%s188 + $0xd8] sm:$0xff]
        %v533 = vld [vmem:[%s188 + $0xe0] sm:$0xff]
        %v534 = vld [vmem:[%s188 + $0xe8] sm:$0xff]
        %v535 = vld [vmem:[%s188 + $0xf0] sm:$0xff]
        %v536 = vld [vmem:[%s188 + $0xf8] sm:$0xff]
        %v537 = vld [vmem:[%s188 + $0x100] sm:$0xff]
        %v538 = vld [vmem:[%s188 + $0x108] sm:$0xff]
        %v539 = vld [vmem:[%s188 + $0x110] sm:$0xff]
        %v540 = vld [vmem:[%s188 + $0x118] sm:$0xff]
        %v541 = vld [vmem:[%s188 + $0x120] sm:$0xff]
        %v542 = vld [vmem:[%s188 + $0x128] sm:$0xff]
        %v543 = vld [vmem:[%s188 + $0x130] sm:$0xff]
        %v544 = vld [vmem:[%s188 + $0x138] sm:$0xff]
        %545 = vrot.lane.b32.xlu0 %v505, 126
        %v546 = vpop.permute.xlu0 %545
        %547 = vrot.lane.b32.xlu0 %v515, 126
        %v548 = vpop.permute.xlu0 %547
        %549 = vrot.lane.b32.xlu0 %v525, 126
        %v550 = vpop.permute.xlu0 %549
        %551 = vrot.lane.b32.xlu0 %v535, 126
        %v552 = vpop.permute.xlu0 %551
        %553 = vrot.lane.b32.xlu0 %v506, 126
        %v554 = vpop.permute.xlu0 %553
        %555 = vrot.lane.b32.xlu0 %v516, 126
        %v556 = vpop.permute.xlu0 %555
        %557 = vrot.lane.b32.xlu0 %v526, 126
        %v558 = vpop.permute.xlu0 %557
        %559 = vrot.lane.b32.xlu0 %v536, 126
        %v560 = vpop.permute.xlu0 %559
        %561 = vrot.lane.b32.xlu0 %v507, 126
        %v562 = vpop.permute.xlu0 %561
        %563 = vrot.lane.b32.xlu0 %v517, 126
        %v564 = vpop.permute.xlu0 %563
        %565 = vrot.lane.b32.xlu0 %v527, 126
        %v566 = vpop.permute.xlu0 %565
        %567 = vrot.lane.b32.xlu0 %v537, 126
        %v568 = vpop.permute.xlu0 %567
        %569 = vrot.lane.b32.xlu0 %v508, 126
        %v570 = vpop.permute.xlu0 %569
        %571 = vrot.lane.b32.xlu0 %v518, 126
        %v572 = vpop.permute.xlu0 %571
        %573 = vrot.lane.b32.xlu0 %v528, 126
        %v574 = vpop.permute.xlu0 %573
        %575 = vrot.lane.b32.xlu0 %v538, 126
        %v576 = vpop.permute.xlu0 %575
        %577 = vrot.lane.b32.xlu0 %v509, 126
        %v578 = vpop.permute.xlu0 %577
        %579 = vrot.lane.b32.xlu0 %v519, 126
        %v580 = vpop.permute.xlu0 %579
        %581 = vrot.lane.b32.xlu0 %v529, 126
        %v582 = vpop.permute.xlu0 %581
        %583 = vrot.lane.b32.xlu0 %v539, 126
        %v584 = vpop.permute.xlu0 %583
        %585 = vrot.lane.b32.xlu0 %v510, 126
        %v586 = vpop.permute.xlu0 %585
        %587 = vrot.lane.b32.xlu0 %v520, 126
        %v588 = vpop.permute.xlu0 %587
        %589 = vrot.lane.b32.xlu0 %v530, 126
        %v590 = vpop.permute.xlu0 %589
        %591 = vrot.lane.b32.xlu0 %v540, 126
        %v592 = vpop.permute.xlu0 %591
        %593 = vrot.lane.b32.xlu0 %v511, 126
        %v594 = vpop.permute.xlu0 %593
        %595 = vrot.lane.b32.xlu0 %v521, 126
        %v596 = vpop.permute.xlu0 %595
        %597 = vrot.lane.b32.xlu0 %v531, 126
        %v598 = vpop.permute.xlu0 %597
        %599 = vrot.lane.b32.xlu0 %v541, 126
        %v600 = vpop.permute.xlu0 %599
        %601 = vrot.lane.b32.xlu0 %v512, 126
        %v602 = vpop.permute.xlu0 %601
        %603 = vrot.lane.b32.xlu0 %v522, 126
        %v604 = vpop.permute.xlu0 %603
        %605 = vrot.lane.b32.xlu0 %v532, 126
        %v606 = vpop.permute.xlu0 %605
        %607 = vrot.lane.b32.xlu0 %v542, 126
        %v608 = vpop.permute.xlu0 %607
        %609 = vrot.lane.b32.xlu0 %v513, 126
        %v610 = vpop.permute.xlu0 %609
        %611 = vrot.lane.b32.xlu0 %v523, 126
        %v612 = vpop.permute.xlu0 %611
        %613 = vrot.lane.b32.xlu0 %v533, 126
        %v614 = vpop.permute.xlu0 %613
        %615 = vrot.lane.b32.xlu0 %v543, 126
        %v616 = vpop.permute.xlu0 %615
        %617 = vrot.lane.b32.xlu0 %v514, 126
        %v618 = vpop.permute.xlu0 %617
        %619 = vrot.lane.b32.xlu0 %v524, 126
        %v620 = vpop.permute.xlu0 %619
        %621 = vrot.lane.b32.xlu0 %v534, 126
        %v622 = vpop.permute.xlu0 %621
        %623 = vrot.lane.b32.xlu0 %v544, 126
        %v624 = vpop.permute.xlu0 %623
        %vm625 = vcmp.lt.s32.totalorder %v423, 126
        %v626 = vsel %vm625, %v610, %v618
        %v627 = vsel %vm625, %v612, %v620
        %v628 = vsel %vm625, %v614, %v622
        %v629 = vsel %vm625, %v616, %v624
        %v630 = vsel %vm625, %v602, %v610
        %v631 = vsel %vm625, %v604, %v612
        %v632 = vsel %vm625, %v606, %v614
        %v633 = vsel %vm625, %v608, %v616
        %v634 = vsel %vm625, %v594, %v602
        %v635 = vsel %vm625, %v596, %v604
        %v636 = vsel %vm625, %v598, %v606
        %v637 = vsel %vm625, %v600, %v608
        %v638 = vsel %vm625, %v586, %v594
        %v639 = vsel %vm625, %v588, %v596
        %v640 = vsel %vm625, %v590, %v598
        %v641 = vsel %vm625, %v592, %v600
        %v642 = vsel %vm625, %v578, %v586
        %v643 = vsel %vm625, %v580, %v588
        %v644 = vsel %vm625, %v582, %v590
        %v645 = vsel %vm625, %v584, %v592
        %v646 = vsel %vm625, %v570, %v578
        %v647 = vsel %vm625, %v572, %v580
        %v648 = vsel %vm625, %v574, %v582
        %v649 = vsel %vm625, %v576, %v584
        %v650 = vsel %vm625, %v562, %v570
        %v651 = vsel %vm625, %v564, %v572
        %v652 = vsel %vm625, %v566, %v574
        %v653 = vsel %vm625, %v568, %v576
        %v654 = vsel %vm625, %v554, %v562
        %v655 = vsel %vm625, %v556, %v564
        %v656 = vsel %vm625, %v558, %v566
        %v657 = vsel %vm625, %v560, %v568
        %v658 = vsel %vm625, %v546, %v554
        %v659 = vsel %vm625, %v548, %v556
        %v660 = vsel %vm625, %v550, %v558
        %v661 = vsel %vm625, %v552, %v560
        %v662 = vsel %vm625, %v618, %v546
        %v663 = vsel %vm625, %v620, %v548
        %v664 = vsel %vm625, %v622, %v550
        %v665 = vsel %vm625, %v624, %v552
        %666 = vst [vmem:[#allocation2 + $0x280] sm:$0xff] %v658
        %667 = vst [vmem:[#allocation2 + $0x288] sm:$0xff] %v654
        %668 = vst [vmem:[#allocation2 + $0x290] sm:$0xff] %v650
        %669 = vst [vmem:[#allocation2 + $0x298] sm:$0xff] %v646
        %670 = vst [vmem:[#allocation2 + $0x2a0] sm:$0xff] %v642
        %671 = vst [vmem:[#allocation2 + $0x2a8] sm:$0xff] %v638
        %672 = vst [vmem:[#allocation2 + $0x2b0] sm:$0xff] %v634
        %673 = vst [vmem:[#allocation2 + $0x2b8] sm:$0xff] %v630
        %674 = vst [vmem:[#allocation2 + $0x2c0] sm:$0xff] %v626
        %675 = vst [vmem:[#allocation2 + $0x2c8] sm:$0xff] %v662
        %676 = vst [vmem:[#allocation2 + $0x2d0] sm:$0xff] %v659
        %677 = vst [vmem:[#allocation2 + $0x2d8] sm:$0xff] %v655
        %678 = vst [vmem:[#allocation2 + $0x2e0] sm:$0xff] %v651
        %679 = vst [vmem:[#allocation2 + $0x2e8] sm:$0xff] %v647
        %680 = vst [vmem:[#allocation2 + $0x2f0] sm:$0xff] %v643
        %681 = vst [vmem:[#allocation2 + $0x2f8] sm:$0xff] %v639
        %682 = vst [vmem:[#allocation2 + $0x300] sm:$0xff] %v635
        %683 = vst [vmem:[#allocation2 + $0x308] sm:$0xff] %v631
        %684 = vst [vmem:[#allocation2 + $0x310] sm:$0xff] %v627
        %685 = vst [vmem:[#allocation2 + $0x318] sm:$0xff] %v663
        %686 = vst [vmem:[#allocation2 + $0x320] sm:$0xff] %v660
        %687 = vst [vmem:[#allocation2 + $0x328] sm:$0xff] %v656
        %688 = vst [vmem:[#allocation2 + $0x330] sm:$0xff] %v652
        %689 = vst [vmem:[#allocation2 + $0x338] sm:$0xff] %v648
        %690 = vst [vmem:[#allocation2 + $0x340] sm:$0xff] %v644
        %691 = vst [vmem:[#allocation2 + $0x348] sm:$0xff] %v640
        %692 = vst [vmem:[#allocation2 + $0x350] sm:$0xff] %v636
        %693 = vst [vmem:[#allocation2 + $0x358] sm:$0xff] %v632
        %694 = vst [vmem:[#allocation2 + $0x360] sm:$0xff] %v628
        %695 = vst [vmem:[#allocation2 + $0x368] sm:$0xff] %v664
        %696 = vst [vmem:[#allocation2 + $0x370] sm:$0xff] %v661
        %697 = vst [vmem:[#allocation2 + $0x378] sm:$0xff] %v657
        %698 = vst [vmem:[#allocation2 + $0x380] sm:$0xff] %v653
        %699 = vst [vmem:[#allocation2 + $0x388] sm:$0xff] %v649
        %700 = vst [vmem:[#allocation2 + $0x390] sm:$0xff] %v645
        %701 = vst [vmem:[#allocation2 + $0x398] sm:$0xff] %v641
        %702 = vst [vmem:[#allocation2 + $0x3a0] sm:$0xff] %v637
        %703 = vst [vmem:[#allocation2 + $0x3a8] sm:$0xff] %v633
        %704 = vst [vmem:[#allocation2 + $0x3b0] sm:$0xff] %v629
        %705 = vst [vmem:[#allocation2 + $0x3b8] sm:$0xff] %v665
        %v706 = vld [vmem:[%s188] sm:$0xff]
        %v707 = vld [vmem:[%s188 + $0x8] sm:$0xff]
        %v708 = vld [vmem:[%s188 + $0x10] sm:$0xff]
        %v709 = vld [vmem:[%s188 + $0x18] sm:$0xff]
        %v710 = vld [vmem:[%s188 + $0x20] sm:$0xff]
        %v711 = vld [vmem:[%s188 + $0x28] sm:$0xff]
        %v712 = vld [vmem:[%s188 + $0x30] sm:$0xff]
        %v713 = vld [vmem:[%s188 + $0x38] sm:$0xff]
        %v714 = vld [vmem:[%s188 + $0x40] sm:$0xff]
        %v715 = vld [vmem:[%s188 + $0x48] sm:$0xff]
        %v716 = vld [vmem:[%s188 + $0x50] sm:$0xff]
        %v717 = vld [vmem:[%s188 + $0x58] sm:$0xff]
        %v718 = vld [vmem:[%s188 + $0x60] sm:$0xff]
        %v719 = vld [vmem:[%s188 + $0x68] sm:$0xff]
        %v720 = vld [vmem:[%s188 + $0x70] sm:$0xff]
        %v721 = vld [vmem:[%s188 + $0x78] sm:$0xff]
        %v722 = vld [vmem:[%s188 + $0x80] sm:$0xff]
        %v723 = vld [vmem:[%s188 + $0x88] sm:$0xff]
        %v724 = vld [vmem:[%s188 + $0x90] sm:$0xff]
        %v725 = vld [vmem:[%s188 + $0x98] sm:$0xff]
        %v726 = vld [vmem:[%s188 + $0xa0] sm:$0xff]
        %v727 = vld [vmem:[%s188 + $0xa8] sm:$0xff]
        %v728 = vld [vmem:[%s188 + $0xb0] sm:$0xff]
        %v729 = vld [vmem:[%s188 + $0xb8] sm:$0xff]
        %v730 = vld [vmem:[%s188 + $0xc0] sm:$0xff]
        %v731 = vld [vmem:[%s188 + $0xc8] sm:$0xff]
        %v732 = vld [vmem:[%s188 + $0xd0] sm:$0xff]
        %v733 = vld [vmem:[%s188 + $0xd8] sm:$0xff]
        %v734 = vld [vmem:[%s188 + $0xe0] sm:$0xff]
        %v735 = vld [vmem:[%s188 + $0xe8] sm:$0xff]
        %v736 = vld [vmem:[%s188 + $0xf0] sm:$0xff]
        %v737 = vld [vmem:[%s188 + $0xf8] sm:$0xff]
        %v738 = vld [vmem:[%s188 + $0x100] sm:$0xff]
        %v739 = vld [vmem:[%s188 + $0x108] sm:$0xff]
        %v740 = vld [vmem:[%s188 + $0x110] sm:$0xff]
        %v741 = vld [vmem:[%s188 + $0x118] sm:$0xff]
        %v742 = vld [vmem:[%s188 + $0x120] sm:$0xff]
        %v743 = vld [vmem:[%s188 + $0x128] sm:$0xff]
        %v744 = vld [vmem:[%s188 + $0x130] sm:$0xff]
        %v745 = vld [vmem:[%s188 + $0x138] sm:$0xff]
        %746 = vrot.lane.b32.xlu0 %v706, 118
        %v747 = vpop.permute.xlu0 %746
        %748 = vrot.lane.b32.xlu0 %v716, 118
        %v749 = vpop.permute.xlu0 %748
        %750 = vrot.lane.b32.xlu0 %v726, 118
        %v751 = vpop.permute.xlu0 %750
        %752 = vrot.lane.b32.xlu0 %v736, 118
        %v753 = vpop.permute.xlu0 %752
        %754 = vrot.lane.b32.xlu0 %v707, 118
        %v755 = vpop.permute.xlu0 %754
        %756 = vrot.lane.b32.xlu0 %v717, 118
        %v757 = vpop.permute.xlu0 %756
        %758 = vrot.lane.b32.xlu0 %v727, 118
        %v759 = vpop.permute.xlu0 %758
        %760 = vrot.lane.b32.xlu0 %v737, 118
        %v761 = vpop.permute.xlu0 %760
        %762 = vrot.lane.b32.xlu0 %v708, 118
        %v763 = vpop.permute.xlu0 %762
        %764 = vrot.lane.b32.xlu0 %v718, 118
        %v765 = vpop.permute.xlu0 %764
        %766 = vrot.lane.b32.xlu0 %v728, 118
        %v767 = vpop.permute.xlu0 %766
        %768 = vrot.lane.b32.xlu0 %v738, 118
        %v769 = vpop.permute.xlu0 %768
        %770 = vrot.lane.b32.xlu0 %v709, 118
        %v771 = vpop.permute.xlu0 %770
        %772 = vrot.lane.b32.xlu0 %v719, 118
        %v773 = vpop.permute.xlu0 %772
        %774 = vrot.lane.b32.xlu0 %v729, 118
        %v775 = vpop.permute.xlu0 %774
        %776 = vrot.lane.b32.xlu0 %v739, 118
        %v777 = vpop.permute.xlu0 %776
        %778 = vrot.lane.b32.xlu0 %v710, 118
        %v779 = vpop.permute.xlu0 %778
        %780 = vrot.lane.b32.xlu0 %v720, 118
        %v781 = vpop.permute.xlu0 %780
        %782 = vrot.lane.b32.xlu0 %v730, 118
        %v783 = vpop.permute.xlu0 %782
        %784 = vrot.lane.b32.xlu0 %v740, 118
        %v785 = vpop.permute.xlu0 %784
        %786 = vrot.lane.b32.xlu0 %v711, 118
        %v787 = vpop.permute.xlu0 %786
        %788 = vrot.lane.b32.xlu0 %v721, 118
        %v789 = vpop.permute.xlu0 %788
        %790 = vrot.lane.b32.xlu0 %v731, 118
        %v791 = vpop.permute.xlu0 %790
        %792 = vrot.lane.b32.xlu0 %v741, 118
        %v793 = vpop.permute.xlu0 %792
        %794 = vrot.lane.b32.xlu0 %v712, 118
        %v795 = vpop.permute.xlu0 %794
        %796 = vrot.lane.b32.xlu0 %v722, 118
        %v797 = vpop.permute.xlu0 %796
        %798 = vrot.lane.b32.xlu0 %v732, 118
        %v799 = vpop.permute.xlu0 %798
        %800 = vrot.lane.b32.xlu0 %v742, 118
        %v801 = vpop.permute.xlu0 %800
        %802 = vrot.lane.b32.xlu0 %v713, 118
        %v803 = vpop.permute.xlu0 %802
        %804 = vrot.lane.b32.xlu0 %v723, 118
        %v805 = vpop.permute.xlu0 %804
        %806 = vrot.lane.b32.xlu0 %v733, 118
        %v807 = vpop.permute.xlu0 %806
        %808 = vrot.lane.b32.xlu0 %v743, 118
        %v809 = vpop.permute.xlu0 %808
        %810 = vrot.lane.b32.xlu0 %v714, 118
        %v811 = vpop.permute.xlu0 %810
        %812 = vrot.lane.b32.xlu0 %v724, 118
        %v813 = vpop.permute.xlu0 %812
        %814 = vrot.lane.b32.xlu0 %v734, 118
        %v815 = vpop.permute.xlu0 %814
        %816 = vrot.lane.b32.xlu0 %v744, 118
        %v817 = vpop.permute.xlu0 %816
        %818 = vrot.lane.b32.xlu0 %v715, 118
        %v819 = vpop.permute.xlu0 %818
        %820 = vrot.lane.b32.xlu0 %v725, 118
        %v821 = vpop.permute.xlu0 %820
        %822 = vrot.lane.b32.xlu0 %v735, 118
        %v823 = vpop.permute.xlu0 %822
        %824 = vrot.lane.b32.xlu0 %v745, 118
        %v825 = vpop.permute.xlu0 %824
        %vm826 = vcmp.lt.s32.totalorder %v423, 118
        %v827 = vsel %vm826, %v811, %v819
        %v828 = vsel %vm826, %v813, %v821
        %v829 = vsel %vm826, %v815, %v823
        %v830 = vsel %vm826, %v817, %v825
        %v831 = vsel %vm826, %v803, %v811
        %v832 = vsel %vm826, %v805, %v813
        %v833 = vsel %vm826, %v807, %v815
        %v834 = vsel %vm826, %v809, %v817
        %v835 = vsel %vm826, %v795, %v803
        %v836 = vsel %vm826, %v797, %v805
        %v837 = vsel %vm826, %v799, %v807
        %v838 = vsel %vm826, %v801, %v809
        %v839 = vsel %vm826, %v787, %v795
        %v840 = vsel %vm826, %v789, %v797
        %v841 = vsel %vm826, %v791, %v799
        %v842 = vsel %vm826, %v793, %v801
        %v843 = vsel %vm826, %v779, %v787
        %v844 = vsel %vm826, %v781, %v789
        %v845 = vsel %vm826, %v783, %v791
        %v846 = vsel %vm826, %v785, %v793
        %v847 = vsel %vm826, %v771, %v779
        %v848 = vsel %vm826, %v773, %v781
        %v849 = vsel %vm826, %v775, %v783
        %v850 = vsel %vm826, %v777, %v785
        %v851 = vsel %vm826, %v763, %v771
        %v852 = vsel %vm826, %v765, %v773
        %v853 = vsel %vm826, %v767, %v775
        %v854 = vsel %vm826, %v769, %v777
        %v855 = vsel %vm826, %v755, %v763
        %v856 = vsel %vm826, %v757, %v765
        %v857 = vsel %vm826, %v759, %v767
        %v858 = vsel %vm826, %v761, %v769
        %v859 = vsel %vm826, %v747, %v755
        %v860 = vsel %vm826, %v749, %v757
        %v861 = vsel %vm826, %v751, %v759
        %v862 = vsel %vm826, %v753, %v761
        %v863 = vsel %vm826, %v819, %v747
        %v864 = vsel %vm826, %v821, %v749
        %v865 = vsel %vm826, %v823, %v751
        %v866 = vsel %vm826, %v825, %v753
        %867 = vst [vmem:[#allocation2 + $0x3c0] sm:$0xff] %v859
        %868 = vst [vmem:[#allocation2 + $0x3c8] sm:$0xff] %v855
        %869 = vst [vmem:[#allocation2 + $0x3d0] sm:$0xff] %v851
        %870 = vst [vmem:[#allocation2 + $0x3d8] sm:$0xff] %v847
        %871 = vst [vmem:[#allocation2 + $0x3e0] sm:$0xff] %v843
        %872 = vst [vmem:[#allocation2 + $0x3e8] sm:$0xff] %v839
        %873 = vst [vmem:[#allocation2 + $0x3f0] sm:$0xff] %v835
        %874 = vst [vmem:[#allocation2 + $0x3f8] sm:$0xff] %v831
        %875 = vst [vmem:[#allocation2 + $0x400] sm:$0xff] %v827
        %876 = vst [vmem:[#allocation2 + $0x408] sm:$0xff] %v863
        %877 = vst [vmem:[#allocation2 + $0x410] sm:$0xff] %v860
        %878 = vst [vmem:[#allocation2 + $0x418] sm:$0xff] %v856
        %879 = vst [vmem:[#allocation2 + $0x420] sm:$0xff] %v852
        %880 = vst [vmem:[#allocation2 + $0x428] sm:$0xff] %v848
        %881 = vst [vmem:[#allocation2 + $0x430] sm:$0xff] %v844
        %882 = vst [vmem:[#allocation2 + $0x438] sm:$0xff] %v840
        %883 = vst [vmem:[#allocation2 + $0x440] sm:$0xff] %v836
        %884 = vst [vmem:[#allocation2 + $0x448] sm:$0xff] %v832
        %885 = vst [vmem:[#allocation2 + $0x450] sm:$0xff] %v828
        %886 = vst [vmem:[#allocation2 + $0x458] sm:$0xff] %v864
        %887 = vst [vmem:[#allocation2 + $0x460] sm:$0xff] %v861
        %888 = vst [vmem:[#allocation2 + $0x468] sm:$0xff] %v857
        %889 = vst [vmem:[#allocation2 + $0x470] sm:$0xff] %v853
        %890 = vst [vmem:[#allocation2 + $0x478] sm:$0xff] %v849
        %891 = vst [vmem:[#allocation2 + $0x480] sm:$0xff] %v845
        %892 = vst [vmem:[#allocation2 + $0x488] sm:$0xff] %v841
        %893 = vst [vmem:[#allocation2 + $0x490] sm:$0xff] %v837
        %894 = vst [vmem:[#allocation2 + $0x498] sm:$0xff] %v833
        %895 = vst [vmem:[#allocation2 + $0x4a0] sm:$0xff] %v829
        %896 = vst [vmem:[#allocation2 + $0x4a8] sm:$0xff] %v865
        %897 = vst [vmem:[#allocation2 + $0x4b0] sm:$0xff] %v862
        %898 = vst [vmem:[#allocation2 + $0x4b8] sm:$0xff] %v858
        %899 = vst [vmem:[#allocation2 + $0x4c0] sm:$0xff] %v854
        %900 = vst [vmem:[#allocation2 + $0x4c8] sm:$0xff] %v850
        %901 = vst [vmem:[#allocation2 + $0x4d0] sm:$0xff] %v846
        %902 = vst [vmem:[#allocation2 + $0x4d8] sm:$0xff] %v842
        %903 = vst [vmem:[#allocation2 + $0x4e0] sm:$0xff] %v838
        %904 = vst [vmem:[#allocation2 + $0x4e8] sm:$0xff] %v834
        %905 = vst [vmem:[#allocation2 + $0x4f0] sm:$0xff] %v830
        %906 = vst [vmem:[#allocation2 + $0x4f8] sm:$0xff] %v866
        %v907 = vld [vmem:[%s188] sm:$0xff]
        %v908 = vld [vmem:[%s188 + $0x8] sm:$0xff]
        %v909 = vld [vmem:[%s188 + $0x10] sm:$0xff]
        %v910 = vld [vmem:[%s188 + $0x18] sm:$0xff]
        %v911 = vld [vmem:[%s188 + $0x20] sm:$0xff]
        %v912 = vld [vmem:[%s188 + $0x28] sm:$0xff]
        %v913 = vld [vmem:[%s188 + $0x30] sm:$0xff]
        %v914 = vld [vmem:[%s188 + $0x38] sm:$0xff]
        %v915 = vld [vmem:[%s188 + $0x40] sm:$0xff]
        %v916 = vld [vmem:[%s188 + $0x48] sm:$0xff]
        %v917 = vld [vmem:[%s188 + $0x50] sm:$0xff]
        %v918 = vld [vmem:[%s188 + $0x58] sm:$0xff]
        %v919 = vld [vmem:[%s188 + $0x60] sm:$0xff]
        %v920 = vld [vmem:[%s188 + $0x68] sm:$0xff]
        %v921 = vld [vmem:[%s188 + $0x70] sm:$0xff]
        %v922 = vld [vmem:[%s188 + $0x78] sm:$0xff]
        %v923 = vld [vmem:[%s188 + $0x80] sm:$0xff]
        %v924 = vld [vmem:[%s188 + $0x88] sm:$0xff]
        %v925 = vld [vmem:[%s188 + $0x90] sm:$0xff]
        %v926 = vld [vmem:[%s188 + $0x98] sm:$0xff]
        %v927 = vld [vmem:[%s188 + $0xa0] sm:$0xff]
        %v928 = vld [vmem:[%s188 + $0xa8] sm:$0xff]
        %v929 = vld [vmem:[%s188 + $0xb0] sm:$0xff]
        %v930 = vld [vmem:[%s188 + $0xb8] sm:$0xff]
        %v931 = vld [vmem:[%s188 + $0xc0] sm:$0xff]
        %v932 = vld [vmem:[%s188 + $0xc8] sm:$0xff]
        %v933 = vld [vmem:[%s188 + $0xd0] sm:$0xff]
        %v934 = vld [vmem:[%s188 + $0xd8] sm:$0xff]
        %v935 = vld [vmem:[%s188 + $0xe0] sm:$0xff]
        %v936 = vld [vmem:[%s188 + $0xe8] sm:$0xff]
        %v937 = vld [vmem:[%s188 + $0xf0] sm:$0xff]
        %v938 = vld [vmem:[%s188 + $0xf8] sm:$0xff]
        %v939 = vld [vmem:[%s188 + $0x100] sm:$0xff]
        %v940 = vld [vmem:[%s188 + $0x108] sm:$0xff]
        %v941 = vld [vmem:[%s188 + $0x110] sm:$0xff]
        %v942 = vld [vmem:[%s188 + $0x118] sm:$0xff]
        %v943 = vld [vmem:[%s188 + $0x120] sm:$0xff]
        %v944 = vld [vmem:[%s188 + $0x128] sm:$0xff]
        %v945 = vld [vmem:[%s188 + $0x130] sm:$0xff]
        %v946 = vld [vmem:[%s188 + $0x138] sm:$0xff]
        %947 = vrot.lane.b32.xlu0 %v907, 117
        %v948 = vpop.permute.xlu0 %947
        %949 = vrot.lane.b32.xlu0 %v917, 117
        %v950 = vpop.permute.xlu0 %949
        %951 = vrot.lane.b32.xlu0 %v927, 117
        %v952 = vpop.permute.xlu0 %951
        %953 = vrot.lane.b32.xlu0 %v937, 117
        %v954 = vpop.permute.xlu0 %953
        %955 = vrot.lane.b32.xlu0 %v908, 117
        %v956 = vpop.permute.xlu0 %955
        %957 = vrot.lane.b32.xlu0 %v918, 117
        %v958 = vpop.permute.xlu0 %957
        %959 = vrot.lane.b32.xlu0 %v928, 117
        %v960 = vpop.permute.xlu0 %959
        %961 = vrot.lane.b32.xlu0 %v938, 117
        %v962 = vpop.permute.xlu0 %961
        %963 = vrot.lane.b32.xlu0 %v909, 117
        %v964 = vpop.permute.xlu0 %963
        %965 = vrot.lane.b32.xlu0 %v919, 117
        %v966 = vpop.permute.xlu0 %965
        %967 = vrot.lane.b32.xlu0 %v929, 117
        %v968 = vpop.permute.xlu0 %967
        %969 = vrot.lane.b32.xlu0 %v939, 117
        %v970 = vpop.permute.xlu0 %969
        %971 = vrot.lane.b32.xlu0 %v910, 117
        %v972 = vpop.permute.xlu0 %971
        %973 = vrot.lane.b32.xlu0 %v920, 117
        %v974 = vpop.permute.xlu0 %973
        %975 = vrot.lane.b32.xlu0 %v930, 117
        %v976 = vpop.permute.xlu0 %975
        %977 = vrot.lane.b32.xlu0 %v940, 117
        %v978 = vpop.permute.xlu0 %977
        %979 = vrot.lane.b32.xlu0 %v911, 117
        %v980 = vpop.permute.xlu0 %979
        %981 = vrot.lane.b32.xlu0 %v921, 117
        %v982 = vpop.permute.xlu0 %981
        %983 = vrot.lane.b32.xlu0 %v931, 117
        %v984 = vpop.permute.xlu0 %983
        %985 = vrot.lane.b32.xlu0 %v941, 117
        %v986 = vpop.permute.xlu0 %985
        %987 = vrot.lane.b32.xlu0 %v912, 117
        %v988 = vpop.permute.xlu0 %987
        %989 = vrot.lane.b32.xlu0 %v922, 117
        %v990 = vpop.permute.xlu0 %989
        %991 = vrot.lane.b32.xlu0 %v932, 117
        %v992 = vpop.permute.xlu0 %991
        %993 = vrot.lane.b32.xlu0 %v942, 117
        %v994 = vpop.permute.xlu0 %993
        %995 = vrot.lane.b32.xlu0 %v913, 117
        %v996 = vpop.permute.xlu0 %995
        %997 = vrot.lane.b32.xlu0 %v923, 117
        %v998 = vpop.permute.xlu0 %997
        %999 = vrot.lane.b32.xlu0 %v933, 117
        %v1000 = vpop.permute.xlu0 %999
        %1001 = vrot.lane.b32.xlu0 %v943, 117
        %v1002 = vpop.permute.xlu0 %1001
        %1003 = vrot.lane.b32.xlu0 %v914, 117
        %v1004 = vpop.permute.xlu0 %1003
        %1005 = vrot.lane.b32.xlu0 %v924, 117
        %v1006 = vpop.permute.xlu0 %1005
        %1007 = vrot.lane.b32.xlu0 %v934, 117
        %v1008 = vpop.permute.xlu0 %1007
        %1009 = vrot.lane.b32.xlu0 %v944, 117
        %v1010 = vpop.permute.xlu0 %1009
        %1011 = vrot.lane.b32.xlu0 %v915, 117
        %v1012 = vpop.permute.xlu0 %1011
        %1013 = vrot.lane.b32.xlu0 %v925, 117
        %v1014 = vpop.permute.xlu0 %1013
        %1015 = vrot.lane.b32.xlu0 %v935, 117
        %v1016 = vpop.permute.xlu0 %1015
        %1017 = vrot.lane.b32.xlu0 %v945, 117
        %v1018 = vpop.permute.xlu0 %1017
        %1019 = vrot.lane.b32.xlu0 %v916, 117
        %v1020 = vpop.permute.xlu0 %1019
        %1021 = vrot.lane.b32.xlu0 %v926, 117
        %v1022 = vpop.permute.xlu0 %1021
        %1023 = vrot.lane.b32.xlu0 %v936, 117
        %v1024 = vpop.permute.xlu0 %1023
        %1025 = vrot.lane.b32.xlu0 %v946, 117
        %v1026 = vpop.permute.xlu0 %1025
        %vm1027 = vcmp.lt.s32.totalorder %v423, 117
        %v1028 = vsel %vm1027, %v1012, %v1020
        %v1029 = vsel %vm1027, %v1014, %v1022
        %v1030 = vsel %vm1027, %v1016, %v1024
        %v1031 = vsel %vm1027, %v1018, %v1026
        %v1032 = vsel %vm1027, %v1004, %v1012
        %v1033 = vsel %vm1027, %v1006, %v1014
        %v1034 = vsel %vm1027, %v1008, %v1016
        %v1035 = vsel %vm1027, %v1010, %v1018
        %v1036 = vsel %vm1027, %v996, %v1004
        %v1037 = vsel %vm1027, %v998, %v1006
        %v1038 = vsel %vm1027, %v1000, %v1008
        %v1039 = vsel %vm1027, %v1002, %v1010
        %v1040 = vsel %vm1027, %v988, %v996
        %v1041 = vsel %vm1027, %v990, %v998
        %v1042 = vsel %vm1027, %v992, %v1000
        %v1043 = vsel %vm1027, %v994, %v1002
        %v1044 = vsel %vm1027, %v980, %v988
        %v1045 = vsel %vm1027, %v982, %v990
        %v1046 = vsel %vm1027, %v984, %v992
        %v1047 = vsel %vm1027, %v986, %v994
        %v1048 = vsel %vm1027, %v972, %v980
        %v1049 = vsel %vm1027, %v974, %v982
        %v1050 = vsel %vm1027, %v976, %v984
        %v1051 = vsel %vm1027, %v978, %v986
        %v1052 = vsel %vm1027, %v964, %v972
        %v1053 = vsel %vm1027, %v966, %v974
        %v1054 = vsel %vm1027, %v968, %v976
        %v1055 = vsel %vm1027, %v970, %v978
        %v1056 = vsel %vm1027, %v956, %v964
        %v1057 = vsel %vm1027, %v958, %v966
        %v1058 = vsel %vm1027, %v960, %v968
        %v1059 = vsel %vm1027, %v962, %v970
        %v1060 = vsel %vm1027, %v948, %v956
        %v1061 = vsel %vm1027, %v950, %v958
        %v1062 = vsel %vm1027, %v952, %v960
        %v1063 = vsel %vm1027, %v954, %v962
        %v1064 = vsel %vm1027, %v1020, %v948
        %v1065 = vsel %vm1027, %v1022, %v950
        %v1066 = vsel %vm1027, %v1024, %v952
        %v1067 = vsel %vm1027, %v1026, %v954
        %1068 = vst [vmem:[#allocation2 + $0x500] sm:$0xff] %v1060
        %1069 = vst [vmem:[#allocation2 + $0x508] sm:$0xff] %v1056
        %1070 = vst [vmem:[#allocation2 + $0x510] sm:$0xff] %v1052
        %1071 = vst [vmem:[#allocation2 + $0x518] sm:$0xff] %v1048
        %1072 = vst [vmem:[#allocation2 + $0x520] sm:$0xff] %v1044
        %1073 = vst [vmem:[#allocation2 + $0x528] sm:$0xff] %v1040
        %1074 = vst [vmem:[#allocation2 + $0x530] sm:$0xff] %v1036
        %1075 = vst [vmem:[#allocation2 + $0x538] sm:$0xff] %v1032
        %1076 = vst [vmem:[#allocation2 + $0x540] sm:$0xff] %v1028
        %1077 = vst [vmem:[#allocation2 + $0x548] sm:$0xff] %v1064
        %1078 = vst [vmem:[#allocation2 + $0x550] sm:$0xff] %v1061
        %1079 = vst [vmem:[#allocation2 + $0x558] sm:$0xff] %v1057
        %1080 = vst [vmem:[#allocation2 + $0x560] sm:$0xff] %v1053
        %1081 = vst [vmem:[#allocation2 + $0x568] sm:$0xff] %v1049
        %1082 = vst [vmem:[#allocation2 + $0x570] sm:$0xff] %v1045
        %1083 = vst [vmem:[#allocation2 + $0x578] sm:$0xff] %v1041
        %1084 = vst [vmem:[#allocation2 + $0x580] sm:$0xff] %v1037
        %1085 = vst [vmem:[#allocation2 + $0x588] sm:$0xff] %v1033
        %1086 = vst [vmem:[#allocation2 + $0x590] sm:$0xff] %v1029
        %1087 = vst [vmem:[#allocation2 + $0x598] sm:$0xff] %v1065
        %1088 = vst [vmem:[#allocation2 + $0x5a0] sm:$0xff] %v1062
        %1089 = vst [vmem:[#allocation2 + $0x5a8] sm:$0xff] %v1058
        %1090 = vst [vmem:[#allocation2 + $0x5b0] sm:$0xff] %v1054
        %1091 = vst [vmem:[#allocation2 + $0x5b8] sm:$0xff] %v1050
        %1092 = vst [vmem:[#allocation2 + $0x5c0] sm:$0xff] %v1046
        %1093 = vst [vmem:[#allocation2 + $0x5c8] sm:$0xff] %v1042
        %1094 = vst [vmem:[#allocation2 + $0x5d0] sm:$0xff] %v1038
        %1095 = vst [vmem:[#allocation2 + $0x5d8] sm:$0xff] %v1034
        %1096 = vst [vmem:[#allocation2 + $0x5e0] sm:$0xff] %v1030
        %1097 = vst [vmem:[#allocation2 + $0x5e8] sm:$0xff] %v1066
        %1098 = vst [vmem:[#allocation2 + $0x5f0] sm:$0xff] %v1063
        %1099 = vst [vmem:[#allocation2 + $0x5f8] sm:$0xff] %v1059
        %1100 = vst [vmem:[#allocation2 + $0x600] sm:$0xff] %v1055
        %1101 = vst [vmem:[#allocation2 + $0x608] sm:$0xff] %v1051
        %1102 = vst [vmem:[#allocation2 + $0x610] sm:$0xff] %v1047
        %1103 = vst [vmem:[#allocation2 + $0x618] sm:$0xff] %v1043
        %1104 = vst [vmem:[#allocation2 + $0x620] sm:$0xff] %v1039
        %1105 = vst [vmem:[#allocation2 + $0x628] sm:$0xff] %v1035
        %1106 = vst [vmem:[#allocation2 + $0x630] sm:$0xff] %v1031
        %1107 = vst [vmem:[#allocation2 + $0x638] sm:$0xff] %v1067
        %v1108 = vld [vmem:[%s188] sm:$0xff]
        %v1109 = vld [vmem:[%s188 + $0x8] sm:$0xff]
        %v1110 = vld [vmem:[%s188 + $0x10] sm:$0xff]
        %v1111 = vld [vmem:[%s188 + $0x18] sm:$0xff]
        %v1112 = vld [vmem:[%s188 + $0x20] sm:$0xff]
        %v1113 = vld [vmem:[%s188 + $0x28] sm:$0xff]
        %v1114 = vld [vmem:[%s188 + $0x30] sm:$0xff]
        %v1115 = vld [vmem:[%s188 + $0x38] sm:$0xff]
        %v1116 = vld [vmem:[%s188 + $0x40] sm:$0xff]
        %v1117 = vld [vmem:[%s188 + $0x48] sm:$0xff]
        %v1118 = vld [vmem:[%s188 + $0x50] sm:$0xff]
        %v1119 = vld [vmem:[%s188 + $0x58] sm:$0xff]
        %v1120 = vld [vmem:[%s188 + $0x60] sm:$0xff]
        %v1121 = vld [vmem:[%s188 + $0x68] sm:$0xff]
        %v1122 = vld [vmem:[%s188 + $0x70] sm:$0xff]
        %v1123 = vld [vmem:[%s188 + $0x78] sm:$0xff]
        %v1124 = vld [vmem:[%s188 + $0x80] sm:$0xff]
        %v1125 = vld [vmem:[%s188 + $0x88] sm:$0xff]
        %v1126 = vld [vmem:[%s188 + $0x90] sm:$0xff]
        %v1127 = vld [vmem:[%s188 + $0x98] sm:$0xff]
        %v1128 = vld [vmem:[%s188 + $0xa0] sm:$0xff]
        %v1129 = vld [vmem:[%s188 + $0xa8] sm:$0xff]
        %v1130 = vld [vmem:[%s188 + $0xb0] sm:$0xff]
        %v1131 = vld [vmem:[%s188 + $0xb8] sm:$0xff]
        %v1132 = vld [vmem:[%s188 + $0xc0] sm:$0xff]
        %v1133 = vld [vmem:[%s188 + $0xc8] sm:$0xff]
        %v1134 = vld [vmem:[%s188 + $0xd0] sm:$0xff]
        %v1135 = vld [vmem:[%s188 + $0xd8] sm:$0xff]
        %v1136 = vld [vmem:[%s188 + $0xe0] sm:$0xff]
        %v1137 = vld [vmem:[%s188 + $0xe8] sm:$0xff]
        %v1138 = vld [vmem:[%s188 + $0xf0] sm:$0xff]
        %v1139 = vld [vmem:[%s188 + $0xf8] sm:$0xff]
        %v1140 = vld [vmem:[%s188 + $0x100] sm:$0xff]
        %v1141 = vld [vmem:[%s188 + $0x108] sm:$0xff]
        %v1142 = vld [vmem:[%s188 + $0x110] sm:$0xff]
        %v1143 = vld [vmem:[%s188 + $0x118] sm:$0xff]
        %v1144 = vld [vmem:[%s188 + $0x120] sm:$0xff]
        %v1145 = vld [vmem:[%s188 + $0x128] sm:$0xff]
        %v1146 = vld [vmem:[%s188 + $0x130] sm:$0xff]
        %v1147 = vld [vmem:[%s188 + $0x138] sm:$0xff]
        %1148 = vrot.lane.b32.xlu0 %v1108, 116
        %v1149 = vpop.permute.xlu0 %1148
        %1150 = vrot.lane.b32.xlu0 %v1118, 116
        %v1151 = vpop.permute.xlu0 %1150
        %1152 = vrot.lane.b32.xlu0 %v1128, 116
        %v1153 = vpop.permute.xlu0 %1152
        %1154 = vrot.lane.b32.xlu0 %v1138, 116
        %v1155 = vpop.permute.xlu0 %1154
        %1156 = vrot.lane.b32.xlu0 %v1109, 116
        %v1157 = vpop.permute.xlu0 %1156
        %1158 = vrot.lane.b32.xlu0 %v1119, 116
        %v1159 = vpop.permute.xlu0 %1158
        %1160 = vrot.lane.b32.xlu0 %v1129, 116
        %v1161 = vpop.permute.xlu0 %1160
        %1162 = vrot.lane.b32.xlu0 %v1139, 116
        %v1163 = vpop.permute.xlu0 %1162
        %1164 = vrot.lane.b32.xlu0 %v1110, 116
        %v1165 = vpop.permute.xlu0 %1164
        %1166 = vrot.lane.b32.xlu0 %v1120, 116
        %v1167 = vpop.permute.xlu0 %1166
        %1168 = vrot.lane.b32.xlu0 %v1130, 116
        %v1169 = vpop.permute.xlu0 %1168
        %1170 = vrot.lane.b32.xlu0 %v1140, 116
        %v1171 = vpop.permute.xlu0 %1170
        %1172 = vrot.lane.b32.xlu0 %v1111, 116
        %v1173 = vpop.permute.xlu0 %1172
        %1174 = vrot.lane.b32.xlu0 %v1121, 116
        %v1175 = vpop.permute.xlu0 %1174
        %1176 = vrot.lane.b32.xlu0 %v1131, 116
        %v1177 = vpop.permute.xlu0 %1176
        %1178 = vrot.lane.b32.xlu0 %v1141, 116
        %v1179 = vpop.permute.xlu0 %1178
        %1180 = vrot.lane.b32.xlu0 %v1112, 116
        %v1181 = vpop.permute.xlu0 %1180
        %1182 = vrot.lane.b32.xlu0 %v1122, 116
        %v1183 = vpop.permute.xlu0 %1182
        %1184 = vrot.lane.b32.xlu0 %v1132, 116
        %v1185 = vpop.permute.xlu0 %1184
        %1186 = vrot.lane.b32.xlu0 %v1142, 116
        %v1187 = vpop.permute.xlu0 %1186
        %1188 = vrot.lane.b32.xlu0 %v1113, 116
        %v1189 = vpop.permute.xlu0 %1188
        %1190 = vrot.lane.b32.xlu0 %v1123, 116
        %v1191 = vpop.permute.xlu0 %1190
        %1192 = vrot.lane.b32.xlu0 %v1133, 116
        %v1193 = vpop.permute.xlu0 %1192
        %1194 = vrot.lane.b32.xlu0 %v1143, 116
        %v1195 = vpop.permute.xlu0 %1194
        %1196 = vrot.lane.b32.xlu0 %v1114, 116
        %v1197 = vpop.permute.xlu0 %1196
        %1198 = vrot.lane.b32.xlu0 %v1124, 116
        %v1199 = vpop.permute.xlu0 %1198
        %1200 = vrot.lane.b32.xlu0 %v1134, 116
        %v1201 = vpop.permute.xlu0 %1200
        %1202 = vrot.lane.b32.xlu0 %v1144, 116
        %v1203 = vpop.permute.xlu0 %1202
        %1204 = vrot.lane.b32.xlu0 %v1115, 116
        %v1205 = vpop.permute.xlu0 %1204
        %1206 = vrot.lane.b32.xlu0 %v1125, 116
        %v1207 = vpop.permute.xlu0 %1206
        %1208 = vrot.lane.b32.xlu0 %v1135, 116
        %v1209 = vpop.permute.xlu0 %1208
        %1210 = vrot.lane.b32.xlu0 %v1145, 116
        %v1211 = vpop.permute.xlu0 %1210
        %1212 = vrot.lane.b32.xlu0 %v1116, 116
        %v1213 = vpop.permute.xlu0 %1212
        %1214 = vrot.lane.b32.xlu0 %v1126, 116
        %v1215 = vpop.permute.xlu0 %1214
        %1216 = vrot.lane.b32.xlu0 %v1136, 116
        %v1217 = vpop.permute.xlu0 %1216
        %1218 = vrot.lane.b32.xlu0 %v1146, 116
        %v1219 = vpop.permute.xlu0 %1218
        %1220 = vrot.lane.b32.xlu0 %v1117, 116
        %v1221 = vpop.permute.xlu0 %1220
        %1222 = vrot.lane.b32.xlu0 %v1127, 116
        %v1223 = vpop.permute.xlu0 %1222
        %1224 = vrot.lane.b32.xlu0 %v1137, 116
        %v1225 = vpop.permute.xlu0 %1224
        %1226 = vrot.lane.b32.xlu0 %v1147, 116
        %v1227 = vpop.permute.xlu0 %1226
        %vm1228 = vcmp.lt.s32.totalorder %v423, 116
        %v1229 = vsel %vm1228, %v1213, %v1221
        %v1230 = vsel %vm1228, %v1215, %v1223
        %v1231 = vsel %vm1228, %v1217, %v1225
        %v1232 = vsel %vm1228, %v1219, %v1227
        %v1233 = vsel %vm1228, %v1205, %v1213
        %v1234 = vsel %vm1228, %v1207, %v1215
        %v1235 = vsel %vm1228, %v1209, %v1217
        %v1236 = vsel %vm1228, %v1211, %v1219
        %v1237 = vsel %vm1228, %v1197, %v1205
        %v1238 = vsel %vm1228, %v1199, %v1207
        %v1239 = vsel %vm1228, %v1201, %v1209
        %v1240 = vsel %vm1228, %v1203, %v1211
        %v1241 = vsel %vm1228, %v1189, %v1197
        %v1242 = vsel %vm1228, %v1191, %v1199
        %v1243 = vsel %vm1228, %v1193, %v1201
        %v1244 = vsel %vm1228, %v1195, %v1203
        %v1245 = vsel %vm1228, %v1181, %v1189
        %v1246 = vsel %vm1228, %v1183, %v1191
        %v1247 = vsel %vm1228, %v1185, %v1193
        %v1248 = vsel %vm1228, %v1187, %v1195
        %v1249 = vsel %vm1228, %v1173, %v1181
        %v1250 = vsel %vm1228, %v1175, %v1183
        %v1251 = vsel %vm1228, %v1177, %v1185
        %v1252 = vsel %vm1228, %v1179, %v1187
        %v1253 = vsel %vm1228, %v1165, %v1173
        %v1254 = vsel %vm1228, %v1167, %v1175
        %v1255 = vsel %vm1228, %v1169, %v1177
        %v1256 = vsel %vm1228, %v1171, %v1179
        %v1257 = vsel %vm1228, %v1157, %v1165
        %v1258 = vsel %vm1228, %v1159, %v1167
        %v1259 = vsel %vm1228, %v1161, %v1169
        %v1260 = vsel %vm1228, %v1163, %v1171
        %v1261 = vsel %vm1228, %v1149, %v1157
        %v1262 = vsel %vm1228, %v1151, %v1159
        %v1263 = vsel %vm1228, %v1153, %v1161
        %v1264 = vsel %vm1228, %v1155, %v1163
        %v1265 = vsel %vm1228, %v1221, %v1149
        %v1266 = vsel %vm1228, %v1223, %v1151
        %v1267 = vsel %vm1228, %v1225, %v1153
        %v1268 = vsel %vm1228, %v1227, %v1155
        %1269 = vst [vmem:[#allocation2 + $0x640] sm:$0xff] %v1261
        %1270 = vst [vmem:[#allocation2 + $0x648] sm:$0xff] %v1257
        %1271 = vst [vmem:[#allocation2 + $0x650] sm:$0xff] %v1253
        %1272 = vst [vmem:[#allocation2 + $0x658] sm:$0xff] %v1249
        %1273 = vst [vmem:[#allocation2 + $0x660] sm:$0xff] %v1245
        %1274 = vst [vmem:[#allocation2 + $0x668] sm:$0xff] %v1241
        %1275 = vst [vmem:[#allocation2 + $0x670] sm:$0xff] %v1237
        %1276 = vst [vmem:[#allocation2 + $0x678] sm:$0xff] %v1233
        %1277 = vst [vmem:[#allocation2 + $0x680] sm:$0xff] %v1229
        %1278 = vst [vmem:[#allocation2 + $0x688] sm:$0xff] %v1265
        %1279 = vst [vmem:[#allocation2 + $0x690] sm:$0xff] %v1262
        %1280 = vst [vmem:[#allocation2 + $0x698] sm:$0xff] %v1258
        %1281 = vst [vmem:[#allocation2 + $0x6a0] sm:$0xff] %v1254
        %1282 = vst [vmem:[#allocation2 + $0x6a8] sm:$0xff] %v1250
        %1283 = vst [vmem:[#allocation2 + $0x6b0] sm:$0xff] %v1246
        %1284 = vst [vmem:[#allocation2 + $0x6b8] sm:$0xff] %v1242
        %1285 = vst [vmem:[#allocation2 + $0x6c0] sm:$0xff] %v1238
        %1286 = vst [vmem:[#allocation2 + $0x6c8] sm:$0xff] %v1234
        %1287 = vst [vmem:[#allocation2 + $0x6d0] sm:$0xff] %v1230
        %1288 = vst [vmem:[#allocation2 + $0x6d8] sm:$0xff] %v1266
        %1289 = vst [vmem:[#allocation2 + $0x6e0] sm:$0xff] %v1263
        %1290 = vst [vmem:[#allocation2 + $0x6e8] sm:$0xff] %v1259
        %1291 = vst [vmem:[#allocation2 + $0x6f0] sm:$0xff] %v1255
        %1292 = vst [vmem:[#allocation2 + $0x6f8] sm:$0xff] %v1251
        %1293 = vst [vmem:[#allocation2 + $0x700] sm:$0xff] %v1247
        %1294 = vst [vmem:[#allocation2 + $0x708] sm:$0xff] %v1243
        %1295 = vst [vmem:[#allocation2 + $0x710] sm:$0xff] %v1239
        %1296 = vst [vmem:[#allocation2 + $0x718] sm:$0xff] %v1235
        %1297 = vst [vmem:[#allocation2 + $0x720] sm:$0xff] %v1231
        %1298 = vst [vmem:[#allocation2 + $0x728] sm:$0xff] %v1267
        %1299 = vst [vmem:[#allocation2 + $0x730] sm:$0xff] %v1264
        %1300 = vst [vmem:[#allocation2 + $0x738] sm:$0xff] %v1260
        %1301 = vst [vmem:[#allocation2 + $0x740] sm:$0xff] %v1256
        %1302 = vst [vmem:[#allocation2 + $0x748] sm:$0xff] %v1252
        %1303 = vst [vmem:[#allocation2 + $0x750] sm:$0xff] %v1248
        %1304 = vst [vmem:[#allocation2 + $0x758] sm:$0xff] %v1244
        %1305 = vst [vmem:[#allocation2 + $0x760] sm:$0xff] %v1240
        %1306 = vst [vmem:[#allocation2 + $0x768] sm:$0xff] %v1236
        %1307 = vst [vmem:[#allocation2 + $0x770] sm:$0xff] %v1232
        %1308 = vst [vmem:[#allocation2 + $0x778] sm:$0xff] %v1268
        %v1309 = vld [vmem:[%s188] sm:$0xff]
        %v1310 = vld [vmem:[%s188 + $0x8] sm:$0xff]
        %v1311 = vld [vmem:[%s188 + $0x10] sm:$0xff]
        %v1312 = vld [vmem:[%s188 + $0x18] sm:$0xff]
        %v1313 = vld [vmem:[%s188 + $0x20] sm:$0xff]
        %v1314 = vld [vmem:[%s188 + $0x28] sm:$0xff]
        %v1315 = vld [vmem:[%s188 + $0x30] sm:$0xff]
        %v1316 = vld [vmem:[%s188 + $0x38] sm:$0xff]
        %v1317 = vld [vmem:[%s188 + $0x40] sm:$0xff]
        %v1318 = vld [vmem:[%s188 + $0x48] sm:$0xff]
        %v1319 = vld [vmem:[%s188 + $0x50] sm:$0xff]
        %v1320 = vld [vmem:[%s188 + $0x58] sm:$0xff]
        %v1321 = vld [vmem:[%s188 + $0x60] sm:$0xff]
        %v1322 = vld [vmem:[%s188 + $0x68] sm:$0xff]
        %v1323 = vld [vmem:[%s188 + $0x70] sm:$0xff]
        %v1324 = vld [vmem:[%s188 + $0x78] sm:$0xff]
        %v1325 = vld [vmem:[%s188 + $0x80] sm:$0xff]
        %v1326 = vld [vmem:[%s188 + $0x88] sm:$0xff]
        %v1327 = vld [vmem:[%s188 + $0x90] sm:$0xff]
        %v1328 = vld [vmem:[%s188 + $0x98] sm:$0xff]
        %v1329 = vld [vmem:[%s188 + $0xa0] sm:$0xff]
        %v1330 = vld [vmem:[%s188 + $0xa8] sm:$0xff]
        %v1331 = vld [vmem:[%s188 + $0xb0] sm:$0xff]
        %v1332 = vld [vmem:[%s188 + $0xb8] sm:$0xff]
        %v1333 = vld [vmem:[%s188 + $0xc0] sm:$0xff]
        %v1334 = vld [vmem:[%s188 + $0xc8] sm:$0xff]
        %v1335 = vld [vmem:[%s188 + $0xd0] sm:$0xff]
        %v1336 = vld [vmem:[%s188 + $0xd8] sm:$0xff]
        %v1337 = vld [vmem:[%s188 + $0xe0] sm:$0xff]
        %v1338 = vld [vmem:[%s188 + $0xe8] sm:$0xff]
        %v1339 = vld [vmem:[%s188 + $0xf0] sm:$0xff]
        %v1340 = vld [vmem:[%s188 + $0xf8] sm:$0xff]
        %v1341 = vld [vmem:[%s188 + $0x100] sm:$0xff]
        %v1342 = vld [vmem:[%s188 + $0x108] sm:$0xff]
        %v1343 = vld [vmem:[%s188 + $0x110] sm:$0xff]
        %v1344 = vld [vmem:[%s188 + $0x118] sm:$0xff]
        %v1345 = vld [vmem:[%s188 + $0x120] sm:$0xff]
        %v1346 = vld [vmem:[%s188 + $0x128] sm:$0xff]
        %v1347 = vld [vmem:[%s188 + $0x130] sm:$0xff]
        %v1348 = vld [vmem:[%s188 + $0x138] sm:$0xff]
        %1349 = vrot.lane.b32.xlu0 %v1309, 108
        %v1350 = vpop.permute.xlu0 %1349
        %1351 = vrot.lane.b32.xlu0 %v1319, 108
        %v1352 = vpop.permute.xlu0 %1351
        %1353 = vrot.lane.b32.xlu0 %v1329, 108
        %v1354 = vpop.permute.xlu0 %1353
        %1355 = vrot.lane.b32.xlu0 %v1339, 108
        %v1356 = vpop.permute.xlu0 %1355
        %1357 = vrot.lane.b32.xlu0 %v1310, 108
        %v1358 = vpop.permute.xlu0 %1357
        %1359 = vrot.lane.b32.xlu0 %v1320, 108
        %v1360 = vpop.permute.xlu0 %1359
        %1361 = vrot.lane.b32.xlu0 %v1330, 108
        %v1362 = vpop.permute.xlu0 %1361
        %1363 = vrot.lane.b32.xlu0 %v1340, 108
        %v1364 = vpop.permute.xlu0 %1363
        %1365 = vrot.lane.b32.xlu0 %v1311, 108
        %v1366 = vpop.permute.xlu0 %1365
        %1367 = vrot.lane.b32.xlu0 %v1321, 108
        %v1368 = vpop.permute.xlu0 %1367
        %1369 = vrot.lane.b32.xlu0 %v1331, 108
        %v1370 = vpop.permute.xlu0 %1369
        %1371 = vrot.lane.b32.xlu0 %v1341, 108
        %v1372 = vpop.permute.xlu0 %1371
        %1373 = vrot.lane.b32.xlu0 %v1312, 108
        %v1374 = vpop.permute.xlu0 %1373
        %1375 = vrot.lane.b32.xlu0 %v1322, 108
        %v1376 = vpop.permute.xlu0 %1375
        %1377 = vrot.lane.b32.xlu0 %v1332, 108
        %v1378 = vpop.permute.xlu0 %1377
        %1379 = vrot.lane.b32.xlu0 %v1342, 108
        %v1380 = vpop.permute.xlu0 %1379
        %1381 = vrot.lane.b32.xlu0 %v1313, 108
        %v1382 = vpop.permute.xlu0 %1381
        %1383 = vrot.lane.b32.xlu0 %v1323, 108
        %v1384 = vpop.permute.xlu0 %1383
        %1385 = vrot.lane.b32.xlu0 %v1333, 108
        %v1386 = vpop.permute.xlu0 %1385
        %1387 = vrot.lane.b32.xlu0 %v1343, 108
        %v1388 = vpop.permute.xlu0 %1387
        %1389 = vrot.lane.b32.xlu0 %v1314, 108
        %v1390 = vpop.permute.xlu0 %1389
        %1391 = vrot.lane.b32.xlu0 %v1324, 108
        %v1392 = vpop.permute.xlu0 %1391
        %1393 = vrot.lane.b32.xlu0 %v1334, 108
        %v1394 = vpop.permute.xlu0 %1393
        %1395 = vrot.lane.b32.xlu0 %v1344, 108
        %v1396 = vpop.permute.xlu0 %1395
        %1397 = vrot.lane.b32.xlu0 %v1315, 108
        %v1398 = vpop.permute.xlu0 %1397
        %1399 = vrot.lane.b32.xlu0 %v1325, 108
        %v1400 = vpop.permute.xlu0 %1399
        %1401 = vrot.lane.b32.xlu0 %v1335, 108
        %v1402 = vpop.permute.xlu0 %1401
        %1403 = vrot.lane.b32.xlu0 %v1345, 108
        %v1404 = vpop.permute.xlu0 %1403
        %1405 = vrot.lane.b32.xlu0 %v1316, 108
        %v1406 = vpop.permute.xlu0 %1405
        %1407 = vrot.lane.b32.xlu0 %v1326, 108
        %v1408 = vpop.permute.xlu0 %1407
        %1409 = vrot.lane.b32.xlu0 %v1336, 108
        %v1410 = vpop.permute.xlu0 %1409
        %1411 = vrot.lane.b32.xlu0 %v1346, 108
        %v1412 = vpop.permute.xlu0 %1411
        %1413 = vrot.lane.b32.xlu0 %v1317, 108
        %v1414 = vpop.permute.xlu0 %1413
        %1415 = vrot.lane.b32.xlu0 %v1327, 108
        %v1416 = vpop.permute.xlu0 %1415
        %1417 = vrot.lane.b32.xlu0 %v1337, 108
        %v1418 = vpop.permute.xlu0 %1417
        %1419 = vrot.lane.b32.xlu0 %v1347, 108
        %v1420 = vpop.permute.xlu0 %1419
        %1421 = vrot.lane.b32.xlu0 %v1318, 108
        %v1422 = vpop.permute.xlu0 %1421
        %1423 = vrot.lane.b32.xlu0 %v1328, 108
        %v1424 = vpop.permute.xlu0 %1423
        %1425 = vrot.lane.b32.xlu0 %v1338, 108
        %v1426 = vpop.permute.xlu0 %1425
        %1427 = vrot.lane.b32.xlu0 %v1348, 108
        %v1428 = vpop.permute.xlu0 %1427
        %vm1429 = vcmp.lt.s32.totalorder %v423, 108
        %v1430 = vsel %vm1429, %v1414, %v1422
        %v1431 = vsel %vm1429, %v1416, %v1424
        %v1432 = vsel %vm1429, %v1418, %v1426
        %v1433 = vsel %vm1429, %v1420, %v1428
        %v1434 = vsel %vm1429, %v1406, %v1414
        %v1435 = vsel %vm1429, %v1408, %v1416
        %v1436 = vsel %vm1429, %v1410, %v1418
        %v1437 = vsel %vm1429, %v1412, %v1420
        %v1438 = vsel %vm1429, %v1398, %v1406
        %v1439 = vsel %vm1429, %v1400, %v1408
        %v1440 = vsel %vm1429, %v1402, %v1410
        %v1441 = vsel %vm1429, %v1404, %v1412
        %v1442 = vsel %vm1429, %v1390, %v1398
        %v1443 = vsel %vm1429, %v1392, %v1400
        %v1444 = vsel %vm1429, %v1394, %v1402
        %v1445 = vsel %vm1429, %v1396, %v1404
        %v1446 = vsel %vm1429, %v1382, %v1390
        %v1447 = vsel %vm1429, %v1384, %v1392
        %v1448 = vsel %vm1429, %v1386, %v1394
        %v1449 = vsel %vm1429, %v1388, %v1396
        %v1450 = vsel %vm1429, %v1374, %v1382
        %v1451 = vsel %vm1429, %v1376, %v1384
        %v1452 = vsel %vm1429, %v1378, %v1386
        %v1453 = vsel %vm1429, %v1380, %v1388
        %v1454 = vsel %vm1429, %v1366, %v1374
        %v1455 = vsel %vm1429, %v1368, %v1376
        %v1456 = vsel %vm1429, %v1370, %v1378
        %v1457 = vsel %vm1429, %v1372, %v1380
        %v1458 = vsel %vm1429, %v1358, %v1366
        %v1459 = vsel %vm1429, %v1360, %v1368
        %v1460 = vsel %vm1429, %v1362, %v1370
        %v1461 = vsel %vm1429, %v1364, %v1372
        %v1462 = vsel %vm1429, %v1350, %v1358
        %v1463 = vsel %vm1429, %v1352, %v1360
        %v1464 = vsel %vm1429, %v1354, %v1362
        %v1465 = vsel %vm1429, %v1356, %v1364
        %v1466 = vsel %vm1429, %v1422, %v1350
        %v1467 = vsel %vm1429, %v1424, %v1352
        %v1468 = vsel %vm1429, %v1426, %v1354
        %v1469 = vsel %vm1429, %v1428, %v1356
        %1470 = vst [vmem:[#allocation2 + $0x780] sm:$0xff] %v1462
        %1471 = vst [vmem:[#allocation2 + $0x788] sm:$0xff] %v1458
        %1472 = vst [vmem:[#allocation2 + $0x790] sm:$0xff] %v1454
        %1473 = vst [vmem:[#allocation2 + $0x798] sm:$0xff] %v1450
        %1474 = vst [vmem:[#allocation2 + $0x7a0] sm:$0xff] %v1446
        %1475 = vst [vmem:[#allocation2 + $0x7a8] sm:$0xff] %v1442
        %1476 = vst [vmem:[#allocation2 + $0x7b0] sm:$0xff] %v1438
        %1477 = vst [vmem:[#allocation2 + $0x7b8] sm:$0xff] %v1434
        %1478 = vst [vmem:[#allocation2 + $0x7c0] sm:$0xff] %v1430
        %1479 = vst [vmem:[#allocation2 + $0x7c8] sm:$0xff] %v1466
        %1480 = vst [vmem:[#allocation2 + $0x7d0] sm:$0xff] %v1463
        %1481 = vst [vmem:[#allocation2 + $0x7d8] sm:$0xff] %v1459
        %1482 = vst [vmem:[#allocation2 + $0x7e0] sm:$0xff] %v1455
        %1483 = vst [vmem:[#allocation2 + $0x7e8] sm:$0xff] %v1451
        %1484 = vst [vmem:[#allocation2 + $0x7f0] sm:$0xff] %v1447
        %1485 = vst [vmem:[#allocation2 + $0x7f8] sm:$0xff] %v1443
        %1486 = vst [vmem:[#allocation2 + $0x800] sm:$0xff] %v1439
        %1487 = vst [vmem:[#allocation2 + $0x808] sm:$0xff] %v1435
        %1488 = vst [vmem:[#allocation2 + $0x810] sm:$0xff] %v1431
        %1489 = vst [vmem:[#allocation2 + $0x818] sm:$0xff] %v1467
        %1490 = vst [vmem:[#allocation2 + $0x820] sm:$0xff] %v1464
        %1491 = vst [vmem:[#allocation2 + $0x828] sm:$0xff] %v1460
        %1492 = vst [vmem:[#allocation2 + $0x830] sm:$0xff] %v1456
        %1493 = vst [vmem:[#allocation2 + $0x838] sm:$0xff] %v1452
        %1494 = vst [vmem:[#allocation2 + $0x840] sm:$0xff] %v1448
        %1495 = vst [vmem:[#allocation2 + $0x848] sm:$0xff] %v1444
        %1496 = vst [vmem:[#allocation2 + $0x850] sm:$0xff] %v1440
        %1497 = vst [vmem:[#allocation2 + $0x858] sm:$0xff] %v1436
        %1498 = vst [vmem:[#allocation2 + $0x860] sm:$0xff] %v1432
        %1499 = vst [vmem:[#allocation2 + $0x868] sm:$0xff] %v1468
        %1500 = vst [vmem:[#allocation2 + $0x870] sm:$0xff] %v1465
        %1501 = vst [vmem:[#allocation2 + $0x878] sm:$0xff] %v1461
        %1502 = vst [vmem:[#allocation2 + $0x880] sm:$0xff] %v1457
        %1503 = vst [vmem:[#allocation2 + $0x888] sm:$0xff] %v1453
        %1504 = vst [vmem:[#allocation2 + $0x890] sm:$0xff] %v1449
        %1505 = vst [vmem:[#allocation2 + $0x898] sm:$0xff] %v1445
        %1506 = vst [vmem:[#allocation2 + $0x8a0] sm:$0xff] %v1441
        %1507 = vst [vmem:[#allocation2 + $0x8a8] sm:$0xff] %v1437
        %1508 = vst [vmem:[#allocation2 + $0x8b0] sm:$0xff] %v1433
        %1509 = vst [vmem:[#allocation2 + $0x8b8] sm:$0xff] %v1469
        %v1510 = vld [vmem:[%s188] sm:$0xff]
        %v1511 = vld [vmem:[%s188 + $0x8] sm:$0xff]
        %v1512 = vld [vmem:[%s188 + $0x10] sm:$0xff]
        %v1513 = vld [vmem:[%s188 + $0x18] sm:$0xff]
        %v1514 = vld [vmem:[%s188 + $0x20] sm:$0xff]
        %v1515 = vld [vmem:[%s188 + $0x28] sm:$0xff]
        %v1516 = vld [vmem:[%s188 + $0x30] sm:$0xff]
        %v1517 = vld [vmem:[%s188 + $0x38] sm:$0xff]
        %v1518 = vld [vmem:[%s188 + $0x40] sm:$0xff]
        %v1519 = vld [vmem:[%s188 + $0x48] sm:$0xff]
        %v1520 = vld [vmem:[%s188 + $0x50] sm:$0xff]
        %v1521 = vld [vmem:[%s188 + $0x58] sm:$0xff]
        %v1522 = vld [vmem:[%s188 + $0x60] sm:$0xff]
        %v1523 = vld [vmem:[%s188 + $0x68] sm:$0xff]
        %v1524 = vld [vmem:[%s188 + $0x70] sm:$0xff]
        %v1525 = vld [vmem:[%s188 + $0x78] sm:$0xff]
        %v1526 = vld [vmem:[%s188 + $0x80] sm:$0xff]
        %v1527 = vld [vmem:[%s188 + $0x88] sm:$0xff]
        %v1528 = vld [vmem:[%s188 + $0x90] sm:$0xff]
        %v1529 = vld [vmem:[%s188 + $0x98] sm:$0xff]
        %v1530 = vld [vmem:[%s188 + $0xa0] sm:$0xff]
        %v1531 = vld [vmem:[%s188 + $0xa8] sm:$0xff]
        %v1532 = vld [vmem:[%s188 + $0xb0] sm:$0xff]
        %v1533 = vld [vmem:[%s188 + $0xb8] sm:$0xff]
        %v1534 = vld [vmem:[%s188 + $0xc0] sm:$0xff]
        %v1535 = vld [vmem:[%s188 + $0xc8] sm:$0xff]
        %v1536 = vld [vmem:[%s188 + $0xd0] sm:$0xff]
        %v1537 = vld [vmem:[%s188 + $0xd8] sm:$0xff]
        %v1538 = vld [vmem:[%s188 + $0xe0] sm:$0xff]
        %v1539 = vld [vmem:[%s188 + $0xe8] sm:$0xff]
        %v1540 = vld [vmem:[%s188 + $0xf0] sm:$0xff]
        %v1541 = vld [vmem:[%s188 + $0xf8] sm:$0xff]
        %v1542 = vld [vmem:[%s188 + $0x100] sm:$0xff]
        %v1543 = vld [vmem:[%s188 + $0x108] sm:$0xff]
        %v1544 = vld [vmem:[%s188 + $0x110] sm:$0xff]
        %v1545 = vld [vmem:[%s188 + $0x118] sm:$0xff]
        %v1546 = vld [vmem:[%s188 + $0x120] sm:$0xff]
        %v1547 = vld [vmem:[%s188 + $0x128] sm:$0xff]
        %v1548 = vld [vmem:[%s188 + $0x130] sm:$0xff]
        %v1549 = vld [vmem:[%s188 + $0x138] sm:$0xff]
        %1550 = vrot.lane.b32.xlu0 %v1510, 107
        %v1551 = vpop.permute.xlu0 %1550
        %1552 = vrot.lane.b32.xlu0 %v1520, 107
        %v1553 = vpop.permute.xlu0 %1552
        %1554 = vrot.lane.b32.xlu0 %v1530, 107
        %v1555 = vpop.permute.xlu0 %1554
        %1556 = vrot.lane.b32.xlu0 %v1540, 107
        %v1557 = vpop.permute.xlu0 %1556
        %1558 = vrot.lane.b32.xlu0 %v1511, 107
        %v1559 = vpop.permute.xlu0 %1558
        %1560 = vrot.lane.b32.xlu0 %v1521, 107
        %v1561 = vpop.permute.xlu0 %1560
        %1562 = vrot.lane.b32.xlu0 %v1531, 107
        %v1563 = vpop.permute.xlu0 %1562
        %1564 = vrot.lane.b32.xlu0 %v1541, 107
        %v1565 = vpop.permute.xlu0 %1564
        %1566 = vrot.lane.b32.xlu0 %v1512, 107
        %v1567 = vpop.permute.xlu0 %1566
        %1568 = vrot.lane.b32.xlu0 %v1522, 107
        %v1569 = vpop.permute.xlu0 %1568
        %1570 = vrot.lane.b32.xlu0 %v1532, 107
        %v1571 = vpop.permute.xlu0 %1570
        %1572 = vrot.lane.b32.xlu0 %v1542, 107
        %v1573 = vpop.permute.xlu0 %1572
        %1574 = vrot.lane.b32.xlu0 %v1513, 107
        %v1575 = vpop.permute.xlu0 %1574
        %1576 = vrot.lane.b32.xlu0 %v1523, 107
        %v1577 = vpop.permute.xlu0 %1576
        %1578 = vrot.lane.b32.xlu0 %v1533, 107
        %v1579 = vpop.permute.xlu0 %1578
        %1580 = vrot.lane.b32.xlu0 %v1543, 107
        %v1581 = vpop.permute.xlu0 %1580
        %1582 = vrot.lane.b32.xlu0 %v1514, 107
        %v1583 = vpop.permute.xlu0 %1582
        %1584 = vrot.lane.b32.xlu0 %v1524, 107
        %v1585 = vpop.permute.xlu0 %1584
        %1586 = vrot.lane.b32.xlu0 %v1534, 107
        %v1587 = vpop.permute.xlu0 %1586
        %1588 = vrot.lane.b32.xlu0 %v1544, 107
        %v1589 = vpop.permute.xlu0 %1588
        %1590 = vrot.lane.b32.xlu0 %v1515, 107
        %v1591 = vpop.permute.xlu0 %1590
        %1592 = vrot.lane.b32.xlu0 %v1525, 107
        %v1593 = vpop.permute.xlu0 %1592
        %1594 = vrot.lane.b32.xlu0 %v1535, 107
        %v1595 = vpop.permute.xlu0 %1594
        %1596 = vrot.lane.b32.xlu0 %v1545, 107
        %v1597 = vpop.permute.xlu0 %1596
        %1598 = vrot.lane.b32.xlu0 %v1516, 107
        %v1599 = vpop.permute.xlu0 %1598
        %1600 = vrot.lane.b32.xlu0 %v1526, 107
        %v1601 = vpop.permute.xlu0 %1600
        %1602 = vrot.lane.b32.xlu0 %v1536, 107
        %v1603 = vpop.permute.xlu0 %1602
        %1604 = vrot.lane.b32.xlu0 %v1546, 107
        %v1605 = vpop.permute.xlu0 %1604
        %1606 = vrot.lane.b32.xlu0 %v1517, 107
        %v1607 = vpop.permute.xlu0 %1606
        %1608 = vrot.lane.b32.xlu0 %v1527, 107
        %v1609 = vpop.permute.xlu0 %1608
        %1610 = vrot.lane.b32.xlu0 %v1537, 107
        %v1611 = vpop.permute.xlu0 %1610
        %1612 = vrot.lane.b32.xlu0 %v1547, 107
        %v1613 = vpop.permute.xlu0 %1612
        %1614 = vrot.lane.b32.xlu0 %v1518, 107
        %v1615 = vpop.permute.xlu0 %1614
        %1616 = vrot.lane.b32.xlu0 %v1528, 107
        %v1617 = vpop.permute.xlu0 %1616
        %1618 = vrot.lane.b32.xlu0 %v1538, 107
        %v1619 = vpop.permute.xlu0 %1618
        %1620 = vrot.lane.b32.xlu0 %v1548, 107
        %v1621 = vpop.permute.xlu0 %1620
        %1622 = vrot.lane.b32.xlu0 %v1519, 107
        %v1623 = vpop.permute.xlu0 %1622
        %1624 = vrot.lane.b32.xlu0 %v1529, 107
        %v1625 = vpop.permute.xlu0 %1624
        %1626 = vrot.lane.b32.xlu0 %v1539, 107
        %v1627 = vpop.permute.xlu0 %1626
        %1628 = vrot.lane.b32.xlu0 %v1549, 107
        %v1629 = vpop.permute.xlu0 %1628
        %vm1630 = vcmp.lt.s32.totalorder %v423, 107
        %v1631 = vsel %vm1630, %v1615, %v1623
        %v1632 = vsel %vm1630, %v1617, %v1625
        %v1633 = vsel %vm1630, %v1619, %v1627
        %v1634 = vsel %vm1630, %v1621, %v1629
        %v1635 = vsel %vm1630, %v1607, %v1615
        %v1636 = vsel %vm1630, %v1609, %v1617
        %v1637 = vsel %vm1630, %v1611, %v1619
        %v1638 = vsel %vm1630, %v1613, %v1621
        %v1639 = vsel %vm1630, %v1599, %v1607
        %v1640 = vsel %vm1630, %v1601, %v1609
        %v1641 = vsel %vm1630, %v1603, %v1611
        %v1642 = vsel %vm1630, %v1605, %v1613
        %v1643 = vsel %vm1630, %v1591, %v1599
        %v1644 = vsel %vm1630, %v1593, %v1601
        %v1645 = vsel %vm1630, %v1595, %v1603
        %v1646 = vsel %vm1630, %v1597, %v1605
        %v1647 = vsel %vm1630, %v1583, %v1591
        %v1648 = vsel %vm1630, %v1585, %v1593
        %v1649 = vsel %vm1630, %v1587, %v1595
        %v1650 = vsel %vm1630, %v1589, %v1597
        %v1651 = vsel %vm1630, %v1575, %v1583
        %v1652 = vsel %vm1630, %v1577, %v1585
        %v1653 = vsel %vm1630, %v1579, %v1587
        %v1654 = vsel %vm1630, %v1581, %v1589
        %v1655 = vsel %vm1630, %v1567, %v1575
        %v1656 = vsel %vm1630, %v1569, %v1577
        %v1657 = vsel %vm1630, %v1571, %v1579
        %v1658 = vsel %vm1630, %v1573, %v1581
        %v1659 = vsel %vm1630, %v1559, %v1567
        %v1660 = vsel %vm1630, %v1561, %v1569
        %v1661 = vsel %vm1630, %v1563, %v1571
        %v1662 = vsel %vm1630, %v1565, %v1573
        %v1663 = vsel %vm1630, %v1551, %v1559
        %v1664 = vsel %vm1630, %v1553, %v1561
        %v1665 = vsel %vm1630, %v1555, %v1563
        %v1666 = vsel %vm1630, %v1557, %v1565
        %v1667 = vsel %vm1630, %v1623, %v1551
        %v1668 = vsel %vm1630, %v1625, %v1553
        %v1669 = vsel %vm1630, %v1627, %v1555
        %v1670 = vsel %vm1630, %v1629, %v1557
        %1671 = vst [vmem:[#allocation2 + $0x8c0] sm:$0xff] %v1663
        %1672 = vst [vmem:[#allocation2 + $0x8c8] sm:$0xff] %v1659
        %1673 = vst [vmem:[#allocation2 + $0x8d0] sm:$0xff] %v1655
        %1674 = vst [vmem:[#allocation2 + $0x8d8] sm:$0xff] %v1651
        %1675 = vst [vmem:[#allocation2 + $0x8e0] sm:$0xff] %v1647
        %1676 = vst [vmem:[#allocation2 + $0x8e8] sm:$0xff] %v1643
        %1677 = vst [vmem:[#allocation2 + $0x8f0] sm:$0xff] %v1639
        %1678 = vst [vmem:[#allocation2 + $0x8f8] sm:$0xff] %v1635
        %1679 = vst [vmem:[#allocation2 + $0x900] sm:$0xff] %v1631
        %1680 = vst [vmem:[#allocation2 + $0x908] sm:$0xff] %v1667
        %1681 = vst [vmem:[#allocation2 + $0x910] sm:$0xff] %v1664
        %1682 = vst [vmem:[#allocation2 + $0x918] sm:$0xff] %v1660
        %1683 = vst [vmem:[#allocation2 + $0x920] sm:$0xff] %v1656
        %1684 = vst [vmem:[#allocation2 + $0x928] sm:$0xff] %v1652
        %1685 = vst [vmem:[#allocation2 + $0x930] sm:$0xff] %v1648
        %1686 = vst [vmem:[#allocation2 + $0x938] sm:$0xff] %v1644
        %1687 = vst [vmem:[#allocation2 + $0x940] sm:$0xff] %v1640
        %1688 = vst [vmem:[#allocation2 + $0x948] sm:$0xff] %v1636
        %1689 = vst [vmem:[#allocation2 + $0x950] sm:$0xff] %v1632
        %1690 = vst [vmem:[#allocation2 + $0x958] sm:$0xff] %v1668
        %1691 = vst [vmem:[#allocation2 + $0x960] sm:$0xff] %v1665
        %1692 = vst [vmem:[#allocation2 + $0x968] sm:$0xff] %v1661
        %1693 = vst [vmem:[#allocation2 + $0x970] sm:$0xff] %v1657
        %1694 = vst [vmem:[#allocation2 + $0x978] sm:$0xff] %v1653
        %1695 = vst [vmem:[#allocation2 + $0x980] sm:$0xff] %v1649
        %1696 = vst [vmem:[#allocation2 + $0x988] sm:$0xff] %v1645
        %1697 = vst [vmem:[#allocation2 + $0x990] sm:$0xff] %v1641
        %1698 = vst [vmem:[#allocation2 + $0x998] sm:$0xff] %v1637
        %1699 = vst [vmem:[#allocation2 + $0x9a0] sm:$0xff] %v1633
        %1700 = vst [vmem:[#allocation2 + $0x9a8] sm:$0xff] %v1669
        %1701 = vst [vmem:[#allocation2 + $0x9b0] sm:$0xff] %v1666
        %1702 = vst [vmem:[#allocation2 + $0x9b8] sm:$0xff] %v1662
        %1703 = vst [vmem:[#allocation2 + $0x9c0] sm:$0xff] %v1658
        %1704 = vst [vmem:[#allocation2 + $0x9c8] sm:$0xff] %v1654
        %1705 = vst [vmem:[#allocation2 + $0x9d0] sm:$0xff] %v1650
        %1706 = vst [vmem:[#allocation2 + $0x9d8] sm:$0xff] %v1646
        %1707 = vst [vmem:[#allocation2 + $0x9e0] sm:$0xff] %v1642
        %1708 = vst [vmem:[#allocation2 + $0x9e8] sm:$0xff] %v1638
        %1709 = vst [vmem:[#allocation2 + $0x9f0] sm:$0xff] %v1634
        %1710 = vst [vmem:[#allocation2 + $0x9f8] sm:$0xff] %v1670
        %v1711 = vld [vmem:[%s188] sm:$0xff]
        %v1712 = vld [vmem:[%s188 + $0x8] sm:$0xff]
        %v1713 = vld [vmem:[%s188 + $0x10] sm:$0xff]
        %v1714 = vld [vmem:[%s188 + $0x18] sm:$0xff]
        %v1715 = vld [vmem:[%s188 + $0x20] sm:$0xff]
        %v1716 = vld [vmem:[%s188 + $0x28] sm:$0xff]
        %v1717 = vld [vmem:[%s188 + $0x30] sm:$0xff]
        %v1718 = vld [vmem:[%s188 + $0x38] sm:$0xff]
        %v1719 = vld [vmem:[%s188 + $0x40] sm:$0xff]
        %v1720 = vld [vmem:[%s188 + $0x48] sm:$0xff]
        %v1721 = vld [vmem:[%s188 + $0x50] sm:$0xff]
        %v1722 = vld [vmem:[%s188 + $0x58] sm:$0xff]
        %v1723 = vld [vmem:[%s188 + $0x60] sm:$0xff]
        %v1724 = vld [vmem:[%s188 + $0x68] sm:$0xff]
        %v1725 = vld [vmem:[%s188 + $0x70] sm:$0xff]
        %v1726 = vld [vmem:[%s188 + $0x78] sm:$0xff]
        %v1727 = vld [vmem:[%s188 + $0x80] sm:$0xff]
        %v1728 = vld [vmem:[%s188 + $0x88] sm:$0xff]
        %v1729 = vld [vmem:[%s188 + $0x90] sm:$0xff]
        %v1730 = vld [vmem:[%s188 + $0x98] sm:$0xff]
        %v1731 = vld [vmem:[%s188 + $0xa0] sm:$0xff]
        %v1732 = vld [vmem:[%s188 + $0xa8] sm:$0xff]
        %v1733 = vld [vmem:[%s188 + $0xb0] sm:$0xff]
        %v1734 = vld [vmem:[%s188 + $0xb8] sm:$0xff]
        %v1735 = vld [vmem:[%s188 + $0xc0] sm:$0xff]
        %v1736 = vld [vmem:[%s188 + $0xc8] sm:$0xff]
        %v1737 = vld [vmem:[%s188 + $0xd0] sm:$0xff]
        %v1738 = vld [vmem:[%s188 + $0xd8] sm:$0xff]
        %v1739 = vld [vmem:[%s188 + $0xe0] sm:$0xff]
        %v1740 = vld [vmem:[%s188 + $0xe8] sm:$0xff]
        %v1741 = vld [vmem:[%s188 + $0xf0] sm:$0xff]
        %v1742 = vld [vmem:[%s188 + $0xf8] sm:$0xff]
        %v1743 = vld [vmem:[%s188 + $0x100] sm:$0xff]
        %v1744 = vld [vmem:[%s188 + $0x108] sm:$0xff]
        %v1745 = vld [vmem:[%s188 + $0x110] sm:$0xff]
        %v1746 = vld [vmem:[%s188 + $0x118] sm:$0xff]
        %v1747 = vld [vmem:[%s188 + $0x120] sm:$0xff]
        %v1748 = vld [vmem:[%s188 + $0x128] sm:$0xff]
        %v1749 = vld [vmem:[%s188 + $0x130] sm:$0xff]
        %v1750 = vld [vmem:[%s188 + $0x138] sm:$0xff]
        %1751 = vrot.lane.b32.xlu0 %v1711, 106
        %v1752 = vpop.permute.xlu0 %1751
        %1753 = vrot.lane.b32.xlu0 %v1721, 106
        %v1754 = vpop.permute.xlu0 %1753
        %1755 = vrot.lane.b32.xlu0 %v1731, 106
        %v1756 = vpop.permute.xlu0 %1755
        %1757 = vrot.lane.b32.xlu0 %v1741, 106
        %v1758 = vpop.permute.xlu0 %1757
        %1759 = vrot.lane.b32.xlu0 %v1712, 106
        %v1760 = vpop.permute.xlu0 %1759
        %1761 = vrot.lane.b32.xlu0 %v1722, 106
        %v1762 = vpop.permute.xlu0 %1761
        %1763 = vrot.lane.b32.xlu0 %v1732, 106
        %v1764 = vpop.permute.xlu0 %1763
        %1765 = vrot.lane.b32.xlu0 %v1742, 106
        %v1766 = vpop.permute.xlu0 %1765
        %1767 = vrot.lane.b32.xlu0 %v1713, 106
        %v1768 = vpop.permute.xlu0 %1767
        %1769 = vrot.lane.b32.xlu0 %v1723, 106
        %v1770 = vpop.permute.xlu0 %1769
        %1771 = vrot.lane.b32.xlu0 %v1733, 106
        %v1772 = vpop.permute.xlu0 %1771
        %1773 = vrot.lane.b32.xlu0 %v1743, 106
        %v1774 = vpop.permute.xlu0 %1773
        %1775 = vrot.lane.b32.xlu0 %v1714, 106
        %v1776 = vpop.permute.xlu0 %1775
        %1777 = vrot.lane.b32.xlu0 %v1724, 106
        %v1778 = vpop.permute.xlu0 %1777
        %1779 = vrot.lane.b32.xlu0 %v1734, 106
        %v1780 = vpop.permute.xlu0 %1779
        %1781 = vrot.lane.b32.xlu0 %v1744, 106
        %v1782 = vpop.permute.xlu0 %1781
        %1783 = vrot.lane.b32.xlu0 %v1715, 106
        %v1784 = vpop.permute.xlu0 %1783
        %1785 = vrot.lane.b32.xlu0 %v1725, 106
        %v1786 = vpop.permute.xlu0 %1785
        %1787 = vrot.lane.b32.xlu0 %v1735, 106
        %v1788 = vpop.permute.xlu0 %1787
        %1789 = vrot.lane.b32.xlu0 %v1745, 106
        %v1790 = vpop.permute.xlu0 %1789
        %1791 = vrot.lane.b32.xlu0 %v1716, 106
        %v1792 = vpop.permute.xlu0 %1791
        %1793 = vrot.lane.b32.xlu0 %v1726, 106
        %v1794 = vpop.permute.xlu0 %1793
        %1795 = vrot.lane.b32.xlu0 %v1736, 106
        %v1796 = vpop.permute.xlu0 %1795
        %1797 = vrot.lane.b32.xlu0 %v1746, 106
        %v1798 = vpop.permute.xlu0 %1797
        %1799 = vrot.lane.b32.xlu0 %v1717, 106
        %v1800 = vpop.permute.xlu0 %1799
        %1801 = vrot.lane.b32.xlu0 %v1727, 106
        %v1802 = vpop.permute.xlu0 %1801
        %1803 = vrot.lane.b32.xlu0 %v1737, 106
        %v1804 = vpop.permute.xlu0 %1803
        %1805 = vrot.lane.b32.xlu0 %v1747, 106
        %v1806 = vpop.permute.xlu0 %1805
        %1807 = vrot.lane.b32.xlu0 %v1718, 106
        %v1808 = vpop.permute.xlu0 %1807
        %1809 = vrot.lane.b32.xlu0 %v1728, 106
        %v1810 = vpop.permute.xlu0 %1809
        %1811 = vrot.lane.b32.xlu0 %v1738, 106
        %v1812 = vpop.permute.xlu0 %1811
        %1813 = vrot.lane.b32.xlu0 %v1748, 106
        %v1814 = vpop.permute.xlu0 %1813
        %1815 = vrot.lane.b32.xlu0 %v1719, 106
        %v1816 = vpop.permute.xlu0 %1815
        %1817 = vrot.lane.b32.xlu0 %v1729, 106
        %v1818 = vpop.permute.xlu0 %1817
        %1819 = vrot.lane.b32.xlu0 %v1739, 106
        %v1820 = vpop.permute.xlu0 %1819
        %1821 = vrot.lane.b32.xlu0 %v1749, 106
        %v1822 = vpop.permute.xlu0 %1821
        %1823 = vrot.lane.b32.xlu0 %v1720, 106
        %v1824 = vpop.permute.xlu0 %1823
        %1825 = vrot.lane.b32.xlu0 %v1730, 106
        %v1826 = vpop.permute.xlu0 %1825
        %1827 = vrot.lane.b32.xlu0 %v1740, 106
        %v1828 = vpop.permute.xlu0 %1827
        %1829 = vrot.lane.b32.xlu0 %v1750, 106
        %v1830 = vpop.permute.xlu0 %1829
        %vm1831 = vcmp.lt.s32.totalorder %v423, 106
        %v1832 = vsel %vm1831, %v1816, %v1824
        %v1833 = vsel %vm1831, %v1818, %v1826
        %v1834 = vsel %vm1831, %v1820, %v1828
        %v1835 = vsel %vm1831, %v1822, %v1830
        %v1836 = vsel %vm1831, %v1808, %v1816
        %v1837 = vsel %vm1831, %v1810, %v1818
        %v1838 = vsel %vm1831, %v1812, %v1820
        %v1839 = vsel %vm1831, %v1814, %v1822
        %v1840 = vsel %vm1831, %v1800, %v1808
        %v1841 = vsel %vm1831, %v1802, %v1810
        %v1842 = vsel %vm1831, %v1804, %v1812
        %v1843 = vsel %vm1831, %v1806, %v1814
        %v1844 = vsel %vm1831, %v1792, %v1800
        %v1845 = vsel %vm1831, %v1794, %v1802
        %v1846 = vsel %vm1831, %v1796, %v1804
        %v1847 = vsel %vm1831, %v1798, %v1806
        %v1848 = vsel %vm1831, %v1784, %v1792
        %v1849 = vsel %vm1831, %v1786, %v1794
        %v1850 = vsel %vm1831, %v1788, %v1796
        %v1851 = vsel %vm1831, %v1790, %v1798
        %v1852 = vsel %vm1831, %v1776, %v1784
        %v1853 = vsel %vm1831, %v1778, %v1786
        %v1854 = vsel %vm1831, %v1780, %v1788
        %v1855 = vsel %vm1831, %v1782, %v1790
        %v1856 = vsel %vm1831, %v1768, %v1776
        %v1857 = vsel %vm1831, %v1770, %v1778
        %v1858 = vsel %vm1831, %v1772, %v1780
        %v1859 = vsel %vm1831, %v1774, %v1782
        %v1860 = vsel %vm1831, %v1760, %v1768
        %v1861 = vsel %vm1831, %v1762, %v1770
        %v1862 = vsel %vm1831, %v1764, %v1772
        %v1863 = vsel %vm1831, %v1766, %v1774
        %v1864 = vsel %vm1831, %v1752, %v1760
        %v1865 = vsel %vm1831, %v1754, %v1762
        %v1866 = vsel %vm1831, %v1756, %v1764
        %v1867 = vsel %vm1831, %v1758, %v1766
        %v1868 = vsel %vm1831, %v1824, %v1752
        %v1869 = vsel %vm1831, %v1826, %v1754
        %v1870 = vsel %vm1831, %v1828, %v1756
        %v1871 = vsel %vm1831, %v1830, %v1758
        %1872 = vst [vmem:[#allocation2 + $0xa00] sm:$0xff] %v1864
        %1873 = vst [vmem:[#allocation2 + $0xa08] sm:$0xff] %v1860
        %1874 = vst [vmem:[#allocation2 + $0xa10] sm:$0xff] %v1856
        %1875 = vst [vmem:[#allocation2 + $0xa18] sm:$0xff] %v1852
        %1876 = vst [vmem:[#allocation2 + $0xa20] sm:$0xff] %v1848
        %1877 = vst [vmem:[#allocation2 + $0xa28] sm:$0xff] %v1844
        %1878 = vst [vmem:[#allocation2 + $0xa30] sm:$0xff] %v1840
        %1879 = vst [vmem:[#allocation2 + $0xa38] sm:$0xff] %v1836
        %1880 = vst [vmem:[#allocation2 + $0xa40] sm:$0xff] %v1832
        %1881 = vst [vmem:[#allocation2 + $0xa48] sm:$0xff] %v1868
        %1882 = vst [vmem:[#allocation2 + $0xa50] sm:$0xff] %v1865
        %1883 = vst [vmem:[#allocation2 + $0xa58] sm:$0xff] %v1861
        %1884 = vst [vmem:[#allocation2 + $0xa60] sm:$0xff] %v1857
        %1885 = vst [vmem:[#allocation2 + $0xa68] sm:$0xff] %v1853
        %1886 = vst [vmem:[#allocation2 + $0xa70] sm:$0xff] %v1849
        %1887 = vst [vmem:[#allocation2 + $0xa78] sm:$0xff] %v1845
        %1888 = vst [vmem:[#allocation2 + $0xa80] sm:$0xff] %v1841
        %1889 = vst [vmem:[#allocation2 + $0xa88] sm:$0xff] %v1837
        %1890 = vst [vmem:[#allocation2 + $0xa90] sm:$0xff] %v1833
        %1891 = vst [vmem:[#allocation2 + $0xa98] sm:$0xff] %v1869
        %1892 = vst [vmem:[#allocation2 + $0xaa0] sm:$0xff] %v1866
        %1893 = vst [vmem:[#allocation2 + $0xaa8] sm:$0xff] %v1862
        %1894 = vst [vmem:[#allocation2 + $0xab0] sm:$0xff] %v1858
        %1895 = vst [vmem:[#allocation2 + $0xab8] sm:$0xff] %v1854
        %1896 = vst [vmem:[#allocation2 + $0xac0] sm:$0xff] %v1850
        %1897 = vst [vmem:[#allocation2 + $0xac8] sm:$0xff] %v1846
        %1898 = vst [vmem:[#allocation2 + $0xad0] sm:$0xff] %v1842
        %1899 = vst [vmem:[#allocation2 + $0xad8] sm:$0xff] %v1838
        %1900 = vst [vmem:[#allocation2 + $0xae0] sm:$0xff] %v1834
        %1901 = vst [vmem:[#allocation2 + $0xae8] sm:$0xff] %v1870
        %1902 = vst [vmem:[#allocation2 + $0xaf0] sm:$0xff] %v1867
        %1903 = vst [vmem:[#allocation2 + $0xaf8] sm:$0xff] %v1863
        %1904 = vst [vmem:[#allocation2 + $0xb00] sm:$0xff] %v1859
        %1905 = vst [vmem:[#allocation2 + $0xb08] sm:$0xff] %v1855
        %1906 = vst [vmem:[#allocation2 + $0xb10] sm:$0xff] %v1851
        %1907 = vst [vmem:[#allocation2 + $0xb18] sm:$0xff] %v1847
        %1908 = vst [vmem:[#allocation2 + $0xb20] sm:$0xff] %v1843
        %1909 = vst [vmem:[#allocation2 + $0xb28] sm:$0xff] %v1839
        %1910 = vst [vmem:[#allocation2 + $0xb30] sm:$0xff] %v1835
        %1911 = vst [vmem:[#allocation2 + $0xb38] sm:$0xff] %v1871
        %v1912 = vld [vmem:[#allocation7] sm:$0xff]
        %v1913 = vld [vmem:[#allocation7 + $0x8] sm:$0xff]
        %v1914 = vld [vmem:[#allocation7 + $0x10] sm:$0xff]
        %v1915 = vld [vmem:[#allocation7 + $0x18] sm:$0xff]
        %v1916 = vld [vmem:[#allocation7 + $0x20] sm:$0xff]
        %v1917 = vld [vmem:[#allocation7 + $0x28] sm:$0xff]
        %v1918 = vld [vmem:[#allocation7 + $0x30] sm:$0xff]
        %v1919 = vld [vmem:[#allocation7 + $0x38] sm:$0xff]
        %v1920 = vld [vmem:[#allocation7 + $0x40] sm:$0xff]
        %v1921 = vld [vmem:[#allocation7 + $0x48] sm:$0xff]
        %v1922 = vld [vmem:[#allocation7 + $0x50] sm:$0xff]
        %v1923 = vld [vmem:[#allocation7 + $0x58] sm:$0xff]
        %v1924 = vld [vmem:[#allocation2] sm:$0xff]
        %v1925 = vld [vmem:[#allocation2 + $0x8] sm:$0xff]
        %v1926 = vld [vmem:[#allocation2 + $0x10] sm:$0xff]
        %v1927 = vld [vmem:[#allocation2 + $0x18] sm:$0xff]
        %v1928 = vld [vmem:[#allocation2 + $0x20] sm:$0xff]
        %v1929 = vld [vmem:[#allocation2 + $0x28] sm:$0xff]
        %v1930 = vld [vmem:[#allocation2 + $0x30] sm:$0xff]
        %v1931 = vld [vmem:[#allocation2 + $0x38] sm:$0xff]
        %v1932 = vld [vmem:[#allocation2 + $0x50] sm:$0xff]
        %v1933 = vld [vmem:[#allocation2 + $0x58] sm:$0xff]
        %v1934 = vld [vmem:[#allocation2 + $0x60] sm:$0xff]
        %v1935 = vld [vmem:[#allocation2 + $0x68] sm:$0xff]
        %v1936 = vld [vmem:[#allocation2 + $0x70] sm:$0xff]
        %v1937 = vld [vmem:[#allocation2 + $0x78] sm:$0xff]
        %v1938 = vld [vmem:[#allocation2 + $0x80] sm:$0xff]
        %v1939 = vld [vmem:[#allocation2 + $0x88] sm:$0xff]
        %v1940 = vld [vmem:[#allocation2 + $0xa0] sm:$0xff]
        %v1941 = vld [vmem:[#allocation2 + $0xa8] sm:$0xff]
        %v1942 = vld [vmem:[#allocation2 + $0xb0] sm:$0xff]
        %v1943 = vld [vmem:[#allocation2 + $0xb8] sm:$0xff]
        %v1944 = vld [vmem:[#allocation2 + $0xc0] sm:$0xff]
        %v1945 = vld [vmem:[#allocation2 + $0xc8] sm:$0xff]
        %v1946 = vld [vmem:[#allocation2 + $0xd0] sm:$0xff]
        %v1947 = vld [vmem:[#allocation2 + $0xd8] sm:$0xff]
        %v1948 = vld [vmem:[#allocation2 + $0xf0] sm:$0xff]
        %v1949 = vld [vmem:[#allocation2 + $0xf8] sm:$0xff]
        %v1950 = vld [vmem:[#allocation2 + $0x100] sm:$0xff]
        %v1951 = vld [vmem:[#allocation2 + $0x108] sm:$0xff]
        %v1952 = vld [vmem:[#allocation2 + $0x110] sm:$0xff]
        %v1953 = vld [vmem:[#allocation2 + $0x118] sm:$0xff]
        %v1954 = vld [vmem:[#allocation2 + $0x120] sm:$0xff]
        %v1955 = vld [vmem:[#allocation2 + $0x128] sm:$0xff]
        %v1956 = vld [vmem:[#allocation2 + $0x140] sm:$0xff]
        %v1957 = vld [vmem:[#allocation2 + $0x148] sm:$0xff]
        %v1958 = vld [vmem:[#allocation2 + $0x150] sm:$0xff]
        %v1959 = vld [vmem:[#allocation2 + $0x158] sm:$0xff]
        %v1960 = vld [vmem:[#allocation2 + $0x160] sm:$0xff]
        %v1961 = vld [vmem:[#allocation2 + $0x168] sm:$0xff]
        %v1962 = vld [vmem:[#allocation2 + $0x170] sm:$0xff]
        %v1963 = vld [vmem:[#allocation2 + $0x178] sm:$0xff]
        %v1964 = vld [vmem:[#allocation2 + $0x190] sm:$0xff]
        %v1965 = vld [vmem:[#allocation2 + $0x198] sm:$0xff]
        %v1966 = vld [vmem:[#allocation2 + $0x1a0] sm:$0xff]
        %v1967 = vld [vmem:[#allocation2 + $0x1a8] sm:$0xff]
        %v1968 = vld [vmem:[#allocation2 + $0x1b0] sm:$0xff]
        %v1969 = vld [vmem:[#allocation2 + $0x1b8] sm:$0xff]
        %v1970 = vld [vmem:[#allocation2 + $0x1c0] sm:$0xff]
        %v1971 = vld [vmem:[#allocation2 + $0x1c8] sm:$0xff]
        %v1972 = vld [vmem:[#allocation2 + $0x1e0] sm:$0xff]
        %v1973 = vld [vmem:[#allocation2 + $0x1e8] sm:$0xff]
        %v1974 = vld [vmem:[#allocation2 + $0x1f0] sm:$0xff]
        %v1975 = vld [vmem:[#allocation2 + $0x1f8] sm:$0xff]
        %v1976 = vld [vmem:[#allocation2 + $0x200] sm:$0xff]
        %v1977 = vld [vmem:[#allocation2 + $0x208] sm:$0xff]
        %v1978 = vld [vmem:[#allocation2 + $0x210] sm:$0xff]
        %v1979 = vld [vmem:[#allocation2 + $0x218] sm:$0xff]
        %v1980 = vld [vmem:[#allocation2 + $0x230] sm:$0xff]
        %v1981 = vld [vmem:[#allocation2 + $0x238] sm:$0xff]
        %v1982 = vld [vmem:[#allocation2 + $0x240] sm:$0xff]
        %v1983 = vld [vmem:[#allocation2 + $0x248] sm:$0xff]
        %v1984 = vld [vmem:[#allocation2 + $0x250] sm:$0xff]
        %v1985 = vld [vmem:[#allocation2 + $0x258] sm:$0xff]
        %v1986 = vld [vmem:[#allocation2 + $0x260] sm:$0xff]
        %v1987 = vld [vmem:[#allocation2 + $0x268] sm:$0xff]
        %v1988 = vld [vmem:[#allocation2 + $0x280] sm:$0xff]
        %v1989 = vld [vmem:[#allocation2 + $0x288] sm:$0xff]
        %v1990 = vld [vmem:[#allocation2 + $0x290] sm:$0xff]
        %v1991 = vld [vmem:[#allocation2 + $0x298] sm:$0xff]
        %v1992 = vld [vmem:[#allocation2 + $0x2a0] sm:$0xff]
        %v1993 = vld [vmem:[#allocation2 + $0x2a8] sm:$0xff]
        %v1994 = vld [vmem:[#allocation2 + $0x2b0] sm:$0xff]
        %v1995 = vld [vmem:[#allocation2 + $0x2b8] sm:$0xff]
        %v1996 = vld [vmem:[#allocation2 + $0x2d0] sm:$0xff]
        %v1997 = vld [vmem:[#allocation2 + $0x2d8] sm:$0xff]
        %v1998 = vld [vmem:[#allocation2 + $0x2e0] sm:$0xff]
        %v1999 = vld [vmem:[#allocation2 + $0x2e8] sm:$0xff]
        %v2000 = vld [vmem:[#allocation2 + $0x2f0] sm:$0xff]
        %v2001 = vld [vmem:[#allocation2 + $0x2f8] sm:$0xff]
        %v2002 = vld [vmem:[#allocation2 + $0x300] sm:$0xff]
        %v2003 = vld [vmem:[#allocation2 + $0x308] sm:$0xff]
        %v2004 = vld [vmem:[#allocation2 + $0x320] sm:$0xff]
        %v2005 = vld [vmem:[#allocation2 + $0x328] sm:$0xff]
        %v2006 = vld [vmem:[#allocation2 + $0x330] sm:$0xff]
        %v2007 = vld [vmem:[#allocation2 + $0x338] sm:$0xff]
        %v2008 = vld [vmem:[#allocation2 + $0x340] sm:$0xff]
        %v2009 = vld [vmem:[#allocation2 + $0x348] sm:$0xff]
        %v2010 = vld [vmem:[#allocation2 + $0x350] sm:$0xff]
        %v2011 = vld [vmem:[#allocation2 + $0x358] sm:$0xff]
        %v2012 = vld [vmem:[#allocation2 + $0x370] sm:$0xff]
        %v2013 = vld [vmem:[#allocation2 + $0x378] sm:$0xff]
        %v2014 = vld [vmem:[#allocation2 + $0x380] sm:$0xff]
        %v2015 = vld [vmem:[#allocation2 + $0x388] sm:$0xff]
        %v2016 = vld [vmem:[#allocation2 + $0x390] sm:$0xff]
        %v2017 = vld [vmem:[#allocation2 + $0x398] sm:$0xff]
        %v2018 = vld [vmem:[#allocation2 + $0x3a0] sm:$0xff]
        %v2019 = vld [vmem:[#allocation2 + $0x3a8] sm:$0xff]
        %v2020 = vld [vmem:[#allocation2 + $0x3c0] sm:$0xff]
        %v2021 = vld [vmem:[#allocation2 + $0x3c8] sm:$0xff]
        %v2022 = vld [vmem:[#allocation2 + $0x3d0] sm:$0xff]
        %v2023 = vld [vmem:[#allocation2 + $0x3d8] sm:$0xff]
        %v2024 = vld [vmem:[#allocation2 + $0x3e0] sm:$0xff]
        %v2025 = vld [vmem:[#allocation2 + $0x3e8] sm:$0xff]
        %v2026 = vld [vmem:[#allocation2 + $0x3f0] sm:$0xff]
        %v2027 = vld [vmem:[#allocation2 + $0x3f8] sm:$0xff]
        %v2028 = vld [vmem:[#allocation2 + $0x410] sm:$0xff]
        %v2029 = vld [vmem:[#allocation2 + $0x418] sm:$0xff]
        %v2030 = vld [vmem:[#allocation2 + $0x420] sm:$0xff]
        %v2031 = vld [vmem:[#allocation2 + $0x428] sm:$0xff]
        %v2032 = vld [vmem:[#allocation2 + $0x430] sm:$0xff]
        %v2033 = vld [vmem:[#allocation2 + $0x438] sm:$0xff]
        %v2034 = vld [vmem:[#allocation2 + $0x440] sm:$0xff]
        %v2035 = vld [vmem:[#allocation2 + $0x448] sm:$0xff]
        %v2036 = vld [vmem:[#allocation2 + $0x460] sm:$0xff]
        %v2037 = vld [vmem:[#allocation2 + $0x468] sm:$0xff]
        %v2038 = vld [vmem:[#allocation2 + $0x470] sm:$0xff]
        %v2039 = vld [vmem:[#allocation2 + $0x478] sm:$0xff]
        %v2040 = vld [vmem:[#allocation2 + $0x480] sm:$0xff]
        %v2041 = vld [vmem:[#allocation2 + $0x488] sm:$0xff]
        %v2042 = vld [vmem:[#allocation2 + $0x490] sm:$0xff]
        %v2043 = vld [vmem:[#allocation2 + $0x498] sm:$0xff]
        %v2044 = vld [vmem:[#allocation2 + $0x4b0] sm:$0xff]
        %v2045 = vld [vmem:[#allocation2 + $0x4b8] sm:$0xff]
        %v2046 = vld [vmem:[#allocation2 + $0x4c0] sm:$0xff]
        %v2047 = vld [vmem:[#allocation2 + $0x4c8] sm:$0xff]
        %v2048 = vld [vmem:[#allocation2 + $0x4d0] sm:$0xff]
        %v2049 = vld [vmem:[#allocation2 + $0x4d8] sm:$0xff]
        %v2050 = vld [vmem:[#allocation2 + $0x4e0] sm:$0xff]
        %v2051 = vld [vmem:[#allocation2 + $0x4e8] sm:$0xff]
        %v2052 = vld [vmem:[#allocation2 + $0x500] sm:$0xff]
        %v2053 = vld [vmem:[#allocation2 + $0x508] sm:$0xff]
        %v2054 = vld [vmem:[#allocation2 + $0x510] sm:$0xff]
        %v2055 = vld [vmem:[#allocation2 + $0x518] sm:$0xff]
        %v2056 = vld [vmem:[#allocation2 + $0x520] sm:$0xff]
        %v2057 = vld [vmem:[#allocation2 + $0x528] sm:$0xff]
        %v2058 = vld [vmem:[#allocation2 + $0x530] sm:$0xff]
        %v2059 = vld [vmem:[#allocation2 + $0x538] sm:$0xff]
        %v2060 = vld [vmem:[#allocation2 + $0x550] sm:$0xff]
        %v2061 = vld [vmem:[#allocation2 + $0x558] sm:$0xff]
        %v2062 = vld [vmem:[#allocation2 + $0x560] sm:$0xff]
        %v2063 = vld [vmem:[#allocation2 + $0x568] sm:$0xff]
        %v2064 = vld [vmem:[#allocation2 + $0x570] sm:$0xff]
        %v2065 = vld [vmem:[#allocation2 + $0x578] sm:$0xff]
        %v2066 = vld [vmem:[#allocation2 + $0x580] sm:$0xff]
        %v2067 = vld [vmem:[#allocation2 + $0x588] sm:$0xff]
        %v2068 = vld [vmem:[#allocation2 + $0x5a0] sm:$0xff]
        %v2069 = vld [vmem:[#allocation2 + $0x5a8] sm:$0xff]
        %v2070 = vld [vmem:[#allocation2 + $0x5b0] sm:$0xff]
        %v2071 = vld [vmem:[#allocation2 + $0x5b8] sm:$0xff]
        %v2072 = vld [vmem:[#allocation2 + $0x5c0] sm:$0xff]
        %v2073 = vld [vmem:[#allocation2 + $0x5c8] sm:$0xff]
        %v2074 = vld [vmem:[#allocation2 + $0x5d0] sm:$0xff]
        %v2075 = vld [vmem:[#allocation2 + $0x5d8] sm:$0xff]
        %v2076 = vld [vmem:[#allocation2 + $0x5f0] sm:$0xff]
        %v2077 = vld [vmem:[#allocation2 + $0x5f8] sm:$0xff]
        %v2078 = vld [vmem:[#allocation2 + $0x600] sm:$0xff]
        %v2079 = vld [vmem:[#allocation2 + $0x608] sm:$0xff]
        %v2080 = vld [vmem:[#allocation2 + $0x610] sm:$0xff]
        %v2081 = vld [vmem:[#allocation2 + $0x618] sm:$0xff]
        %v2082 = vld [vmem:[#allocation2 + $0x620] sm:$0xff]
        %v2083 = vld [vmem:[#allocation2 + $0x628] sm:$0xff]
        %v2084 = vld [vmem:[#allocation2 + $0x640] sm:$0xff]
        %v2085 = vld [vmem:[#allocation2 + $0x648] sm:$0xff]
        %v2086 = vld [vmem:[#allocation2 + $0x650] sm:$0xff]
        %v2087 = vld [vmem:[#allocation2 + $0x658] sm:$0xff]
        %v2088 = vld [vmem:[#allocation2 + $0x660] sm:$0xff]
        %v2089 = vld [vmem:[#allocation2 + $0x668] sm:$0xff]
        %v2090 = vld [vmem:[#allocation2 + $0x670] sm:$0xff]
        %v2091 = vld [vmem:[#allocation2 + $0x678] sm:$0xff]
        %v2092 = vld [vmem:[#allocation2 + $0x690] sm:$0xff]
        %v2093 = vld [vmem:[#allocation2 + $0x698] sm:$0xff]
        %v2094 = vld [vmem:[#allocation2 + $0x6a0] sm:$0xff]
        %v2095 = vld [vmem:[#allocation2 + $0x6a8] sm:$0xff]
        %v2096 = vld [vmem:[#allocation2 + $0x6b0] sm:$0xff]
        %v2097 = vld [vmem:[#allocation2 + $0x6b8] sm:$0xff]
        %v2098 = vld [vmem:[#allocation2 + $0x6c0] sm:$0xff]
        %v2099 = vld [vmem:[#allocation2 + $0x6c8] sm:$0xff]
        %v2100 = vld [vmem:[#allocation2 + $0x6e0] sm:$0xff]
        %v2101 = vld [vmem:[#allocation2 + $0x6e8] sm:$0xff]
        %v2102 = vld [vmem:[#allocation2 + $0x6f0] sm:$0xff]
        %v2103 = vld [vmem:[#allocation2 + $0x6f8] sm:$0xff]
        %v2104 = vld [vmem:[#allocation2 + $0x700] sm:$0xff]
        %v2105 = vld [vmem:[#allocation2 + $0x708] sm:$0xff]
        %v2106 = vld [vmem:[#allocation2 + $0x710] sm:$0xff]
        %v2107 = vld [vmem:[#allocation2 + $0x718] sm:$0xff]
        %v2108 = vld [vmem:[#allocation2 + $0x730] sm:$0xff]
        %v2109 = vld [vmem:[#allocation2 + $0x738] sm:$0xff]
        %v2110 = vld [vmem:[#allocation2 + $0x740] sm:$0xff]
        %v2111 = vld [vmem:[#allocation2 + $0x748] sm:$0xff]
        %v2112 = vld [vmem:[#allocation2 + $0x750] sm:$0xff]
        %v2113 = vld [vmem:[#allocation2 + $0x758] sm:$0xff]
        %v2114 = vld [vmem:[#allocation2 + $0x760] sm:$0xff]
        %v2115 = vld [vmem:[#allocation2 + $0x768] sm:$0xff]
        %v2116 = vld [vmem:[#allocation2 + $0x780] sm:$0xff]
        %v2117 = vld [vmem:[#allocation2 + $0x788] sm:$0xff]
        %v2118 = vld [vmem:[#allocation2 + $0x790] sm:$0xff]
        %v2119 = vld [vmem:[#allocation2 + $0x798] sm:$0xff]
        %v2120 = vld [vmem:[#allocation2 + $0x7a0] sm:$0xff]
        %v2121 = vld [vmem:[#allocation2 + $0x7a8] sm:$0xff]
        %v2122 = vld [vmem:[#allocation2 + $0x7b0] sm:$0xff]
        %v2123 = vld [vmem:[#allocation2 + $0x7b8] sm:$0xff]
        %v2124 = vld [vmem:[#allocation2 + $0x7d0] sm:$0xff]
        %v2125 = vld [vmem:[#allocation2 + $0x7d8] sm:$0xff]
        %v2126 = vld [vmem:[#allocation2 + $0x7e0] sm:$0xff]
        %v2127 = vld [vmem:[#allocation2 + $0x7e8] sm:$0xff]
        %v2128 = vld [vmem:[#allocation2 + $0x7f0] sm:$0xff]
        %v2129 = vld [vmem:[#allocation2 + $0x7f8] sm:$0xff]
        %v2130 = vld [vmem:[#allocation2 + $0x800] sm:$0xff]
        %v2131 = vld [vmem:[#allocation2 + $0x808] sm:$0xff]
        %v2132 = vld [vmem:[#allocation2 + $0x820] sm:$0xff]
        %v2133 = vld [vmem:[#allocation2 + $0x828] sm:$0xff]
        %v2134 = vld [vmem:[#allocation2 + $0x830] sm:$0xff]
        %v2135 = vld [vmem:[#allocation2 + $0x838] sm:$0xff]
        %v2136 = vld [vmem:[#allocation2 + $0x840] sm:$0xff]
        %v2137 = vld [vmem:[#allocation2 + $0x848] sm:$0xff]
        %v2138 = vld [vmem:[#allocation2 + $0x850] sm:$0xff]
        %v2139 = vld [vmem:[#allocation2 + $0x858] sm:$0xff]
        %v2140 = vld [vmem:[#allocation2 + $0x870] sm:$0xff]
        %v2141 = vld [vmem:[#allocation2 + $0x878] sm:$0xff]
        %v2142 = vld [vmem:[#allocation2 + $0x880] sm:$0xff]
        %v2143 = vld [vmem:[#allocation2 + $0x888] sm:$0xff]
        %v2144 = vld [vmem:[#allocation2 + $0x890] sm:$0xff]
        %v2145 = vld [vmem:[#allocation2 + $0x898] sm:$0xff]
        %v2146 = vld [vmem:[#allocation2 + $0x8a0] sm:$0xff]
        %v2147 = vld [vmem:[#allocation2 + $0x8a8] sm:$0xff]
        %v2148 = vld [vmem:[#allocation2 + $0x8c0] sm:$0xff]
        %v2149 = vld [vmem:[#allocation2 + $0x8c8] sm:$0xff]
        %v2150 = vld [vmem:[#allocation2 + $0x8d0] sm:$0xff]
        %v2151 = vld [vmem:[#allocation2 + $0x8d8] sm:$0xff]
        %v2152 = vld [vmem:[#allocation2 + $0x8e0] sm:$0xff]
        %v2153 = vld [vmem:[#allocation2 + $0x8e8] sm:$0xff]
        %v2154 = vld [vmem:[#allocation2 + $0x8f0] sm:$0xff]
        %v2155 = vld [vmem:[#allocation2 + $0x8f8] sm:$0xff]
        %v2156 = vld [vmem:[#allocation2 + $0x910] sm:$0xff]
        %v2157 = vld [vmem:[#allocation2 + $0x918] sm:$0xff]
        %v2158 = vld [vmem:[#allocation2 + $0x920] sm:$0xff]
        %v2159 = vld [vmem:[#allocation2 + $0x928] sm:$0xff]
        %v2160 = vld [vmem:[#allocation2 + $0x930] sm:$0xff]
        %v2161 = vld [vmem:[#allocation2 + $0x938] sm:$0xff]
        %v2162 = vld [vmem:[#allocation2 + $0x940] sm:$0xff]
        %v2163 = vld [vmem:[#allocation2 + $0x948] sm:$0xff]
        %v2164 = vld [vmem:[#allocation2 + $0x960] sm:$0xff]
        %v2165 = vld [vmem:[#allocation2 + $0x968] sm:$0xff]
        %v2166 = vld [vmem:[#allocation2 + $0x970] sm:$0xff]
        %v2167 = vld [vmem:[#allocation2 + $0x978] sm:$0xff]
        %v2168 = vld [vmem:[#allocation2 + $0x980] sm:$0xff]
        %v2169 = vld [vmem:[#allocation2 + $0x988] sm:$0xff]
        %v2170 = vld [vmem:[#allocation2 + $0x990] sm:$0xff]
        %v2171 = vld [vmem:[#allocation2 + $0x998] sm:$0xff]
        %v2172 = vld [vmem:[#allocation2 + $0x9b0] sm:$0xff]
        %v2173 = vld [vmem:[#allocation2 + $0x9b8] sm:$0xff]
        %v2174 = vld [vmem:[#allocation2 + $0x9c0] sm:$0xff]
        %v2175 = vld [vmem:[#allocation2 + $0x9c8] sm:$0xff]
        %v2176 = vld [vmem:[#allocation2 + $0x9d0] sm:$0xff]
        %v2177 = vld [vmem:[#allocation2 + $0x9d8] sm:$0xff]
        %v2178 = vld [vmem:[#allocation2 + $0x9e0] sm:$0xff]
        %v2179 = vld [vmem:[#allocation2 + $0x9e8] sm:$0xff]
        %v2180 = vld [vmem:[#allocation2 + $0xa00] sm:$0xff]
        %v2181 = vld [vmem:[#allocation2 + $0xa08] sm:$0xff]
        %v2182 = vld [vmem:[#allocation2 + $0xa10] sm:$0xff]
        %v2183 = vld [vmem:[#allocation2 + $0xa18] sm:$0xff]
        %v2184 = vld [vmem:[#allocation2 + $0xa20] sm:$0xff]
        %v2185 = vld [vmem:[#allocation2 + $0xa28] sm:$0xff]
        %v2186 = vld [vmem:[#allocation2 + $0xa30] sm:$0xff]
        %v2187 = vld [vmem:[#allocation2 + $0xa38] sm:$0xff]
        %v2188 = vld [vmem:[#allocation2 + $0xa50] sm:$0xff]
        %v2189 = vld [vmem:[#allocation2 + $0xa58] sm:$0xff]
        %v2190 = vld [vmem:[#allocation2 + $0xa60] sm:$0xff]
        %v2191 = vld [vmem:[#allocation2 + $0xa68] sm:$0xff]
        %v2192 = vld [vmem:[#allocation2 + $0xa70] sm:$0xff]
        %v2193 = vld [vmem:[#allocation2 + $0xa78] sm:$0xff]
        %v2194 = vld [vmem:[#allocation2 + $0xa80] sm:$0xff]
        %v2195 = vld [vmem:[#allocation2 + $0xa88] sm:$0xff]
        %v2196 = vld [vmem:[#allocation2 + $0xaa0] sm:$0xff]
        %v2197 = vld [vmem:[#allocation2 + $0xaa8] sm:$0xff]
        %v2198 = vld [vmem:[#allocation2 + $0xab0] sm:$0xff]
        %v2199 = vld [vmem:[#allocation2 + $0xab8] sm:$0xff]
        %v2200 = vld [vmem:[#allocation2 + $0xac0] sm:$0xff]
        %v2201 = vld [vmem:[#allocation2 + $0xac8] sm:$0xff]
        %v2202 = vld [vmem:[#allocation2 + $0xad0] sm:$0xff]
        %v2203 = vld [vmem:[#allocation2 + $0xad8] sm:$0xff]
        %v2204 = vld [vmem:[#allocation2 + $0xaf0] sm:$0xff]
        %v2205 = vld [vmem:[#allocation2 + $0xaf8] sm:$0xff]
        %v2206 = vld [vmem:[#allocation2 + $0xb00] sm:$0xff]
        %v2207 = vld [vmem:[#allocation2 + $0xb08] sm:$0xff]
        %v2208 = vld [vmem:[#allocation2 + $0xb10] sm:$0xff]
        %v2209 = vld [vmem:[#allocation2 + $0xb18] sm:$0xff]
        %v2210 = vld [vmem:[#allocation2 + $0xb20] sm:$0xff]
        %v2211 = vld [vmem:[#allocation2 + $0xb28] sm:$0xff]
        %vm2212 = vcmask 261120
        %v2214 = vsel %vm2212, %v1914, 0
        %v2217 = vsel %vm2212, %v1917, 0
        %v2220 = vsel %vm2212, %v1920, 0
        %v2223 = vsel %vm2212, %v1923, 0
        %2225 = vmatpush.msra.mxu0 %v2044
        %2226 = vmatpush.msra.mxu0 %v2036
        %2227 = vmatpush.msra.mxu0 %v2028
        %2228 = vmatpush.msra.mxu0 %v2020
        %2229 = vmatpush.msra.mxu0 %v2012
        %2230 = vmatpush.msra.mxu0 %v2004
        %2231 = vmatpush.msra.mxu0 %v1996
        %2232 = vmatpush.msra.mxu0 %v1988
        %2233 = vmatpush.msra.mxu0 %v1980
        %2234 = vmatpush.msra.mxu0 %v1972
        %2235 = vmatpush.msra.mxu0 %v1964
        %2236 = vmatpush.msra.mxu0 %v1956
        %2237 = vmatpush.msra.mxu0 %v1948
        %2238 = vmatpush.msra.mxu0 %v1940
        %2239 = vmatpush.msra.mxu0 %v1932
        %2240 = vmatpush.msra.mxu0 %v1924
        %2241 = vmatmul.f32.gmra.mxu0 %v1912
        %v2242 = vpop.f32.mrf.mxu0
        %v2243 = vadd.f32 0.0, %v2242
        %2244 = vmatmul.f32.gmra.mxu0 %v1915
        %v2245 = vpop.f32.mrf.mxu0
        %v2246 = vadd.f32 0.0, %v2245
        %2247 = vmatmul.f32.gmra.mxu0 %v1918
        %v2248 = vpop.f32.mrf.mxu0
        %v2249 = vadd.f32 0.0, %v2248
        %2250 = vmatmul.f32.gmra.mxu0 %v1921
        %v2251 = vpop.f32.mrf.mxu0
        %v2252 = vadd.f32 0.0, %v2251
        %2253 = vdwg.mxu0
        %2254 = vmatpush.msra.mxu0 %v2172
        %2255 = vmatpush.msra.mxu0 %v2164
        %2256 = vmatpush.msra.mxu0 %v2156
        %2257 = vmatpush.msra.mxu0 %v2148
        %2258 = vmatpush.msra.mxu0 %v2140
        %2259 = vmatpush.msra.mxu0 %v2132
        %2260 = vmatpush.msra.mxu0 %v2124
        %2261 = vmatpush.msra.mxu0 %v2116
        %2262 = vmatpush.msra.mxu0 %v2108
        %2263 = vmatpush.msra.mxu0 %v2100
        %2264 = vmatpush.msra.mxu0 %v2092
        %2265 = vmatpush.msra.mxu0 %v2084
        %2266 = vmatpush.msra.mxu0 %v2076
        %2267 = vmatpush.msra.mxu0 %v2068
        %2268 = vmatpush.msra.mxu0 %v2060
        %2269 = vmatpush.msra.mxu0 %v2052
        %2270 = vmatmul.f32.gmra.mxu0 %v1913
        %v2271 = vpop.f32.mrf.mxu0
        %v2272 = vadd.f32 %v2243, %v2271
        %2273 = vmatmul.f32.gmra.mxu0 %v1916
        %v2274 = vpop.f32.mrf.mxu0
        %v2275 = vadd.f32 %v2246, %v2274
        %2276 = vmatmul.f32.gmra.mxu0 %v1919
        %v2277 = vpop.f32.mrf.mxu0
        %v2278 = vadd.f32 %v2249, %v2277
        %2279 = vmatmul.f32.gmra.mxu0 %v1922
        %v2280 = vpop.f32.mrf.mxu0
        %v2281 = vadd.f32 %v2252, %v2280
        %2282 = vdwg.mxu0
        %2283 = vmatpush.msra.mxu0 0.0
        %2284 = vmatpush.msra.mxu0 0.0
        %2285 = vmatpush.msra.mxu0 0.0
        %2286 = vmatpush.msra.mxu0 0.0
        %2287 = vmatpush.msra.mxu0 0.0
        %2288 = vmatpush.msra.mxu0 0.0
        %2289 = vmatpush.msra.mxu0 0.0
        %2290 = vmatpush.msra.mxu0 0.0
        %2291 = vmatpush.msra.mxu0 0.0
        %2292 = vmatpush.msra.mxu0 0.0
        %2293 = vmatpush.msra.mxu0 0.0
        %2294 = vmatpush.msra.mxu0 0.0
        %2295 = vmatpush.msra.mxu0 %v2204
        %2296 = vmatpush.msra.mxu0 %v2196
        %2297 = vmatpush.msra.mxu0 %v2188
        %2298 = vmatpush.msra.mxu0 %v2180
        %2299 = vmatmul.f32.gmra.mxu0 %v2214
        %v2300 = vpop.f32.mrf.mxu0
        %v2301 = vadd.f32 %v2272, %v2300
        %2302 = vmatmul.f32.gmra.mxu0 %v2217
        %v2303 = vpop.f32.mrf.mxu0
        %v2304 = vadd.f32 %v2275, %v2303
        %2305 = vmatmul.f32.gmra.mxu0 %v2220
        %v2306 = vpop.f32.mrf.mxu0
        %v2307 = vadd.f32 %v2278, %v2306
        %2308 = vmatmul.f32.gmra.mxu0 %v2223
        %v2309 = vpop.f32.mrf.mxu0
        %v2310 = vadd.f32 %v2281, %v2309
        %2311 = vdwg.mxu0
        %2312 = vmatpush.msra.mxu0 %v2045
        %2313 = vmatpush.msra.mxu0 %v2037
        %2314 = vmatpush.msra.mxu0 %v2029
        %2315 = vmatpush.msra.mxu0 %v2021
        %2316 = vmatpush.msra.mxu0 %v2013
        %2317 = vmatpush.msra.mxu0 %v2005
        %2318 = vmatpush.msra.mxu0 %v1997
        %2319 = vmatpush.msra.mxu0 %v1989
        %2320 = vmatpush.msra.mxu0 %v1981
        %2321 = vmatpush.msra.mxu0 %v1973
        %2322 = vmatpush.msra.mxu0 %v1965
        %2323 = vmatpush.msra.mxu0 %v1957
        %2324 = vmatpush.msra.mxu0 %v1949
        %2325 = vmatpush.msra.mxu0 %v1941
        %2326 = vmatpush.msra.mxu0 %v1933
        %2327 = vmatpush.msra.mxu0 %v1925
        %2328 = vmatmul.f32.gmra.mxu0 %v1912
        %v2329 = vpop.f32.mrf.mxu0
        %v2330 = vadd.f32 0.0, %v2329
        %2331 = vmatmul.f32.gmra.mxu0 %v1915
        %v2332 = vpop.f32.mrf.mxu0
        %v2333 = vadd.f32 0.0, %v2332
        %2334 = vmatmul.f32.gmra.mxu0 %v1918
        %v2335 = vpop.f32.mrf.mxu0
        %v2336 = vadd.f32 0.0, %v2335
        %2337 = vmatmul.f32.gmra.mxu0 %v1921
        %v2338 = vpop.f32.mrf.mxu0
        %v2339 = vadd.f32 0.0, %v2338
        %2340 = vdwg.mxu0
        %2341 = vmatpush.msra.mxu0 %v2173
        %2342 = vmatpush.msra.mxu0 %v2165
        %2343 = vmatpush.msra.mxu0 %v2157
        %2344 = vmatpush.msra.mxu0 %v2149
        %2345 = vmatpush.msra.mxu0 %v2141
        %2346 = vmatpush.msra.mxu0 %v2133
        %2347 = vmatpush.msra.mxu0 %v2125
        %2348 = vmatpush.msra.mxu0 %v2117
        %2349 = vmatpush.msra.mxu0 %v2109
        %2350 = vmatpush.msra.mxu0 %v2101
        %2351 = vmatpush.msra.mxu0 %v2093
        %2352 = vmatpush.msra.mxu0 %v2085
        %2353 = vmatpush.msra.mxu0 %v2077
        %2354 = vmatpush.msra.mxu0 %v2069
        %2355 = vmatpush.msra.mxu0 %v2061
        %2356 = vmatpush.msra.mxu0 %v2053
        %2357 = vmatmul.f32.gmra.mxu0 %v1913
        %v2358 = vpop.f32.mrf.mxu0
        %v2359 = vadd.f32 %v2330, %v2358
        %2360 = vmatmul.f32.gmra.mxu0 %v1916
        %v2361 = vpop.f32.mrf.mxu0
        %v2362 = vadd.f32 %v2333, %v2361
        %2363 = vmatmul.f32.gmra.mxu0 %v1919
        %v2364 = vpop.f32.mrf.mxu0
        %v2365 = vadd.f32 %v2336, %v2364
        %2366 = vmatmul.f32.gmra.mxu0 %v1922
        %v2367 = vpop.f32.mrf.mxu0
        %v2368 = vadd.f32 %v2339, %v2367
        %2369 = vdwg.mxu0
        %2370 = vmatpush.msra.mxu0 0.0
        %2371 = vmatpush.msra.mxu0 0.0
        %2372 = vmatpush.msra.mxu0 0.0
        %2373 = vmatpush.msra.mxu0 0.0
        %2374 = vmatpush.msra.mxu0 0.0
        %2375 = vmatpush.msra.mxu0 0.0
        %2376 = vmatpush.msra.mxu0 0.0
        %2377 = vmatpush.msra.mxu0 0.0
        %2378 = vmatpush.msra.mxu0 0.0
        %2379 = vmatpush.msra.mxu0 0.0
        %2380 = vmatpush.msra.mxu0 0.0
        %2381 = vmatpush.msra.mxu0 0.0
        %2382 = vmatpush.msra.mxu0 %v2205
        %2383 = vmatpush.msra.mxu0 %v2197
        %2384 = vmatpush.msra.mxu0 %v2189
        %2385 = vmatpush.msra.mxu0 %v2181
        %2386 = vmatmul.f32.gmra.mxu0 %v2214
        %v2387 = vpop.f32.mrf.mxu0
        %v2388 = vadd.f32 %v2359, %v2387
        %2389 = vmatmul.f32.gmra.mxu0 %v2217
        %v2390 = vpop.f32.mrf.mxu0
        %v2391 = vadd.f32 %v2362, %v2390
        %2392 = vmatmul.f32.gmra.mxu0 %v2220
        %v2393 = vpop.f32.mrf.mxu0
        %v2394 = vadd.f32 %v2365, %v2393
        %2395 = vmatmul.f32.gmra.mxu0 %v2223
        %v2396 = vpop.f32.mrf.mxu0
        %v2397 = vadd.f32 %v2368, %v2396
        %2398 = vdwg.mxu0
        %2399 = vmatpush.msra.mxu0 %v2046
        %2400 = vmatpush.msra.mxu0 %v2038
        %2401 = vmatpush.msra.mxu0 %v2030
        %2402 = vmatpush.msra.mxu0 %v2022
        %2403 = vmatpush.msra.mxu0 %v2014
        %2404 = vmatpush.msra.mxu0 %v2006
        %2405 = vmatpush.msra.mxu0 %v1998
        %2406 = vmatpush.msra.mxu0 %v1990
        %2407 = vmatpush.msra.mxu0 %v1982
        %2408 = vmatpush.msra.mxu0 %v1974
        %2409 = vmatpush.msra.mxu0 %v1966
        %2410 = vmatpush.msra.mxu0 %v1958
        %2411 = vmatpush.msra.mxu0 %v1950
        %2412 = vmatpush.msra.mxu0 %v1942
        %2413 = vmatpush.msra.mxu0 %v1934
        %2414 = vmatpush.msra.mxu0 %v1926
        %2415 = vmatmul.f32.gmra.mxu0 %v1912
        %v2416 = vpop.f32.mrf.mxu0
        %v2417 = vadd.f32 0.0, %v2416
        %2418 = vmatmul.f32.gmra.mxu0 %v1915
        %v2419 = vpop.f32.mrf.mxu0
        %v2420 = vadd.f32 0.0, %v2419
        %2421 = vmatmul.f32.gmra.mxu0 %v1918
        %v2422 = vpop.f32.mrf.mxu0
        %v2423 = vadd.f32 0.0, %v2422
        %2424 = vmatmul.f32.gmra.mxu0 %v1921
        %v2425 = vpop.f32.mrf.mxu0
        %v2426 = vadd.f32 0.0, %v2425
        %2427 = vdwg.mxu0
        %2428 = vmatpush.msra.mxu0 %v2174
        %2429 = vmatpush.msra.mxu0 %v2166
        %2430 = vmatpush.msra.mxu0 %v2158
        %2431 = vmatpush.msra.mxu0 %v2150
        %2432 = vmatpush.msra.mxu0 %v2142
        %2433 = vmatpush.msra.mxu0 %v2134
        %2434 = vmatpush.msra.mxu0 %v2126
        %2435 = vmatpush.msra.mxu0 %v2118
        %2436 = vmatpush.msra.mxu0 %v2110
        %2437 = vmatpush.msra.mxu0 %v2102
        %2438 = vmatpush.msra.mxu0 %v2094
        %2439 = vmatpush.msra.mxu0 %v2086
        %2440 = vmatpush.msra.mxu0 %v2078
        %2441 = vmatpush.msra.mxu0 %v2070
        %2442 = vmatpush.msra.mxu0 %v2062
        %2443 = vmatpush.msra.mxu0 %v2054
        %2444 = vmatmul.f32.gmra.mxu0 %v1913
        %v2445 = vpop.f32.mrf.mxu0
        %v2446 = vadd.f32 %v2417, %v2445
        %2447 = vmatmul.f32.gmra.mxu0 %v1916
        %v2448 = vpop.f32.mrf.mxu0
        %v2449 = vadd.f32 %v2420, %v2448
        %2450 = vmatmul.f32.gmra.mxu0 %v1919
        %v2451 = vpop.f32.mrf.mxu0
        %v2452 = vadd.f32 %v2423, %v2451
        %2453 = vmatmul.f32.gmra.mxu0 %v1922
        %v2454 = vpop.f32.mrf.mxu0
        %v2455 = vadd.f32 %v2426, %v2454
        %2456 = vdwg.mxu0
        %2457 = vmatpush.msra.mxu0 0.0
        %2458 = vmatpush.msra.mxu0 0.0
        %2459 = vmatpush.msra.mxu0 0.0
        %2460 = vmatpush.msra.mxu0 0.0
        %2461 = vmatpush.msra.mxu0 0.0
        %2462 = vmatpush.msra.mxu0 0.0
        %2463 = vmatpush.msra.mxu0 0.0
        %2464 = vmatpush.msra.mxu0 0.0
        %2465 = vmatpush.msra.mxu0 0.0
        %2466 = vmatpush.msra.mxu0 0.0
        %2467 = vmatpush.msra.mxu0 0.0
        %2468 = vmatpush.msra.mxu0 0.0
        %2469 = vmatpush.msra.mxu0 %v2206
        %2470 = vmatpush.msra.mxu0 %v2198
        %2471 = vmatpush.msra.mxu0 %v2190
        %2472 = vmatpush.msra.mxu0 %v2182
        %2473 = vmatmul.f32.gmra.mxu0 %v2214
        %v2474 = vpop.f32.mrf.mxu0
        %v2475 = vadd.f32 %v2446, %v2474
        %2476 = vmatmul.f32.gmra.mxu0 %v2217
        %v2477 = vpop.f32.mrf.mxu0
        %v2478 = vadd.f32 %v2449, %v2477
        %2479 = vmatmul.f32.gmra.mxu0 %v2220
        %v2480 = vpop.f32.mrf.mxu0
        %v2481 = vadd.f32 %v2452, %v2480
        %2482 = vmatmul.f32.gmra.mxu0 %v2223
        %v2483 = vpop.f32.mrf.mxu0
        %v2484 = vadd.f32 %v2455, %v2483
        %2485 = vdwg.mxu0
        %2486 = vmatpush.msra.mxu0 %v2047
        %2487 = vmatpush.msra.mxu0 %v2039
        %2488 = vmatpush.msra.mxu0 %v2031
        %2489 = vmatpush.msra.mxu0 %v2023
        %2490 = vmatpush.msra.mxu0 %v2015
        %2491 = vmatpush.msra.mxu0 %v2007
        %2492 = vmatpush.msra.mxu0 %v1999
        %2493 = vmatpush.msra.mxu0 %v1991
        %2494 = vmatpush.msra.mxu0 %v1983
        %2495 = vmatpush.msra.mxu0 %v1975
        %2496 = vmatpush.msra.mxu0 %v1967
        %2497 = vmatpush.msra.mxu0 %v1959
        %2498 = vmatpush.msra.mxu0 %v1951
        %2499 = vmatpush.msra.mxu0 %v1943
        %2500 = vmatpush.msra.mxu0 %v1935
        %2501 = vmatpush.msra.mxu0 %v1927
        %2502 = vmatmul.f32.gmra.mxu0 %v1912
        %v2503 = vpop.f32.mrf.mxu0
        %v2504 = vadd.f32 0.0, %v2503
        %2505 = vmatmul.f32.gmra.mxu0 %v1915
        %v2506 = vpop.f32.mrf.mxu0
        %v2507 = vadd.f32 0.0, %v2506
        %2508 = vmatmul.f32.gmra.mxu0 %v1918
        %v2509 = vpop.f32.mrf.mxu0
        %v2510 = vadd.f32 0.0, %v2509
        %2511 = vmatmul.f32.gmra.mxu0 %v1921
        %v2512 = vpop.f32.mrf.mxu0
        %v2513 = vadd.f32 0.0, %v2512
        %2514 = vdwg.mxu0
        %2515 = vmatpush.msra.mxu0 %v2175
        %2516 = vmatpush.msra.mxu0 %v2167
        %2517 = vmatpush.msra.mxu0 %v2159
        %2518 = vmatpush.msra.mxu0 %v2151
        %2519 = vmatpush.msra.mxu0 %v2143
        %2520 = vmatpush.msra.mxu0 %v2135
        %2521 = vmatpush.msra.mxu0 %v2127
        %2522 = vmatpush.msra.mxu0 %v2119
        %2523 = vmatpush.msra.mxu0 %v2111
        %2524 = vmatpush.msra.mxu0 %v2103
        %2525 = vmatpush.msra.mxu0 %v2095
        %2526 = vmatpush.msra.mxu0 %v2087
        %2527 = vmatpush.msra.mxu0 %v2079
        %2528 = vmatpush.msra.mxu0 %v2071
        %2529 = vmatpush.msra.mxu0 %v2063
        %2530 = vmatpush.msra.mxu0 %v2055
        %2531 = vmatmul.f32.gmra.mxu0 %v1913
        %v2532 = vpop.f32.mrf.mxu0
        %v2533 = vadd.f32 %v2504, %v2532
        %2534 = vmatmul.f32.gmra.mxu0 %v1916
        %v2535 = vpop.f32.mrf.mxu0
        %v2536 = vadd.f32 %v2507, %v2535
        %2537 = vmatmul.f32.gmra.mxu0 %v1919
        %v2538 = vpop.f32.mrf.mxu0
        %v2539 = vadd.f32 %v2510, %v2538
        %2540 = vmatmul.f32.gmra.mxu0 %v1922
        %v2541 = vpop.f32.mrf.mxu0
        %v2542 = vadd.f32 %v2513, %v2541
        %2543 = vdwg.mxu0
        %2544 = vmatpush.msra.mxu0 0.0
        %2545 = vmatpush.msra.mxu0 0.0
        %2546 = vmatpush.msra.mxu0 0.0
        %2547 = vmatpush.msra.mxu0 0.0
        %2548 = vmatpush.msra.mxu0 0.0
        %2549 = vmatpush.msra.mxu0 0.0
        %2550 = vmatpush.msra.mxu0 0.0
        %2551 = vmatpush.msra.mxu0 0.0
        %2552 = vmatpush.msra.mxu0 0.0
        %2553 = vmatpush.msra.mxu0 0.0
        %2554 = vmatpush.msra.mxu0 0.0
        %2555 = vmatpush.msra.mxu0 0.0
        %2556 = vmatpush.msra.mxu0 %v2207
        %2557 = vmatpush.msra.mxu0 %v2199
        %2558 = vmatpush.msra.mxu0 %v2191
        %2559 = vmatpush.msra.mxu0 %v2183
        %2560 = vmatmul.f32.gmra.mxu0 %v2214
        %v2561 = vpop.f32.mrf.mxu0
        %v2562 = vadd.f32 %v2533, %v2561
        %2563 = vmatmul.f32.gmra.mxu0 %v2217
        %v2564 = vpop.f32.mrf.mxu0
        %v2565 = vadd.f32 %v2536, %v2564
        %2566 = vmatmul.f32.gmra.mxu0 %v2220
        %v2567 = vpop.f32.mrf.mxu0
        %v2568 = vadd.f32 %v2539, %v2567
        %2569 = vmatmul.f32.gmra.mxu0 %v2223
        %v2570 = vpop.f32.mrf.mxu0
        %v2571 = vadd.f32 %v2542, %v2570
        %2572 = vdwg.mxu0
        %2573 = vmatpush.msra.mxu0 %v2048
        %2574 = vmatpush.msra.mxu0 %v2040
        %2575 = vmatpush.msra.mxu0 %v2032
        %2576 = vmatpush.msra.mxu0 %v2024
        %2577 = vmatpush.msra.mxu0 %v2016
        %2578 = vmatpush.msra.mxu0 %v2008
        %2579 = vmatpush.msra.mxu0 %v2000
        %2580 = vmatpush.msra.mxu0 %v1992
        %2581 = vmatpush.msra.mxu0 %v1984
        %2582 = vmatpush.msra.mxu0 %v1976
        %2583 = vmatpush.msra.mxu0 %v1968
        %2584 = vmatpush.msra.mxu0 %v1960
        %2585 = vmatpush.msra.mxu0 %v1952
        %2586 = vmatpush.msra.mxu0 %v1944
        %2587 = vmatpush.msra.mxu0 %v1936
        %2588 = vmatpush.msra.mxu0 %v1928
        %2589 = vmatmul.f32.gmra.mxu0 %v1912
        %v2590 = vpop.f32.mrf.mxu0
        %v2591 = vadd.f32 0.0, %v2590
        %2592 = vmatmul.f32.gmra.mxu0 %v1915
        %v2593 = vpop.f32.mrf.mxu0
        %v2594 = vadd.f32 0.0, %v2593
        %2595 = vmatmul.f32.gmra.mxu0 %v1918
        %v2596 = vpop.f32.mrf.mxu0
        %v2597 = vadd.f32 0.0, %v2596
        %2598 = vmatmul.f32.gmra.mxu0 %v1921
        %v2599 = vpop.f32.mrf.mxu0
        %v2600 = vadd.f32 0.0, %v2599
        %2601 = vdwg.mxu0
        %2602 = vmatpush.msra.mxu0 %v2176
        %2603 = vmatpush.msra.mxu0 %v2168
        %2604 = vmatpush.msra.mxu0 %v2160
        %2605 = vmatpush.msra.mxu0 %v2152
        %2606 = vmatpush.msra.mxu0 %v2144
        %2607 = vmatpush.msra.mxu0 %v2136
        %2608 = vmatpush.msra.mxu0 %v2128
        %2609 = vmatpush.msra.mxu0 %v2120
        %2610 = vmatpush.msra.mxu0 %v2112
        %2611 = vmatpush.msra.mxu0 %v2104
        %2612 = vmatpush.msra.mxu0 %v2096
        %2613 = vmatpush.msra.mxu0 %v2088
        %2614 = vmatpush.msra.mxu0 %v2080
        %2615 = vmatpush.msra.mxu0 %v2072
        %2616 = vmatpush.msra.mxu0 %v2064
        %2617 = vmatpush.msra.mxu0 %v2056
        %2618 = vmatmul.f32.gmra.mxu0 %v1913
        %v2619 = vpop.f32.mrf.mxu0
        %v2620 = vadd.f32 %v2591, %v2619
        %2621 = vmatmul.f32.gmra.mxu0 %v1916
        %v2622 = vpop.f32.mrf.mxu0
        %v2623 = vadd.f32 %v2594, %v2622
        %2624 = vmatmul.f32.gmra.mxu0 %v1919
        %v2625 = vpop.f32.mrf.mxu0
        %v2626 = vadd.f32 %v2597, %v2625
        %2627 = vmatmul.f32.gmra.mxu0 %v1922
        %v2628 = vpop.f32.mrf.mxu0
        %v2629 = vadd.f32 %v2600, %v2628
        %2630 = vdwg.mxu0
        %2631 = vmatpush.msra.mxu0 0.0
        %2632 = vmatpush.msra.mxu0 0.0
        %2633 = vmatpush.msra.mxu0 0.0
        %2634 = vmatpush.msra.mxu0 0.0
        %2635 = vmatpush.msra.mxu0 0.0
        %2636 = vmatpush.msra.mxu0 0.0
        %2637 = vmatpush.msra.mxu0 0.0
        %2638 = vmatpush.msra.mxu0 0.0
        %2639 = vmatpush.msra.mxu0 0.0
        %2640 = vmatpush.msra.mxu0 0.0
        %2641 = vmatpush.msra.mxu0 0.0
        %2642 = vmatpush.msra.mxu0 0.0
        %2643 = vmatpush.msra.mxu0 %v2208
        %2644 = vmatpush.msra.mxu0 %v2200
        %2645 = vmatpush.msra.mxu0 %v2192
        %2646 = vmatpush.msra.mxu0 %v2184
        %2647 = vmatmul.f32.gmra.mxu0 %v2214
        %v2648 = vpop.f32.mrf.mxu0
        %v2649 = vadd.f32 %v2620, %v2648
        %2650 = vmatmul.f32.gmra.mxu0 %v2217
        %v2651 = vpop.f32.mrf.mxu0
        %v2652 = vadd.f32 %v2623, %v2651
        %2653 = vmatmul.f32.gmra.mxu0 %v2220
        %v2654 = vpop.f32.mrf.mxu0
        %v2655 = vadd.f32 %v2626, %v2654
        %2656 = vmatmul.f32.gmra.mxu0 %v2223
        %v2657 = vpop.f32.mrf.mxu0
        %v2658 = vadd.f32 %v2629, %v2657
        %2659 = vdwg.mxu0
        %2660 = vmatpush.msra.mxu0 %v2049
        %2661 = vmatpush.msra.mxu0 %v2041
        %2662 = vmatpush.msra.mxu0 %v2033
        %2663 = vmatpush.msra.mxu0 %v2025
        %2664 = vmatpush.msra.mxu0 %v2017
        %2665 = vmatpush.msra.mxu0 %v2009
        %2666 = vmatpush.msra.mxu0 %v2001
        %2667 = vmatpush.msra.mxu0 %v1993
        %2668 = vmatpush.msra.mxu0 %v1985
        %2669 = vmatpush.msra.mxu0 %v1977
        %2670 = vmatpush.msra.mxu0 %v1969
        %2671 = vmatpush.msra.mxu0 %v1961
        %2672 = vmatpush.msra.mxu0 %v1953
        %2673 = vmatpush.msra.mxu0 %v1945
        %2674 = vmatpush.msra.mxu0 %v1937
        %2675 = vmatpush.msra.mxu0 %v1929
        %2676 = vmatmul.f32.gmra.mxu0 %v1912
        %v2677 = vpop.f32.mrf.mxu0
        %v2678 = vadd.f32 0.0, %v2677
        %2679 = vmatmul.f32.gmra.mxu0 %v1915
        %v2680 = vpop.f32.mrf.mxu0
        %v2681 = vadd.f32 0.0, %v2680
        %2682 = vmatmul.f32.gmra.mxu0 %v1918
        %v2683 = vpop.f32.mrf.mxu0
        %v2684 = vadd.f32 0.0, %v2683
        %2685 = vmatmul.f32.gmra.mxu0 %v1921
        %v2686 = vpop.f32.mrf.mxu0
        %v2687 = vadd.f32 0.0, %v2686
        %2688 = vdwg.mxu0
        %2689 = vmatpush.msra.mxu0 %v2177
        %2690 = vmatpush.msra.mxu0 %v2169
        %2691 = vmatpush.msra.mxu0 %v2161
        %2692 = vmatpush.msra.mxu0 %v2153
        %2693 = vmatpush.msra.mxu0 %v2145
        %2694 = vmatpush.msra.mxu0 %v2137
        %2695 = vmatpush.msra.mxu0 %v2129
        %2696 = vmatpush.msra.mxu0 %v2121
        %2697 = vmatpush.msra.mxu0 %v2113
        %2698 = vmatpush.msra.mxu0 %v2105
        %2699 = vmatpush.msra.mxu0 %v2097
        %2700 = vmatpush.msra.mxu0 %v2089
        %2701 = vmatpush.msra.mxu0 %v2081
        %2702 = vmatpush.msra.mxu0 %v2073
        %2703 = vmatpush.msra.mxu0 %v2065
        %2704 = vmatpush.msra.mxu0 %v2057
        %2705 = vmatmul.f32.gmra.mxu0 %v1913
        %v2706 = vpop.f32.mrf.mxu0
        %v2707 = vadd.f32 %v2678, %v2706
        %2708 = vmatmul.f32.gmra.mxu0 %v1916
        %v2709 = vpop.f32.mrf.mxu0
        %v2710 = vadd.f32 %v2681, %v2709
        %2711 = vmatmul.f32.gmra.mxu0 %v1919
        %v2712 = vpop.f32.mrf.mxu0
        %v2713 = vadd.f32 %v2684, %v2712
        %2714 = vmatmul.f32.gmra.mxu0 %v1922
        %v2715 = vpop.f32.mrf.mxu0
        %v2716 = vadd.f32 %v2687, %v2715
        %2717 = vdwg.mxu0
        %2718 = vmatpush.msra.mxu0 0.0
        %2719 = vmatpush.msra.mxu0 0.0
        %2720 = vmatpush.msra.mxu0 0.0
        %2721 = vmatpush.msra.mxu0 0.0
        %2722 = vmatpush.msra.mxu0 0.0
        %2723 = vmatpush.msra.mxu0 0.0
        %2724 = vmatpush.msra.mxu0 0.0
        %2725 = vmatpush.msra.mxu0 0.0
        %2726 = vmatpush.msra.mxu0 0.0
        %2727 = vmatpush.msra.mxu0 0.0
        %2728 = vmatpush.msra.mxu0 0.0
        %2729 = vmatpush.msra.mxu0 0.0
        %2730 = vmatpush.msra.mxu0 %v2209
        %2731 = vmatpush.msra.mxu0 %v2201
        %2732 = vmatpush.msra.mxu0 %v2193
        %2733 = vmatpush.msra.mxu0 %v2185
        %2734 = vmatmul.f32.gmra.mxu0 %v2214
        %v2735 = vpop.f32.mrf.mxu0
        %v2736 = vadd.f32 %v2707, %v2735
        %2737 = vmatmul.f32.gmra.mxu0 %v2217
        %v2738 = vpop.f32.mrf.mxu0
        %v2739 = vadd.f32 %v2710, %v2738
        %2740 = vmatmul.f32.gmra.mxu0 %v2220
        %v2741 = vpop.f32.mrf.mxu0
        %v2742 = vadd.f32 %v2713, %v2741
        %2743 = vmatmul.f32.gmra.mxu0 %v2223
        %v2744 = vpop.f32.mrf.mxu0
        %v2745 = vadd.f32 %v2716, %v2744
        %2746 = vdwg.mxu0
        %2747 = vmatpush.msra.mxu0 %v2050
        %2748 = vmatpush.msra.mxu0 %v2042
        %2749 = vmatpush.msra.mxu0 %v2034
        %2750 = vmatpush.msra.mxu0 %v2026
        %2751 = vmatpush.msra.mxu0 %v2018
        %2752 = vmatpush.msra.mxu0 %v2010
        %2753 = vmatpush.msra.mxu0 %v2002
        %2754 = vmatpush.msra.mxu0 %v1994
        %2755 = vmatpush.msra.mxu0 %v1986
        %2756 = vmatpush.msra.mxu0 %v1978
        %2757 = vmatpush.msra.mxu0 %v1970
        %2758 = vmatpush.msra.mxu0 %v1962
        %2759 = vmatpush.msra.mxu0 %v1954
        %2760 = vmatpush.msra.mxu0 %v1946
        %2761 = vmatpush.msra.mxu0 %v1938
        %2762 = vmatpush.msra.mxu0 %v1930
        %2763 = vmatmul.f32.gmra.mxu0 %v1912
        %v2764 = vpop.f32.mrf.mxu0
        %v2765 = vadd.f32 0.0, %v2764
        %2766 = vmatmul.f32.gmra.mxu0 %v1915
        %v2767 = vpop.f32.mrf.mxu0
        %v2768 = vadd.f32 0.0, %v2767
        %2769 = vmatmul.f32.gmra.mxu0 %v1918
        %v2770 = vpop.f32.mrf.mxu0
        %v2771 = vadd.f32 0.0, %v2770
        %2772 = vmatmul.f32.gmra.mxu0 %v1921
        %v2773 = vpop.f32.mrf.mxu0
        %v2774 = vadd.f32 0.0, %v2773
        %2775 = vdwg.mxu0
        %2776 = vmatpush.msra.mxu0 %v2178
        %2777 = vmatpush.msra.mxu0 %v2170
        %2778 = vmatpush.msra.mxu0 %v2162
        %2779 = vmatpush.msra.mxu0 %v2154
        %2780 = vmatpush.msra.mxu0 %v2146
        %2781 = vmatpush.msra.mxu0 %v2138
        %2782 = vmatpush.msra.mxu0 %v2130
        %2783 = vmatpush.msra.mxu0 %v2122
        %2784 = vmatpush.msra.mxu0 %v2114
        %2785 = vmatpush.msra.mxu0 %v2106
        %2786 = vmatpush.msra.mxu0 %v2098
        %2787 = vmatpush.msra.mxu0 %v2090
        %2788 = vmatpush.msra.mxu0 %v2082
        %2789 = vmatpush.msra.mxu0 %v2074
        %2790 = vmatpush.msra.mxu0 %v2066
        %2791 = vmatpush.msra.mxu0 %v2058
        %2792 = vmatmul.f32.gmra.mxu0 %v1913
        %v2793 = vpop.f32.mrf.mxu0
        %v2794 = vadd.f32 %v2765, %v2793
        %2795 = vmatmul.f32.gmra.mxu0 %v1916
        %v2796 = vpop.f32.mrf.mxu0
        %v2797 = vadd.f32 %v2768, %v2796
        %2798 = vmatmul.f32.gmra.mxu0 %v1919
        %v2799 = vpop.f32.mrf.mxu0
        %v2800 = vadd.f32 %v2771, %v2799
        %2801 = vmatmul.f32.gmra.mxu0 %v1922
        %v2802 = vpop.f32.mrf.mxu0
        %v2803 = vadd.f32 %v2774, %v2802
        %2804 = vdwg.mxu0
        %2805 = vmatpush.msra.mxu0 0.0
        %2806 = vmatpush.msra.mxu0 0.0
        %2807 = vmatpush.msra.mxu0 0.0
        %2808 = vmatpush.msra.mxu0 0.0
        %2809 = vmatpush.msra.mxu0 0.0
        %2810 = vmatpush.msra.mxu0 0.0
        %2811 = vmatpush.msra.mxu0 0.0
        %2812 = vmatpush.msra.mxu0 0.0
        %2813 = vmatpush.msra.mxu0 0.0
        %2814 = vmatpush.msra.mxu0 0.0
        %2815 = vmatpush.msra.mxu0 0.0
        %2816 = vmatpush.msra.mxu0 0.0
        %2817 = vmatpush.msra.mxu0 %v2210
        %2818 = vmatpush.msra.mxu0 %v2202
        %2819 = vmatpush.msra.mxu0 %v2194
        %2820 = vmatpush.msra.mxu0 %v2186
        %2821 = vmatmul.f32.gmra.mxu0 %v2214
        %v2822 = vpop.f32.mrf.mxu0
        %v2823 = vadd.f32 %v2794, %v2822
        %2824 = vmatmul.f32.gmra.mxu0 %v2217
        %v2825 = vpop.f32.mrf.mxu0
        %v2826 = vadd.f32 %v2797, %v2825
        %2827 = vmatmul.f32.gmra.mxu0 %v2220
        %v2828 = vpop.f32.mrf.mxu0
        %v2829 = vadd.f32 %v2800, %v2828
        %2830 = vmatmul.f32.gmra.mxu0 %v2223
        %v2831 = vpop.f32.mrf.mxu0
        %v2832 = vadd.f32 %v2803, %v2831
        %2833 = vdwg.mxu0
        %2834 = vmatpush.msra.mxu0 %v2051
        %2835 = vmatpush.msra.mxu0 %v2043
        %2836 = vmatpush.msra.mxu0 %v2035
        %2837 = vmatpush.msra.mxu0 %v2027
        %2838 = vmatpush.msra.mxu0 %v2019
        %2839 = vmatpush.msra.mxu0 %v2011
        %2840 = vmatpush.msra.mxu0 %v2003
        %2841 = vmatpush.msra.mxu0 %v1995
        %2842 = vmatpush.msra.mxu0 %v1987
        %2843 = vmatpush.msra.mxu0 %v1979
        %2844 = vmatpush.msra.mxu0 %v1971
        %2845 = vmatpush.msra.mxu0 %v1963
        %2846 = vmatpush.msra.mxu0 %v1955
        %2847 = vmatpush.msra.mxu0 %v1947
        %2848 = vmatpush.msra.mxu0 %v1939
        %2849 = vmatpush.msra.mxu0 %v1931
        %2850 = vmatmul.f32.gmra.mxu0 %v1912
        %v2851 = vpop.f32.mrf.mxu0
        %v2852 = vadd.f32 0.0, %v2851
        %2853 = vmatmul.f32.gmra.mxu0 %v1915
        %v2854 = vpop.f32.mrf.mxu0
        %v2855 = vadd.f32 0.0, %v2854
        %2856 = vmatmul.f32.gmra.mxu0 %v1918
        %v2857 = vpop.f32.mrf.mxu0
        %v2858 = vadd.f32 0.0, %v2857
        %2859 = vmatmul.f32.gmra.mxu0 %v1921
        %v2860 = vpop.f32.mrf.mxu0
        %v2861 = vadd.f32 0.0, %v2860
        %2862 = vdwg.mxu0
        %2863 = vmatpush.msra.mxu0 %v2179
        %2864 = vmatpush.msra.mxu0 %v2171
        %2865 = vmatpush.msra.mxu0 %v2163
        %2866 = vmatpush.msra.mxu0 %v2155
        %2867 = vmatpush.msra.mxu0 %v2147
        %2868 = vmatpush.msra.mxu0 %v2139
        %2869 = vmatpush.msra.mxu0 %v2131
        %2870 = vmatpush.msra.mxu0 %v2123
        %2871 = vmatpush.msra.mxu0 %v2115
        %2872 = vmatpush.msra.mxu0 %v2107
        %2873 = vmatpush.msra.mxu0 %v2099
        %2874 = vmatpush.msra.mxu0 %v2091
        %2875 = vmatpush.msra.mxu0 %v2083
        %2876 = vmatpush.msra.mxu0 %v2075
        %2877 = vmatpush.msra.mxu0 %v2067
        %2878 = vmatpush.msra.mxu0 %v2059
        %2879 = vmatmul.f32.gmra.mxu0 %v1913
        %v2880 = vpop.f32.mrf.mxu0
        %v2881 = vadd.f32 %v2852, %v2880
        %2882 = vmatmul.f32.gmra.mxu0 %v1916
        %v2883 = vpop.f32.mrf.mxu0
        %v2884 = vadd.f32 %v2855, %v2883
        %2885 = vmatmul.f32.gmra.mxu0 %v1919
        %v2886 = vpop.f32.mrf.mxu0
        %v2887 = vadd.f32 %v2858, %v2886
        %2888 = vmatmul.f32.gmra.mxu0 %v1922
        %v2889 = vpop.f32.mrf.mxu0
        %v2890 = vadd.f32 %v2861, %v2889
        %2891 = vdwg.mxu0
        %2892 = vmatpush.msra.mxu0 0.0
        %2893 = vmatpush.msra.mxu0 0.0
        %2894 = vmatpush.msra.mxu0 0.0
        %2895 = vmatpush.msra.mxu0 0.0
        %2896 = vmatpush.msra.mxu0 0.0
        %2897 = vmatpush.msra.mxu0 0.0
        %2898 = vmatpush.msra.mxu0 0.0
        %2899 = vmatpush.msra.mxu0 0.0
        %2900 = vmatpush.msra.mxu0 0.0
        %2901 = vmatpush.msra.mxu0 0.0
        %2902 = vmatpush.msra.mxu0 0.0
        %2903 = vmatpush.msra.mxu0 0.0
        %2904 = vmatpush.msra.mxu0 %v2211
        %2905 = vmatpush.msra.mxu0 %v2203
        %2906 = vmatpush.msra.mxu0 %v2195
        %2907 = vmatpush.msra.mxu0 %v2187
        %2908 = vmatmul.f32.gmra.mxu0 %v2214
        %v2909 = vpop.f32.mrf.mxu0
        %v2910 = vadd.f32 %v2881, %v2909
        %2911 = vmatmul.f32.gmra.mxu0 %v2217
        %v2912 = vpop.f32.mrf.mxu0
        %v2913 = vadd.f32 %v2884, %v2912
        %2914 = vmatmul.f32.gmra.mxu0 %v2220
        %v2915 = vpop.f32.mrf.mxu0
        %v2916 = vadd.f32 %v2887, %v2915
        %2917 = vmatmul.f32.gmra.mxu0 %v2223
        %v2918 = vpop.f32.mrf.mxu0
        %v2919 = vadd.f32 %v2890, %v2918
        %2920 = vdwg.mxu0
        %2921 = vst [vmem:[#allocation3] sm:$0xff] %v2301
        %2922 = vst [vmem:[#allocation3 + $0x8] sm:$0xff] %v2388
        %2923 = vst [vmem:[#allocation3 + $0x10] sm:$0xff] %v2475
        %2924 = vst [vmem:[#allocation3 + $0x18] sm:$0xff] %v2562
        %2925 = vst [vmem:[#allocation3 + $0x20] sm:$0xff] %v2649
        %2926 = vst [vmem:[#allocation3 + $0x28] sm:$0xff] %v2736
        %2927 = vst [vmem:[#allocation3 + $0x30] sm:$0xff] %v2823
        %2928 = vst [vmem:[#allocation3 + $0x38] sm:$0xff] %v2910
        %2929 = vst [vmem:[#allocation3 + $0x40] sm:$0xff] %v2304
        %2930 = vst [vmem:[#allocation3 + $0x48] sm:$0xff] %v2391
        %2931 = vst [vmem:[#allocation3 + $0x50] sm:$0xff] %v2478
        %2932 = vst [vmem:[#allocation3 + $0x58] sm:$0xff] %v2565
        %2933 = vst [vmem:[#allocation3 + $0x60] sm:$0xff] %v2652
        %2934 = vst [vmem:[#allocation3 + $0x68] sm:$0xff] %v2739
        %2935 = vst [vmem:[#allocation3 + $0x70] sm:$0xff] %v2826
        %2936 = vst [vmem:[#allocation3 + $0x78] sm:$0xff] %v2913
        %2937 = vst [vmem:[#allocation3 + $0x80] sm:$0xff] %v2307
        %2938 = vst [vmem:[#allocation3 + $0x88] sm:$0xff] %v2394
        %2939 = vst [vmem:[#allocation3 + $0x90] sm:$0xff] %v2481
        %2940 = vst [vmem:[#allocation3 + $0x98] sm:$0xff] %v2568
        %2941 = vst [vmem:[#allocation3 + $0xa0] sm:$0xff] %v2655
        %2942 = vst [vmem:[#allocation3 + $0xa8] sm:$0xff] %v2742
        %2943 = vst [vmem:[#allocation3 + $0xb0] sm:$0xff] %v2829
        %2944 = vst [vmem:[#allocation3 + $0xb8] sm:$0xff] %v2916
        %2945 = vst [vmem:[#allocation3 + $0xc0] sm:$0xff] %v2310
        %2946 = vst [vmem:[#allocation3 + $0xc8] sm:$0xff] %v2397
        %2947 = vst [vmem:[#allocation3 + $0xd0] sm:$0xff] %v2484
        %2948 = vst [vmem:[#allocation3 + $0xd8] sm:$0xff] %v2571
        %2949 = vst [vmem:[#allocation3 + $0xe0] sm:$0xff] %v2658
        %2950 = vst [vmem:[#allocation3 + $0xe8] sm:$0xff] %v2745
        %2951 = vst [vmem:[#allocation3 + $0xf0] sm:$0xff] %v2832
        %2952 = vst [vmem:[#allocation3 + $0xf8] sm:$0xff] %v2919
        %v2953 = vld [vmem:[#allocation3] sm:$0xff]
        %v2954 = vld [vmem:[#allocation3 + $0x8] sm:$0xff]
        %v2955 = vld [vmem:[#allocation3 + $0x10] sm:$0xff]
        %v2956 = vld [vmem:[#allocation3 + $0x18] sm:$0xff]
        %v2957 = vld [vmem:[#allocation3 + $0x20] sm:$0xff]
        %v2958 = vld [vmem:[#allocation3 + $0x28] sm:$0xff]
        %v2959 = vld [vmem:[#allocation3 + $0x30] sm:$0xff]
        %v2960 = vld [vmem:[#allocation3 + $0x38] sm:$0xff]
        %v2961 = vld [vmem:[#allocation3 + $0x40] sm:$0xff]
        %v2962 = vld [vmem:[#allocation3 + $0x48] sm:$0xff]
        %v2963 = vld [vmem:[#allocation3 + $0x50] sm:$0xff]
        %v2964 = vld [vmem:[#allocation3 + $0x58] sm:$0xff]
        %v2965 = vld [vmem:[#allocation3 + $0x60] sm:$0xff]
        %v2966 = vld [vmem:[#allocation3 + $0x68] sm:$0xff]
        %v2967 = vld [vmem:[#allocation3 + $0x70] sm:$0xff]
        %v2968 = vld [vmem:[#allocation3 + $0x78] sm:$0xff]
        %v2969 = vld [vmem:[#allocation3 + $0x80] sm:$0xff]
        %v2970 = vld [vmem:[#allocation3 + $0x88] sm:$0xff]
        %v2971 = vld [vmem:[#allocation3 + $0x90] sm:$0xff]
        %v2972 = vld [vmem:[#allocation3 + $0x98] sm:$0xff]
        %v2973 = vld [vmem:[#allocation3 + $0xa0] sm:$0xff]
        %v2974 = vld [vmem:[#allocation3 + $0xa8] sm:$0xff]
        %v2975 = vld [vmem:[#allocation3 + $0xb0] sm:$0xff]
        %v2976 = vld [vmem:[#allocation3 + $0xb8] sm:$0xff]
        %v2977 = vld [vmem:[#allocation3 + $0xc0] sm:$0xff]
        %v2978 = vld [vmem:[#allocation3 + $0xc8] sm:$0xff]
        %v2979 = vld [vmem:[#allocation3 + $0xd0] sm:$0xff]
        %v2980 = vld [vmem:[#allocation3 + $0xd8] sm:$0xff]
        %v2981 = vld [vmem:[#allocation3 + $0xe0] sm:$0xff]
        %v2982 = vld [vmem:[#allocation3 + $0xe8] sm:$0xff]
        %v2983 = vld [vmem:[#allocation3 + $0xf0] sm:$0xff]
        %v2984 = vld [vmem:[#allocation3 + $0xf8] sm:$0xff]
        %s2985 = scalar_lea.vmem [#allocation7], 96
        %v2986 = vld [vmem:[%s2985] sm:$0xff]
        %v2987 = vld [vmem:[%s2985 + $0x8] sm:$0xff]
        %v2988 = vld [vmem:[%s2985 + $0x10] sm:$0xff]
        %v2989 = vld [vmem:[%s2985 + $0x18] sm:$0xff]
        %v2990 = vld [vmem:[%s2985 + $0x20] sm:$0xff]
        %v2991 = vld [vmem:[%s2985 + $0x28] sm:$0xff]
        %v2992 = vld [vmem:[%s2985 + $0x30] sm:$0xff]
        %v2993 = vld [vmem:[%s2985 + $0x38] sm:$0xff]
        %v2994 = vld [vmem:[%s2985 + $0x40] sm:$0xff]
        %v2995 = vld [vmem:[%s2985 + $0x48] sm:$0xff]
        %v2996 = vld [vmem:[%s2985 + $0x50] sm:$0xff]
        %v2997 = vld [vmem:[%s2985 + $0x58] sm:$0xff]
        %v2998 = vld [vmem:[#allocation2 + $0x8] sm:$0xff]
        %v2999 = vld [vmem:[#allocation2 + $0x10] sm:$0xff]
        %v3000 = vld [vmem:[#allocation2 + $0x18] sm:$0xff]
        %v3001 = vld [vmem:[#allocation2 + $0x20] sm:$0xff]
        %v3002 = vld [vmem:[#allocation2 + $0x28] sm:$0xff]
        %v3003 = vld [vmem:[#allocation2 + $0x30] sm:$0xff]
        %v3004 = vld [vmem:[#allocation2 + $0x38] sm:$0xff]
        %v3005 = vld [vmem:[#allocation2 + $0x40] sm:$0xff]
        %v3006 = vld [vmem:[#allocation2 + $0x58] sm:$0xff]
        %v3007 = vld [vmem:[#allocation2 + $0x60] sm:$0xff]
        %v3008 = vld [vmem:[#allocation2 + $0x68] sm:$0xff]
        %v3009 = vld [vmem:[#allocation2 + $0x70] sm:$0xff]
        %v3010 = vld [vmem:[#allocation2 + $0x78] sm:$0xff]
        %v3011 = vld [vmem:[#allocation2 + $0x80] sm:$0xff]
        %v3012 = vld [vmem:[#allocation2 + $0x88] sm:$0xff]
        %v3013 = vld [vmem:[#allocation2 + $0x90] sm:$0xff]
        %v3014 = vld [vmem:[#allocation2 + $0xa8] sm:$0xff]
        %v3015 = vld [vmem:[#allocation2 + $0xb0] sm:$0xff]
        %v3016 = vld [vmem:[#allocation2 + $0xb8] sm:$0xff]
        %v3017 = vld [vmem:[#allocation2 + $0xc0] sm:$0xff]
        %v3018 = vld [vmem:[#allocation2 + $0xc8] sm:$0xff]
        %v3019 = vld [vmem:[#allocation2 + $0xd0] sm:$0xff]
        %v3020 = vld [vmem:[#allocation2 + $0xd8] sm:$0xff]
        %v3021 = vld [vmem:[#allocation2 + $0xe0] sm:$0xff]
        %v3022 = vld [vmem:[#allocation2 + $0xf8] sm:$0xff]
        %v3023 = vld [vmem:[#allocation2 + $0x100] sm:$0xff]
        %v3024 = vld [vmem:[#allocation2 + $0x108] sm:$0xff]
        %v3025 = vld [vmem:[#allocation2 + $0x110] sm:$0xff]
        %v3026 = vld [vmem:[#allocation2 + $0x118] sm:$0xff]
        %v3027 = vld [vmem:[#allocation2 + $0x120] sm:$0xff]
        %v3028 = vld [vmem:[#allocation2 + $0x128] sm:$0xff]
        %v3029 = vld [vmem:[#allocation2 + $0x130] sm:$0xff]
        %v3030 = vld [vmem:[#allocation2 + $0x148] sm:$0xff]
        %v3031 = vld [vmem:[#allocation2 + $0x150] sm:$0xff]
        %v3032 = vld [vmem:[#allocation2 + $0x158] sm:$0xff]
        %v3033 = vld [vmem:[#allocation2 + $0x160] sm:$0xff]
        %v3034 = vld [vmem:[#allocation2 + $0x168] sm:$0xff]
        %v3035 = vld [vmem:[#allocation2 + $0x170] sm:$0xff]
        %v3036 = vld [vmem:[#allocation2 + $0x178] sm:$0xff]
        %v3037 = vld [vmem:[#allocation2 + $0x180] sm:$0xff]
        %v3038 = vld [vmem:[#allocation2 + $0x198] sm:$0xff]
        %v3039 = vld [vmem:[#allocation2 + $0x1a0] sm:$0xff]
        %v3040 = vld [vmem:[#allocation2 + $0x1a8] sm:$0xff]
        %v3041 = vld [vmem:[#allocation2 + $0x1b0] sm:$0xff]
        %v3042 = vld [vmem:[#allocation2 + $0x1b8] sm:$0xff]
        %v3043 = vld [vmem:[#allocation2 + $0x1c0] sm:$0xff]
        %v3044 = vld [vmem:[#allocation2 + $0x1c8] sm:$0xff]
        %v3045 = vld [vmem:[#allocation2 + $0x1d0] sm:$0xff]
        %v3046 = vld [vmem:[#allocation2 + $0x1e8] sm:$0xff]
        %v3047 = vld [vmem:[#allocation2 + $0x1f0] sm:$0xff]
        %v3048 = vld [vmem:[#allocation2 + $0x1f8] sm:$0xff]
        %v3049 = vld [vmem:[#allocation2 + $0x200] sm:$0xff]
        %v3050 = vld [vmem:[#allocation2 + $0x208] sm:$0xff]
        %v3051 = vld [vmem:[#allocation2 + $0x210] sm:$0xff]
        %v3052 = vld [vmem:[#allocation2 + $0x218] sm:$0xff]
        %v3053 = vld [vmem:[#allocation2 + $0x220] sm:$0xff]
        %v3054 = vld [vmem:[#allocation2 + $0x238] sm:$0xff]
        %v3055 = vld [vmem:[#allocation2 + $0x240] sm:$0xff]
        %v3056 = vld [vmem:[#allocation2 + $0x248] sm:$0xff]
        %v3057 = vld [vmem:[#allocation2 + $0x250] sm:$0xff]
        %v3058 = vld [vmem:[#allocation2 + $0x258] sm:$0xff]
        %v3059 = vld [vmem:[#allocation2 + $0x260] sm:$0xff]
        %v3060 = vld [vmem:[#allocation2 + $0x268] sm:$0xff]
        %v3061 = vld [vmem:[#allocation2 + $0x270] sm:$0xff]
        %v3062 = vld [vmem:[#allocation2 + $0x288] sm:$0xff]
        %v3063 = vld [vmem:[#allocation2 + $0x290] sm:$0xff]
        %v3064 = vld [vmem:[#allocation2 + $0x298] sm:$0xff]
        %v3065 = vld [vmem:[#allocation2 + $0x2a0] sm:$0xff]
        %v3066 = vld [vmem:[#allocation2 + $0x2a8] sm:$0xff]
        %v3067 = vld [vmem:[#allocation2 + $0x2b0] sm:$0xff]
        %v3068 = vld [vmem:[#allocation2 + $0x2b8] sm:$0xff]
        %v3069 = vld [vmem:[#allocation2 + $0x2c0] sm:$0xff]
        %v3070 = vld [vmem:[#allocation2 + $0x2d8] sm:$0xff]
        %v3071 = vld [vmem:[#allocation2 + $0x2e0] sm:$0xff]
        %v3072 = vld [vmem:[#allocation2 + $0x2e8] sm:$0xff]
        %v3073 = vld [vmem:[#allocation2 + $0x2f0] sm:$0xff]
        %v3074 = vld [vmem:[#allocation2 + $0x2f8] sm:$0xff]
        %v3075 = vld [vmem:[#allocation2 + $0x300] sm:$0xff]
        %v3076 = vld [vmem:[#allocation2 + $0x308] sm:$0xff]
        %v3077 = vld [vmem:[#allocation2 + $0x310] sm:$0xff]
        %v3078 = vld [vmem:[#allocation2 + $0x328] sm:$0xff]
        %v3079 = vld [vmem:[#allocation2 + $0x330] sm:$0xff]
        %v3080 = vld [vmem:[#allocation2 + $0x338] sm:$0xff]
        %v3081 = vld [vmem:[#allocation2 + $0x340] sm:$0xff]
        %v3082 = vld [vmem:[#allocation2 + $0x348] sm:$0xff]
        %v3083 = vld [vmem:[#allocation2 + $0x350] sm:$0xff]
        %v3084 = vld [vmem:[#allocation2 + $0x358] sm:$0xff]
        %v3085 = vld [vmem:[#allocation2 + $0x360] sm:$0xff]
        %v3086 = vld [vmem:[#allocation2 + $0x378] sm:$0xff]
        %v3087 = vld [vmem:[#allocation2 + $0x380] sm:$0xff]
        %v3088 = vld [vmem:[#allocation2 + $0x388] sm:$0xff]
        %v3089 = vld [vmem:[#allocation2 + $0x390] sm:$0xff]
        %v3090 = vld [vmem:[#allocation2 + $0x398] sm:$0xff]
        %v3091 = vld [vmem:[#allocation2 + $0x3a0] sm:$0xff]
        %v3092 = vld [vmem:[#allocation2 + $0x3a8] sm:$0xff]
        %v3093 = vld [vmem:[#allocation2 + $0x3b0] sm:$0xff]
        %v3094 = vld [vmem:[#allocation2 + $0x3c8] sm:$0xff]
        %v3095 = vld [vmem:[#allocation2 + $0x3d0] sm:$0xff]
        %v3096 = vld [vmem:[#allocation2 + $0x3d8] sm:$0xff]
        %v3097 = vld [vmem:[#allocation2 + $0x3e0] sm:$0xff]
        %v3098 = vld [vmem:[#allocation2 + $0x3e8] sm:$0xff]
        %v3099 = vld [vmem:[#allocation2 + $0x3f0] sm:$0xff]
        %v3100 = vld [vmem:[#allocation2 + $0x3f8] sm:$0xff]
        %v3101 = vld [vmem:[#allocation2 + $0x400] sm:$0xff]
        %v3102 = vld [vmem:[#allocation2 + $0x418] sm:$0xff]
        %v3103 = vld [vmem:[#allocation2 + $0x420] sm:$0xff]
        %v3104 = vld [vmem:[#allocation2 + $0x428] sm:$0xff]
        %v3105 = vld [vmem:[#allocation2 + $0x430] sm:$0xff]
        %v3106 = vld [vmem:[#allocation2 + $0x438] sm:$0xff]
        %v3107 = vld [vmem:[#allocation2 + $0x440] sm:$0xff]
        %v3108 = vld [vmem:[#allocation2 + $0x448] sm:$0xff]
        %v3109 = vld [vmem:[#allocation2 + $0x450] sm:$0xff]
        %v3110 = vld [vmem:[#allocation2 + $0x468] sm:$0xff]
        %v3111 = vld [vmem:[#allocation2 + $0x470] sm:$0xff]
        %v3112 = vld [vmem:[#allocation2 + $0x478] sm:$0xff]
        %v3113 = vld [vmem:[#allocation2 + $0x480] sm:$0xff]
        %v3114 = vld [vmem:[#allocation2 + $0x488] sm:$0xff]
        %v3115 = vld [vmem:[#allocation2 + $0x490] sm:$0xff]
        %v3116 = vld [vmem:[#allocation2 + $0x498] sm:$0xff]
        %v3117 = vld [vmem:[#allocation2 + $0x4a0] sm:$0xff]
        %v3118 = vld [vmem:[#allocation2 + $0x4b8] sm:$0xff]
        %v3119 = vld [vmem:[#allocation2 + $0x4c0] sm:$0xff]
        %v3120 = vld [vmem:[#allocation2 + $0x4c8] sm:$0xff]
        %v3121 = vld [vmem:[#allocation2 + $0x4d0] sm:$0xff]
        %v3122 = vld [vmem:[#allocation2 + $0x4d8] sm:$0xff]
        %v3123 = vld [vmem:[#allocation2 + $0x4e0] sm:$0xff]
        %v3124 = vld [vmem:[#allocation2 + $0x4e8] sm:$0xff]
        %v3125 = vld [vmem:[#allocation2 + $0x4f0] sm:$0xff]
        %v3126 = vld [vmem:[#allocation2 + $0x508] sm:$0xff]
        %v3127 = vld [vmem:[#allocation2 + $0x510] sm:$0xff]
        %v3128 = vld [vmem:[#allocation2 + $0x518] sm:$0xff]
        %v3129 = vld [vmem:[#allocation2 + $0x520] sm:$0xff]
        %v3130 = vld [vmem:[#allocation2 + $0x528] sm:$0xff]
        %v3131 = vld [vmem:[#allocation2 + $0x530] sm:$0xff]
        %v3132 = vld [vmem:[#allocation2 + $0x538] sm:$0xff]
        %v3133 = vld [vmem:[#allocation2 + $0x540] sm:$0xff]
        %v3134 = vld [vmem:[#allocation2 + $0x558] sm:$0xff]
        %v3135 = vld [vmem:[#allocation2 + $0x560] sm:$0xff]
        %v3136 = vld [vmem:[#allocation2 + $0x568] sm:$0xff]
        %v3137 = vld [vmem:[#allocation2 + $0x570] sm:$0xff]
        %v3138 = vld [vmem:[#allocation2 + $0x578] sm:$0xff]
        %v3139 = vld [vmem:[#allocation2 + $0x580] sm:$0xff]
        %v3140 = vld [vmem:[#allocation2 + $0x588] sm:$0xff]
        %v3141 = vld [vmem:[#allocation2 + $0x590] sm:$0xff]
        %v3142 = vld [vmem:[#allocation2 + $0x5a8] sm:$0xff]
        %v3143 = vld [vmem:[#allocation2 + $0x5b0] sm:$0xff]
        %v3144 = vld [vmem:[#allocation2 + $0x5b8] sm:$0xff]
        %v3145 = vld [vmem:[#allocation2 + $0x5c0] sm:$0xff]
        %v3146 = vld [vmem:[#allocation2 + $0x5c8] sm:$0xff]
        %v3147 = vld [vmem:[#allocation2 + $0x5d0] sm:$0xff]
        %v3148 = vld [vmem:[#allocation2 + $0x5d8] sm:$0xff]
        %v3149 = vld [vmem:[#allocation2 + $0x5e0] sm:$0xff]
        %v3150 = vld [vmem:[#allocation2 + $0x5f8] sm:$0xff]
        %v3151 = vld [vmem:[#allocation2 + $0x600] sm:$0xff]
        %v3152 = vld [vmem:[#allocation2 + $0x608] sm:$0xff]
        %v3153 = vld [vmem:[#allocation2 + $0x610] sm:$0xff]
        %v3154 = vld [vmem:[#allocation2 + $0x618] sm:$0xff]
        %v3155 = vld [vmem:[#allocation2 + $0x620] sm:$0xff]
        %v3156 = vld [vmem:[#allocation2 + $0x628] sm:$0xff]
        %v3157 = vld [vmem:[#allocation2 + $0x630] sm:$0xff]
        %v3158 = vld [vmem:[#allocation2 + $0x648] sm:$0xff]
        %v3159 = vld [vmem:[#allocation2 + $0x650] sm:$0xff]
        %v3160 = vld [vmem:[#allocation2 + $0x658] sm:$0xff]
        %v3161 = vld [vmem:[#allocation2 + $0x660] sm:$0xff]
        %v3162 = vld [vmem:[#allocation2 + $0x668] sm:$0xff]
        %v3163 = vld [vmem:[#allocation2 + $0x670] sm:$0xff]
        %v3164 = vld [vmem:[#allocation2 + $0x678] sm:$0xff]
        %v3165 = vld [vmem:[#allocation2 + $0x680] sm:$0xff]
        %v3166 = vld [vmem:[#allocation2 + $0x698] sm:$0xff]
        %v3167 = vld [vmem:[#allocation2 + $0x6a0] sm:$0xff]
        %v3168 = vld [vmem:[#allocation2 + $0x6a8] sm:$0xff]
        %v3169 = vld [vmem:[#allocation2 + $0x6b0] sm:$0xff]
        %v3170 = vld [vmem:[#allocation2 + $0x6b8] sm:$0xff]
        %v3171 = vld [vmem:[#allocation2 + $0x6c0] sm:$0xff]
        %v3172 = vld [vmem:[#allocation2 + $0x6c8] sm:$0xff]
        %v3173 = vld [vmem:[#allocation2 + $0x6d0] sm:$0xff]
        %v3174 = vld [vmem:[#allocation2 + $0x6e8] sm:$0xff]
        %v3175 = vld [vmem:[#allocation2 + $0x6f0] sm:$0xff]
        %v3176 = vld [vmem:[#allocation2 + $0x6f8] sm:$0xff]
        %v3177 = vld [vmem:[#allocation2 + $0x700] sm:$0xff]
        %v3178 = vld [vmem:[#allocation2 + $0x708] sm:$0xff]
        %v3179 = vld [vmem:[#allocation2 + $0x710] sm:$0xff]
        %v3180 = vld [vmem:[#allocation2 + $0x718] sm:$0xff]
        %v3181 = vld [vmem:[#allocation2 + $0x720] sm:$0xff]
        %v3182 = vld [vmem:[#allocation2 + $0x738] sm:$0xff]
        %v3183 = vld [vmem:[#allocation2 + $0x740] sm:$0xff]
        %v3184 = vld [vmem:[#allocation2 + $0x748] sm:$0xff]
        %v3185 = vld [vmem:[#allocation2 + $0x750] sm:$0xff]
        %v3186 = vld [vmem:[#allocation2 + $0x758] sm:$0xff]
        %v3187 = vld [vmem:[#allocation2 + $0x760] sm:$0xff]
        %v3188 = vld [vmem:[#allocation2 + $0x768] sm:$0xff]
        %v3189 = vld [vmem:[#allocation2 + $0x770] sm:$0xff]
        %v3190 = vld [vmem:[#allocation2 + $0x788] sm:$0xff]
        %v3191 = vld [vmem:[#allocation2 + $0x790] sm:$0xff]
        %v3192 = vld [vmem:[#allocation2 + $0x798] sm:$0xff]
        %v3193 = vld [vmem:[#allocation2 + $0x7a0] sm:$0xff]
        %v3194 = vld [vmem:[#allocation2 + $0x7a8] sm:$0xff]
        %v3195 = vld [vmem:[#allocation2 + $0x7b0] sm:$0xff]
        %v3196 = vld [vmem:[#allocation2 + $0x7b8] sm:$0xff]
        %v3197 = vld [vmem:[#allocation2 + $0x7c0] sm:$0xff]
        %v3198 = vld [vmem:[#allocation2 + $0x7d8] sm:$0xff]
        %v3199 = vld [vmem:[#allocation2 + $0x7e0] sm:$0xff]
        %v3200 = vld [vmem:[#allocation2 + $0x7e8] sm:$0xff]
        %v3201 = vld [vmem:[#allocation2 + $0x7f0] sm:$0xff]
        %v3202 = vld [vmem:[#allocation2 + $0x7f8] sm:$0xff]
        %v3203 = vld [vmem:[#allocation2 + $0x800] sm:$0xff]
        %v3204 = vld [vmem:[#allocation2 + $0x808] sm:$0xff]
        %v3205 = vld [vmem:[#allocation2 + $0x810] sm:$0xff]
        %v3206 = vld [vmem:[#allocation2 + $0x828] sm:$0xff]
        %v3207 = vld [vmem:[#allocation2 + $0x830] sm:$0xff]
        %v3208 = vld [vmem:[#allocation2 + $0x838] sm:$0xff]
        %v3209 = vld [vmem:[#allocation2 + $0x840] sm:$0xff]
        %v3210 = vld [vmem:[#allocation2 + $0x848] sm:$0xff]
        %v3211 = vld [vmem:[#allocation2 + $0x850] sm:$0xff]
        %v3212 = vld [vmem:[#allocation2 + $0x858] sm:$0xff]
        %v3213 = vld [vmem:[#allocation2 + $0x860] sm:$0xff]
        %v3214 = vld [vmem:[#allocation2 + $0x878] sm:$0xff]
        %v3215 = vld [vmem:[#allocation2 + $0x880] sm:$0xff]
        %v3216 = vld [vmem:[#allocation2 + $0x888] sm:$0xff]
        %v3217 = vld [vmem:[#allocation2 + $0x890] sm:$0xff]
        %v3218 = vld [vmem:[#allocation2 + $0x898] sm:$0xff]
        %v3219 = vld [vmem:[#allocation2 + $0x8a0] sm:$0xff]
        %v3220 = vld [vmem:[#allocation2 + $0x8a8] sm:$0xff]
        %v3221 = vld [vmem:[#allocation2 + $0x8b0] sm:$0xff]
        %v3222 = vld [vmem:[#allocation2 + $0x8c8] sm:$0xff]
        %v3223 = vld [vmem:[#allocation2 + $0x8d0] sm:$0xff]
        %v3224 = vld [vmem:[#allocation2 + $0x8d8] sm:$0xff]
        %v3225 = vld [vmem:[#allocation2 + $0x8e0] sm:$0xff]
        %v3226 = vld [vmem:[#allocation2 + $0x8e8] sm:$0xff]
        %v3227 = vld [vmem:[#allocation2 + $0x8f0] sm:$0xff]
        %v3228 = vld [vmem:[#allocation2 + $0x8f8] sm:$0xff]
        %v3229 = vld [vmem:[#allocation2 + $0x900] sm:$0xff]
        %v3230 = vld [vmem:[#allocation2 + $0x918] sm:$0xff]
        %v3231 = vld [vmem:[#allocation2 + $0x920] sm:$0xff]
        %v3232 = vld [vmem:[#allocation2 + $0x928] sm:$0xff]
        %v3233 = vld [vmem:[#allocation2 + $0x930] sm:$0xff]
        %v3234 = vld [vmem:[#allocation2 + $0x938] sm:$0xff]
        %v3235 = vld [vmem:[#allocation2 + $0x940] sm:$0xff]
        %v3236 = vld [vmem:[#allocation2 + $0x948] sm:$0xff]
        %v3237 = vld [vmem:[#allocation2 + $0x950] sm:$0xff]
        %v3238 = vld [vmem:[#allocation2 + $0x968] sm:$0xff]
        %v3239 = vld [vmem:[#allocation2 + $0x970] sm:$0xff]
        %v3240 = vld [vmem:[#allocation2 + $0x978] sm:$0xff]
        %v3241 = vld [vmem:[#allocation2 + $0x980] sm:$0xff]
        %v3242 = vld [vmem:[#allocation2 + $0x988] sm:$0xff]
        %v3243 = vld [vmem:[#allocation2 + $0x990] sm:$0xff]
        %v3244 = vld [vmem:[#allocation2 + $0x998] sm:$0xff]
        %v3245 = vld [vmem:[#allocation2 + $0x9a0] sm:$0xff]
        %v3246 = vld [vmem:[#allocation2 + $0x9b8] sm:$0xff]
        %v3247 = vld [vmem:[#allocation2 + $0x9c0] sm:$0xff]
        %v3248 = vld [vmem:[#allocation2 + $0x9c8] sm:$0xff]
        %v3249 = vld [vmem:[#allocation2 + $0x9d0] sm:$0xff]
        %v3250 = vld [vmem:[#allocation2 + $0x9d8] sm:$0xff]
        %v3251 = vld [vmem:[#allocation2 + $0x9e0] sm:$0xff]
        %v3252 = vld [vmem:[#allocation2 + $0x9e8] sm:$0xff]
        %v3253 = vld [vmem:[#allocation2 + $0x9f0] sm:$0xff]
        %v3254 = vld [vmem:[#allocation2 + $0xa08] sm:$0xff]
        %v3255 = vld [vmem:[#allocation2 + $0xa10] sm:$0xff]
        %v3256 = vld [vmem:[#allocation2 + $0xa18] sm:$0xff]
        %v3257 = vld [vmem:[#allocation2 + $0xa20] sm:$0xff]
        %v3258 = vld [vmem:[#allocation2 + $0xa28] sm:$0xff]
        %v3259 = vld [vmem:[#allocation2 + $0xa30] sm:$0xff]
        %v3260 = vld [vmem:[#allocation2 + $0xa38] sm:$0xff]
        %v3261 = vld [vmem:[#allocation2 + $0xa40] sm:$0xff]
        %v3262 = vld [vmem:[#allocation2 + $0xa58] sm:$0xff]
        %v3263 = vld [vmem:[#allocation2 + $0xa60] sm:$0xff]
        %v3264 = vld [vmem:[#allocation2 + $0xa68] sm:$0xff]
        %v3265 = vld [vmem:[#allocation2 + $0xa70] sm:$0xff]
        %v3266 = vld [vmem:[#allocation2 + $0xa78] sm:$0xff]
        %v3267 = vld [vmem:[#allocation2 + $0xa80] sm:$0xff]
        %v3268 = vld [vmem:[#allocation2 + $0xa88] sm:$0xff]
        %v3269 = vld [vmem:[#allocation2 + $0xa90] sm:$0xff]
        %v3270 = vld [vmem:[#allocation2 + $0xaa8] sm:$0xff]
        %v3271 = vld [vmem:[#allocation2 + $0xab0] sm:$0xff]
        %v3272 = vld [vmem:[#allocation2 + $0xab8] sm:$0xff]
        %v3273 = vld [vmem:[#allocation2 + $0xac0] sm:$0xff]
        %v3274 = vld [vmem:[#allocation2 + $0xac8] sm:$0xff]
        %v3275 = vld [vmem:[#allocation2 + $0xad0] sm:$0xff]
        %v3276 = vld [vmem:[#allocation2 + $0xad8] sm:$0xff]
        %v3277 = vld [vmem:[#allocation2 + $0xae0] sm:$0xff]
        %v3278 = vld [vmem:[#allocation2 + $0xaf8] sm:$0xff]
        %v3279 = vld [vmem:[#allocation2 + $0xb00] sm:$0xff]
        %v3280 = vld [vmem:[#allocation2 + $0xb08] sm:$0xff]
        %v3281 = vld [vmem:[#allocation2 + $0xb10] sm:$0xff]
        %v3282 = vld [vmem:[#allocation2 + $0xb18] sm:$0xff]
        %v3283 = vld [vmem:[#allocation2 + $0xb20] sm:$0xff]
        %v3284 = vld [vmem:[#allocation2 + $0xb28] sm:$0xff]
        %v3285 = vld [vmem:[#allocation2 + $0xb30] sm:$0xff]
        %v3287 = vsel %vm2212, %v2988, 0
        %v3290 = vsel %vm2212, %v2991, 0
        %v3293 = vsel %vm2212, %v2994, 0
        %v3296 = vsel %vm2212, %v2997, 0
        %3298 = vmatpush.msra.mxu0 %v3118
        %3299 = vmatpush.msra.mxu0 %v3110
        %3300 = vmatpush.msra.mxu0 %v3102
        %3301 = vmatpush.msra.mxu0 %v3094
        %3302 = vmatpush.msra.mxu0 %v3086
        %3303 = vmatpush.msra.mxu0 %v3078
        %3304 = vmatpush.msra.mxu0 %v3070
        %3305 = vmatpush.msra.mxu0 %v3062
        %3306 = vmatpush.msra.mxu0 %v3054
        %3307 = vmatpush.msra.mxu0 %v3046
        %3308 = vmatpush.msra.mxu0 %v3038
        %3309 = vmatpush.msra.mxu0 %v3030
        %3310 = vmatpush.msra.mxu0 %v3022
        %3311 = vmatpush.msra.mxu0 %v3014
        %3312 = vmatpush.msra.mxu0 %v3006
        %3313 = vmatpush.msra.mxu0 %v2998
        %3314 = vmatmul.f32.gmra.mxu0 %v2986
        %v3315 = vpop.f32.mrf.mxu0
        %v3316 = vadd.f32 0.0, %v3315
        %3317 = vmatmul.f32.gmra.mxu0 %v2989
        %v3318 = vpop.f32.mrf.mxu0
        %v3319 = vadd.f32 0.0, %v3318
        %3320 = vmatmul.f32.gmra.mxu0 %v2992
        %v3321 = vpop.f32.mrf.mxu0
        %v3322 = vadd.f32 0.0, %v3321
        %3323 = vmatmul.f32.gmra.mxu0 %v2995
        %v3324 = vpop.f32.mrf.mxu0
        %v3325 = vadd.f32 0.0, %v3324
        %3326 = vdwg.mxu0
        %3327 = vmatpush.msra.mxu0 %v3246
        %3328 = vmatpush.msra.mxu0 %v3238
        %3329 = vmatpush.msra.mxu0 %v3230
        %3330 = vmatpush.msra.mxu0 %v3222
        %3331 = vmatpush.msra.mxu0 %v3214
        %3332 = vmatpush.msra.mxu0 %v3206
        %3333 = vmatpush.msra.mxu0 %v3198
        %3334 = vmatpush.msra.mxu0 %v3190
        %3335 = vmatpush.msra.mxu0 %v3182
        %3336 = vmatpush.msra.mxu0 %v3174
        %3337 = vmatpush.msra.mxu0 %v3166
        %3338 = vmatpush.msra.mxu0 %v3158
        %3339 = vmatpush.msra.mxu0 %v3150
        %3340 = vmatpush.msra.mxu0 %v3142
        %3341 = vmatpush.msra.mxu0 %v3134
        %3342 = vmatpush.msra.mxu0 %v3126
        %3343 = vmatmul.f32.gmra.mxu0 %v2987
        %v3344 = vpop.f32.mrf.mxu0
        %v3345 = vadd.f32 %v3316, %v3344
        %3346 = vmatmul.f32.gmra.mxu0 %v2990
        %v3347 = vpop.f32.mrf.mxu0
        %v3348 = vadd.f32 %v3319, %v3347
        %3349 = vmatmul.f32.gmra.mxu0 %v2993
        %v3350 = vpop.f32.mrf.mxu0
        %v3351 = vadd.f32 %v3322, %v3350
        %3352 = vmatmul.f32.gmra.mxu0 %v2996
        %v3353 = vpop.f32.mrf.mxu0
        %v3354 = vadd.f32 %v3325, %v3353
        %3355 = vdwg.mxu0
        %3356 = vmatpush.msra.mxu0 0.0
        %3357 = vmatpush.msra.mxu0 0.0
        %3358 = vmatpush.msra.mxu0 0.0
        %3359 = vmatpush.msra.mxu0 0.0
        %3360 = vmatpush.msra.mxu0 0.0
        %3361 = vmatpush.msra.mxu0 0.0
        %3362 = vmatpush.msra.mxu0 0.0
        %3363 = vmatpush.msra.mxu0 0.0
        %3364 = vmatpush.msra.mxu0 0.0
        %3365 = vmatpush.msra.mxu0 0.0
        %3366 = vmatpush.msra.mxu0 0.0
        %3367 = vmatpush.msra.mxu0 0.0
        %3368 = vmatpush.msra.mxu0 %v3278
        %3369 = vmatpush.msra.mxu0 %v3270
        %3370 = vmatpush.msra.mxu0 %v3262
        %3371 = vmatpush.msra.mxu0 %v3254
        %3372 = vmatmul.f32.gmra.mxu0 %v3287
        %v3373 = vpop.f32.mrf.mxu0
        %v3374 = vadd.f32 %v3345, %v3373
        %3375 = vmatmul.f32.gmra.mxu0 %v3290
        %v3376 = vpop.f32.mrf.mxu0
        %v3377 = vadd.f32 %v3348, %v3376
        %3378 = vmatmul.f32.gmra.mxu0 %v3293
        %v3379 = vpop.f32.mrf.mxu0
        %v3380 = vadd.f32 %v3351, %v3379
        %3381 = vmatmul.f32.gmra.mxu0 %v3296
        %v3382 = vpop.f32.mrf.mxu0
        %v3383 = vadd.f32 %v3354, %v3382
        %3384 = vdwg.mxu0
        %3385 = vmatpush.msra.mxu0 %v3119
        %3386 = vmatpush.msra.mxu0 %v3111
        %3387 = vmatpush.msra.mxu0 %v3103
        %3388 = vmatpush.msra.mxu0 %v3095
        %3389 = vmatpush.msra.mxu0 %v3087
        %3390 = vmatpush.msra.mxu0 %v3079
        %3391 = vmatpush.msra.mxu0 %v3071
        %3392 = vmatpush.msra.mxu0 %v3063
        %3393 = vmatpush.msra.mxu0 %v3055
        %3394 = vmatpush.msra.mxu0 %v3047
        %3395 = vmatpush.msra.mxu0 %v3039
        %3396 = vmatpush.msra.mxu0 %v3031
        %3397 = vmatpush.msra.mxu0 %v3023
        %3398 = vmatpush.msra.mxu0 %v3015
        %3399 = vmatpush.msra.mxu0 %v3007
        %3400 = vmatpush.msra.mxu0 %v2999
        %3401 = vmatmul.f32.gmra.mxu0 %v2986
        %v3402 = vpop.f32.mrf.mxu0
        %v3403 = vadd.f32 0.0, %v3402
        %3404 = vmatmul.f32.gmra.mxu0 %v2989
        %v3405 = vpop.f32.mrf.mxu0
        %v3406 = vadd.f32 0.0, %v3405
        %3407 = vmatmul.f32.gmra.mxu0 %v2992
        %v3408 = vpop.f32.mrf.mxu0
        %v3409 = vadd.f32 0.0, %v3408
        %3410 = vmatmul.f32.gmra.mxu0 %v2995
        %v3411 = vpop.f32.mrf.mxu0
        %v3412 = vadd.f32 0.0, %v3411
        %3413 = vdwg.mxu0
        %3414 = vmatpush.msra.mxu0 %v3247
        %3415 = vmatpush.msra.mxu0 %v3239
        %3416 = vmatpush.msra.mxu0 %v3231
        %3417 = vmatpush.msra.mxu0 %v3223
        %3418 = vmatpush.msra.mxu0 %v3215
        %3419 = vmatpush.msra.mxu0 %v3207
        %3420 = vmatpush.msra.mxu0 %v3199
        %3421 = vmatpush.msra.mxu0 %v3191
        %3422 = vmatpush.msra.mxu0 %v3183
        %3423 = vmatpush.msra.mxu0 %v3175
        %3424 = vmatpush.msra.mxu0 %v3167
        %3425 = vmatpush.msra.mxu0 %v3159
        %3426 = vmatpush.msra.mxu0 %v3151
        %3427 = vmatpush.msra.mxu0 %v3143
        %3428 = vmatpush.msra.mxu0 %v3135
        %3429 = vmatpush.msra.mxu0 %v3127
        %3430 = vmatmul.f32.gmra.mxu0 %v2987
        %v3431 = vpop.f32.mrf.mxu0
        %v3432 = vadd.f32 %v3403, %v3431
        %3433 = vmatmul.f32.gmra.mxu0 %v2990
        %v3434 = vpop.f32.mrf.mxu0
        %v3435 = vadd.f32 %v3406, %v3434
        %3436 = vmatmul.f32.gmra.mxu0 %v2993
        %v3437 = vpop.f32.mrf.mxu0
        %v3438 = vadd.f32 %v3409, %v3437
        %3439 = vmatmul.f32.gmra.mxu0 %v2996
        %v3440 = vpop.f32.mrf.mxu0
        %v3441 = vadd.f32 %v3412, %v3440
        %3442 = vdwg.mxu0
        %3443 = vmatpush.msra.mxu0 0.0
        %3444 = vmatpush.msra.mxu0 0.0
        %3445 = vmatpush.msra.mxu0 0.0
        %3446 = vmatpush.msra.mxu0 0.0
        %3447 = vmatpush.msra.mxu0 0.0
        %3448 = vmatpush.msra.mxu0 0.0
        %3449 = vmatpush.msra.mxu0 0.0
        %3450 = vmatpush.msra.mxu0 0.0
        %3451 = vmatpush.msra.mxu0 0.0
        %3452 = vmatpush.msra.mxu0 0.0
        %3453 = vmatpush.msra.mxu0 0.0
        %3454 = vmatpush.msra.mxu0 0.0
        %3455 = vmatpush.msra.mxu0 %v3279
        %3456 = vmatpush.msra.mxu0 %v3271
        %3457 = vmatpush.msra.mxu0 %v3263
        %3458 = vmatpush.msra.mxu0 %v3255
        %3459 = vmatmul.f32.gmra.mxu0 %v3287
        %v3460 = vpop.f32.mrf.mxu0
        %v3461 = vadd.f32 %v3432, %v3460
        %3462 = vmatmul.f32.gmra.mxu0 %v3290
        %v3463 = vpop.f32.mrf.mxu0
        %v3464 = vadd.f32 %v3435, %v3463
        %3465 = vmatmul.f32.gmra.mxu0 %v3293
        %v3466 = vpop.f32.mrf.mxu0
        %v3467 = vadd.f32 %v3438, %v3466
        %3468 = vmatmul.f32.gmra.mxu0 %v3296
        %v3469 = vpop.f32.mrf.mxu0
        %v3470 = vadd.f32 %v3441, %v3469
        %3471 = vdwg.mxu0
        %3472 = vmatpush.msra.mxu0 %v3120
        %3473 = vmatpush.msra.mxu0 %v3112
        %3474 = vmatpush.msra.mxu0 %v3104
        %3475 = vmatpush.msra.mxu0 %v3096
        %3476 = vmatpush.msra.mxu0 %v3088
        %3477 = vmatpush.msra.mxu0 %v3080
        %3478 = vmatpush.msra.mxu0 %v3072
        %3479 = vmatpush.msra.mxu0 %v3064
        %3480 = vmatpush.msra.mxu0 %v3056
        %3481 = vmatpush.msra.mxu0 %v3048
        %3482 = vmatpush.msra.mxu0 %v3040
        %3483 = vmatpush.msra.mxu0 %v3032
        %3484 = vmatpush.msra.mxu0 %v3024
        %3485 = vmatpush.msra.mxu0 %v3016
        %3486 = vmatpush.msra.mxu0 %v3008
        %3487 = vmatpush.msra.mxu0 %v3000
        %3488 = vmatmul.f32.gmra.mxu0 %v2986
        %v3489 = vpop.f32.mrf.mxu0
        %v3490 = vadd.f32 0.0, %v3489
        %3491 = vmatmul.f32.gmra.mxu0 %v2989
        %v3492 = vpop.f32.mrf.mxu0
        %v3493 = vadd.f32 0.0, %v3492
        %3494 = vmatmul.f32.gmra.mxu0 %v2992
        %v3495 = vpop.f32.mrf.mxu0
        %v3496 = vadd.f32 0.0, %v3495
        %3497 = vmatmul.f32.gmra.mxu0 %v2995
        %v3498 = vpop.f32.mrf.mxu0
        %v3499 = vadd.f32 0.0, %v3498
        %3500 = vdwg.mxu0
        %3501 = vmatpush.msra.mxu0 %v3248
        %3502 = vmatpush.msra.mxu0 %v3240
        %3503 = vmatpush.msra.mxu0 %v3232
        %3504 = vmatpush.msra.mxu0 %v3224
        %3505 = vmatpush.msra.mxu0 %v3216
        %3506 = vmatpush.msra.mxu0 %v3208
        %3507 = vmatpush.msra.mxu0 %v3200
        %3508 = vmatpush.msra.mxu0 %v3192
        %3509 = vmatpush.msra.mxu0 %v3184
        %3510 = vmatpush.msra.mxu0 %v3176
        %3511 = vmatpush.msra.mxu0 %v3168
        %3512 = vmatpush.msra.mxu0 %v3160
        %3513 = vmatpush.msra.mxu0 %v3152
        %3514 = vmatpush.msra.mxu0 %v3144
        %3515 = vmatpush.msra.mxu0 %v3136
        %3516 = vmatpush.msra.mxu0 %v3128
        %3517 = vmatmul.f32.gmra.mxu0 %v2987
        %v3518 = vpop.f32.mrf.mxu0
        %v3519 = vadd.f32 %v3490, %v3518
        %3520 = vmatmul.f32.gmra.mxu0 %v2990
        %v3521 = vpop.f32.mrf.mxu0
        %v3522 = vadd.f32 %v3493, %v3521
        %3523 = vmatmul.f32.gmra.mxu0 %v2993
        %v3524 = vpop.f32.mrf.mxu0
        %v3525 = vadd.f32 %v3496, %v3524
        %3526 = vmatmul.f32.gmra.mxu0 %v2996
        %v3527 = vpop.f32.mrf.mxu0
        %v3528 = vadd.f32 %v3499, %v3527
        %3529 = vdwg.mxu0
        %3530 = vmatpush.msra.mxu0 0.0
        %3531 = vmatpush.msra.mxu0 0.0
        %3532 = vmatpush.msra.mxu0 0.0
        %3533 = vmatpush.msra.mxu0 0.0
        %3534 = vmatpush.msra.mxu0 0.0
        %3535 = vmatpush.msra.mxu0 0.0
        %3536 = vmatpush.msra.mxu0 0.0
        %3537 = vmatpush.msra.mxu0 0.0
        %3538 = vmatpush.msra.mxu0 0.0
        %3539 = vmatpush.msra.mxu0 0.0
        %3540 = vmatpush.msra.mxu0 0.0
        %3541 = vmatpush.msra.mxu0 0.0
        %3542 = vmatpush.msra.mxu0 %v3280
        %3543 = vmatpush.msra.mxu0 %v3272
        %3544 = vmatpush.msra.mxu0 %v3264
        %3545 = vmatpush.msra.mxu0 %v3256
        %3546 = vmatmul.f32.gmra.mxu0 %v3287
        %v3547 = vpop.f32.mrf.mxu0
        %v3548 = vadd.f32 %v3519, %v3547
        %3549 = vmatmul.f32.gmra.mxu0 %v3290
        %v3550 = vpop.f32.mrf.mxu0
        %v3551 = vadd.f32 %v3522, %v3550
        %3552 = vmatmul.f32.gmra.mxu0 %v3293
        %v3553 = vpop.f32.mrf.mxu0
        %v3554 = vadd.f32 %v3525, %v3553
        %3555 = vmatmul.f32.gmra.mxu0 %v3296
        %v3556 = vpop.f32.mrf.mxu0
        %v3557 = vadd.f32 %v3528, %v3556
        %3558 = vdwg.mxu0
        %3559 = vmatpush.msra.mxu0 %v3121
        %3560 = vmatpush.msra.mxu0 %v3113
        %3561 = vmatpush.msra.mxu0 %v3105
        %3562 = vmatpush.msra.mxu0 %v3097
        %3563 = vmatpush.msra.mxu0 %v3089
        %3564 = vmatpush.msra.mxu0 %v3081
        %3565 = vmatpush.msra.mxu0 %v3073
        %3566 = vmatpush.msra.mxu0 %v3065
        %3567 = vmatpush.msra.mxu0 %v3057
        %3568 = vmatpush.msra.mxu0 %v3049
        %3569 = vmatpush.msra.mxu0 %v3041
        %3570 = vmatpush.msra.mxu0 %v3033
        %3571 = vmatpush.msra.mxu0 %v3025
        %3572 = vmatpush.msra.mxu0 %v3017
        %3573 = vmatpush.msra.mxu0 %v3009
        %3574 = vmatpush.msra.mxu0 %v3001
        %3575 = vmatmul.f32.gmra.mxu0 %v2986
        %v3576 = vpop.f32.mrf.mxu0
        %v3577 = vadd.f32 0.0, %v3576
        %3578 = vmatmul.f32.gmra.mxu0 %v2989
        %v3579 = vpop.f32.mrf.mxu0
        %v3580 = vadd.f32 0.0, %v3579
        %3581 = vmatmul.f32.gmra.mxu0 %v2992
        %v3582 = vpop.f32.mrf.mxu0
        %v3583 = vadd.f32 0.0, %v3582
        %3584 = vmatmul.f32.gmra.mxu0 %v2995
        %v3585 = vpop.f32.mrf.mxu0
        %v3586 = vadd.f32 0.0, %v3585
        %3587 = vdwg.mxu0
        %3588 = vmatpush.msra.mxu0 %v3249
        %3589 = vmatpush.msra.mxu0 %v3241
        %3590 = vmatpush.msra.mxu0 %v3233
        %3591 = vmatpush.msra.mxu0 %v3225
        %3592 = vmatpush.msra.mxu0 %v3217
        %3593 = vmatpush.msra.mxu0 %v3209
        %3594 = vmatpush.msra.mxu0 %v3201
        %3595 = vmatpush.msra.mxu0 %v3193
        %3596 = vmatpush.msra.mxu0 %v3185
        %3597 = vmatpush.msra.mxu0 %v3177
        %3598 = vmatpush.msra.mxu0 %v3169
        %3599 = vmatpush.msra.mxu0 %v3161
        %3600 = vmatpush.msra.mxu0 %v3153
        %3601 = vmatpush.msra.mxu0 %v3145
        %3602 = vmatpush.msra.mxu0 %v3137
        %3603 = vmatpush.msra.mxu0 %v3129
        %3604 = vmatmul.f32.gmra.mxu0 %v2987
        %v3605 = vpop.f32.mrf.mxu0
        %v3606 = vadd.f32 %v3577, %v3605
        %3607 = vmatmul.f32.gmra.mxu0 %v2990
        %v3608 = vpop.f32.mrf.mxu0
        %v3609 = vadd.f32 %v3580, %v3608
        %3610 = vmatmul.f32.gmra.mxu0 %v2993
        %v3611 = vpop.f32.mrf.mxu0
        %v3612 = vadd.f32 %v3583, %v3611
        %3613 = vmatmul.f32.gmra.mxu0 %v2996
        %v3614 = vpop.f32.mrf.mxu0
        %v3615 = vadd.f32 %v3586, %v3614
        %3616 = vdwg.mxu0
        %3617 = vmatpush.msra.mxu0 0.0
        %3618 = vmatpush.msra.mxu0 0.0
        %3619 = vmatpush.msra.mxu0 0.0
        %3620 = vmatpush.msra.mxu0 0.0
        %3621 = vmatpush.msra.mxu0 0.0
        %3622 = vmatpush.msra.mxu0 0.0
        %3623 = vmatpush.msra.mxu0 0.0
        %3624 = vmatpush.msra.mxu0 0.0
        %3625 = vmatpush.msra.mxu0 0.0
        %3626 = vmatpush.msra.mxu0 0.0
        %3627 = vmatpush.msra.mxu0 0.0
        %3628 = vmatpush.msra.mxu0 0.0
        %3629 = vmatpush.msra.mxu0 %v3281
        %3630 = vmatpush.msra.mxu0 %v3273
        %3631 = vmatpush.msra.mxu0 %v3265
        %3632 = vmatpush.msra.mxu0 %v3257
        %3633 = vmatmul.f32.gmra.mxu0 %v3287
        %v3634 = vpop.f32.mrf.mxu0
        %v3635 = vadd.f32 %v3606, %v3634
        %3636 = vmatmul.f32.gmra.mxu0 %v3290
        %v3637 = vpop.f32.mrf.mxu0
        %v3638 = vadd.f32 %v3609, %v3637
        %3639 = vmatmul.f32.gmra.mxu0 %v3293
        %v3640 = vpop.f32.mrf.mxu0
        %v3641 = vadd.f32 %v3612, %v3640
        %3642 = vmatmul.f32.gmra.mxu0 %v3296
        %v3643 = vpop.f32.mrf.mxu0
        %v3644 = vadd.f32 %v3615, %v3643
        %3645 = vdwg.mxu0
        %3646 = vmatpush.msra.mxu0 %v3122
        %3647 = vmatpush.msra.mxu0 %v3114
        %3648 = vmatpush.msra.mxu0 %v3106
        %3649 = vmatpush.msra.mxu0 %v3098
        %3650 = vmatpush.msra.mxu0 %v3090
        %3651 = vmatpush.msra.mxu0 %v3082
        %3652 = vmatpush.msra.mxu0 %v3074
        %3653 = vmatpush.msra.mxu0 %v3066
        %3654 = vmatpush.msra.mxu0 %v3058
        %3655 = vmatpush.msra.mxu0 %v3050
        %3656 = vmatpush.msra.mxu0 %v3042
        %3657 = vmatpush.msra.mxu0 %v3034
        %3658 = vmatpush.msra.mxu0 %v3026
        %3659 = vmatpush.msra.mxu0 %v3018
        %3660 = vmatpush.msra.mxu0 %v3010
        %3661 = vmatpush.msra.mxu0 %v3002
        %3662 = vmatmul.f32.gmra.mxu0 %v2986
        %v3663 = vpop.f32.mrf.mxu0
        %v3664 = vadd.f32 0.0, %v3663
        %3665 = vmatmul.f32.gmra.mxu0 %v2989
        %v3666 = vpop.f32.mrf.mxu0
        %v3667 = vadd.f32 0.0, %v3666
        %3668 = vmatmul.f32.gmra.mxu0 %v2992
        %v3669 = vpop.f32.mrf.mxu0
        %v3670 = vadd.f32 0.0, %v3669
        %3671 = vmatmul.f32.gmra.mxu0 %v2995
        %v3672 = vpop.f32.mrf.mxu0
        %v3673 = vadd.f32 0.0, %v3672
        %3674 = vdwg.mxu0
        %3675 = vmatpush.msra.mxu0 %v3250
        %3676 = vmatpush.msra.mxu0 %v3242
        %3677 = vmatpush.msra.mxu0 %v3234
        %3678 = vmatpush.msra.mxu0 %v3226
        %3679 = vmatpush.msra.mxu0 %v3218
        %3680 = vmatpush.msra.mxu0 %v3210
        %3681 = vmatpush.msra.mxu0 %v3202
        %3682 = vmatpush.msra.mxu0 %v3194
        %3683 = vmatpush.msra.mxu0 %v3186
        %3684 = vmatpush.msra.mxu0 %v3178
        %3685 = vmatpush.msra.mxu0 %v3170
        %3686 = vmatpush.msra.mxu0 %v3162
        %3687 = vmatpush.msra.mxu0 %v3154
        %3688 = vmatpush.msra.mxu0 %v3146
        %3689 = vmatpush.msra.mxu0 %v3138
        %3690 = vmatpush.msra.mxu0 %v3130
        %3691 = vmatmul.f32.gmra.mxu0 %v2987
        %v3692 = vpop.f32.mrf.mxu0
        %v3693 = vadd.f32 %v3664, %v3692
        %3694 = vmatmul.f32.gmra.mxu0 %v2990
        %v3695 = vpop.f32.mrf.mxu0
        %v3696 = vadd.f32 %v3667, %v3695
        %3697 = vmatmul.f32.gmra.mxu0 %v2993
        %v3698 = vpop.f32.mrf.mxu0
        %v3699 = vadd.f32 %v3670, %v3698
        %3700 = vmatmul.f32.gmra.mxu0 %v2996
        %v3701 = vpop.f32.mrf.mxu0
        %v3702 = vadd.f32 %v3673, %v3701
        %3703 = vdwg.mxu0
        %3704 = vmatpush.msra.mxu0 0.0
        %3705 = vmatpush.msra.mxu0 0.0
        %3706 = vmatpush.msra.mxu0 0.0
        %3707 = vmatpush.msra.mxu0 0.0
        %3708 = vmatpush.msra.mxu0 0.0
        %3709 = vmatpush.msra.mxu0 0.0
        %3710 = vmatpush.msra.mxu0 0.0
        %3711 = vmatpush.msra.mxu0 0.0
        %3712 = vmatpush.msra.mxu0 0.0
        %3713 = vmatpush.msra.mxu0 0.0
        %3714 = vmatpush.msra.mxu0 0.0
        %3715 = vmatpush.msra.mxu0 0.0
        %3716 = vmatpush.msra.mxu0 %v3282
        %3717 = vmatpush.msra.mxu0 %v3274
        %3718 = vmatpush.msra.mxu0 %v3266
        %3719 = vmatpush.msra.mxu0 %v3258
        %3720 = vmatmul.f32.gmra.mxu0 %v3287
        %v3721 = vpop.f32.mrf.mxu0
        %v3722 = vadd.f32 %v3693, %v3721
        %3723 = vmatmul.f32.gmra.mxu0 %v3290
        %v3724 = vpop.f32.mrf.mxu0
        %v3725 = vadd.f32 %v3696, %v3724
        %3726 = vmatmul.f32.gmra.mxu0 %v3293
        %v3727 = vpop.f32.mrf.mxu0
        %v3728 = vadd.f32 %v3699, %v3727
        %3729 = vmatmul.f32.gmra.mxu0 %v3296
        %v3730 = vpop.f32.mrf.mxu0
        %v3731 = vadd.f32 %v3702, %v3730
        %3732 = vdwg.mxu0
        %3733 = vmatpush.msra.mxu0 %v3123
        %3734 = vmatpush.msra.mxu0 %v3115
        %3735 = vmatpush.msra.mxu0 %v3107
        %3736 = vmatpush.msra.mxu0 %v3099
        %3737 = vmatpush.msra.mxu0 %v3091
        %3738 = vmatpush.msra.mxu0 %v3083
        %3739 = vmatpush.msra.mxu0 %v3075
        %3740 = vmatpush.msra.mxu0 %v3067
        %3741 = vmatpush.msra.mxu0 %v3059
        %3742 = vmatpush.msra.mxu0 %v3051
        %3743 = vmatpush.msra.mxu0 %v3043
        %3744 = vmatpush.msra.mxu0 %v3035
        %3745 = vmatpush.msra.mxu0 %v3027
        %3746 = vmatpush.msra.mxu0 %v3019
        %3747 = vmatpush.msra.mxu0 %v3011
        %3748 = vmatpush.msra.mxu0 %v3003
        %3749 = vmatmul.f32.gmra.mxu0 %v2986
        %v3750 = vpop.f32.mrf.mxu0
        %v3751 = vadd.f32 0.0, %v3750
        %3752 = vmatmul.f32.gmra.mxu0 %v2989
        %v3753 = vpop.f32.mrf.mxu0
        %v3754 = vadd.f32 0.0, %v3753
        %3755 = vmatmul.f32.gmra.mxu0 %v2992
        %v3756 = vpop.f32.mrf.mxu0
        %v3757 = vadd.f32 0.0, %v3756
        %3758 = vmatmul.f32.gmra.mxu0 %v2995
        %v3759 = vpop.f32.mrf.mxu0
        %v3760 = vadd.f32 0.0, %v3759
        %3761 = vdwg.mxu0
        %3762 = vmatpush.msra.mxu0 %v3251
        %3763 = vmatpush.msra.mxu0 %v3243
        %3764 = vmatpush.msra.mxu0 %v3235
        %3765 = vmatpush.msra.mxu0 %v3227
        %3766 = vmatpush.msra.mxu0 %v3219
        %3767 = vmatpush.msra.mxu0 %v3211
        %3768 = vmatpush.msra.mxu0 %v3203
        %3769 = vmatpush.msra.mxu0 %v3195
        %3770 = vmatpush.msra.mxu0 %v3187
        %3771 = vmatpush.msra.mxu0 %v3179
        %3772 = vmatpush.msra.mxu0 %v3171
        %3773 = vmatpush.msra.mxu0 %v3163
        %3774 = vmatpush.msra.mxu0 %v3155
        %3775 = vmatpush.msra.mxu0 %v3147
        %3776 = vmatpush.msra.mxu0 %v3139
        %3777 = vmatpush.msra.mxu0 %v3131
        %3778 = vmatmul.f32.gmra.mxu0 %v2987
        %v3779 = vpop.f32.mrf.mxu0
        %v3780 = vadd.f32 %v3751, %v3779
        %3781 = vmatmul.f32.gmra.mxu0 %v2990
        %v3782 = vpop.f32.mrf.mxu0
        %v3783 = vadd.f32 %v3754, %v3782
        %3784 = vmatmul.f32.gmra.mxu0 %v2993
        %v3785 = vpop.f32.mrf.mxu0
        %v3786 = vadd.f32 %v3757, %v3785
        %3787 = vmatmul.f32.gmra.mxu0 %v2996
        %v3788 = vpop.f32.mrf.mxu0
        %v3789 = vadd.f32 %v3760, %v3788
        %3790 = vdwg.mxu0
        %3791 = vmatpush.msra.mxu0 0.0
        %3792 = vmatpush.msra.mxu0 0.0
        %3793 = vmatpush.msra.mxu0 0.0
        %3794 = vmatpush.msra.mxu0 0.0
        %3795 = vmatpush.msra.mxu0 0.0
        %3796 = vmatpush.msra.mxu0 0.0
        %3797 = vmatpush.msra.mxu0 0.0
        %3798 = vmatpush.msra.mxu0 0.0
        %3799 = vmatpush.msra.mxu0 0.0
        %3800 = vmatpush.msra.mxu0 0.0
        %3801 = vmatpush.msra.mxu0 0.0
        %3802 = vmatpush.msra.mxu0 0.0
        %3803 = vmatpush.msra.mxu0 %v3283
        %3804 = vmatpush.msra.mxu0 %v3275
        %3805 = vmatpush.msra.mxu0 %v3267
        %3806 = vmatpush.msra.mxu0 %v3259
        %3807 = vmatmul.f32.gmra.mxu0 %v3287
        %v3808 = vpop.f32.mrf.mxu0
        %v3809 = vadd.f32 %v3780, %v3808
        %3810 = vmatmul.f32.gmra.mxu0 %v3290
        %v3811 = vpop.f32.mrf.mxu0
        %v3812 = vadd.f32 %v3783, %v3811
        %3813 = vmatmul.f32.gmra.mxu0 %v3293
        %v3814 = vpop.f32.mrf.mxu0
        %v3815 = vadd.f32 %v3786, %v3814
        %3816 = vmatmul.f32.gmra.mxu0 %v3296
        %v3817 = vpop.f32.mrf.mxu0
        %v3818 = vadd.f32 %v3789, %v3817
        %3819 = vdwg.mxu0
        %3820 = vmatpush.msra.mxu0 %v3124
        %3821 = vmatpush.msra.mxu0 %v3116
        %3822 = vmatpush.msra.mxu0 %v3108
        %3823 = vmatpush.msra.mxu0 %v3100
        %3824 = vmatpush.msra.mxu0 %v3092
        %3825 = vmatpush.msra.mxu0 %v3084
        %3826 = vmatpush.msra.mxu0 %v3076
        %3827 = vmatpush.msra.mxu0 %v3068
        %3828 = vmatpush.msra.mxu0 %v3060
        %3829 = vmatpush.msra.mxu0 %v3052
        %3830 = vmatpush.msra.mxu0 %v3044
        %3831 = vmatpush.msra.mxu0 %v3036
        %3832 = vmatpush.msra.mxu0 %v3028
        %3833 = vmatpush.msra.mxu0 %v3020
        %3834 = vmatpush.msra.mxu0 %v3012
        %3835 = vmatpush.msra.mxu0 %v3004
        %3836 = vmatmul.f32.gmra.mxu0 %v2986
        %v3837 = vpop.f32.mrf.mxu0
        %v3838 = vadd.f32 0.0, %v3837
        %3839 = vmatmul.f32.gmra.mxu0 %v2989
        %v3840 = vpop.f32.mrf.mxu0
        %v3841 = vadd.f32 0.0, %v3840
        %3842 = vmatmul.f32.gmra.mxu0 %v2992
        %v3843 = vpop.f32.mrf.mxu0
        %v3844 = vadd.f32 0.0, %v3843
        %3845 = vmatmul.f32.gmra.mxu0 %v2995
        %v3846 = vpop.f32.mrf.mxu0
        %v3847 = vadd.f32 0.0, %v3846
        %3848 = vdwg.mxu0
        %3849 = vmatpush.msra.mxu0 %v3252
        %3850 = vmatpush.msra.mxu0 %v3244
        %3851 = vmatpush.msra.mxu0 %v3236
        %3852 = vmatpush.msra.mxu0 %v3228
        %3853 = vmatpush.msra.mxu0 %v3220
        %3854 = vmatpush.msra.mxu0 %v3212
        %3855 = vmatpush.msra.mxu0 %v3204
        %3856 = vmatpush.msra.mxu0 %v3196
        %3857 = vmatpush.msra.mxu0 %v3188
        %3858 = vmatpush.msra.mxu0 %v3180
        %3859 = vmatpush.msra.mxu0 %v3172
        %3860 = vmatpush.msra.mxu0 %v3164
        %3861 = vmatpush.msra.mxu0 %v3156
        %3862 = vmatpush.msra.mxu0 %v3148
        %3863 = vmatpush.msra.mxu0 %v3140
        %3864 = vmatpush.msra.mxu0 %v3132
        %3865 = vmatmul.f32.gmra.mxu0 %v2987
        %v3866 = vpop.f32.mrf.mxu0
        %v3867 = vadd.f32 %v3838, %v3866
        %3868 = vmatmul.f32.gmra.mxu0 %v2990
        %v3869 = vpop.f32.mrf.mxu0
        %v3870 = vadd.f32 %v3841, %v3869
        %3871 = vmatmul.f32.gmra.mxu0 %v2993
        %v3872 = vpop.f32.mrf.mxu0
        %v3873 = vadd.f32 %v3844, %v3872
        %3874 = vmatmul.f32.gmra.mxu0 %v2996
        %v3875 = vpop.f32.mrf.mxu0
        %v3876 = vadd.f32 %v3847, %v3875
        %3877 = vdwg.mxu0
        %3878 = vmatpush.msra.mxu0 0.0
        %3879 = vmatpush.msra.mxu0 0.0
        %3880 = vmatpush.msra.mxu0 0.0
        %3881 = vmatpush.msra.mxu0 0.0
        %3882 = vmatpush.msra.mxu0 0.0
        %3883 = vmatpush.msra.mxu0 0.0
        %3884 = vmatpush.msra.mxu0 0.0
        %3885 = vmatpush.msra.mxu0 0.0
        %3886 = vmatpush.msra.mxu0 0.0
        %3887 = vmatpush.msra.mxu0 0.0
        %3888 = vmatpush.msra.mxu0 0.0
        %3889 = vmatpush.msra.mxu0 0.0
        %3890 = vmatpush.msra.mxu0 %v3284
        %3891 = vmatpush.msra.mxu0 %v3276
        %3892 = vmatpush.msra.mxu0 %v3268
        %3893 = vmatpush.msra.mxu0 %v3260
        %3894 = vmatmul.f32.gmra.mxu0 %v3287
        %v3895 = vpop.f32.mrf.mxu0
        %v3896 = vadd.f32 %v3867, %v3895
        %3897 = vmatmul.f32.gmra.mxu0 %v3290
        %v3898 = vpop.f32.mrf.mxu0
        %v3899 = vadd.f32 %v3870, %v3898
        %3900 = vmatmul.f32.gmra.mxu0 %v3293
        %v3901 = vpop.f32.mrf.mxu0
        %v3902 = vadd.f32 %v3873, %v3901
        %3903 = vmatmul.f32.gmra.mxu0 %v3296
        %v3904 = vpop.f32.mrf.mxu0
        %v3905 = vadd.f32 %v3876, %v3904
        %3906 = vdwg.mxu0
        %3907 = vmatpush.msra.mxu0 %v3125
        %3908 = vmatpush.msra.mxu0 %v3117
        %3909 = vmatpush.msra.mxu0 %v3109
        %3910 = vmatpush.msra.mxu0 %v3101
        %3911 = vmatpush.msra.mxu0 %v3093
        %3912 = vmatpush.msra.mxu0 %v3085
        %3913 = vmatpush.msra.mxu0 %v3077
        %3914 = vmatpush.msra.mxu0 %v3069
        %3915 = vmatpush.msra.mxu0 %v3061
        %3916 = vmatpush.msra.mxu0 %v3053
        %3917 = vmatpush.msra.mxu0 %v3045
        %3918 = vmatpush.msra.mxu0 %v3037
        %3919 = vmatpush.msra.mxu0 %v3029
        %3920 = vmatpush.msra.mxu0 %v3021
        %3921 = vmatpush.msra.mxu0 %v3013
        %3922 = vmatpush.msra.mxu0 %v3005
        %3923 = vmatmul.f32.gmra.mxu0 %v2986
        %v3924 = vpop.f32.mrf.mxu0
        %v3925 = vadd.f32 0.0, %v3924
        %3926 = vmatmul.f32.gmra.mxu0 %v2989
        %v3927 = vpop.f32.mrf.mxu0
        %v3928 = vadd.f32 0.0, %v3927
        %3929 = vmatmul.f32.gmra.mxu0 %v2992
        %v3930 = vpop.f32.mrf.mxu0
        %v3931 = vadd.f32 0.0, %v3930
        %3932 = vmatmul.f32.gmra.mxu0 %v2995
        %v3933 = vpop.f32.mrf.mxu0
        %v3934 = vadd.f32 0.0, %v3933
        %3935 = vdwg.mxu0
        %3936 = vmatpush.msra.mxu0 %v3253
        %3937 = vmatpush.msra.mxu0 %v3245
        %3938 = vmatpush.msra.mxu0 %v3237
        %3939 = vmatpush.msra.mxu0 %v3229
        %3940 = vmatpush.msra.mxu0 %v3221
        %3941 = vmatpush.msra.mxu0 %v3213
        %3942 = vmatpush.msra.mxu0 %v3205
        %3943 = vmatpush.msra.mxu0 %v3197
        %3944 = vmatpush.msra.mxu0 %v3189
        %3945 = vmatpush.msra.mxu0 %v3181
        %3946 = vmatpush.msra.mxu0 %v3173
        %3947 = vmatpush.msra.mxu0 %v3165
        %3948 = vmatpush.msra.mxu0 %v3157
        %3949 = vmatpush.msra.mxu0 %v3149
        %3950 = vmatpush.msra.mxu0 %v3141
        %3951 = vmatpush.msra.mxu0 %v3133
        %3952 = vmatmul.f32.gmra.mxu0 %v2987
        %v3953 = vpop.f32.mrf.mxu0
        %v3954 = vadd.f32 %v3925, %v3953
        %3955 = vmatmul.f32.gmra.mxu0 %v2990
        %v3956 = vpop.f32.mrf.mxu0
        %v3957 = vadd.f32 %v3928, %v3956
        %3958 = vmatmul.f32.gmra.mxu0 %v2993
        %v3959 = vpop.f32.mrf.mxu0
        %v3960 = vadd.f32 %v3931, %v3959
        %3961 = vmatmul.f32.gmra.mxu0 %v2996
        %v3962 = vpop.f32.mrf.mxu0
        %v3963 = vadd.f32 %v3934, %v3962
        %3964 = vdwg.mxu0
        %3965 = vmatpush.msra.mxu0 0.0
        %3966 = vmatpush.msra.mxu0 0.0
        %3967 = vmatpush.msra.mxu0 0.0
        %3968 = vmatpush.msra.mxu0 0.0
        %3969 = vmatpush.msra.mxu0 0.0
        %3970 = vmatpush.msra.mxu0 0.0
        %3971 = vmatpush.msra.mxu0 0.0
        %3972 = vmatpush.msra.mxu0 0.0
        %3973 = vmatpush.msra.mxu0 0.0
        %3974 = vmatpush.msra.mxu0 0.0
        %3975 = vmatpush.msra.mxu0 0.0
        %3976 = vmatpush.msra.mxu0 0.0
        %3977 = vmatpush.msra.mxu0 %v3285
        %3978 = vmatpush.msra.mxu0 %v3277
        %3979 = vmatpush.msra.mxu0 %v3269
        %3980 = vmatpush.msra.mxu0 %v3261
        %3981 = vmatmul.f32.gmra.mxu0 %v3287
        %v3982 = vpop.f32.mrf.mxu0
        %v3983 = vadd.f32 %v3954, %v3982
        %3984 = vmatmul.f32.gmra.mxu0 %v3290
        %v3985 = vpop.f32.mrf.mxu0
        %v3986 = vadd.f32 %v3957, %v3985
        %3987 = vmatmul.f32.gmra.mxu0 %v3293
        %v3988 = vpop.f32.mrf.mxu0
        %v3989 = vadd.f32 %v3960, %v3988
        %3990 = vmatmul.f32.gmra.mxu0 %v3296
        %v3991 = vpop.f32.mrf.mxu0
        %v3992 = vadd.f32 %v3963, %v3991
        %3993 = vdwg.mxu0
        %v3994 = vadd.f32 %v2953, %v3374
        %v3995 = vadd.f32 %v2954, %v3461
        %v3996 = vadd.f32 %v2955, %v3548
        %v3997 = vadd.f32 %v2956, %v3635
        %v3998 = vadd.f32 %v2957, %v3722
        %v3999 = vadd.f32 %v2958, %v3809
        %v4000 = vadd.f32 %v2959, %v3896
        %v4001 = vadd.f32 %v2960, %v3983
        %v4002 = vadd.f32 %v2961, %v3377
        %v4003 = vadd.f32 %v2962, %v3464
        %v4004 = vadd.f32 %v2963, %v3551
        %v4005 = vadd.f32 %v2964, %v3638
        %v4006 = vadd.f32 %v2965, %v3725
        %v4007 = vadd.f32 %v2966, %v3812
        %v4008 = vadd.f32 %v2967, %v3899
        %v4009 = vadd.f32 %v2968, %v3986
        %v4010 = vadd.f32 %v2969, %v3380
        %v4011 = vadd.f32 %v2970, %v3467
        %v4012 = vadd.f32 %v2971, %v3554
        %v4013 = vadd.f32 %v2972, %v3641
        %v4014 = vadd.f32 %v2973, %v3728
        %v4015 = vadd.f32 %v2974, %v3815
        %v4016 = vadd.f32 %v2975, %v3902
        %v4017 = vadd.f32 %v2976, %v3989
        %v4018 = vadd.f32 %v2977, %v3383
        %v4019 = vadd.f32 %v2978, %v3470
        %v4020 = vadd.f32 %v2979, %v3557
        %v4021 = vadd.f32 %v2980, %v3644
        %v4022 = vadd.f32 %v2981, %v3731
        %v4023 = vadd.f32 %v2982, %v3818
        %v4024 = vadd.f32 %v2983, %v3905
        %v4025 = vadd.f32 %v2984, %v3992
        %4026 = vst [vmem:[#allocation3] sm:$0xff] %v3994
        %4027 = vst [vmem:[#allocation3 + $0x8] sm:$0xff] %v3995
        %4028 = vst [vmem:[#allocation3 + $0x10] sm:$0xff] %v3996
        %4029 = vst [vmem:[#allocation3 + $0x18] sm:$0xff] %v3997
        %4030 = vst [vmem:[#allocation3 + $0x20] sm:$0xff] %v3998
        %4031 = vst [vmem:[#allocation3 + $0x28] sm:$0xff] %v3999
        %4032 = vst [vmem:[#allocation3 + $0x30] sm:$0xff] %v4000
        %4033 = vst [vmem:[#allocation3 + $0x38] sm:$0xff] %v4001
        %4034 = vst [vmem:[#allocation3 + $0x40] sm:$0xff] %v4002
        %4035 = vst [vmem:[#allocation3 + $0x48] sm:$0xff] %v4003
        %4036 = vst [vmem:[#allocation3 + $0x50] sm:$0xff] %v4004
        %4037 = vst [vmem:[#allocation3 + $0x58] sm:$0xff] %v4005
        %4038 = vst [vmem:[#allocation3 + $0x60] sm:$0xff] %v4006
        %4039 = vst [vmem:[#allocation3 + $0x68] sm:$0xff] %v4007
        %4040 = vst [vmem:[#allocation3 + $0x70] sm:$0xff] %v4008
        %4041 = vst [vmem:[#allocation3 + $0x78] sm:$0xff] %v4009
        %4042 = vst [vmem:[#allocation3 + $0x80] sm:$0xff] %v4010
        %4043 = vst [vmem:[#allocation3 + $0x88] sm:$0xff] %v4011
        %4044 = vst [vmem:[#allocation3 + $0x90] sm:$0xff] %v4012
        %4045 = vst [vmem:[#allocation3 + $0x98] sm:$0xff] %v4013
        %4046 = vst [vmem:[#allocation3 + $0xa0] sm:$0xff] %v4014
        %4047 = vst [vmem:[#allocation3 + $0xa8] sm:$0xff] %v4015
        %4048 = vst [vmem:[#allocation3 + $0xb0] sm:$0xff] %v4016
        %4049 = vst [vmem:[#allocation3 + $0xb8] sm:$0xff] %v4017
        %4050 = vst [vmem:[#allocation3 + $0xc0] sm:$0xff] %v4018
        %4051 = vst [vmem:[#allocation3 + $0xc8] sm:$0xff] %v4019
        %4052 = vst [vmem:[#allocation3 + $0xd0] sm:$0xff] %v4020
        %4053 = vst [vmem:[#allocation3 + $0xd8] sm:$0xff] %v4021
        %4054 = vst [vmem:[#allocation3 + $0xe0] sm:$0xff] %v4022
        %4055 = vst [vmem:[#allocation3 + $0xe8] sm:$0xff] %v4023
        %4056 = vst [vmem:[#allocation3 + $0xf0] sm:$0xff] %v4024
        %4057 = vst [vmem:[#allocation3 + $0xf8] sm:$0xff] %v4025
        %v4058 = vld [vmem:[#allocation3] sm:$0xff]
        %v4059 = vld [vmem:[#allocation3 + $0x8] sm:$0xff]
        %v4060 = vld [vmem:[#allocation3 + $0x10] sm:$0xff]
        %v4061 = vld [vmem:[#allocation3 + $0x18] sm:$0xff]
        %v4062 = vld [vmem:[#allocation3 + $0x20] sm:$0xff]
        %v4063 = vld [vmem:[#allocation3 + $0x28] sm:$0xff]
        %v4064 = vld [vmem:[#allocation3 + $0x30] sm:$0xff]
        %v4065 = vld [vmem:[#allocation3 + $0x38] sm:$0xff]
        %v4066 = vld [vmem:[#allocation3 + $0x40] sm:$0xff]
        %v4067 = vld [vmem:[#allocation3 + $0x48] sm:$0xff]
        %v4068 = vld [vmem:[#allocation3 + $0x50] sm:$0xff]
        %v4069 = vld [vmem:[#allocation3 + $0x58] sm:$0xff]
        %v4070 = vld [vmem:[#allocation3 + $0x60] sm:$0xff]
        %v4071 = vld [vmem:[#allocation3 + $0x68] sm:$0xff]
        %v4072 = vld [vmem:[#allocation3 + $0x70] sm:$0xff]
        %v4073 = vld [vmem:[#allocation3 + $0x78] sm:$0xff]
        %v4074 = vld [vmem:[#allocation3 + $0x80] sm:$0xff]
        %v4075 = vld [vmem:[#allocation3 + $0x88] sm:$0xff]
        %v4076 = vld [vmem:[#allocation3 + $0x90] sm:$0xff]
        %v4077 = vld [vmem:[#allocation3 + $0x98] sm:$0xff]
        %v4078 = vld [vmem:[#allocation3 + $0xa0] sm:$0xff]
        %v4079 = vld [vmem:[#allocation3 + $0xa8] sm:$0xff]
        %v4080 = vld [vmem:[#allocation3 + $0xb0] sm:$0xff]
        %v4081 = vld [vmem:[#allocation3 + $0xb8] sm:$0xff]
        %v4082 = vld [vmem:[#allocation3 + $0xc0] sm:$0xff]
        %v4083 = vld [vmem:[#allocation3 + $0xc8] sm:$0xff]
        %v4084 = vld [vmem:[#allocation3 + $0xd0] sm:$0xff]
        %v4085 = vld [vmem:[#allocation3 + $0xd8] sm:$0xff]
        %v4086 = vld [vmem:[#allocation3 + $0xe0] sm:$0xff]
        %v4087 = vld [vmem:[#allocation3 + $0xe8] sm:$0xff]
        %v4088 = vld [vmem:[#allocation3 + $0xf0] sm:$0xff]
        %v4089 = vld [vmem:[#allocation3 + $0xf8] sm:$0xff]
        %s4090 = scalar_lea.vmem [#allocation7], 192
        %v4091 = vld [vmem:[%s4090] sm:$0xff]
        %v4092 = vld [vmem:[%s4090 + $0x8] sm:$0xff]
        %v4093 = vld [vmem:[%s4090 + $0x10] sm:$0xff]
        %v4094 = vld [vmem:[%s4090 + $0x18] sm:$0xff]
        %v4095 = vld [vmem:[%s4090 + $0x20] sm:$0xff]
        %v4096 = vld [vmem:[%s4090 + $0x28] sm:$0xff]
        %v4097 = vld [vmem:[%s4090 + $0x30] sm:$0xff]
        %v4098 = vld [vmem:[%s4090 + $0x38] sm:$0xff]
        %v4099 = vld [vmem:[%s4090 + $0x40] sm:$0xff]
        %v4100 = vld [vmem:[%s4090 + $0x48] sm:$0xff]
        %v4101 = vld [vmem:[%s4090 + $0x50] sm:$0xff]
        %v4102 = vld [vmem:[%s4090 + $0x58] sm:$0xff]
        %v4103 = vld [vmem:[#allocation2 + $0x10] sm:$0xff]
        %v4104 = vld [vmem:[#allocation2 + $0x18] sm:$0xff]
        %v4105 = vld [vmem:[#allocation2 + $0x20] sm:$0xff]
        %v4106 = vld [vmem:[#allocation2 + $0x28] sm:$0xff]
        %v4107 = vld [vmem:[#allocation2 + $0x30] sm:$0xff]
        %v4108 = vld [vmem:[#allocation2 + $0x38] sm:$0xff]
        %v4109 = vld [vmem:[#allocation2 + $0x40] sm:$0xff]
        %v4110 = vld [vmem:[#allocation2 + $0x48] sm:$0xff]
        %v4111 = vld [vmem:[#allocation2 + $0x60] sm:$0xff]
        %v4112 = vld [vmem:[#allocation2 + $0x68] sm:$0xff]
        %v4113 = vld [vmem:[#allocation2 + $0x70] sm:$0xff]
        %v4114 = vld [vmem:[#allocation2 + $0x78] sm:$0xff]
        %v4115 = vld [vmem:[#allocation2 + $0x80] sm:$0xff]
        %v4116 = vld [vmem:[#allocation2 + $0x88] sm:$0xff]
        %v4117 = vld [vmem:[#allocation2 + $0x90] sm:$0xff]
        %v4118 = vld [vmem:[#allocation2 + $0x98] sm:$0xff]
        %v4119 = vld [vmem:[#allocation2 + $0xb0] sm:$0xff]
        %v4120 = vld [vmem:[#allocation2 + $0xb8] sm:$0xff]
        %v4121 = vld [vmem:[#allocation2 + $0xc0] sm:$0xff]
        %v4122 = vld [vmem:[#allocation2 + $0xc8] sm:$0xff]
        %v4123 = vld [vmem:[#allocation2 + $0xd0] sm:$0xff]
        %v4124 = vld [vmem:[#allocation2 + $0xd8] sm:$0xff]
        %v4125 = vld [vmem:[#allocation2 + $0xe0] sm:$0xff]
        %v4126 = vld [vmem:[#allocation2 + $0xe8] sm:$0xff]
        %v4127 = vld [vmem:[#allocation2 + $0x100] sm:$0xff]
        %v4128 = vld [vmem:[#allocation2 + $0x108] sm:$0xff]
        %v4129 = vld [vmem:[#allocation2 + $0x110] sm:$0xff]
        %v4130 = vld [vmem:[#allocation2 + $0x118] sm:$0xff]
        %v4131 = vld [vmem:[#allocation2 + $0x120] sm:$0xff]
        %v4132 = vld [vmem:[#allocation2 + $0x128] sm:$0xff]
        %v4133 = vld [vmem:[#allocation2 + $0x130] sm:$0xff]
        %v4134 = vld [vmem:[#allocation2 + $0x138] sm:$0xff]
        %v4135 = vld [vmem:[#allocation2 + $0x150] sm:$0xff]
        %v4136 = vld [vmem:[#allocation2 + $0x158] sm:$0xff]
        %v4137 = vld [vmem:[#allocation2 + $0x160] sm:$0xff]
        %v4138 = vld [vmem:[#allocation2 + $0x168] sm:$0xff]
        %v4139 = vld [vmem:[#allocation2 + $0x170] sm:$0xff]
        %v4140 = vld [vmem:[#allocation2 + $0x178] sm:$0xff]
        %v4141 = vld [vmem:[#allocation2 + $0x180] sm:$0xff]
        %v4142 = vld [vmem:[#allocation2 + $0x188] sm:$0xff]
        %v4143 = vld [vmem:[#allocation2 + $0x1a0] sm:$0xff]
        %v4144 = vld [vmem:[#allocation2 + $0x1a8] sm:$0xff]
        %v4145 = vld [vmem:[#allocation2 + $0x1b0] sm:$0xff]
        %v4146 = vld [vmem:[#allocation2 + $0x1b8] sm:$0xff]
        %v4147 = vld [vmem:[#allocation2 + $0x1c0] sm:$0xff]
        %v4148 = vld [vmem:[#allocation2 + $0x1c8] sm:$0xff]
        %v4149 = vld [vmem:[#allocation2 + $0x1d0] sm:$0xff]
        %v4150 = vld [vmem:[#allocation2 + $0x1d8] sm:$0xff]
        %v4151 = vld [vmem:[#allocation2 + $0x1f0] sm:$0xff]
        %v4152 = vld [vmem:[#allocation2 + $0x1f8] sm:$0xff]
        %v4153 = vld [vmem:[#allocation2 + $0x200] sm:$0xff]
        %v4154 = vld [vmem:[#allocation2 + $0x208] sm:$0xff]
        %v4155 = vld [vmem:[#allocation2 + $0x210] sm:$0xff]
        %v4156 = vld [vmem:[#allocation2 + $0x218] sm:$0xff]
        %v4157 = vld [vmem:[#allocation2 + $0x220] sm:$0xff]
        %v4158 = vld [vmem:[#allocation2 + $0x228] sm:$0xff]
        %v4159 = vld [vmem:[#allocation2 + $0x240] sm:$0xff]
        %v4160 = vld [vmem:[#allocation2 + $0x248] sm:$0xff]
        %v4161 = vld [vmem:[#allocation2 + $0x250] sm:$0xff]
        %v4162 = vld [vmem:[#allocation2 + $0x258] sm:$0xff]
        %v4163 = vld [vmem:[#allocation2 + $0x260] sm:$0xff]
        %v4164 = vld [vmem:[#allocation2 + $0x268] sm:$0xff]
        %v4165 = vld [vmem:[#allocation2 + $0x270] sm:$0xff]
        %v4166 = vld [vmem:[#allocation2 + $0x278] sm:$0xff]
        %v4167 = vld [vmem:[#allocation2 + $0x290] sm:$0xff]
        %v4168 = vld [vmem:[#allocation2 + $0x298] sm:$0xff]
        %v4169 = vld [vmem:[#allocation2 + $0x2a0] sm:$0xff]
        %v4170 = vld [vmem:[#allocation2 + $0x2a8] sm:$0xff]
        %v4171 = vld [vmem:[#allocation2 + $0x2b0] sm:$0xff]
        %v4172 = vld [vmem:[#allocation2 + $0x2b8] sm:$0xff]
        %v4173 = vld [vmem:[#allocation2 + $0x2c0] sm:$0xff]
        %v4174 = vld [vmem:[#allocation2 + $0x2c8] sm:$0xff]
        %v4175 = vld [vmem:[#allocation2 + $0x2e0] sm:$0xff]
        %v4176 = vld [vmem:[#allocation2 + $0x2e8] sm:$0xff]
        %v4177 = vld [vmem:[#allocation2 + $0x2f0] sm:$0xff]
        %v4178 = vld [vmem:[#allocation2 + $0x2f8] sm:$0xff]
        %v4179 = vld [vmem:[#allocation2 + $0x300] sm:$0xff]
        %v4180 = vld [vmem:[#allocation2 + $0x308] sm:$0xff]
        %v4181 = vld [vmem:[#allocation2 + $0x310] sm:$0xff]
        %v4182 = vld [vmem:[#allocation2 + $0x318] sm:$0xff]
        %v4183 = vld [vmem:[#allocation2 + $0x330] sm:$0xff]
        %v4184 = vld [vmem:[#allocation2 + $0x338] sm:$0xff]
        %v4185 = vld [vmem:[#allocation2 + $0x340] sm:$0xff]
        %v4186 = vld [vmem:[#allocation2 + $0x348] sm:$0xff]
        %v4187 = vld [vmem:[#allocation2 + $0x350] sm:$0xff]
        %v4188 = vld [vmem:[#allocation2 + $0x358] sm:$0xff]
        %v4189 = vld [vmem:[#allocation2 + $0x360] sm:$0xff]
        %v4190 = vld [vmem:[#allocation2 + $0x368] sm:$0xff]
        %v4191 = vld [vmem:[#allocation2 + $0x380] sm:$0xff]
        %v4192 = vld [vmem:[#allocation2 + $0x388] sm:$0xff]
        %v4193 = vld [vmem:[#allocation2 + $0x390] sm:$0xff]
        %v4194 = vld [vmem:[#allocation2 + $0x398] sm:$0xff]
        %v4195 = vld [vmem:[#allocation2 + $0x3a0] sm:$0xff]
        %v4196 = vld [vmem:[#allocation2 + $0x3a8] sm:$0xff]
        %v4197 = vld [vmem:[#allocation2 + $0x3b0] sm:$0xff]
        %v4198 = vld [vmem:[#allocation2 + $0x3b8] sm:$0xff]
        %v4199 = vld [vmem:[#allocation2 + $0x3d0] sm:$0xff]
        %v4200 = vld [vmem:[#allocation2 + $0x3d8] sm:$0xff]
        %v4201 = vld [vmem:[#allocation2 + $0x3e0] sm:$0xff]
        %v4202 = vld [vmem:[#allocation2 + $0x3e8] sm:$0xff]
        %v4203 = vld [vmem:[#allocation2 + $0x3f0] sm:$0xff]
        %v4204 = vld [vmem:[#allocation2 + $0x3f8] sm:$0xff]
        %v4205 = vld [vmem:[#allocation2 + $0x400] sm:$0xff]
        %v4206 = vld [vmem:[#allocation2 + $0x408] sm:$0xff]
        %v4207 = vld [vmem:[#allocation2 + $0x420] sm:$0xff]
        %v4208 = vld [vmem:[#allocation2 + $0x428] sm:$0xff]
        %v4209 = vld [vmem:[#allocation2 + $0x430] sm:$0xff]
        %v4210 = vld [vmem:[#allocation2 + $0x438] sm:$0xff]
        %v4211 = vld [vmem:[#allocation2 + $0x440] sm:$0xff]
        %v4212 = vld [vmem:[#allocation2 + $0x448] sm:$0xff]
        %v4213 = vld [vmem:[#allocation2 + $0x450] sm:$0xff]
        %v4214 = vld [vmem:[#allocation2 + $0x458] sm:$0xff]
        %v4215 = vld [vmem:[#allocation2 + $0x470] sm:$0xff]
        %v4216 = vld [vmem:[#allocation2 + $0x478] sm:$0xff]
        %v4217 = vld [vmem:[#allocation2 + $0x480] sm:$0xff]
        %v4218 = vld [vmem:[#allocation2 + $0x488] sm:$0xff]
        %v4219 = vld [vmem:[#allocation2 + $0x490] sm:$0xff]
        %v4220 = vld [vmem:[#allocation2 + $0x498] sm:$0xff]
        %v4221 = vld [vmem:[#allocation2 + $0x4a0] sm:$0xff]
        %v4222 = vld [vmem:[#allocation2 + $0x4a8] sm:$0xff]
        %v4223 = vld [vmem:[#allocation2 + $0x4c0] sm:$0xff]
        %v4224 = vld [vmem:[#allocation2 + $0x4c8] sm:$0xff]
        %v4225 = vld [vmem:[#allocation2 + $0x4d0] sm:$0xff]
        %v4226 = vld [vmem:[#allocation2 + $0x4d8] sm:$0xff]
        %v4227 = vld [vmem:[#allocation2 + $0x4e0] sm:$0xff]
        %v4228 = vld [vmem:[#allocation2 + $0x4e8] sm:$0xff]
        %v4229 = vld [vmem:[#allocation2 + $0x4f0] sm:$0xff]
        %v4230 = vld [vmem:[#allocation2 + $0x4f8] sm:$0xff]
        %v4231 = vld [vmem:[#allocation2 + $0x510] sm:$0xff]
        %v4232 = vld [vmem:[#allocation2 + $0x518] sm:$0xff]
        %v4233 = vld [vmem:[#allocation2 + $0x520] sm:$0xff]
        %v4234 = vld [vmem:[#allocation2 + $0x528] sm:$0xff]
        %v4235 = vld [vmem:[#allocation2 + $0x530] sm:$0xff]
        %v4236 = vld [vmem:[#allocation2 + $0x538] sm:$0xff]
        %v4237 = vld [vmem:[#allocation2 + $0x540] sm:$0xff]
        %v4238 = vld [vmem:[#allocation2 + $0x548] sm:$0xff]
        %v4239 = vld [vmem:[#allocation2 + $0x560] sm:$0xff]
        %v4240 = vld [vmem:[#allocation2 + $0x568] sm:$0xff]
        %v4241 = vld [vmem:[#allocation2 + $0x570] sm:$0xff]
        %v4242 = vld [vmem:[#allocation2 + $0x578] sm:$0xff]
        %v4243 = vld [vmem:[#allocation2 + $0x580] sm:$0xff]
        %v4244 = vld [vmem:[#allocation2 + $0x588] sm:$0xff]
        %v4245 = vld [vmem:[#allocation2 + $0x590] sm:$0xff]
        %v4246 = vld [vmem:[#allocation2 + $0x598] sm:$0xff]
        %v4247 = vld [vmem:[#allocation2 + $0x5b0] sm:$0xff]
        %v4248 = vld [vmem:[#allocation2 + $0x5b8] sm:$0xff]
        %v4249 = vld [vmem:[#allocation2 + $0x5c0] sm:$0xff]
        %v4250 = vld [vmem:[#allocation2 + $0x5c8] sm:$0xff]
        %v4251 = vld [vmem:[#allocation2 + $0x5d0] sm:$0xff]
        %v4252 = vld [vmem:[#allocation2 + $0x5d8] sm:$0xff]
        %v4253 = vld [vmem:[#allocation2 + $0x5e0] sm:$0xff]
        %v4254 = vld [vmem:[#allocation2 + $0x5e8] sm:$0xff]
        %v4255 = vld [vmem:[#allocation2 + $0x600] sm:$0xff]
        %v4256 = vld [vmem:[#allocation2 + $0x608] sm:$0xff]
        %v4257 = vld [vmem:[#allocation2 + $0x610] sm:$0xff]
        %v4258 = vld [vmem:[#allocation2 + $0x618] sm:$0xff]
        %v4259 = vld [vmem:[#allocation2 + $0x620] sm:$0xff]
        %v4260 = vld [vmem:[#allocation2 + $0x628] sm:$0xff]
        %v4261 = vld [vmem:[#allocation2 + $0x630] sm:$0xff]
        %v4262 = vld [vmem:[#allocation2 + $0x638] sm:$0xff]
        %v4263 = vld [vmem:[#allocation2 + $0x650] sm:$0xff]
        %v4264 = vld [vmem:[#allocation2 + $0x658] sm:$0xff]
        %v4265 = vld [vmem:[#allocation2 + $0x660] sm:$0xff]
        %v4266 = vld [vmem:[#allocation2 + $0x668] sm:$0xff]
        %v4267 = vld [vmem:[#allocation2 + $0x670] sm:$0xff]
        %v4268 = vld [vmem:[#allocation2 + $0x678] sm:$0xff]
        %v4269 = vld [vmem:[#allocation2 + $0x680] sm:$0xff]
        %v4270 = vld [vmem:[#allocation2 + $0x688] sm:$0xff]
        %v4271 = vld [vmem:[#allocation2 + $0x6a0] sm:$0xff]
        %v4272 = vld [vmem:[#allocation2 + $0x6a8] sm:$0xff]
        %v4273 = vld [vmem:[#allocation2 + $0x6b0] sm:$0xff]
        %v4274 = vld [vmem:[#allocation2 + $0x6b8] sm:$0xff]
        %v4275 = vld [vmem:[#allocation2 + $0x6c0] sm:$0xff]
        %v4276 = vld [vmem:[#allocation2 + $0x6c8] sm:$0xff]
        %v4277 = vld [vmem:[#allocation2 + $0x6d0] sm:$0xff]
        %v4278 = vld [vmem:[#allocation2 + $0x6d8] sm:$0xff]
        %v4279 = vld [vmem:[#allocation2 + $0x6f0] sm:$0xff]
        %v4280 = vld [vmem:[#allocation2 + $0x6f8] sm:$0xff]
        %v4281 = vld [vmem:[#allocation2 + $0x700] sm:$0xff]
        %v4282 = vld [vmem:[#allocation2 + $0x708] sm:$0xff]
        %v4283 = vld [vmem:[#allocation2 + $0x710] sm:$0xff]
        %v4284 = vld [vmem:[#allocation2 + $0x718] sm:$0xff]
        %v4285 = vld [vmem:[#allocation2 + $0x720] sm:$0xff]
        %v4286 = vld [vmem:[#allocation2 + $0x728] sm:$0xff]
        %v4287 = vld [vmem:[#allocation2 + $0x740] sm:$0xff]
        %v4288 = vld [vmem:[#allocation2 + $0x748] sm:$0xff]
        %v4289 = vld [vmem:[#allocation2 + $0x750] sm:$0xff]
        %v4290 = vld [vmem:[#allocation2 + $0x758] sm:$0xff]
        %v4291 = vld [vmem:[#allocation2 + $0x760] sm:$0xff]
        %v4292 = vld [vmem:[#allocation2 + $0x768] sm:$0xff]
        %v4293 = vld [vmem:[#allocation2 + $0x770] sm:$0xff]
        %v4294 = vld [vmem:[#allocation2 + $0x778] sm:$0xff]
        %v4295 = vld [vmem:[#allocation2 + $0x790] sm:$0xff]
        %v4296 = vld [vmem:[#allocation2 + $0x798] sm:$0xff]
        %v4297 = vld [vmem:[#allocation2 + $0x7a0] sm:$0xff]
        %v4298 = vld [vmem:[#allocation2 + $0x7a8] sm:$0xff]
        %v4299 = vld [vmem:[#allocation2 + $0x7b0] sm:$0xff]
        %v4300 = vld [vmem:[#allocation2 + $0x7b8] sm:$0xff]
        %v4301 = vld [vmem:[#allocation2 + $0x7c0] sm:$0xff]
        %v4302 = vld [vmem:[#allocation2 + $0x7c8] sm:$0xff]
        %v4303 = vld [vmem:[#allocation2 + $0x7e0] sm:$0xff]
        %v4304 = vld [vmem:[#allocation2 + $0x7e8] sm:$0xff]
        %v4305 = vld [vmem:[#allocation2 + $0x7f0] sm:$0xff]
        %v4306 = vld [vmem:[#allocation2 + $0x7f8] sm:$0xff]
        %v4307 = vld [vmem:[#allocation2 + $0x800] sm:$0xff]
        %v4308 = vld [vmem:[#allocation2 + $0x808] sm:$0xff]
        %v4309 = vld [vmem:[#allocation2 + $0x810] sm:$0xff]
        %v4310 = vld [vmem:[#allocation2 + $0x818] sm:$0xff]
        %v4311 = vld [vmem:[#allocation2 + $0x830] sm:$0xff]
        %v4312 = vld [vmem:[#allocation2 + $0x838] sm:$0xff]
        %v4313 = vld [vmem:[#allocation2 + $0x840] sm:$0xff]
        %v4314 = vld [vmem:[#allocation2 + $0x848] sm:$0xff]
        %v4315 = vld [vmem:[#allocation2 + $0x850] sm:$0xff]
        %v4316 = vld [vmem:[#allocation2 + $0x858] sm:$0xff]
        %v4317 = vld [vmem:[#allocation2 + $0x860] sm:$0xff]
        %v4318 = vld [vmem:[#allocation2 + $0x868] sm:$0xff]
        %v4319 = vld [vmem:[#allocation2 + $0x880] sm:$0xff]
        %v4320 = vld [vmem:[#allocation2 + $0x888] sm:$0xff]
        %v4321 = vld [vmem:[#allocation2 + $0x890] sm:$0xff]
        %v4322 = vld [vmem:[#allocation2 + $0x898] sm:$0xff]
        %v4323 = vld [vmem:[#allocation2 + $0x8a0] sm:$0xff]
        %v4324 = vld [vmem:[#allocation2 + $0x8a8] sm:$0xff]
        %v4325 = vld [vmem:[#allocation2 + $0x8b0] sm:$0xff]
        %v4326 = vld [vmem:[#allocation2 + $0x8b8] sm:$0xff]
        %v4327 = vld [vmem:[#allocation2 + $0x8d0] sm:$0xff]
        %v4328 = vld [vmem:[#allocation2 + $0x8d8] sm:$0xff]
        %v4329 = vld [vmem:[#allocation2 + $0x8e0] sm:$0xff]
        %v4330 = vld [vmem:[#allocation2 + $0x8e8] sm:$0xff]
        %v4331 = vld [vmem:[#allocation2 + $0x8f0] sm:$0xff]
        %v4332 = vld [vmem:[#allocation2 + $0x8f8] sm:$0xff]
        %v4333 = vld [vmem:[#allocation2 + $0x900] sm:$0xff]
        %v4334 = vld [vmem:[#allocation2 + $0x908] sm:$0xff]
        %v4335 = vld [vmem:[#allocation2 + $0x920] sm:$0xff]
        %v4336 = vld [vmem:[#allocation2 + $0x928] sm:$0xff]
        %v4337 = vld [vmem:[#allocation2 + $0x930] sm:$0xff]
        %v4338 = vld [vmem:[#allocation2 + $0x938] sm:$0xff]
        %v4339 = vld [vmem:[#allocation2 + $0x940] sm:$0xff]
        %v4340 = vld [vmem:[#allocation2 + $0x948] sm:$0xff]
        %v4341 = vld [vmem:[#allocation2 + $0x950] sm:$0xff]
        %v4342 = vld [vmem:[#allocation2 + $0x958] sm:$0xff]
        %v4343 = vld [vmem:[#allocation2 + $0x970] sm:$0xff]
        %v4344 = vld [vmem:[#allocation2 + $0x978] sm:$0xff]
        %v4345 = vld [vmem:[#allocation2 + $0x980] sm:$0xff]
        %v4346 = vld [vmem:[#allocation2 + $0x988] sm:$0xff]
        %v4347 = vld [vmem:[#allocation2 + $0x990] sm:$0xff]
        %v4348 = vld [vmem:[#allocation2 + $0x998] sm:$0xff]
        %v4349 = vld [vmem:[#allocation2 + $0x9a0] sm:$0xff]
        %v4350 = vld [vmem:[#allocation2 + $0x9a8] sm:$0xff]
        %v4351 = vld [vmem:[#allocation2 + $0x9c0] sm:$0xff]
        %v4352 = vld [vmem:[#allocation2 + $0x9c8] sm:$0xff]
        %v4353 = vld [vmem:[#allocation2 + $0x9d0] sm:$0xff]
        %v4354 = vld [vmem:[#allocation2 + $0x9d8] sm:$0xff]
        %v4355 = vld [vmem:[#allocation2 + $0x9e0] sm:$0xff]
        %v4356 = vld [vmem:[#allocation2 + $0x9e8] sm:$0xff]
        %v4357 = vld [vmem:[#allocation2 + $0x9f0] sm:$0xff]
        %v4358 = vld [vmem:[#allocation2 + $0x9f8] sm:$0xff]
        %v4359 = vld [vmem:[#allocation2 + $0xa10] sm:$0xff]
        %v4360 = vld [vmem:[#allocation2 + $0xa18] sm:$0xff]
        %v4361 = vld [vmem:[#allocation2 + $0xa20] sm:$0xff]
        %v4362 = vld [vmem:[#allocation2 + $0xa28] sm:$0xff]
        %v4363 = vld [vmem:[#allocation2 + $0xa30] sm:$0xff]
        %v4364 = vld [vmem:[#allocation2 + $0xa38] sm:$0xff]
        %v4365 = vld [vmem:[#allocation2 + $0xa40] sm:$0xff]
        %v4366 = vld [vmem:[#allocation2 + $0xa48] sm:$0xff]
        %v4367 = vld [vmem:[#allocation2 + $0xa60] sm:$0xff]
        %v4368 = vld [vmem:[#allocation2 + $0xa68] sm:$0xff]
        %v4369 = vld [vmem:[#allocation2 + $0xa70] sm:$0xff]
        %v4370 = vld [vmem:[#allocation2 + $0xa78] sm:$0xff]
        %v4371 = vld [vmem:[#allocation2 + $0xa80] sm:$0xff]
        %v4372 = vld [vmem:[#allocation2 + $0xa88] sm:$0xff]
        %v4373 = vld [vmem:[#allocation2 + $0xa90] sm:$0xff]
        %v4374 = vld [vmem:[#allocation2 + $0xa98] sm:$0xff]
        %v4375 = vld [vmem:[#allocation2 + $0xab0] sm:$0xff]
        %v4376 = vld [vmem:[#allocation2 + $0xab8] sm:$0xff]
        %v4377 = vld [vmem:[#allocation2 + $0xac0] sm:$0xff]
        %v4378 = vld [vmem:[#allocation2 + $0xac8] sm:$0xff]
        %v4379 = vld [vmem:[#allocation2 + $0xad0] sm:$0xff]
        %v4380 = vld [vmem:[#allocation2 + $0xad8] sm:$0xff]
        %v4381 = vld [vmem:[#allocation2 + $0xae0] sm:$0xff]
        %v4382 = vld [vmem:[#allocation2 + $0xae8] sm:$0xff]
        %v4383 = vld [vmem:[#allocation2 + $0xb00] sm:$0xff]
        %v4384 = vld [vmem:[#allocation2 + $0xb08] sm:$0xff]
        %v4385 = vld [vmem:[#allocation2 + $0xb10] sm:$0xff]
        %v4386 = vld [vmem:[#allocation2 + $0xb18] sm:$0xff]
        %v4387 = vld [vmem:[#allocation2 + $0xb20] sm:$0xff]
        %v4388 = vld [vmem:[#allocation2 + $0xb28] sm:$0xff]
        %v4389 = vld [vmem:[#allocation2 + $0xb30] sm:$0xff]
        %v4390 = vld [vmem:[#allocation2 + $0xb38] sm:$0xff]
        %v4392 = vsel %vm2212, %v4093, 0
        %v4395 = vsel %vm2212, %v4096, 0
        %v4398 = vsel %vm2212, %v4099, 0
        %v4401 = vsel %vm2212, %v4102, 0
        %4403 = vmatpush.msra.mxu0 %v4223
        %4404 = vmatpush.msra.mxu0 %v4215
        %4405 = vmatpush.msra.mxu0 %v4207
        %4406 = vmatpush.msra.mxu0 %v4199
        %4407 = vmatpush.msra.mxu0 %v4191
        %4408 = vmatpush.msra.mxu0 %v4183
        %4409 = vmatpush.msra.mxu0 %v4175
        %4410 = vmatpush.msra.mxu0 %v4167
        %4411 = vmatpush.msra.mxu0 %v4159
        %4412 = vmatpush.msra.mxu0 %v4151
        %4413 = vmatpush.msra.mxu0 %v4143
        %4414 = vmatpush.msra.mxu0 %v4135
        %4415 = vmatpush.msra.mxu0 %v4127
        %4416 = vmatpush.msra.mxu0 %v4119
        %4417 = vmatpush.msra.mxu0 %v4111
        %4418 = vmatpush.msra.mxu0 %v4103
        %4419 = vmatmul.f32.gmra.mxu0 %v4091
        %v4420 = vpop.f32.mrf.mxu0
        %v4421 = vadd.f32 0.0, %v4420
        %4422 = vmatmul.f32.gmra.mxu0 %v4094
        %v4423 = vpop.f32.mrf.mxu0
        %v4424 = vadd.f32 0.0, %v4423
        %4425 = vmatmul.f32.gmra.mxu0 %v4097
        %v4426 = vpop.f32.mrf.mxu0
        %v4427 = vadd.f32 0.0, %v4426
        %4428 = vmatmul.f32.gmra.mxu0 %v4100
        %v4429 = vpop.f32.mrf.mxu0
        %v4430 = vadd.f32 0.0, %v4429
        %4431 = vdwg.mxu0
        %4432 = vmatpush.msra.mxu0 %v4351
        %4433 = vmatpush.msra.mxu0 %v4343
        %4434 = vmatpush.msra.mxu0 %v4335
        %4435 = vmatpush.msra.mxu0 %v4327
        %4436 = vmatpush.msra.mxu0 %v4319
        %4437 = vmatpush.msra.mxu0 %v4311
        %4438 = vmatpush.msra.mxu0 %v4303
        %4439 = vmatpush.msra.mxu0 %v4295
        %4440 = vmatpush.msra.mxu0 %v4287
        %4441 = vmatpush.msra.mxu0 %v4279
        %4442 = vmatpush.msra.mxu0 %v4271
        %4443 = vmatpush.msra.mxu0 %v4263
        %4444 = vmatpush.msra.mxu0 %v4255
        %4445 = vmatpush.msra.mxu0 %v4247
        %4446 = vmatpush.msra.mxu0 %v4239
        %4447 = vmatpush.msra.mxu0 %v4231
        %4448 = vmatmul.f32.gmra.mxu0 %v4092
        %v4449 = vpop.f32.mrf.mxu0
        %v4450 = vadd.f32 %v4421, %v4449
        %4451 = vmatmul.f32.gmra.mxu0 %v4095
        %v4452 = vpop.f32.mrf.mxu0
        %v4453 = vadd.f32 %v4424, %v4452
        %4454 = vmatmul.f32.gmra.mxu0 %v4098
        %v4455 = vpop.f32.mrf.mxu0
        %v4456 = vadd.f32 %v4427, %v4455
        %4457 = vmatmul.f32.gmra.mxu0 %v4101
        %v4458 = vpop.f32.mrf.mxu0
        %v4459 = vadd.f32 %v4430, %v4458
        %4460 = vdwg.mxu0
        %4461 = vmatpush.msra.mxu0 0.0
        %4462 = vmatpush.msra.mxu0 0.0
        %4463 = vmatpush.msra.mxu0 0.0
        %4464 = vmatpush.msra.mxu0 0.0
        %4465 = vmatpush.msra.mxu0 0.0
        %4466 = vmatpush.msra.mxu0 0.0
        %4467 = vmatpush.msra.mxu0 0.0
        %4468 = vmatpush.msra.mxu0 0.0
        %4469 = vmatpush.msra.mxu0 0.0
        %4470 = vmatpush.msra.mxu0 0.0
        %4471 = vmatpush.msra.mxu0 0.0
        %4472 = vmatpush.msra.mxu0 0.0
        %4473 = vmatpush.msra.mxu0 %v4383
        %4474 = vmatpush.msra.mxu0 %v4375
        %4475 = vmatpush.msra.mxu0 %v4367
        %4476 = vmatpush.msra.mxu0 %v4359
        %4477 = vmatmul.f32.gmra.mxu0 %v4392
        %v4478 = vpop.f32.mrf.mxu0
        %v4479 = vadd.f32 %v4450, %v4478
        %4480 = vmatmul.f32.gmra.mxu0 %v4395
        %v4481 = vpop.f32.mrf.mxu0
        %v4482 = vadd.f32 %v4453, %v4481
        %4483 = vmatmul.f32.gmra.mxu0 %v4398
        %v4484 = vpop.f32.mrf.mxu0
        %v4485 = vadd.f32 %v4456, %v4484
        %4486 = vmatmul.f32.gmra.mxu0 %v4401
        %v4487 = vpop.f32.mrf.mxu0
        %v4488 = vadd.f32 %v4459, %v4487
        %4489 = vdwg.mxu0
        %4490 = vmatpush.msra.mxu0 %v4224
        %4491 = vmatpush.msra.mxu0 %v4216
        %4492 = vmatpush.msra.mxu0 %v4208
        %4493 = vmatpush.msra.mxu0 %v4200
        %4494 = vmatpush.msra.mxu0 %v4192
        %4495 = vmatpush.msra.mxu0 %v4184
        %4496 = vmatpush.msra.mxu0 %v4176
        %4497 = vmatpush.msra.mxu0 %v4168
        %4498 = vmatpush.msra.mxu0 %v4160
        %4499 = vmatpush.msra.mxu0 %v4152
        %4500 = vmatpush.msra.mxu0 %v4144
        %4501 = vmatpush.msra.mxu0 %v4136
        %4502 = vmatpush.msra.mxu0 %v4128
        %4503 = vmatpush.msra.mxu0 %v4120
        %4504 = vmatpush.msra.mxu0 %v4112
        %4505 = vmatpush.msra.mxu0 %v4104
        %4506 = vmatmul.f32.gmra.mxu0 %v4091
        %v4507 = vpop.f32.mrf.mxu0
        %v4508 = vadd.f32 0.0, %v4507
        %4509 = vmatmul.f32.gmra.mxu0 %v4094
        %v4510 = vpop.f32.mrf.mxu0
        %v4511 = vadd.f32 0.0, %v4510
        %4512 = vmatmul.f32.gmra.mxu0 %v4097
        %v4513 = vpop.f32.mrf.mxu0
        %v4514 = vadd.f32 0.0, %v4513
        %4515 = vmatmul.f32.gmra.mxu0 %v4100
        %v4516 = vpop.f32.mrf.mxu0
        %v4517 = vadd.f32 0.0, %v4516
        %4518 = vdwg.mxu0
        %4519 = vmatpush.msra.mxu0 %v4352
        %4520 = vmatpush.msra.mxu0 %v4344
        %4521 = vmatpush.msra.mxu0 %v4336
        %4522 = vmatpush.msra.mxu0 %v4328
        %4523 = vmatpush.msra.mxu0 %v4320
        %4524 = vmatpush.msra.mxu0 %v4312
        %4525 = vmatpush.msra.mxu0 %v4304
        %4526 = vmatpush.msra.mxu0 %v4296
        %4527 = vmatpush.msra.mxu0 %v4288
        %4528 = vmatpush.msra.mxu0 %v4280
        %4529 = vmatpush.msra.mxu0 %v4272
        %4530 = vmatpush.msra.mxu0 %v4264
        %4531 = vmatpush.msra.mxu0 %v4256
        %4532 = vmatpush.msra.mxu0 %v4248
        %4533 = vmatpush.msra.mxu0 %v4240
        %4534 = vmatpush.msra.mxu0 %v4232
        %4535 = vmatmul.f32.gmra.mxu0 %v4092
        %v4536 = vpop.f32.mrf.mxu0
        %v4537 = vadd.f32 %v4508, %v4536
        %4538 = vmatmul.f32.gmra.mxu0 %v4095
        %v4539 = vpop.f32.mrf.mxu0
        %v4540 = vadd.f32 %v4511, %v4539
        %4541 = vmatmul.f32.gmra.mxu0 %v4098
        %v4542 = vpop.f32.mrf.mxu0
        %v4543 = vadd.f32 %v4514, %v4542
        %4544 = vmatmul.f32.gmra.mxu0 %v4101
        %v4545 = vpop.f32.mrf.mxu0
        %v4546 = vadd.f32 %v4517, %v4545
        %4547 = vdwg.mxu0
        %4548 = vmatpush.msra.mxu0 0.0
        %4549 = vmatpush.msra.mxu0 0.0
        %4550 = vmatpush.msra.mxu0 0.0
        %4551 = vmatpush.msra.mxu0 0.0
        %4552 = vmatpush.msra.mxu0 0.0
        %4553 = vmatpush.msra.mxu0 0.0
        %4554 = vmatpush.msra.mxu0 0.0
        %4555 = vmatpush.msra.mxu0 0.0
        %4556 = vmatpush.msra.mxu0 0.0
        %4557 = vmatpush.msra.mxu0 0.0
        %4558 = vmatpush.msra.mxu0 0.0
        %4559 = vmatpush.msra.mxu0 0.0
        %4560 = vmatpush.msra.mxu0 %v4384
        %4561 = vmatpush.msra.mxu0 %v4376
        %4562 = vmatpush.msra.mxu0 %v4368
        %4563 = vmatpush.msra.mxu0 %v4360
        %4564 = vmatmul.f32.gmra.mxu0 %v4392
        %v4565 = vpop.f32.mrf.mxu0
        %v4566 = vadd.f32 %v4537, %v4565
        %4567 = vmatmul.f32.gmra.mxu0 %v4395
        %v4568 = vpop.f32.mrf.mxu0
        %v4569 = vadd.f32 %v4540, %v4568
        %4570 = vmatmul.f32.gmra.mxu0 %v4398
        %v4571 = vpop.f32.mrf.mxu0
        %v4572 = vadd.f32 %v4543, %v4571
        %4573 = vmatmul.f32.gmra.mxu0 %v4401
        %v4574 = vpop.f32.mrf.mxu0
        %v4575 = vadd.f32 %v4546, %v4574
        %4576 = vdwg.mxu0
        %4577 = vmatpush.msra.mxu0 %v4225
        %4578 = vmatpush.msra.mxu0 %v4217
        %4579 = vmatpush.msra.mxu0 %v4209
        %4580 = vmatpush.msra.mxu0 %v4201
        %4581 = vmatpush.msra.mxu0 %v4193
        %4582 = vmatpush.msra.mxu0 %v4185
        %4583 = vmatpush.msra.mxu0 %v4177
        %4584 = vmatpush.msra.mxu0 %v4169
        %4585 = vmatpush.msra.mxu0 %v4161
        %4586 = vmatpush.msra.mxu0 %v4153
        %4587 = vmatpush.msra.mxu0 %v4145
        %4588 = vmatpush.msra.mxu0 %v4137
        %4589 = vmatpush.msra.mxu0 %v4129
        %4590 = vmatpush.msra.mxu0 %v4121
        %4591 = vmatpush.msra.mxu0 %v4113
        %4592 = vmatpush.msra.mxu0 %v4105
        %4593 = vmatmul.f32.gmra.mxu0 %v4091
        %v4594 = vpop.f32.mrf.mxu0
        %v4595 = vadd.f32 0.0, %v4594
        %4596 = vmatmul.f32.gmra.mxu0 %v4094
        %v4597 = vpop.f32.mrf.mxu0
        %v4598 = vadd.f32 0.0, %v4597
        %4599 = vmatmul.f32.gmra.mxu0 %v4097
        %v4600 = vpop.f32.mrf.mxu0
        %v4601 = vadd.f32 0.0, %v4600
        %4602 = vmatmul.f32.gmra.mxu0 %v4100
        %v4603 = vpop.f32.mrf.mxu0
        %v4604 = vadd.f32 0.0, %v4603
        %4605 = vdwg.mxu0
        %4606 = vmatpush.msra.mxu0 %v4353
        %4607 = vmatpush.msra.mxu0 %v4345
        %4608 = vmatpush.msra.mxu0 %v4337
        %4609 = vmatpush.msra.mxu0 %v4329
        %4610 = vmatpush.msra.mxu0 %v4321
        %4611 = vmatpush.msra.mxu0 %v4313
        %4612 = vmatpush.msra.mxu0 %v4305
        %4613 = vmatpush.msra.mxu0 %v4297
        %4614 = vmatpush.msra.mxu0 %v4289
        %4615 = vmatpush.msra.mxu0 %v4281
        %4616 = vmatpush.msra.mxu0 %v4273
        %4617 = vmatpush.msra.mxu0 %v4265
        %4618 = vmatpush.msra.mxu0 %v4257
        %4619 = vmatpush.msra.mxu0 %v4249
        %4620 = vmatpush.msra.mxu0 %v4241
        %4621 = vmatpush.msra.mxu0 %v4233
        %4622 = vmatmul.f32.gmra.mxu0 %v4092
        %v4623 = vpop.f32.mrf.mxu0
        %v4624 = vadd.f32 %v4595, %v4623
        %4625 = vmatmul.f32.gmra.mxu0 %v4095
        %v4626 = vpop.f32.mrf.mxu0
        %v4627 = vadd.f32 %v4598, %v4626
        %4628 = vmatmul.f32.gmra.mxu0 %v4098
        %v4629 = vpop.f32.mrf.mxu0
        %v4630 = vadd.f32 %v4601, %v4629
        %4631 = vmatmul.f32.gmra.mxu0 %v4101
        %v4632 = vpop.f32.mrf.mxu0
        %v4633 = vadd.f32 %v4604, %v4632
        %4634 = vdwg.mxu0
        %4635 = vmatpush.msra.mxu0 0.0
        %4636 = vmatpush.msra.mxu0 0.0
        %4637 = vmatpush.msra.mxu0 0.0
        %4638 = vmatpush.msra.mxu0 0.0
        %4639 = vmatpush.msra.mxu0 0.0
        %4640 = vmatpush.msra.mxu0 0.0
        %4641 = vmatpush.msra.mxu0 0.0
        %4642 = vmatpush.msra.mxu0 0.0
        %4643 = vmatpush.msra.mxu0 0.0
        %4644 = vmatpush.msra.mxu0 0.0
        %4645 = vmatpush.msra.mxu0 0.0
        %4646 = vmatpush.msra.mxu0 0.0
        %4647 = vmatpush.msra.mxu0 %v4385
        %4648 = vmatpush.msra.mxu0 %v4377
        %4649 = vmatpush.msra.mxu0 %v4369
        %4650 = vmatpush.msra.mxu0 %v4361
        %4651 = vmatmul.f32.gmra.mxu0 %v4392
        %v4652 = vpop.f32.mrf.mxu0
        %v4653 = vadd.f32 %v4624, %v4652
        %4654 = vmatmul.f32.gmra.mxu0 %v4395
        %v4655 = vpop.f32.mrf.mxu0
        %v4656 = vadd.f32 %v4627, %v4655
        %4657 = vmatmul.f32.gmra.mxu0 %v4398
        %v4658 = vpop.f32.mrf.mxu0
        %v4659 = vadd.f32 %v4630, %v4658
        %4660 = vmatmul.f32.gmra.mxu0 %v4401
        %v4661 = vpop.f32.mrf.mxu0
        %v4662 = vadd.f32 %v4633, %v4661
        %4663 = vdwg.mxu0
        %4664 = vmatpush.msra.mxu0 %v4226
        %4665 = vmatpush.msra.mxu0 %v4218
        %4666 = vmatpush.msra.mxu0 %v4210
        %4667 = vmatpush.msra.mxu0 %v4202
        %4668 = vmatpush.msra.mxu0 %v4194
        %4669 = vmatpush.msra.mxu0 %v4186
        %4670 = vmatpush.msra.mxu0 %v4178
        %4671 = vmatpush.msra.mxu0 %v4170
        %4672 = vmatpush.msra.mxu0 %v4162
        %4673 = vmatpush.msra.mxu0 %v4154
        %4674 = vmatpush.msra.mxu0 %v4146
        %4675 = vmatpush.msra.mxu0 %v4138
        %4676 = vmatpush.msra.mxu0 %v4130
        %4677 = vmatpush.msra.mxu0 %v4122
        %4678 = vmatpush.msra.mxu0 %v4114
        %4679 = vmatpush.msra.mxu0 %v4106
        %4680 = vmatmul.f32.gmra.mxu0 %v4091
        %v4681 = vpop.f32.mrf.mxu0
        %v4682 = vadd.f32 0.0, %v4681
        %4683 = vmatmul.f32.gmra.mxu0 %v4094
        %v4684 = vpop.f32.mrf.mxu0
        %v4685 = vadd.f32 0.0, %v4684
        %4686 = vmatmul.f32.gmra.mxu0 %v4097
        %v4687 = vpop.f32.mrf.mxu0
        %v4688 = vadd.f32 0.0, %v4687
        %4689 = vmatmul.f32.gmra.mxu0 %v4100
        %v4690 = vpop.f32.mrf.mxu0
        %v4691 = vadd.f32 0.0, %v4690
        %4692 = vdwg.mxu0
        %4693 = vmatpush.msra.mxu0 %v4354
        %4694 = vmatpush.msra.mxu0 %v4346
        %4695 = vmatpush.msra.mxu0 %v4338
        %4696 = vmatpush.msra.mxu0 %v4330
        %4697 = vmatpush.msra.mxu0 %v4322
        %4698 = vmatpush.msra.mxu0 %v4314
        %4699 = vmatpush.msra.mxu0 %v4306
        %4700 = vmatpush.msra.mxu0 %v4298
        %4701 = vmatpush.msra.mxu0 %v4290
        %4702 = vmatpush.msra.mxu0 %v4282
        %4703 = vmatpush.msra.mxu0 %v4274
        %4704 = vmatpush.msra.mxu0 %v4266
        %4705 = vmatpush.msra.mxu0 %v4258
        %4706 = vmatpush.msra.mxu0 %v4250
        %4707 = vmatpush.msra.mxu0 %v4242
        %4708 = vmatpush.msra.mxu0 %v4234
        %4709 = vmatmul.f32.gmra.mxu0 %v4092
        %v4710 = vpop.f32.mrf.mxu0
        %v4711 = vadd.f32 %v4682, %v4710
        %4712 = vmatmul.f32.gmra.mxu0 %v4095
        %v4713 = vpop.f32.mrf.mxu0
        %v4714 = vadd.f32 %v4685, %v4713
        %4715 = vmatmul.f32.gmra.mxu0 %v4098
        %v4716 = vpop.f32.mrf.mxu0
        %v4717 = vadd.f32 %v4688, %v4716
        %4718 = vmatmul.f32.gmra.mxu0 %v4101
        %v4719 = vpop.f32.mrf.mxu0
        %v4720 = vadd.f32 %v4691, %v4719
        %4721 = vdwg.mxu0
        %4722 = vmatpush.msra.mxu0 0.0
        %4723 = vmatpush.msra.mxu0 0.0
        %4724 = vmatpush.msra.mxu0 0.0
        %4725 = vmatpush.msra.mxu0 0.0
        %4726 = vmatpush.msra.mxu0 0.0
        %4727 = vmatpush.msra.mxu0 0.0
        %4728 = vmatpush.msra.mxu0 0.0
        %4729 = vmatpush.msra.mxu0 0.0
        %4730 = vmatpush.msra.mxu0 0.0
        %4731 = vmatpush.msra.mxu0 0.0
        %4732 = vmatpush.msra.mxu0 0.0
        %4733 = vmatpush.msra.mxu0 0.0
        %4734 = vmatpush.msra.mxu0 %v4386
        %4735 = vmatpush.msra.mxu0 %v4378
        %4736 = vmatpush.msra.mxu0 %v4370
        %4737 = vmatpush.msra.mxu0 %v4362
        %4738 = vmatmul.f32.gmra.mxu0 %v4392
        %v4739 = vpop.f32.mrf.mxu0
        %v4740 = vadd.f32 %v4711, %v4739
        %4741 = vmatmul.f32.gmra.mxu0 %v4395
        %v4742 = vpop.f32.mrf.mxu0
        %v4743 = vadd.f32 %v4714, %v4742
        %4744 = vmatmul.f32.gmra.mxu0 %v4398
        %v4745 = vpop.f32.mrf.mxu0
        %v4746 = vadd.f32 %v4717, %v4745
        %4747 = vmatmul.f32.gmra.mxu0 %v4401
        %v4748 = vpop.f32.mrf.mxu0
        %v4749 = vadd.f32 %v4720, %v4748
        %4750 = vdwg.mxu0
        %4751 = vmatpush.msra.mxu0 %v4227
        %4752 = vmatpush.msra.mxu0 %v4219
        %4753 = vmatpush.msra.mxu0 %v4211
        %4754 = vmatpush.msra.mxu0 %v4203
        %4755 = vmatpush.msra.mxu0 %v4195
        %4756 = vmatpush.msra.mxu0 %v4187
        %4757 = vmatpush.msra.mxu0 %v4179
        %4758 = vmatpush.msra.mxu0 %v4171
        %4759 = vmatpush.msra.mxu0 %v4163
        %4760 = vmatpush.msra.mxu0 %v4155
        %4761 = vmatpush.msra.mxu0 %v4147
        %4762 = vmatpush.msra.mxu0 %v4139
        %4763 = vmatpush.msra.mxu0 %v4131
        %4764 = vmatpush.msra.mxu0 %v4123
        %4765 = vmatpush.msra.mxu0 %v4115
        %4766 = vmatpush.msra.mxu0 %v4107
        %4767 = vmatmul.f32.gmra.mxu0 %v4091
        %v4768 = vpop.f32.mrf.mxu0
        %v4769 = vadd.f32 0.0, %v4768
        %4770 = vmatmul.f32.gmra.mxu0 %v4094
        %v4771 = vpop.f32.mrf.mxu0
        %v4772 = vadd.f32 0.0, %v4771
        %4773 = vmatmul.f32.gmra.mxu0 %v4097
        %v4774 = vpop.f32.mrf.mxu0
        %v4775 = vadd.f32 0.0, %v4774
        %4776 = vmatmul.f32.gmra.mxu0 %v4100
        %v4777 = vpop.f32.mrf.mxu0
        %v4778 = vadd.f32 0.0, %v4777
        %4779 = vdwg.mxu0
        %4780 = vmatpush.msra.mxu0 %v4355
        %4781 = vmatpush.msra.mxu0 %v4347
        %4782 = vmatpush.msra.mxu0 %v4339
        %4783 = vmatpush.msra.mxu0 %v4331
        %4784 = vmatpush.msra.mxu0 %v4323
        %4785 = vmatpush.msra.mxu0 %v4315
        %4786 = vmatpush.msra.mxu0 %v4307
        %4787 = vmatpush.msra.mxu0 %v4299
        %4788 = vmatpush.msra.mxu0 %v4291
        %4789 = vmatpush.msra.mxu0 %v4283
        %4790 = vmatpush.msra.mxu0 %v4275
        %4791 = vmatpush.msra.mxu0 %v4267
        %4792 = vmatpush.msra.mxu0 %v4259
        %4793 = vmatpush.msra.mxu0 %v4251
        %4794 = vmatpush.msra.mxu0 %v4243
        %4795 = vmatpush.msra.mxu0 %v4235
        %4796 = vmatmul.f32.gmra.mxu0 %v4092
        %v4797 = vpop.f32.mrf.mxu0
        %v4798 = vadd.f32 %v4769, %v4797
        %4799 = vmatmul.f32.gmra.mxu0 %v4095
        %v4800 = vpop.f32.mrf.mxu0
        %v4801 = vadd.f32 %v4772, %v4800
        %4802 = vmatmul.f32.gmra.mxu0 %v4098
        %v4803 = vpop.f32.mrf.mxu0
        %v4804 = vadd.f32 %v4775, %v4803
        %4805 = vmatmul.f32.gmra.mxu0 %v4101
        %v4806 = vpop.f32.mrf.mxu0
        %v4807 = vadd.f32 %v4778, %v4806
        %4808 = vdwg.mxu0
        %4809 = vmatpush.msra.mxu0 0.0
        %4810 = vmatpush.msra.mxu0 0.0
        %4811 = vmatpush.msra.mxu0 0.0
        %4812 = vmatpush.msra.mxu0 0.0
        %4813 = vmatpush.msra.mxu0 0.0
        %4814 = vmatpush.msra.mxu0 0.0
        %4815 = vmatpush.msra.mxu0 0.0
        %4816 = vmatpush.msra.mxu0 0.0
        %4817 = vmatpush.msra.mxu0 0.0
        %4818 = vmatpush.msra.mxu0 0.0
        %4819 = vmatpush.msra.mxu0 0.0
        %4820 = vmatpush.msra.mxu0 0.0
        %4821 = vmatpush.msra.mxu0 %v4387
        %4822 = vmatpush.msra.mxu0 %v4379
        %4823 = vmatpush.msra.mxu0 %v4371
        %4824 = vmatpush.msra.mxu0 %v4363
        %4825 = vmatmul.f32.gmra.mxu0 %v4392
        %v4826 = vpop.f32.mrf.mxu0
        %v4827 = vadd.f32 %v4798, %v4826
        %4828 = vmatmul.f32.gmra.mxu0 %v4395
        %v4829 = vpop.f32.mrf.mxu0
        %v4830 = vadd.f32 %v4801, %v4829
        %4831 = vmatmul.f32.gmra.mxu0 %v4398
        %v4832 = vpop.f32.mrf.mxu0
        %v4833 = vadd.f32 %v4804, %v4832
        %4834 = vmatmul.f32.gmra.mxu0 %v4401
        %v4835 = vpop.f32.mrf.mxu0
        %v4836 = vadd.f32 %v4807, %v4835
        %4837 = vdwg.mxu0
        %4838 = vmatpush.msra.mxu0 %v4228
        %4839 = vmatpush.msra.mxu0 %v4220
        %4840 = vmatpush.msra.mxu0 %v4212
        %4841 = vmatpush.msra.mxu0 %v4204
        %4842 = vmatpush.msra.mxu0 %v4196
        %4843 = vmatpush.msra.mxu0 %v4188
        %4844 = vmatpush.msra.mxu0 %v4180
        %4845 = vmatpush.msra.mxu0 %v4172
        %4846 = vmatpush.msra.mxu0 %v4164
        %4847 = vmatpush.msra.mxu0 %v4156
        %4848 = vmatpush.msra.mxu0 %v4148
        %4849 = vmatpush.msra.mxu0 %v4140
        %4850 = vmatpush.msra.mxu0 %v4132
        %4851 = vmatpush.msra.mxu0 %v4124
        %4852 = vmatpush.msra.mxu0 %v4116
        %4853 = vmatpush.msra.mxu0 %v4108
        %4854 = vmatmul.f32.gmra.mxu0 %v4091
        %v4855 = vpop.f32.mrf.mxu0
        %v4856 = vadd.f32 0.0, %v4855
        %4857 = vmatmul.f32.gmra.mxu0 %v4094
        %v4858 = vpop.f32.mrf.mxu0
        %v4859 = vadd.f32 0.0, %v4858
        %4860 = vmatmul.f32.gmra.mxu0 %v4097
        %v4861 = vpop.f32.mrf.mxu0
        %v4862 = vadd.f32 0.0, %v4861
        %4863 = vmatmul.f32.gmra.mxu0 %v4100
        %v4864 = vpop.f32.mrf.mxu0
        %v4865 = vadd.f32 0.0, %v4864
        %4866 = vdwg.mxu0
        %4867 = vmatpush.msra.mxu0 %v4356
        %4868 = vmatpush.msra.mxu0 %v4348
        %4869 = vmatpush.msra.mxu0 %v4340
        %4870 = vmatpush.msra.mxu0 %v4332
        %4871 = vmatpush.msra.mxu0 %v4324
        %4872 = vmatpush.msra.mxu0 %v4316
        %4873 = vmatpush.msra.mxu0 %v4308
        %4874 = vmatpush.msra.mxu0 %v4300
        %4875 = vmatpush.msra.mxu0 %v4292
        %4876 = vmatpush.msra.mxu0 %v4284
        %4877 = vmatpush.msra.mxu0 %v4276
        %4878 = vmatpush.msra.mxu0 %v4268
        %4879 = vmatpush.msra.mxu0 %v4260
        %4880 = vmatpush.msra.mxu0 %v4252
        %4881 = vmatpush.msra.mxu0 %v4244
        %4882 = vmatpush.msra.mxu0 %v4236
        %4883 = vmatmul.f32.gmra.mxu0 %v4092
        %v4884 = vpop.f32.mrf.mxu0
        %v4885 = vadd.f32 %v4856, %v4884
        %4886 = vmatmul.f32.gmra.mxu0 %v4095
        %v4887 = vpop.f32.mrf.mxu0
        %v4888 = vadd.f32 %v4859, %v4887
        %4889 = vmatmul.f32.gmra.mxu0 %v4098
        %v4890 = vpop.f32.mrf.mxu0
        %v4891 = vadd.f32 %v4862, %v4890
        %4892 = vmatmul.f32.gmra.mxu0 %v4101
        %v4893 = vpop.f32.mrf.mxu0
        %v4894 = vadd.f32 %v4865, %v4893
        %4895 = vdwg.mxu0
        %4896 = vmatpush.msra.mxu0 0.0
        %4897 = vmatpush.msra.mxu0 0.0
        %4898 = vmatpush.msra.mxu0 0.0
        %4899 = vmatpush.msra.mxu0 0.0
        %4900 = vmatpush.msra.mxu0 0.0
        %4901 = vmatpush.msra.mxu0 0.0
        %4902 = vmatpush.msra.mxu0 0.0
        %4903 = vmatpush.msra.mxu0 0.0
        %4904 = vmatpush.msra.mxu0 0.0
        %4905 = vmatpush.msra.mxu0 0.0
        %4906 = vmatpush.msra.mxu0 0.0
        %4907 = vmatpush.msra.mxu0 0.0
        %4908 = vmatpush.msra.mxu0 %v4388
        %4909 = vmatpush.msra.mxu0 %v4380
        %4910 = vmatpush.msra.mxu0 %v4372
        %4911 = vmatpush.msra.mxu0 %v4364
        %4912 = vmatmul.f32.gmra.mxu0 %v4392
        %v4913 = vpop.f32.mrf.mxu0
        %v4914 = vadd.f32 %v4885, %v4913
        %4915 = vmatmul.f32.gmra.mxu0 %v4395
        %v4916 = vpop.f32.mrf.mxu0
        %v4917 = vadd.f32 %v4888, %v4916
        %4918 = vmatmul.f32.gmra.mxu0 %v4398
        %v4919 = vpop.f32.mrf.mxu0
        %v4920 = vadd.f32 %v4891, %v4919
        %4921 = vmatmul.f32.gmra.mxu0 %v4401
        %v4922 = vpop.f32.mrf.mxu0
        %v4923 = vadd.f32 %v4894, %v4922
        %4924 = vdwg.mxu0
        %4925 = vmatpush.msra.mxu0 %v4229
        %4926 = vmatpush.msra.mxu0 %v4221
        %4927 = vmatpush.msra.mxu0 %v4213
        %4928 = vmatpush.msra.mxu0 %v4205
        %4929 = vmatpush.msra.mxu0 %v4197
        %4930 = vmatpush.msra.mxu0 %v4189
        %4931 = vmatpush.msra.mxu0 %v4181
        %4932 = vmatpush.msra.mxu0 %v4173
        %4933 = vmatpush.msra.mxu0 %v4165
        %4934 = vmatpush.msra.mxu0 %v4157
        %4935 = vmatpush.msra.mxu0 %v4149
        %4936 = vmatpush.msra.mxu0 %v4141
        %4937 = vmatpush.msra.mxu0 %v4133
        %4938 = vmatpush.msra.mxu0 %v4125
        %4939 = vmatpush.msra.mxu0 %v4117
        %4940 = vmatpush.msra.mxu0 %v4109
        %4941 = vmatmul.f32.gmra.mxu0 %v4091
        %v4942 = vpop.f32.mrf.mxu0
        %v4943 = vadd.f32 0.0, %v4942
        %4944 = vmatmul.f32.gmra.mxu0 %v4094
        %v4945 = vpop.f32.mrf.mxu0
        %v4946 = vadd.f32 0.0, %v4945
        %4947 = vmatmul.f32.gmra.mxu0 %v4097
        %v4948 = vpop.f32.mrf.mxu0
        %v4949 = vadd.f32 0.0, %v4948
        %4950 = vmatmul.f32.gmra.mxu0 %v4100
        %v4951 = vpop.f32.mrf.mxu0
        %v4952 = vadd.f32 0.0, %v4951
        %4953 = vdwg.mxu0
        %4954 = vmatpush.msra.mxu0 %v4357
        %4955 = vmatpush.msra.mxu0 %v4349
        %4956 = vmatpush.msra.mxu0 %v4341
        %4957 = vmatpush.msra.mxu0 %v4333
        %4958 = vmatpush.msra.mxu0 %v4325
        %4959 = vmatpush.msra.mxu0 %v4317
        %4960 = vmatpush.msra.mxu0 %v4309
        %4961 = vmatpush.msra.mxu0 %v4301
        %4962 = vmatpush.msra.mxu0 %v4293
        %4963 = vmatpush.msra.mxu0 %v4285
        %4964 = vmatpush.msra.mxu0 %v4277
        %4965 = vmatpush.msra.mxu0 %v4269
        %4966 = vmatpush.msra.mxu0 %v4261
        %4967 = vmatpush.msra.mxu0 %v4253
        %4968 = vmatpush.msra.mxu0 %v4245
        %4969 = vmatpush.msra.mxu0 %v4237
        %4970 = vmatmul.f32.gmra.mxu0 %v4092
        %v4971 = vpop.f32.mrf.mxu0
        %v4972 = vadd.f32 %v4943, %v4971
        %4973 = vmatmul.f32.gmra.mxu0 %v4095
        %v4974 = vpop.f32.mrf.mxu0
        %v4975 = vadd.f32 %v4946, %v4974
        %4976 = vmatmul.f32.gmra.mxu0 %v4098
        %v4977 = vpop.f32.mrf.mxu0
        %v4978 = vadd.f32 %v4949, %v4977
        %4979 = vmatmul.f32.gmra.mxu0 %v4101
        %v4980 = vpop.f32.mrf.mxu0
        %v4981 = vadd.f32 %v4952, %v4980
        %4982 = vdwg.mxu0
        %4983 = vmatpush.msra.mxu0 0.0
        %4984 = vmatpush.msra.mxu0 0.0
        %4985 = vmatpush.msra.mxu0 0.0
        %4986 = vmatpush.msra.mxu0 0.0
        %4987 = vmatpush.msra.mxu0 0.0
        %4988 = vmatpush.msra.mxu0 0.0
        %4989 = vmatpush.msra.mxu0 0.0
        %4990 = vmatpush.msra.mxu0 0.0
        %4991 = vmatpush.msra.mxu0 0.0
        %4992 = vmatpush.msra.mxu0 0.0
        %4993 = vmatpush.msra.mxu0 0.0
        %4994 = vmatpush.msra.mxu0 0.0
        %4995 = vmatpush.msra.mxu0 %v4389
        %4996 = vmatpush.msra.mxu0 %v4381
        %4997 = vmatpush.msra.mxu0 %v4373
        %4998 = vmatpush.msra.mxu0 %v4365
        %4999 = vmatmul.f32.gmra.mxu0 %v4392
        %v5000 = vpop.f32.mrf.mxu0
        %v5001 = vadd.f32 %v4972, %v5000
        %5002 = vmatmul.f32.gmra.mxu0 %v4395
        %v5003 = vpop.f32.mrf.mxu0
        %v5004 = vadd.f32 %v4975, %v5003
        %5005 = vmatmul.f32.gmra.mxu0 %v4398
        %v5006 = vpop.f32.mrf.mxu0
        %v5007 = vadd.f32 %v4978, %v5006
        %5008 = vmatmul.f32.gmra.mxu0 %v4401
        %v5009 = vpop.f32.mrf.mxu0
        %v5010 = vadd.f32 %v4981, %v5009
        %5011 = vdwg.mxu0
        %5012 = vmatpush.msra.mxu0 %v4230
        %5013 = vmatpush.msra.mxu0 %v4222
        %5014 = vmatpush.msra.mxu0 %v4214
        %5015 = vmatpush.msra.mxu0 %v4206
        %5016 = vmatpush.msra.mxu0 %v4198
        %5017 = vmatpush.msra.mxu0 %v4190
        %5018 = vmatpush.msra.mxu0 %v4182
        %5019 = vmatpush.msra.mxu0 %v4174
        %5020 = vmatpush.msra.mxu0 %v4166
        %5021 = vmatpush.msra.mxu0 %v4158
        %5022 = vmatpush.msra.mxu0 %v4150
        %5023 = vmatpush.msra.mxu0 %v4142
        %5024 = vmatpush.msra.mxu0 %v4134
        %5025 = vmatpush.msra.mxu0 %v4126
        %5026 = vmatpush.msra.mxu0 %v4118
        %5027 = vmatpush.msra.mxu0 %v4110
        %5028 = vmatmul.f32.gmra.mxu0 %v4091
        %v5029 = vpop.f32.mrf.mxu0
        %v5030 = vadd.f32 0.0, %v5029
        %5031 = vmatmul.f32.gmra.mxu0 %v4094
        %v5032 = vpop.f32.mrf.mxu0
        %v5033 = vadd.f32 0.0, %v5032
        %5034 = vmatmul.f32.gmra.mxu0 %v4097
        %v5035 = vpop.f32.mrf.mxu0
        %v5036 = vadd.f32 0.0, %v5035
        %5037 = vmatmul.f32.gmra.mxu0 %v4100
        %v5038 = vpop.f32.mrf.mxu0
        %v5039 = vadd.f32 0.0, %v5038
        %5040 = vdwg.mxu0
        %5041 = vmatpush.msra.mxu0 %v4358
        %5042 = vmatpush.msra.mxu0 %v4350
        %5043 = vmatpush.msra.mxu0 %v4342
        %5044 = vmatpush.msra.mxu0 %v4334
        %5045 = vmatpush.msra.mxu0 %v4326
        %5046 = vmatpush.msra.mxu0 %v4318
        %5047 = vmatpush.msra.mxu0 %v4310
        %5048 = vmatpush.msra.mxu0 %v4302
        %5049 = vmatpush.msra.mxu0 %v4294
        %5050 = vmatpush.msra.mxu0 %v4286
        %5051 = vmatpush.msra.mxu0 %v4278
        %5052 = vmatpush.msra.mxu0 %v4270
        %5053 = vmatpush.msra.mxu0 %v4262
        %5054 = vmatpush.msra.mxu0 %v4254
        %5055 = vmatpush.msra.mxu0 %v4246
        %5056 = vmatpush.msra.mxu0 %v4238
        %5057 = vmatmul.f32.gmra.mxu0 %v4092
        %v5058 = vpop.f32.mrf.mxu0
        %v5059 = vadd.f32 %v5030, %v5058
        %5060 = vmatmul.f32.gmra.mxu0 %v4095
        %v5061 = vpop.f32.mrf.mxu0
        %v5062 = vadd.f32 %v5033, %v5061
        %5063 = vmatmul.f32.gmra.mxu0 %v4098
        %v5064 = vpop.f32.mrf.mxu0
        %v5065 = vadd.f32 %v5036, %v5064
        %5066 = vmatmul.f32.gmra.mxu0 %v4101
        %v5067 = vpop.f32.mrf.mxu0
        %v5068 = vadd.f32 %v5039, %v5067
        %5069 = vdwg.mxu0
        %5070 = vmatpush.msra.mxu0 0.0
        %5071 = vmatpush.msra.mxu0 0.0
        %5072 = vmatpush.msra.mxu0 0.0
        %5073 = vmatpush.msra.mxu0 0.0
        %5074 = vmatpush.msra.mxu0 0.0
        %5075 = vmatpush.msra.mxu0 0.0
        %5076 = vmatpush.msra.mxu0 0.0
        %5077 = vmatpush.msra.mxu0 0.0
        %5078 = vmatpush.msra.mxu0 0.0
        %5079 = vmatpush.msra.mxu0 0.0
        %5080 = vmatpush.msra.mxu0 0.0
        %5081 = vmatpush.msra.mxu0 0.0
        %5082 = vmatpush.msra.mxu0 %v4390
        %5083 = vmatpush.msra.mxu0 %v4382
        %5084 = vmatpush.msra.mxu0 %v4374
        %5085 = vmatpush.msra.mxu0 %v4366
        %5086 = vmatmul.f32.gmra.mxu0 %v4392
        %v5087 = vpop.f32.mrf.mxu0
        %v5088 = vadd.f32 %v5059, %v5087
        %5089 = vmatmul.f32.gmra.mxu0 %v4395
        %v5090 = vpop.f32.mrf.mxu0
        %v5091 = vadd.f32 %v5062, %v5090
        %5092 = vmatmul.f32.gmra.mxu0 %v4398
        %v5093 = vpop.f32.mrf.mxu0
        %v5094 = vadd.f32 %v5065, %v5093
        %5095 = vmatmul.f32.gmra.mxu0 %v4401
        %v5096 = vpop.f32.mrf.mxu0
        %v5097 = vadd.f32 %v5068, %v5096
        %5098 = vdwg.mxu0
        %v5099 = vadd.f32 %v4058, %v4479
        %v5100 = vadd.f32 %v4059, %v4566
        %v5101 = vadd.f32 %v4060, %v4653
        %v5102 = vadd.f32 %v4061, %v4740
        %v5103 = vadd.f32 %v4062, %v4827
        %v5104 = vadd.f32 %v4063, %v4914
        %v5105 = vadd.f32 %v4064, %v5001
        %v5106 = vadd.f32 %v4065, %v5088
        %v5107 = vadd.f32 %v4066, %v4482
        %v5108 = vadd.f32 %v4067, %v4569
        %v5109 = vadd.f32 %v4068, %v4656
        %v5110 = vadd.f32 %v4069, %v4743
        %v5111 = vadd.f32 %v4070, %v4830
        %v5112 = vadd.f32 %v4071, %v4917
        %v5113 = vadd.f32 %v4072, %v5004
        %v5114 = vadd.f32 %v4073, %v5091
        %v5115 = vadd.f32 %v4074, %v4485
        %v5116 = vadd.f32 %v4075, %v4572
        %v5117 = vadd.f32 %v4076, %v4659
        %v5118 = vadd.f32 %v4077, %v4746
        %v5119 = vadd.f32 %v4078, %v4833
        %v5120 = vadd.f32 %v4079, %v4920
        %v5121 = vadd.f32 %v4080, %v5007
        %v5122 = vadd.f32 %v4081, %v5094
        %v5123 = vadd.f32 %v4082, %v4488
        %v5124 = vadd.f32 %v4083, %v4575
        %v5125 = vadd.f32 %v4084, %v4662
        %v5126 = vadd.f32 %v4085, %v4749
        %v5127 = vadd.f32 %v4086, %v4836
        %v5128 = vadd.f32 %v4087, %v4923
        %v5129 = vadd.f32 %v4088, %v5010
        %v5130 = vadd.f32 %v4089, %v5097
        %5131 = vst [vmem:[#allocation3] sm:$0xff] %v5099
        %5132 = vst [vmem:[#allocation3 + $0x8] sm:$0xff] %v5100
        %5133 = vst [vmem:[#allocation3 + $0x10] sm:$0xff] %v5101
        %5134 = vst [vmem:[#allocation3 + $0x18] sm:$0xff] %v5102
        %5135 = vst [vmem:[#allocation3 + $0x20] sm:$0xff] %v5103
        %5136 = vst [vmem:[#allocation3 + $0x28] sm:$0xff] %v5104
        %5137 = vst [vmem:[#allocation3 + $0x30] sm:$0xff] %v5105
        %5138 = vst [vmem:[#allocation3 + $0x38] sm:$0xff] %v5106
        %5139 = vst [vmem:[#allocation3 + $0x40] sm:$0xff] %v5107
        %5140 = vst [vmem:[#allocation3 + $0x48] sm:$0xff] %v5108
        %5141 = vst [vmem:[#allocation3 + $0x50] sm:$0xff] %v5109
        %5142 = vst [vmem:[#allocation3 + $0x58] sm:$0xff] %v5110
        %5143 = vst [vmem:[#allocation3 + $0x60] sm:$0xff] %v5111
        %5144 = vst [vmem:[#allocation3 + $0x68] sm:$0xff] %v5112
        %5145 = vst [vmem:[#allocation3 + $0x70] sm:$0xff] %v5113
        %5146 = vst [vmem:[#allocation3 + $0x78] sm:$0xff] %v5114
        %5147 = vst [vmem:[#allocation3 + $0x80] sm:$0xff] %v5115
        %5148 = vst [vmem:[#allocation3 + $0x88] sm:$0xff] %v5116
        %5149 = vst [vmem:[#allocation3 + $0x90] sm:$0xff] %v5117
        %5150 = vst [vmem:[#allocation3 + $0x98] sm:$0xff] %v5118
        %5151 = vst [vmem:[#allocation3 + $0xa0] sm:$0xff] %v5119
        %5152 = vst [vmem:[#allocation3 + $0xa8] sm:$0xff] %v5120
        %5153 = vst [vmem:[#allocation3 + $0xb0] sm:$0xff] %v5121
        %5154 = vst [vmem:[#allocation3 + $0xb8] sm:$0xff] %v5122
        %5155 = vst [vmem:[#allocation3 + $0xc0] sm:$0xff] %v5123
        %5156 = vst [vmem:[#allocation3 + $0xc8] sm:$0xff] %v5124
        %5157 = vst [vmem:[#allocation3 + $0xd0] sm:$0xff] %v5125
        %5158 = vst [vmem:[#allocation3 + $0xd8] sm:$0xff] %v5126
        %5159 = vst [vmem:[#allocation3 + $0xe0] sm:$0xff] %v5127
        %5160 = vst [vmem:[#allocation3 + $0xe8] sm:$0xff] %v5128
        %5161 = vst [vmem:[#allocation3 + $0xf0] sm:$0xff] %v5129
        %5162 = vst [vmem:[#allocation3 + $0xf8] sm:$0xff] %v5130
        %v5163 = vld [vmem:[#allocation3] sm:$0xff]
        %v5164 = vld [vmem:[#allocation3 + $0x8] sm:$0xff]
        %v5165 = vld [vmem:[#allocation3 + $0x10] sm:$0xff]
        %v5166 = vld [vmem:[#allocation3 + $0x18] sm:$0xff]
        %v5167 = vld [vmem:[#allocation3 + $0x20] sm:$0xff]
        %v5168 = vld [vmem:[#allocation3 + $0x28] sm:$0xff]
        %v5169 = vld [vmem:[#allocation3 + $0x30] sm:$0xff]
        %v5170 = vld [vmem:[#allocation3 + $0x38] sm:$0xff]
        %v5171 = vld [vmem:[#allocation3 + $0x40] sm:$0xff]
        %v5172 = vld [vmem:[#allocation3 + $0x48] sm:$0xff]
        %v5173 = vld [vmem:[#allocation3 + $0x50] sm:$0xff]
        %v5174 = vld [vmem:[#allocation3 + $0x58] sm:$0xff]
        %v5175 = vld [vmem:[#allocation3 + $0x60] sm:$0xff]
        %v5176 = vld [vmem:[#allocation3 + $0x68] sm:$0xff]
        %v5177 = vld [vmem:[#allocation3 + $0x70] sm:$0xff]
        %v5178 = vld [vmem:[#allocation3 + $0x78] sm:$0xff]
        %v5179 = vld [vmem:[#allocation3 + $0x80] sm:$0xff]
        %v5180 = vld [vmem:[#allocation3 + $0x88] sm:$0xff]
        %v5181 = vld [vmem:[#allocation3 + $0x90] sm:$0xff]
        %v5182 = vld [vmem:[#allocation3 + $0x98] sm:$0xff]
        %v5183 = vld [vmem:[#allocation3 + $0xa0] sm:$0xff]
        %v5184 = vld [vmem:[#allocation3 + $0xa8] sm:$0xff]
        %v5185 = vld [vmem:[#allocation3 + $0xb0] sm:$0xff]
        %v5186 = vld [vmem:[#allocation3 + $0xb8] sm:$0xff]
        %v5187 = vld [vmem:[#allocation3 + $0xc0] sm:$0xff]
        %v5188 = vld [vmem:[#allocation3 + $0xc8] sm:$0xff]
        %v5189 = vld [vmem:[#allocation3 + $0xd0] sm:$0xff]
        %v5190 = vld [vmem:[#allocation3 + $0xd8] sm:$0xff]
        %v5191 = vld [vmem:[#allocation3 + $0xe0] sm:$0xff]
        %v5192 = vld [vmem:[#allocation3 + $0xe8] sm:$0xff]
        %v5193 = vld [vmem:[#allocation3 + $0xf0] sm:$0xff]
        %v5194 = vld [vmem:[#allocation3 + $0xf8] sm:$0xff]
        %v5195 = vld [vmem:[#allocation9] sm:$0xff]
        %v5197 = vperm.slane %v5195, 0
        %v5198 = vperm.slane %v5195, 1
        %v5199 = vperm.slane %v5195, 2
        %v5200 = vperm.slane %v5195, 3
        %v5201 = vperm.slane %v5195, 4
        %v5202 = vperm.slane %v5195, 5
        %v5203 = vperm.slane %v5195, 6
        %v5204 = vperm.slane %v5195, 7
        %v5213 = vmul.f32 %v5163, %v5197
        %v5214 = vmul.f32 %v5164, %v5198
        %v5215 = vmul.f32 %v5165, %v5199
        %v5216 = vmul.f32 %v5166, %v5200
        %v5217 = vmul.f32 %v5167, %v5201
        %v5218 = vmul.f32 %v5168, %v5202
        %v5219 = vmul.f32 %v5169, %v5203
        %v5220 = vmul.f32 %v5170, %v5204
        %v5221 = vmul.f32 %v5171, %v5197
        %v5222 = vmul.f32 %v5172, %v5198
        %v5223 = vmul.f32 %v5173, %v5199
        %v5224 = vmul.f32 %v5174, %v5200
        %v5225 = vmul.f32 %v5175, %v5201
        %v5226 = vmul.f32 %v5176, %v5202
        %v5227 = vmul.f32 %v5177, %v5203
        %v5228 = vmul.f32 %v5178, %v5204
        %v5229 = vmul.f32 %v5179, %v5197
        %v5230 = vmul.f32 %v5180, %v5198
        %v5231 = vmul.f32 %v5181, %v5199
        %v5232 = vmul.f32 %v5182, %v5200
        %v5233 = vmul.f32 %v5183, %v5201
        %v5234 = vmul.f32 %v5184, %v5202
        %v5235 = vmul.f32 %v5185, %v5203
        %v5236 = vmul.f32 %v5186, %v5204
        %v5237 = vmul.f32 %v5187, %v5197
        %v5238 = vmul.f32 %v5188, %v5198
        %v5239 = vmul.f32 %v5189, %v5199
        %v5240 = vmul.f32 %v5190, %v5200
        %v5241 = vmul.f32 %v5191, %v5201
        %v5242 = vmul.f32 %v5192, %v5202
        %v5243 = vmul.f32 %v5193, %v5203
        %v5244 = vmul.f32 %v5194, %v5204
        %v5245 = vadd.f32 %v5213, %v5214
        %v5246 = vadd.f32 %v5245, %v5215
        %v5247 = vadd.f32 %v5246, %v5216
        %v5248 = vadd.f32 %v5247, %v5217
        %v5249 = vadd.f32 %v5248, %v5218
        %v5250 = vadd.f32 %v5249, %v5219
        %v5251 = vadd.f32 %v5250, %v5220
        %5252 = vadd.xlane.f32.xlu0 %v5251
        %v5253 = vpop.xlane.xlu0 %5252
        %v5254 = vadd.f32 %v5221, %v5222
        %v5255 = vadd.f32 %v5254, %v5223
        %v5256 = vadd.f32 %v5255, %v5224
        %v5257 = vadd.f32 %v5256, %v5225
        %v5258 = vadd.f32 %v5257, %v5226
        %v5259 = vadd.f32 %v5258, %v5227
        %v5260 = vadd.f32 %v5259, %v5228
        %5261 = vadd.xlane.f32.xlu0 %v5260
        %v5262 = vpop.xlane.xlu0 %5261
        %v5263 = vadd.f32 %v5229, %v5230
        %v5264 = vadd.f32 %v5263, %v5231
        %v5265 = vadd.f32 %v5264, %v5232
        %v5266 = vadd.f32 %v5265, %v5233
        %v5267 = vadd.f32 %v5266, %v5234
        %v5268 = vadd.f32 %v5267, %v5235
        %v5269 = vadd.f32 %v5268, %v5236
        %5270 = vadd.xlane.f32.xlu0 %v5269
        %v5271 = vpop.xlane.xlu0 %5270
        %v5272 = vadd.f32 %v5237, %v5238
        %v5273 = vadd.f32 %v5272, %v5239
        %v5274 = vadd.f32 %v5273, %v5240
        %v5275 = vadd.f32 %v5274, %v5241
        %v5276 = vadd.f32 %v5275, %v5242
        %v5277 = vadd.f32 %v5276, %v5243
        %v5278 = vadd.f32 %v5277, %v5244
        %5279 = vadd.xlane.f32.xlu0 %v5278
        %v5280 = vpop.xlane.xlu0 %5279
        %v5281 = vmul.f32 %v5213, %v5163
        %v5282 = vmul.f32 %v5214, %v5164
        %v5283 = vmul.f32 %v5215, %v5165
        %v5284 = vmul.f32 %v5216, %v5166
        %v5285 = vmul.f32 %v5217, %v5167
        %v5286 = vmul.f32 %v5218, %v5168
        %v5287 = vmul.f32 %v5219, %v5169
        %v5288 = vmul.f32 %v5220, %v5170
        %v5289 = vmul.f32 %v5221, %v5171
        %v5290 = vmul.f32 %v5222, %v5172
        %v5291 = vmul.f32 %v5223, %v5173
        %v5292 = vmul.f32 %v5224, %v5174
        %v5293 = vmul.f32 %v5225, %v5175
        %v5294 = vmul.f32 %v5226, %v5176
        %v5295 = vmul.f32 %v5227, %v5177
        %v5296 = vmul.f32 %v5228, %v5178
        %v5297 = vmul.f32 %v5229, %v5179
        %v5298 = vmul.f32 %v5230, %v5180
        %v5299 = vmul.f32 %v5231, %v5181
        %v5300 = vmul.f32 %v5232, %v5182
        %v5301 = vmul.f32 %v5233, %v5183
        %v5302 = vmul.f32 %v5234, %v5184
        %v5303 = vmul.f32 %v5235, %v5185
        %v5304 = vmul.f32 %v5236, %v5186
        %v5305 = vmul.f32 %v5237, %v5187
        %v5306 = vmul.f32 %v5238, %v5188
        %v5307 = vmul.f32 %v5239, %v5189
        %v5308 = vmul.f32 %v5240, %v5190
        %v5309 = vmul.f32 %v5241, %v5191
        %v5310 = vmul.f32 %v5242, %v5192
        %v5311 = vmul.f32 %v5243, %v5193
        %v5312 = vmul.f32 %v5244, %v5194
        %v5313 = vadd.f32 %v5281, %v5282
        %v5314 = vadd.f32 %v5313, %v5283
        %v5315 = vadd.f32 %v5314, %v5284
        %v5316 = vadd.f32 %v5315, %v5285
        %v5317 = vadd.f32 %v5316, %v5286
        %v5318 = vadd.f32 %v5317, %v5287
        %v5319 = vadd.f32 %v5318, %v5288
        %5320 = vadd.xlane.f32.xlu0 %v5319
        %v5321 = vpop.xlane.xlu0 %5320
        %v5322 = vadd.f32 %v5289, %v5290
        %v5323 = vadd.f32 %v5322, %v5291
        %v5324 = vadd.f32 %v5323, %v5292
        %v5325 = vadd.f32 %v5324, %v5293
        %v5326 = vadd.f32 %v5325, %v5294
        %v5327 = vadd.f32 %v5326, %v5295
        %v5328 = vadd.f32 %v5327, %v5296
        %5329 = vadd.xlane.f32.xlu0 %v5328
        %v5330 = vpop.xlane.xlu0 %5329
        %v5331 = vadd.f32 %v5297, %v5298
        %v5332 = vadd.f32 %v5331, %v5299
        %v5333 = vadd.f32 %v5332, %v5300
        %v5334 = vadd.f32 %v5333, %v5301
        %v5335 = vadd.f32 %v5334, %v5302
        %v5336 = vadd.f32 %v5335, %v5303
        %v5337 = vadd.f32 %v5336, %v5304
        %5338 = vadd.xlane.f32.xlu0 %v5337
        %v5339 = vpop.xlane.xlu0 %5338
        %v5340 = vadd.f32 %v5305, %v5306
        %v5341 = vadd.f32 %v5340, %v5307
        %v5342 = vadd.f32 %v5341, %v5308
        %v5343 = vadd.f32 %v5342, %v5309
        %v5344 = vadd.f32 %v5343, %v5310
        %v5345 = vadd.f32 %v5344, %v5311
        %v5346 = vadd.f32 %v5345, %v5312
        %5347 = vadd.xlane.f32.xlu0 %v5346
        %v5348 = vpop.xlane.xlu0 %5347
        %v5349 = vmul.f32 %v5253, 0.001953125
        %v5350 = vmul.f32 %v5262, 0.001953125
        %v5351 = vmul.f32 %v5271, 0.001953125
        %v5352 = vmul.f32 %v5280, 0.001953125
        %v5353 = vmul.f32 %v5321, 0.001953125
        %v5354 = vmul.f32 %v5330, 0.001953125
        %v5355 = vmul.f32 %v5339, 0.001953125
        %v5356 = vmul.f32 %v5348, 0.001953125
        %v5357 = vmul.f32 %v5349, %v5349
        %v5358 = vmul.f32 %v5350, %v5350
        %v5359 = vmul.f32 %v5351, %v5351
        %v5360 = vmul.f32 %v5352, %v5352
        %v5361 = vsub.f32 %v5353, %v5357
        %v5362 = vsub.f32 %v5354, %v5358
        %v5363 = vsub.f32 %v5355, %v5359
        %v5364 = vsub.f32 %v5356, %v5360
        %v5365 = vsub.f32 %v5163, %v5349
        %v5366 = vsub.f32 %v5164, %v5349
        %v5367 = vsub.f32 %v5165, %v5349
        %v5368 = vsub.f32 %v5166, %v5349
        %v5369 = vsub.f32 %v5167, %v5349
        %v5370 = vsub.f32 %v5168, %v5349
        %v5371 = vsub.f32 %v5169, %v5349
        %v5372 = vsub.f32 %v5170, %v5349
        %v5373 = vsub.f32 %v5171, %v5350
        %v5374 = vsub.f32 %v5172, %v5350
        %v5375 = vsub.f32 %v5173, %v5350
        %v5376 = vsub.f32 %v5174, %v5350
        %v5377 = vsub.f32 %v5175, %v5350
        %v5378 = vsub.f32 %v5176, %v5350
        %v5379 = vsub.f32 %v5177, %v5350
        %v5380 = vsub.f32 %v5178, %v5350
        %v5381 = vsub.f32 %v5179, %v5351
        %v5382 = vsub.f32 %v5180, %v5351
        %v5383 = vsub.f32 %v5181, %v5351
        %v5384 = vsub.f32 %v5182, %v5351
        %v5385 = vsub.f32 %v5183, %v5351
        %v5386 = vsub.f32 %v5184, %v5351
        %v5387 = vsub.f32 %v5185, %v5351
        %v5388 = vsub.f32 %v5186, %v5351
        %v5389 = vsub.f32 %v5187, %v5352
        %v5390 = vsub.f32 %v5188, %v5352
        %v5391 = vsub.f32 %v5189, %v5352
        %v5392 = vsub.f32 %v5190, %v5352
        %v5393 = vsub.f32 %v5191, %v5352
        %v5394 = vsub.f32 %v5192, %v5352
        %v5395 = vsub.f32 %v5193, %v5352
        %v5396 = vsub.f32 %v5194, %v5352
        %v5397 = vadd.f32 %v5361, 0.001
        %v5398 = vadd.f32 %v5362, 0.001
        %v5399 = vadd.f32 %v5363, 0.001
        %v5400 = vadd.f32 %v5364, 0.001
        %v5401 = vrsqrt.pop %v5397
        %v5402 = vmul.f32 %v5401, %v5397
        %v5403 = vmul.f32 %v5402, %v5401
        %v5404 = vmul.f32 0.5, %v5403
        %v5405 = vsub.f32 1.5, %v5404
        %v5406 = vmul.f32 %v5401, %v5405
        %vm5407 = vweird.f32 %v5397
        %vm5408 = vweird.f32 %v5401
        %vm5409 = vmor %vm5407, %vm5408
        %v5410 = vsel %vm5409, %v5401, %v5406
        %v5411 = vrsqrt.pop %v5398
        %v5412 = vmul.f32 %v5411, %v5398
        %v5413 = vmul.f32 %v5412, %v5411
        %v5414 = vmul.f32 0.5, %v5413
        %v5415 = vsub.f32 1.5, %v5414
        %v5416 = vmul.f32 %v5411, %v5415
        %vm5417 = vweird.f32 %v5398
        %vm5418 = vweird.f32 %v5411
        %vm5419 = vmor %vm5417, %vm5418
        %v5420 = vsel %vm5419, %v5411, %v5416
        %v5421 = vrsqrt.pop %v5399
        %v5422 = vmul.f32 %v5421, %v5399
        %v5423 = vmul.f32 %v5422, %v5421
        %v5424 = vmul.f32 0.5, %v5423
        %v5425 = vsub.f32 1.5, %v5424
        %v5426 = vmul.f32 %v5421, %v5425
        %vm5427 = vweird.f32 %v5399
        %vm5428 = vweird.f32 %v5421
        %vm5429 = vmor %vm5427, %vm5428
        %v5430 = vsel %vm5429, %v5421, %v5426
        %v5431 = vrsqrt.pop %v5400
        %v5432 = vmul.f32 %v5431, %v5400
        %v5433 = vmul.f32 %v5432, %v5431
        %v5434 = vmul.f32 0.5, %v5433
        %v5435 = vsub.f32 1.5, %v5434
        %v5436 = vmul.f32 %v5431, %v5435
        %vm5437 = vweird.f32 %v5400
        %vm5438 = vweird.f32 %v5431
        %vm5439 = vmor %vm5437, %vm5438
        %v5440 = vsel %vm5439, %v5431, %v5436
        %v5441 = vmul.f32 %v5365, %v5410
        %v5442 = vmul.f32 %v5366, %v5410
        %v5443 = vmul.f32 %v5367, %v5410
        %v5444 = vmul.f32 %v5368, %v5410
        %v5445 = vmul.f32 %v5369, %v5410
        %v5446 = vmul.f32 %v5370, %v5410
        %v5447 = vmul.f32 %v5371, %v5410
        %v5448 = vmul.f32 %v5372, %v5410
        %v5449 = vmul.f32 %v5373, %v5420
        %v5450 = vmul.f32 %v5374, %v5420
        %v5451 = vmul.f32 %v5375, %v5420
        %v5452 = vmul.f32 %v5376, %v5420
        %v5453 = vmul.f32 %v5377, %v5420
        %v5454 = vmul.f32 %v5378, %v5420
        %v5455 = vmul.f32 %v5379, %v5420
        %v5456 = vmul.f32 %v5380, %v5420
        %v5457 = vmul.f32 %v5381, %v5430
        %v5458 = vmul.f32 %v5382, %v5430
        %v5459 = vmul.f32 %v5383, %v5430
        %v5460 = vmul.f32 %v5384, %v5430
        %v5461 = vmul.f32 %v5385, %v5430
        %v5462 = vmul.f32 %v5386, %v5430
        %v5463 = vmul.f32 %v5387, %v5430
        %v5464 = vmul.f32 %v5388, %v5430
        %v5465 = vmul.f32 %v5389, %v5440
        %v5466 = vmul.f32 %v5390, %v5440
        %v5467 = vmul.f32 %v5391, %v5440
        %v5468 = vmul.f32 %v5392, %v5440
        %v5469 = vmul.f32 %v5393, %v5440
        %v5470 = vmul.f32 %v5394, %v5440
        %v5471 = vmul.f32 %v5395, %v5440
        %v5472 = vmul.f32 %v5396, %v5440
        %vm5473 = vcmp.ge.f32.partialorder %v5441, 0.0
        %vm5474 = vcmp.ge.f32.partialorder %v5442, 0.0
        %vm5475 = vcmp.ge.f32.partialorder %v5443, 0.0
        %vm5476 = vcmp.ge.f32.partialorder %v5444, 0.0
        %vm5477 = vcmp.ge.f32.partialorder %v5445, 0.0
        %vm5478 = vcmp.ge.f32.partialorder %v5446, 0.0
        %vm5479 = vcmp.ge.f32.partialorder %v5447, 0.0
        %vm5480 = vcmp.ge.f32.partialorder %v5448, 0.0
        %vm5481 = vcmp.ge.f32.partialorder %v5449, 0.0
        %vm5482 = vcmp.ge.f32.partialorder %v5450, 0.0
        %vm5483 = vcmp.ge.f32.partialorder %v5451, 0.0
        %vm5484 = vcmp.ge.f32.partialorder %v5452, 0.0
        %vm5485 = vcmp.ge.f32.partialorder %v5453, 0.0
        %vm5486 = vcmp.ge.f32.partialorder %v5454, 0.0
        %vm5487 = vcmp.ge.f32.partialorder %v5455, 0.0
        %vm5488 = vcmp.ge.f32.partialorder %v5456, 0.0
        %vm5489 = vcmp.ge.f32.partialorder %v5457, 0.0
        %vm5490 = vcmp.ge.f32.partialorder %v5458, 0.0
        %vm5491 = vcmp.ge.f32.partialorder %v5459, 0.0
        %vm5492 = vcmp.ge.f32.partialorder %v5460, 0.0
        %vm5493 = vcmp.ge.f32.partialorder %v5461, 0.0
        %vm5494 = vcmp.ge.f32.partialorder %v5462, 0.0
        %vm5495 = vcmp.ge.f32.partialorder %v5463, 0.0
        %vm5496 = vcmp.ge.f32.partialorder %v5464, 0.0
        %vm5497 = vcmp.ge.f32.partialorder %v5465, 0.0
        %vm5498 = vcmp.ge.f32.partialorder %v5466, 0.0
        %vm5499 = vcmp.ge.f32.partialorder %v5467, 0.0
        %vm5500 = vcmp.ge.f32.partialorder %v5468, 0.0
        %vm5501 = vcmp.ge.f32.partialorder %v5469, 0.0
        %vm5502 = vcmp.ge.f32.partialorder %v5470, 0.0
        %vm5503 = vcmp.ge.f32.partialorder %v5471, 0.0
        %vm5504 = vcmp.ge.f32.partialorder %v5472, 0.0
        %v5505 = vmul.f32 %v5441, 0.22916667
        %v5506 = vmul.f32 %v5442, 0.22916667
        %v5507 = vmul.f32 %v5443, 0.22916667
        %v5508 = vmul.f32 %v5444, 0.22916667
        %v5509 = vmul.f32 %v5445, 0.22916667
        %v5510 = vmul.f32 %v5446, 0.22916667
        %v5511 = vmul.f32 %v5447, 0.22916667
        %v5512 = vmul.f32 %v5448, 0.22916667
        %v5513 = vmul.f32 %v5449, 0.22916667
        %v5514 = vmul.f32 %v5450, 0.22916667
        %v5515 = vmul.f32 %v5451, 0.22916667
        %v5516 = vmul.f32 %v5452, 0.22916667
        %v5517 = vmul.f32 %v5453, 0.22916667
        %v5518 = vmul.f32 %v5454, 0.22916667
        %v5519 = vmul.f32 %v5455, 0.22916667
        %v5520 = vmul.f32 %v5456, 0.22916667
        %v5521 = vmul.f32 %v5457, 0.22916667
        %v5522 = vmul.f32 %v5458, 0.22916667
        %v5523 = vmul.f32 %v5459, 0.22916667
        %v5524 = vmul.f32 %v5460, 0.22916667
        %v5525 = vmul.f32 %v5461, 0.22916667
        %v5526 = vmul.f32 %v5462, 0.22916667
        %v5527 = vmul.f32 %v5463, 0.22916667
        %v5528 = vmul.f32 %v5464, 0.22916667
        %v5529 = vmul.f32 %v5465, 0.22916667
        %v5530 = vmul.f32 %v5466, 0.22916667
        %v5531 = vmul.f32 %v5467, 0.22916667
        %v5532 = vmul.f32 %v5468, 0.22916667
        %v5533 = vmul.f32 %v5469, 0.22916667
        %v5534 = vmul.f32 %v5470, 0.22916667
        %v5535 = vmul.f32 %v5471, 0.22916667
        %v5536 = vmul.f32 %v5472, 0.22916667
        %v5537 = vsel %vm5473, %v5441, %v5505
        %v5538 = vsel %vm5474, %v5442, %v5506
        %v5539 = vsel %vm5475, %v5443, %v5507
        %v5540 = vsel %vm5476, %v5444, %v5508
        %v5541 = vsel %vm5477, %v5445, %v5509
        %v5542 = vsel %vm5478, %v5446, %v5510
        %v5543 = vsel %vm5479, %v5447, %v5511
        %v5544 = vsel %vm5480, %v5448, %v5512
        %v5545 = vsel %vm5481, %v5449, %v5513
        %v5546 = vsel %vm5482, %v5450, %v5514
        %v5547 = vsel %vm5483, %v5451, %v5515
        %v5548 = vsel %vm5484, %v5452, %v5516
        %v5549 = vsel %vm5485, %v5453, %v5517
        %v5550 = vsel %vm5486, %v5454, %v5518
        %v5551 = vsel %vm5487, %v5455, %v5519
        %v5552 = vsel %vm5488, %v5456, %v5520
        %v5553 = vsel %vm5489, %v5457, %v5521
        %v5554 = vsel %vm5490, %v5458, %v5522
        %v5555 = vsel %vm5491, %v5459, %v5523
        %v5556 = vsel %vm5492, %v5460, %v5524
        %v5557 = vsel %vm5493, %v5461, %v5525
        %v5558 = vsel %vm5494, %v5462, %v5526
        %v5559 = vsel %vm5495, %v5463, %v5527
        %v5560 = vsel %vm5496, %v5464, %v5528
        %v5561 = vsel %vm5497, %v5465, %v5529
        %v5562 = vsel %vm5498, %v5466, %v5530
        %v5563 = vsel %vm5499, %v5467, %v5531
        %v5564 = vsel %vm5500, %v5468, %v5532
        %v5565 = vsel %vm5501, %v5469, %v5533
        %v5566 = vsel %vm5502, %v5470, %v5534
        %v5567 = vsel %vm5503, %v5471, %v5535
        %v5568 = vsel %vm5504, %v5472, %v5536
        %5569 = vst [vmem:[%s221] sm:$0xff] %v5537
        %5570 = vst [vmem:[%s221 + $0x8] sm:$0xff] %v5538
        %5571 = vst [vmem:[%s221 + $0x10] sm:$0xff] %v5539
        %5572 = vst [vmem:[%s221 + $0x18] sm:$0xff] %v5540
        %5573 = vst [vmem:[%s221 + $0x20] sm:$0xff] %v5541
        %5574 = vst [vmem:[%s221 + $0x28] sm:$0xff] %v5542
        %5575 = vst [vmem:[%s221 + $0x30] sm:$0xff] %v5543
        %5576 = vst [vmem:[%s221 + $0x38] sm:$0xff] %v5544
        %5577 = vst [vmem:[%s221 + $0x40] sm:$0xff] %v5545
        %5578 = vst [vmem:[%s221 + $0x48] sm:$0xff] %v5546
        %5579 = vst [vmem:[%s221 + $0x50] sm:$0xff] %v5547
        %5580 = vst [vmem:[%s221 + $0x58] sm:$0xff] %v5548
        %5581 = vst [vmem:[%s221 + $0x60] sm:$0xff] %v5549
        %5582 = vst [vmem:[%s221 + $0x68] sm:$0xff] %v5550
        %5583 = vst [vmem:[%s221 + $0x70] sm:$0xff] %v5551
        %5584 = vst [vmem:[%s221 + $0x78] sm:$0xff] %v5552
        %5585 = vst [vmem:[%s221 + $0x80] sm:$0xff] %v5553
        %5586 = vst [vmem:[%s221 + $0x88] sm:$0xff] %v5554
        %5587 = vst [vmem:[%s221 + $0x90] sm:$0xff] %v5555
        %5588 = vst [vmem:[%s221 + $0x98] sm:$0xff] %v5556
        %5589 = vst [vmem:[%s221 + $0xa0] sm:$0xff] %v5557
        %5590 = vst [vmem:[%s221 + $0xa8] sm:$0xff] %v5558
        %5591 = vst [vmem:[%s221 + $0xb0] sm:$0xff] %v5559
        %5592 = vst [vmem:[%s221 + $0xb8] sm:$0xff] %v5560
        %5593 = vst [vmem:[%s221 + $0xc0] sm:$0xff] %v5561
        %5594 = vst [vmem:[%s221 + $0xc8] sm:$0xff] %v5562
        %5595 = vst [vmem:[%s221 + $0xd0] sm:$0xff] %v5563
        %5596 = vst [vmem:[%s221 + $0xd8] sm:$0xff] %v5564
        %5597 = vst [vmem:[%s221 + $0xe0] sm:$0xff] %v5565
        %5598 = vst [vmem:[%s221 + $0xe8] sm:$0xff] %v5566
        %5599 = vst [vmem:[%s221 + $0xf0] sm:$0xff] %v5567
        %5600 = vst [vmem:[%s221 + $0xf8] sm:$0xff] %v5568
        %s5601 = sand.u32 %s97, 1
        %s5602 = scalar_lea.sflag [#allocation6], %s5601
        %s5603 = sand.u32 %s97, 1
        %s5604 = smul.addr %s5603, 256
        %s5605 = scalar_lea.vmem [#allocation10], %s5604
        // Predicated region
        $region45: #{tpu_custom_call.1} parent=31 // pred_check
          %p5606 = pneg %p107
        $region46: #{tpu_custom_call.1} parent=31 // pred_check_branch
          %5608 = sbr.rel (%p5606) target = $region48
        $region47: #{tpu_custom_call.1} parent=31 // pred_region
          %5610 = vsyncadd %s5602, 0
          %s5611 = smul.addr %s21, 32
          %s5612 = smul.addr %s5611, 8
          %s5613 = scalar_lea.hbm %s3, %s5612
          %s5614 = sshll.u32 %s5605, 4
          %s5615 = int_to_ptr.vmem [resolvable:$true] %s5614
          %s5616 = sshll.u32 %s5613, 4
          %s5617 = int_to_ptr.hbm [resolvable:$true] %s5616
          %5622 = dma.vmem_to_hbm [thread:$0]  %s5615, 4096, %s5617, %s5602, 1024, 1024, 64
        $region48: #{tpu_custom_call.1} parent=31 // pred_fallthru
          _
      $region32: #{tpu_custom_call.1} parent=5 // pred_fallthru
        _
      %p5623 = scmp.le.s32.totalorder 2, %s16
      // Predicated region
      $region49: #{tpu_custom_call.1} parent=5 // pred_check
        %p5624 = pneg %p5623
      $region50: #{tpu_custom_call.1} parent=5 // pred_check_branch
        %5626 = sbr.rel (%p5624) target = $region52
      $region51: #{tpu_custom_call.1} parent=5 // pred_region
        %s5627 = ssub.s32 %s16, 2
        // Predicated region
        $region53: #{tpu_custom_call.1} parent=51 // pred_check
          %p5628 = pneg %p113
        $region54: #{tpu_custom_call.1} parent=51 // pred_check_branch
          %5630 = sbr.rel (%p5628) target = $region56
        $region55: #{tpu_custom_call.1} parent=51 // pred_region
          %s5631 = sand.u32 %s98, 1
          %s5632 = scalar_lea.sflag [#allocation6], %s5631
          %s5633 = sand.u32 %s98, 1
          %s5634 = smul.addr %s5633, 256
          %s5635 = scalar_lea.vmem [#allocation10], %s5634
          %5637 = dma.done %s5632, 4096
        $region56: #{tpu_custom_call.1} parent=51 // pred_fallthru
          _
      $region52: #{tpu_custom_call.1} parent=5 // pred_fallthru
        _
    $region6: #{tpu_custom_call.1} parent=1 // loop_footer
      %s20 = sadd.s32 1, %s16
    $region7: #{tpu_custom_call.1} parent=1 // loop_footer_branch
      %15 = sbr.rel target = $region3
    $region8: #{tpu_custom_call.1} parent=1 // loop_exit
      _
    %5638 = vsyncpa [#allocation5], 1
    %s5639 = scalar_lea.sflag [#allocation5], 1
    %5640 = vsyncpa %s5639, 1
    %5641 = vsyncpa [#allocation8], 1
    %5642 = vsyncpa [#allocation6], 1
    %s5643 = scalar_lea.sflag [#allocation6], 1
    %5644 = vsyncpa %s5643, 1

</llo_original>
